<compile_context>
chip_gen: v6e
topology: v6e:2x2x1
jax: 0.10.0
libtpu: 0.0.40
codegen_flags: <defaults>
</compile_context>

<pallas_src>
import functools

import jax
import jax.numpy as jnp
from jax import lax
from jax.experimental import pallas as pl
from jax.experimental.pallas import tpu as pltpu


# ----------------------------- fused Pallas kernel ---------------------------
def _decoder_fused_kernel(x_ref, mask_ref, w1_ref, b1_ref, w2_ref, b2_ref,
                          o_ref, h_ref, *, K, Wg, L1, L2):
    """Fused ConvT+ReLU -> ConvT+Tanh on a flattened (row = n*Hg*Wg + y*Wg + x) grid.

    x_ref   : (L0, C_lat)          zero-padded latent, flattened (L0 >= L1 + max tap)
    mask_ref: (L1, 1)              1.0 on valid layer-1 positions, 0.0 on padding ring
    w1_ref  : (K*K, C_lat, C_mid)  per-tap (spatially flipped) layer-1 weights
    b1_ref  : (1, C_mid)
    w2_ref  : (K*K, C_mid, C_in)
    b2_ref  : (1, C_in)
    o_ref   : (L2, C_in)           flattened layer-2 output (valid rows cropped by caller)
    h_ref   : (L1, C_mid)          VMEM scratch: layer-1 out == layer-2 zero-padded in
    """
    # ---- Layer 1: ConvTranspose2d(stride=1, pad=0) + ReLU --------------------
    # Accumulate in a value; tap offsets d are static, so each slice is a cheap
    # sublane-shifted VMEM load feeding the MXU.
    acc1 = jnp.dot(x_ref[pl.ds(0, L1), :], w1_ref[0],
                   preferred_element_type=jnp.float32)
    for t in range(1, K * K):
        kh, kw = divmod(t, K)
        d = kh * Wg + kw                      # tap offset on the flattened grid
        acc1 = acc1 + jnp.dot(x_ref[pl.ds(d, L1), :], w1_ref[t],
                              preferred_element_type=jnp.float32)
    # Bias added once (hoisted out of the tap loop); mask zeroes the padding ring
    # so h_ref doubles as layer 2's zero-padded input without ever leaving VMEM.
    h_ref[...] = jnp.maximum(acc1 + b1_ref[...], 0.0) * mask_ref[...]

    # ---- Layer 2: ConvTranspose2d(stride=1, pad=0) + Tanh --------------------
    acc2 = jnp.dot(h_ref[pl.ds(0, L2), :], w2_ref[0],
                   preferred_element_type=jnp.float32)
    for t in range(1, K * K):
        kh, kw = divmod(t, K)
        d = kh * Wg + kw
        acc2 = acc2 + jnp.dot(h_ref[pl.ds(d, L2), :], w2_ref[t],
                              preferred_element_type=jnp.float32)
    o_ref[...] = jnp.tanh(acc2 + b2_ref[...])


# ------------------------------ Decoder forward -------------------------------
def decoder_forward(x_nchw, params):
    """Matches Decoder.forward: ConvT -> ReLU -> ConvT -> Tanh (stride=1, pad=0)."""
    w1, b1, w2, b2 = params["w1"], params["b1"], params["w2"], params["b2"]
    N, C_lat, H, W = x_nchw.shape
    C_mid, C_in = w1.shape[1], w2.shape[1]
    K = w1.shape[2]
    P = K - 1
    Ho1, Wo1 = H + P, W + P              # layer-1 output size
    Ho2, Wo2 = Ho1 + P, Wo1 + P          # layer-2 output size
    Hg, Wg = H + 4 * P, W + 4 * P        # working grid: layer-1 out == layer-2 padded in
    G = N * Hg * Wg                      # flattened logical grid size
    D = P * Wg + P                       # largest tap offset

    def rnd8(v):
        return -(-v // 8) * 8

    L2 = rnd8(G)                         # rows of the layer-2 accumulator / output
    L1 = rnd8(L2 + D)                    # rows of the intermediate h grid
    L0 = rnd8(L1 + D)                    # rows of the padded flattened input

    # NCHW -> NHWC, zero-pad spatially by 2*(K-1), flatten, pad rows to L0 (XLA glue).
    x_nhwc = jnp.transpose(x_nchw, (0, 2, 3, 1)).astype(jnp.float32)
    xg = jnp.pad(x_nhwc, ((0, 0), (2 * P, 2 * P), (2 * P, 2 * P), (0, 0)))
    xf = jnp.pad(xg.reshape(G, C_lat), ((0, L0 - G), (0, 0)))

    # 0/1 mask of valid layer-1 positions (the (Ho1, Wo1) block at offset (P, P)).
    q = jnp.arange(L1)
    r = q % (Hg * Wg)
    yy, xx = r // Wg, r % Wg
    valid = (q < G) & (yy >= P) & (yy < P + Ho1) & (xx >= P) & (xx < P + Wo1)
    mask = valid.astype(jnp.float32)[:, None]                       # (L1, 1)

    # Per-tap weights of the equivalent correlation (spatial flip), plus biases.
    w1_taps = jnp.flip(w1, (2, 3)).transpose(2, 3, 0, 1).reshape(K * K, C_lat, C_mid)
    w2_taps = jnp.flip(w2, (2, 3)).transpose(2, 3, 0, 1).reshape(K * K, C_mid, C_in)
    b1r = b1.reshape(1, C_mid).astype(jnp.float32)
    b2r = b2.reshape(1, C_in).astype(jnp.float32)

    kernel = functools.partial(_decoder_fused_kernel, K=K, Wg=Wg, L1=L1, L2=L2)
    flops = 2 * K * K * (L1 * C_lat * C_mid + L2 * C_mid * C_in)
    bytes_accessed = 4 * (xf.size + mask.size + w1_taps.size + w2_taps.size
                          + b1r.size + b2r.size + L2 * C_in)
    vmem_spec = pl.BlockSpec(memory_space=pltpu.MemorySpace.VMEM)

    out_flat = pl.pallas_call(
        kernel,
        out_shape=jax.ShapeDtypeStruct((L2, C_in), jnp.float32),
        in_specs=[vmem_spec] * 6,
        out_specs=vmem_spec,
        scratch_shapes=[pltpu.VMEM((L1, C_mid), jnp.float32)],
        cost_estimate=pl.CostEstimate(flops=flops,
                                      transcendentals=L2 * C_in,
                                      bytes_accessed=bytes_accessed),
    )(xf, mask, w1_taps, b1r, w2_taps, b2r)

    # Un-flatten, crop the valid (Ho2, Wo2) window, and return NCHW.
    out_grid = out_flat[:G].reshape(N, Hg, Wg, C_in)[:, :Ho2, :Wo2, :]
    return jnp.transpose(out_grid, (0, 3, 1, 2))


# ------------------------------ JAX reference ---------------------------------
def _ref_conv_transpose(x_nchw, w_torch, b):
    K = w_torch.shape[2]
    # Transposed conv (stride=1, pad=0) == correlation of input padded by K-1
    # with the spatially-flipped kernel, rearranged to OIHW.
    w_oihw = jnp.transpose(w_torch[:, :, ::-1, ::-1], (1, 0, 2, 3))
    y = lax.conv_general_dilated(
        x_nchw, w_oihw, window_strides=(1, 1),
        padding=[(K - 1, K - 1), (K - 1, K - 1)],
        dimension_numbers=("NCHW", "OIHW", "NCHW"))
    return y + b[None, :, None, None]


def decoder_forward_ref(x_nchw, params):
    h = jnp.maximum(_ref_conv_transpose(x_nchw, params["w1"], params["b1"]), 0.0)
    return jnp.tanh(_ref_conv_transpose(h, params["w2"], params["b2"]))


# ----------------------------------- main --------------------------------------
if __name__ == "__main__":
    # Module defaults: num_input_channels=3, num_middle_channels=8,
    # num_latent_channels=8, kernel_size=3, stride=1, padding=0.
    C_IN, C_MID, C_LAT, K = 3, 8, 8, 3
    N, H, W = 2, 6, 6  # latent input is (N, C_LAT, H, W)

    key = jax.random.PRNGKey(0)
    kx, k1, k2, k3, k4 = jax.random.split(key, 5)

    x = jax.random.normal(kx, (N, C_LAT, H, W), jnp.float32)
    params = {
        # ConvTranspose2d weight layout: (in_channels, out_channels, kH, kW)
        "w1": jax.random.uniform(k1, (C_LAT, C_MID, K, K), jnp.float32, -0.2, 0.2),
        "b1": jax.random.uniform(k2, (C_MID,), jnp.float32, -0.2, 0.2),
        "w2": jax.random.uniform(k3, (C_MID, C_IN, K, K), jnp.float32, -0.2, 0.2),
        "b2": jax.random.uniform(k4, (C_IN,), jnp.float32, -0.2, 0.2),
    }

    fwd = jax.jit(decoder_forward)
    out = jax.block_until_ready(fwd(x, params))
    ref = jax.block_until_ready(decoder_forward_ref(x, params))

    assert out.shape == (N, C_IN, H + 2 * (K - 1), W + 2 * (K - 1)), out.shape
    max_err = float(jnp.max(jnp.abs(out - ref)))
    assert max_err < 1e-4, max_err

    print("KERNEL_OK")
</pallas_src>

<mosaic_0001>
module attributes {stable_mosaic.version = 11 : i64} {
  func.func @_decoder_fused_kernel(%arg0: memref<456x8xf32, #tpu.memory_space<vmem>>, %arg1: memref<424x1xf32, #tpu.memory_space<vmem>>, %arg2: memref<9x8x8xf32, #tpu.memory_space<vmem>>, %arg3: memref<1x8xf32, #tpu.memory_space<vmem>>, %arg4: memref<9x8x3xf32, #tpu.memory_space<vmem>>, %arg5: memref<1x3xf32, #tpu.memory_space<vmem>>, %arg6: memref<392x3xf32, #tpu.memory_space<vmem>>, %arg7: memref<424x8xf32, #tpu.memory_space<vmem>>) attributes {dimension_semantics = [], scalar_prefetch = 0 : i64, scratch_operands = 1 : i64, tpu.core_type = #tpu.core_type<tc>} {
    %c0 = arith.constant 0 : index
    %c0_0 = arith.constant 0 : index
    %0 = vector.load %arg0[%c0, %c0_0] : memref<456x8xf32, #tpu.memory_space<vmem>>, vector<424x8xf32>
    %c0_1 = arith.constant 0 : index
    %c0_2 = arith.constant 0 : index
    %c0_3 = arith.constant 0 : index
    %1 = vector.load %arg2[%c0_1, %c0_2, %c0_3] : memref<9x8x8xf32, #tpu.memory_space<vmem>>, vector<1x8x8xf32>
    %2 = vector.shape_cast %1 : vector<1x8x8xf32> to vector<8x8xf32>
    %cst = arith.constant dense<0.000000e+00> : vector<424x8xf32>
    %3 = tpu.matmul %0, %2, %cst {dimension_numbers = #tpu.dot_dimension_numbers<[1], [0], [0], [1], [0, 0, 1, 1], [], []>} : vector<424x8xf32>, vector<8x8xf32>, vector<424x8xf32> -> vector<424x8xf32>
    %c1 = arith.constant 1 : index
    %c0_4 = arith.constant 0 : index
    %4 = vector.load %arg0[%c1, %c0_4] : memref<456x8xf32, #tpu.memory_space<vmem>>, vector<424x8xf32>
    %c1_5 = arith.constant 1 : index
    %c0_6 = arith.constant 0 : index
    %c0_7 = arith.constant 0 : index
    %5 = vector.load %arg2[%c1_5, %c0_6, %c0_7] : memref<9x8x8xf32, #tpu.memory_space<vmem>>, vector<1x8x8xf32>
    %6 = vector.shape_cast %5 : vector<1x8x8xf32> to vector<8x8xf32>
    %cst_8 = arith.constant dense<0.000000e+00> : vector<424x8xf32>
    %7 = tpu.matmul %4, %6, %cst_8 {dimension_numbers = #tpu.dot_dimension_numbers<[1], [0], [0], [1], [0, 0, 1, 1], [], []>} : vector<424x8xf32>, vector<8x8xf32>, vector<424x8xf32> -> vector<424x8xf32>
    %8 = arith.addf %3, %7 : vector<424x8xf32>
    %c2 = arith.constant 2 : index
    %c0_9 = arith.constant 0 : index
    %9 = vector.load %arg0[%c2, %c0_9] : memref<456x8xf32, #tpu.memory_space<vmem>>, vector<424x8xf32>
    %c2_10 = arith.constant 2 : index
    %c0_11 = arith.constant 0 : index
    %c0_12 = arith.constant 0 : index
    %10 = vector.load %arg2[%c2_10, %c0_11, %c0_12] : memref<9x8x8xf32, #tpu.memory_space<vmem>>, vector<1x8x8xf32>
    %11 = vector.shape_cast %10 : vector<1x8x8xf32> to vector<8x8xf32>
    %cst_13 = arith.constant dense<0.000000e+00> : vector<424x8xf32>
    %12 = tpu.matmul %9, %11, %cst_13 {dimension_numbers = #tpu.dot_dimension_numbers<[1], [0], [0], [1], [0, 0, 1, 1], [], []>} : vector<424x8xf32>, vector<8x8xf32>, vector<424x8xf32> -> vector<424x8xf32>
    %13 = arith.addf %8, %12 : vector<424x8xf32>
    %c14 = arith.constant 14 : index
    %c0_14 = arith.constant 0 : index
    %14 = vector.load %arg0[%c14, %c0_14] : memref<456x8xf32, #tpu.memory_space<vmem>>, vector<424x8xf32>
    %c3 = arith.constant 3 : index
    %c0_15 = arith.constant 0 : index
    %c0_16 = arith.constant 0 : index
    %15 = vector.load %arg2[%c3, %c0_15, %c0_16] : memref<9x8x8xf32, #tpu.memory_space<vmem>>, vector<1x8x8xf32>
    %16 = vector.shape_cast %15 : vector<1x8x8xf32> to vector<8x8xf32>
    %cst_17 = arith.constant dense<0.000000e+00> : vector<424x8xf32>
    %17 = tpu.matmul %14, %16, %cst_17 {dimension_numbers = #tpu.dot_dimension_numbers<[1], [0], [0], [1], [0, 0, 1, 1], [], []>} : vector<424x8xf32>, vector<8x8xf32>, vector<424x8xf32> -> vector<424x8xf32>
    %18 = arith.addf %13, %17 : vector<424x8xf32>
    %c15 = arith.constant 15 : index
    %c0_18 = arith.constant 0 : index
    %19 = vector.load %arg0[%c15, %c0_18] : memref<456x8xf32, #tpu.memory_space<vmem>>, vector<424x8xf32>
    %c4 = arith.constant 4 : index
    %c0_19 = arith.constant 0 : index
    %c0_20 = arith.constant 0 : index
    %20 = vector.load %arg2[%c4, %c0_19, %c0_20] : memref<9x8x8xf32, #tpu.memory_space<vmem>>, vector<1x8x8xf32>
    %21 = vector.shape_cast %20 : vector<1x8x8xf32> to vector<8x8xf32>
    %cst_21 = arith.constant dense<0.000000e+00> : vector<424x8xf32>
    %22 = tpu.matmul %19, %21, %cst_21 {dimension_numbers = #tpu.dot_dimension_numbers<[1], [0], [0], [1], [0, 0, 1, 1], [], []>} : vector<424x8xf32>, vector<8x8xf32>, vector<424x8xf32> -> vector<424x8xf32>
    %23 = arith.addf %18, %22 : vector<424x8xf32>
    %c16 = arith.constant 16 : index
    %c0_22 = arith.constant 0 : index
    %24 = vector.load %arg0[%c16, %c0_22] : memref<456x8xf32, #tpu.memory_space<vmem>>, vector<424x8xf32>
    %c5 = arith.constant 5 : index
    %c0_23 = arith.constant 0 : index
    %c0_24 = arith.constant 0 : index
    %25 = vector.load %arg2[%c5, %c0_23, %c0_24] : memref<9x8x8xf32, #tpu.memory_space<vmem>>, vector<1x8x8xf32>
    %26 = vector.shape_cast %25 : vector<1x8x8xf32> to vector<8x8xf32>
    %cst_25 = arith.constant dense<0.000000e+00> : vector<424x8xf32>
    %27 = tpu.matmul %24, %26, %cst_25 {dimension_numbers = #tpu.dot_dimension_numbers<[1], [0], [0], [1], [0, 0, 1, 1], [], []>} : vector<424x8xf32>, vector<8x8xf32>, vector<424x8xf32> -> vector<424x8xf32>
    %28 = arith.addf %23, %27 : vector<424x8xf32>
    %c28 = arith.constant 28 : index
    %c0_26 = arith.constant 0 : index
    %29 = vector.load %arg0[%c28, %c0_26] : memref<456x8xf32, #tpu.memory_space<vmem>>, vector<424x8xf32>
    %c6 = arith.constant 6 : index
    %c0_27 = arith.constant 0 : index
    %c0_28 = arith.constant 0 : index
    %30 = vector.load %arg2[%c6, %c0_27, %c0_28] : memref<9x8x8xf32, #tpu.memory_space<vmem>>, vector<1x8x8xf32>
    %31 = vector.shape_cast %30 : vector<1x8x8xf32> to vector<8x8xf32>
    %cst_29 = arith.constant dense<0.000000e+00> : vector<424x8xf32>
    %32 = tpu.matmul %29, %31, %cst_29 {dimension_numbers = #tpu.dot_dimension_numbers<[1], [0], [0], [1], [0, 0, 1, 1], [], []>} : vector<424x8xf32>, vector<8x8xf32>, vector<424x8xf32> -> vector<424x8xf32>
    %33 = arith.addf %28, %32 : vector<424x8xf32>
    %c29 = arith.constant 29 : index
    %c0_30 = arith.constant 0 : index
    %34 = vector.load %arg0[%c29, %c0_30] : memref<456x8xf32, #tpu.memory_space<vmem>>, vector<424x8xf32>
    %c7 = arith.constant 7 : index
    %c0_31 = arith.constant 0 : index
    %c0_32 = arith.constant 0 : index
    %35 = vector.load %arg2[%c7, %c0_31, %c0_32] : memref<9x8x8xf32, #tpu.memory_space<vmem>>, vector<1x8x8xf32>
    %36 = vector.shape_cast %35 : vector<1x8x8xf32> to vector<8x8xf32>
    %cst_33 = arith.constant dense<0.000000e+00> : vector<424x8xf32>
    %37 = tpu.matmul %34, %36, %cst_33 {dimension_numbers = #tpu.dot_dimension_numbers<[1], [0], [0], [1], [0, 0, 1, 1], [], []>} : vector<424x8xf32>, vector<8x8xf32>, vector<424x8xf32> -> vector<424x8xf32>
    %38 = arith.addf %33, %37 : vector<424x8xf32>
    %c30 = arith.constant 30 : index
    %c0_34 = arith.constant 0 : index
    %39 = vector.load %arg0[%c30, %c0_34] : memref<456x8xf32, #tpu.memory_space<vmem>>, vector<424x8xf32>
    %c8 = arith.constant 8 : index
    %c0_35 = arith.constant 0 : index
    %c0_36 = arith.constant 0 : index
    %40 = vector.load %arg2[%c8, %c0_35, %c0_36] : memref<9x8x8xf32, #tpu.memory_space<vmem>>, vector<1x8x8xf32>
    %41 = vector.shape_cast %40 : vector<1x8x8xf32> to vector<8x8xf32>
    %cst_37 = arith.constant dense<0.000000e+00> : vector<424x8xf32>
    %42 = tpu.matmul %39, %41, %cst_37 {dimension_numbers = #tpu.dot_dimension_numbers<[1], [0], [0], [1], [0, 0, 1, 1], [], []>} : vector<424x8xf32>, vector<8x8xf32>, vector<424x8xf32> -> vector<424x8xf32>
    %43 = arith.addf %38, %42 : vector<424x8xf32>
    %c0_38 = arith.constant 0 : index
    %c0_39 = arith.constant 0 : index
    %44 = vector.load %arg3[%c0_38, %c0_39] : memref<1x8xf32, #tpu.memory_space<vmem>>, vector<1x8xf32>
    %45 = vector.broadcast %44 : vector<1x8xf32> to vector<424x8xf32>
    %46 = arith.addf %43, %45 : vector<424x8xf32>
    %cst_40 = arith.constant 0.000000e+00 : f32
    %47 = vector.broadcast %cst_40 : f32 to vector<424x8xf32>
    %48 = arith.maximumf %46, %47 : vector<424x8xf32>
    %c0_41 = arith.constant 0 : index
    %c0_42 = arith.constant 0 : index
    %49 = vector.load %arg1[%c0_41, %c0_42] : memref<424x1xf32, #tpu.memory_space<vmem>>, vector<424x1xf32>
    %50 = vector.broadcast %49 : vector<424x1xf32> to vector<424x8xf32>
    %51 = arith.mulf %48, %50 : vector<424x8xf32>
    %c0_43 = arith.constant 0 : index
    %c0_44 = arith.constant 0 : index
    %52 = vector.load %arg7[%c0_43, %c0_44] : memref<424x8xf32, #tpu.memory_space<vmem>>, vector<424x8xf32>
    tpu.vector_store %arg7[%c0_43, %c0_44], %51 {strides = array<i32>} : memref<424x8xf32, #tpu.memory_space<vmem>>, vector<424x8xf32>,
    %c0_45 = arith.constant 0 : index
    %c0_46 = arith.constant 0 : index
    %53 = vector.load %arg7[%c0_45, %c0_46] : memref<424x8xf32, #tpu.memory_space<vmem>>, vector<392x8xf32>
    %c0_47 = arith.constant 0 : index
    %c0_48 = arith.constant 0 : index
    %c0_49 = arith.constant 0 : index
    %54 = vector.load %arg4[%c0_47, %c0_48, %c0_49] : memref<9x8x3xf32, #tpu.memory_space<vmem>>, vector<1x8x3xf32>
    %55 = vector.shape_cast %54 : vector<1x8x3xf32> to vector<8x3xf32>
    %cst_50 = arith.constant dense<0.000000e+00> : vector<392x3xf32>
    %56 = tpu.matmul %53, %55, %cst_50 {dimension_numbers = #tpu.dot_dimension_numbers<[1], [0], [0], [1], [0, 0, 1, 1], [], []>} : vector<392x8xf32>, vector<8x3xf32>, vector<392x3xf32> -> vector<392x3xf32>
    %c1_51 = arith.constant 1 : index
    %c0_52 = arith.constant 0 : index
    %57 = vector.load %arg7[%c1_51, %c0_52] : memref<424x8xf32, #tpu.memory_space<vmem>>, vector<392x8xf32>
    %c1_53 = arith.constant 1 : index
    %c0_54 = arith.constant 0 : index
    %c0_55 = arith.constant 0 : index
    %58 = vector.load %arg4[%c1_53, %c0_54, %c0_55] : memref<9x8x3xf32, #tpu.memory_space<vmem>>, vector<1x8x3xf32>
    %59 = vector.shape_cast %58 : vector<1x8x3xf32> to vector<8x3xf32>
    %cst_56 = arith.constant dense<0.000000e+00> : vector<392x3xf32>
    %60 = tpu.matmul %57, %59, %cst_56 {dimension_numbers = #tpu.dot_dimension_numbers<[1], [0], [0], [1], [0, 0, 1, 1], [], []>} : vector<392x8xf32>, vector<8x3xf32>, vector<392x3xf32> -> vector<392x3xf32>
    %61 = arith.addf %56, %60 : vector<392x3xf32>
    %c2_57 = arith.constant 2 : index
    %c0_58 = arith.constant 0 : index
    %62 = vector.load %arg7[%c2_57, %c0_58] : memref<424x8xf32, #tpu.memory_space<vmem>>, vector<392x8xf32>
    %c2_59 = arith.constant 2 : index
    %c0_60 = arith.constant 0 : index
    %c0_61 = arith.constant 0 : index
    %63 = vector.load %arg4[%c2_59, %c0_60, %c0_61] : memref<9x8x3xf32, #tpu.memory_space<vmem>>, vector<1x8x3xf32>
    %64 = vector.shape_cast %63 : vector<1x8x3xf32> to vector<8x3xf32>
    %cst_62 = arith.constant dense<0.000000e+00> : vector<392x3xf32>
    %65 = tpu.matmul %62, %64, %cst_62 {dimension_numbers = #tpu.dot_dimension_numbers<[1], [0], [0], [1], [0, 0, 1, 1], [], []>} : vector<392x8xf32>, vector<8x3xf32>, vector<392x3xf32> -> vector<392x3xf32>
    %66 = arith.addf %61, %65 : vector<392x3xf32>
    %c14_63 = arith.constant 14 : index
    %c0_64 = arith.constant 0 : index
    %67 = vector.load %arg7[%c14_63, %c0_64] : memref<424x8xf32, #tpu.memory_space<vmem>>, vector<392x8xf32>
    %c3_65 = arith.constant 3 : index
    %c0_66 = arith.constant 0 : index
    %c0_67 = arith.constant 0 : index
    %68 = vector.load %arg4[%c3_65, %c0_66, %c0_67] : memref<9x8x3xf32, #tpu.memory_space<vmem>>, vector<1x8x3xf32>
    %69 = vector.shape_cast %68 : vector<1x8x3xf32> to vector<8x3xf32>
    %cst_68 = arith.constant dense<0.000000e+00> : vector<392x3xf32>
    %70 = tpu.matmul %67, %69, %cst_68 {dimension_numbers = #tpu.dot_dimension_numbers<[1], [0], [0], [1], [0, 0, 1, 1], [], []>} : vector<392x8xf32>, vector<8x3xf32>, vector<392x3xf32> -> vector<392x3xf32>
    %71 = arith.addf %66, %70 : vector<392x3xf32>
    %c15_69 = arith.constant 15 : index
    %c0_70 = arith.constant 0 : index
    %72 = vector.load %arg7[%c15_69, %c0_70] : memref<424x8xf32, #tpu.memory_space<vmem>>, vector<392x8xf32>
    %c4_71 = arith.constant 4 : index
    %c0_72 = arith.constant 0 : index
    %c0_73 = arith.constant 0 : index
    %73 = vector.load %arg4[%c4_71, %c0_72, %c0_73] : memref<9x8x3xf32, #tpu.memory_space<vmem>>, vector<1x8x3xf32>
    %74 = vector.shape_cast %73 : vector<1x8x3xf32> to vector<8x3xf32>
    %cst_74 = arith.constant dense<0.000000e+00> : vector<392x3xf32>
    %75 = tpu.matmul %72, %74, %cst_74 {dimension_numbers = #tpu.dot_dimension_numbers<[1], [0], [0], [1], [0, 0, 1, 1], [], []>} : vector<392x8xf32>, vector<8x3xf32>, vector<392x3xf32> -> vector<392x3xf32>
    %76 = arith.addf %71, %75 : vector<392x3xf32>
    %c16_75 = arith.constant 16 : index
    %c0_76 = arith.constant 0 : index
    %77 = vector.load %arg7[%c16_75, %c0_76] : memref<424x8xf32, #tpu.memory_space<vmem>>, vector<392x8xf32>
    %c5_77 = arith.constant 5 : index
    %c0_78 = arith.constant 0 : index
    %c0_79 = arith.constant 0 : index
    %78 = vector.load %arg4[%c5_77, %c0_78, %c0_79] : memref<9x8x3xf32, #tpu.memory_space<vmem>>, vector<1x8x3xf32>
    %79 = vector.shape_cast %78 : vector<1x8x3xf32> to vector<8x3xf32>
    %cst_80 = arith.constant dense<0.000000e+00> : vector<392x3xf32>
    %80 = tpu.matmul %77, %79, %cst_80 {dimension_numbers = #tpu.dot_dimension_numbers<[1], [0], [0], [1], [0, 0, 1, 1], [], []>} : vector<392x8xf32>, vector<8x3xf32>, vector<392x3xf32> -> vector<392x3xf32>
    %81 = arith.addf %76, %80 : vector<392x3xf32>
    %c28_81 = arith.constant 28 : index
    %c0_82 = arith.constant 0 : index
    %82 = vector.load %arg7[%c28_81, %c0_82] : memref<424x8xf32, #tpu.memory_space<vmem>>, vector<392x8xf32>
    %c6_83 = arith.constant 6 : index
    %c0_84 = arith.constant 0 : index
    %c0_85 = arith.constant 0 : index
    %83 = vector.load %arg4[%c6_83, %c0_84, %c0_85] : memref<9x8x3xf32, #tpu.memory_space<vmem>>, vector<1x8x3xf32>
    %84 = vector.shape_cast %83 : vector<1x8x3xf32> to vector<8x3xf32>
    %cst_86 = arith.constant dense<0.000000e+00> : vector<392x3xf32>
    %85 = tpu.matmul %82, %84, %cst_86 {dimension_numbers = #tpu.dot_dimension_numbers<[1], [0], [0], [1], [0, 0, 1, 1], [], []>} : vector<392x8xf32>, vector<8x3xf32>, vector<392x3xf32> -> vector<392x3xf32>
    %86 = arith.addf %81, %85 : vector<392x3xf32>
    %c29_87 = arith.constant 29 : index
    %c0_88 = arith.constant 0 : index
    %87 = vector.load %arg7[%c29_87, %c0_88] : memref<424x8xf32, #tpu.memory_space<vmem>>, vector<392x8xf32>
    %c7_89 = arith.constant 7 : index
    %c0_90 = arith.constant 0 : index
    %c0_91 = arith.constant 0 : index
    %88 = vector.load %arg4[%c7_89, %c0_90, %c0_91] : memref<9x8x3xf32, #tpu.memory_space<vmem>>, vector<1x8x3xf32>
    %89 = vector.shape_cast %88 : vector<1x8x3xf32> to vector<8x3xf32>
    %cst_92 = arith.constant dense<0.000000e+00> : vector<392x3xf32>
    %90 = tpu.matmul %87, %89, %cst_92 {dimension_numbers = #tpu.dot_dimension_numbers<[1], [0], [0], [1], [0, 0, 1, 1], [], []>} : vector<392x8xf32>, vector<8x3xf32>, vector<392x3xf32> -> vector<392x3xf32>
    %91 = arith.addf %86, %90 : vector<392x3xf32>
    %c30_93 = arith.constant 30 : index
    %c0_94 = arith.constant 0 : index
    %92 = vector.load %arg7[%c30_93, %c0_94] : memref<424x8xf32, #tpu.memory_space<vmem>>, vector<392x8xf32>
    %c8_95 = arith.constant 8 : index
    %c0_96 = arith.constant 0 : index
    %c0_97 = arith.constant 0 : index
    %93 = vector.load %arg4[%c8_95, %c0_96, %c0_97] : memref<9x8x3xf32, #tpu.memory_space<vmem>>, vector<1x8x3xf32>
    %94 = vector.shape_cast %93 : vector<1x8x3xf32> to vector<8x3xf32>
    %cst_98 = arith.constant dense<0.000000e+00> : vector<392x3xf32>
    %95 = tpu.matmul %92, %94, %cst_98 {dimension_numbers = #tpu.dot_dimension_numbers<[1], [0], [0], [1], [0, 0, 1, 1], [], []>} : vector<392x8xf32>, vector<8x3xf32>, vector<392x3xf32> -> vector<392x3xf32>
    %96 = arith.addf %91, %95 : vector<392x3xf32>
    %c0_99 = arith.constant 0 : index
    %c0_100 = arith.constant 0 : index
    %97 = vector.load %arg5[%c0_99, %c0_100] : memref<1x3xf32, #tpu.memory_space<vmem>>, vector<1x3xf32>
    %98 = vector.broadcast %97 : vector<1x3xf32> to vector<392x3xf32>
    %99 = arith.addf %96, %98 : vector<392x3xf32>
    %100 = math.tanh %99 : vector<392x3xf32>
    %c0_101 = arith.constant 0 : index
    %c0_102 = arith.constant 0 : index
    %101 = vector.load %arg6[%c0_101, %c0_102] : memref<392x3xf32, #tpu.memory_space<vmem>>, vector<392x3xf32>
    tpu.vector_store %arg6[%c0_101, %c0_102], %100 {strides = array<i32>} : memref<392x3xf32, #tpu.memory_space<vmem>>, vector<392x3xf32>,
    return
  }
}

</mosaic_0001>

<llo_original>
// kernel: decoder_forward.1
$region0: #{decoder_forward.1}
  #allocation0 [shape = 'u32[]', space=smem, size = 0x4, offset = 0x4, fixed_abs, tag = 'smem constant byte address 0x4 - core index']
  #allocation1 [shape = 'u32[144,128]{1,0:T(1,128)}', space=vmem, size = 0x12000, scoped, tag = 'internal scratch']
  #allocation2 [shape = 'f32[424,8]{1,0:T(8,128)}', space=vmem, size = 0x35000, scoped, tag = 'scratch operand']
  %s0 = inlined_call_operand.vmem [shape: f32[456,8], index: 0, kind: input, shape index: {}]
  %s1 = inlined_call_operand.vmem [shape: f32[424,1], index: 1, kind: input, shape index: {}]
  %s2 = inlined_call_operand.vmem [shape: f32[9,8,8], index: 2, kind: input, shape index: {}]
  %s3 = inlined_call_operand.vmem [shape: f32[1,8], index: 3, kind: input, shape index: {}]
  %s4 = inlined_call_operand.vmem [shape: f32[9,8,3], index: 4, kind: input, shape index: {}]
  %s5 = inlined_call_operand.vmem [shape: f32[1,3], index: 5, kind: input, shape index: {}]
  %s6 = inlined_call_operand.vmem [shape: f32[392,3], index: 6, kind: output, shape index: {}]
  %s7 = sld [smem:[#allocation0]]
  $region34: #{decoder_forward.1} parent=0
    _
  %s9 = ssub.s32 1, %s7
  %s10 = scalar_select 0, %s9, %s7
  // Predicated region
  $region2: #{decoder_forward.1} parent=0 // pred_check
    _
  $region3: #{decoder_forward.1} parent=0 // pred_check_branch
    %12 = sbr.rel (0) target = $region5
  $region4: #{decoder_forward.1} parent=0 // pred_region
    _
  $region5: #{decoder_forward.1} parent=0 // pred_fallthru
    _
  // Predicated region
  $region6: #{decoder_forward.1} parent=0 // pred_check
    _
  $region7: #{decoder_forward.1} parent=0 // pred_check_branch
    %14 = sbr.rel (0) target = $region9
  $region8: #{decoder_forward.1} parent=0 // pred_region
    _
  $region9: #{decoder_forward.1} parent=0 // pred_fallthru
    _
  // Predicated region
  $region10: #{decoder_forward.1} parent=0 // pred_check
    _
  $region11: #{decoder_forward.1} parent=0 // pred_check_branch
    %16 = sbr.rel (0) target = $region13
  $region12: #{decoder_forward.1} parent=0 // pred_region
    _
  $region13: #{decoder_forward.1} parent=0 // pred_fallthru
    _
  // Predicated region
  $region14: #{decoder_forward.1} parent=0 // pred_check
    _
  $region15: #{decoder_forward.1} parent=0 // pred_check_branch
    %18 = sbr.rel (0) target = $region17
  $region16: #{decoder_forward.1} parent=0 // pred_region
    _
  $region17: #{decoder_forward.1} parent=0 // pred_fallthru
    _
  // Predicated region
  $region18: #{decoder_forward.1} parent=0 // pred_check
    _
  $region19: #{decoder_forward.1} parent=0 // pred_check_branch
    %20 = sbr.rel (0) target = $region21
  $region20: #{decoder_forward.1} parent=0 // pred_region
    _
  $region21: #{decoder_forward.1} parent=0 // pred_fallthru
    _
  // Predicated region
  $region22: #{decoder_forward.1} parent=0 // pred_check
    _
  $region23: #{decoder_forward.1} parent=0 // pred_check_branch
    %22 = sbr.rel (0) target = $region25
  $region24: #{decoder_forward.1} parent=0 // pred_region
    _
  $region25: #{decoder_forward.1} parent=0 // pred_fallthru
    _
  %v23 = vld [vmem:[%s0] sm:$0xff]
  %v24 = vld [vmem:[%s0 + $0x8] sm:$0xff]
  %v25 = vld [vmem:[%s0 + $0x10] sm:$0xff]
  %v26 = vld [vmem:[%s0 + $0x18] sm:$0xff]
  %v27 = vld [vmem:[%s0 + $0x20] sm:$0xff]
  %v28 = vld [vmem:[%s0 + $0x28] sm:$0xff]
  %v29 = vld [vmem:[%s0 + $0x30] sm:$0xff]
  %v30 = vld [vmem:[%s0 + $0x38] sm:$0xff]
  %v31 = vld [vmem:[%s0 + $0x40] sm:$0xff]
  %v32 = vld [vmem:[%s0 + $0x48] sm:$0xff]
  %v33 = vld [vmem:[%s0 + $0x50] sm:$0xff]
  %v34 = vld [vmem:[%s0 + $0x58] sm:$0xff]
  %v35 = vld [vmem:[%s0 + $0x60] sm:$0xff]
  %v36 = vld [vmem:[%s0 + $0x68] sm:$0xff]
  %v37 = vld [vmem:[%s0 + $0x70] sm:$0xff]
  %v38 = vld [vmem:[%s0 + $0x78] sm:$0xff]
  %v39 = vld [vmem:[%s0 + $0x80] sm:$0xff]
  %v40 = vld [vmem:[%s0 + $0x88] sm:$0xff]
  %v41 = vld [vmem:[%s0 + $0x90] sm:$0xff]
  %v42 = vld [vmem:[%s0 + $0x98] sm:$0xff]
  %v43 = vld [vmem:[%s0 + $0xa0] sm:$0xff]
  %v44 = vld [vmem:[%s0 + $0xa8] sm:$0xff]
  %v45 = vld [vmem:[%s0 + $0xb0] sm:$0xff]
  %v46 = vld [vmem:[%s0 + $0xb8] sm:$0xff]
  %v47 = vld [vmem:[%s0 + $0xc0] sm:$0xff]
  %v48 = vld [vmem:[%s0 + $0xc8] sm:$0xff]
  %v49 = vld [vmem:[%s0 + $0xd0] sm:$0xff]
  %v50 = vld [vmem:[%s0 + $0xd8] sm:$0xff]
  %v51 = vld [vmem:[%s0 + $0xe0] sm:$0xff]
  %v52 = vld [vmem:[%s0 + $0xe8] sm:$0xff]
  %v53 = vld [vmem:[%s0 + $0xf0] sm:$0xff]
  %v54 = vld [vmem:[%s0 + $0xf8] sm:$0xff]
  %v55 = vld [vmem:[%s0 + $0x100] sm:$0xff]
  %v56 = vld [vmem:[%s0 + $0x108] sm:$0xff]
  %v57 = vld [vmem:[%s0 + $0x110] sm:$0xff]
  %v58 = vld [vmem:[%s0 + $0x118] sm:$0xff]
  %v59 = vld [vmem:[%s0 + $0x120] sm:$0xff]
  %v60 = vld [vmem:[%s0 + $0x128] sm:$0xff]
  %v61 = vld [vmem:[%s0 + $0x130] sm:$0xff]
  %v62 = vld [vmem:[%s0 + $0x138] sm:$0xff]
  %v63 = vld [vmem:[%s0 + $0x140] sm:$0xff]
  %v64 = vld [vmem:[%s0 + $0x148] sm:$0xff]
  %v65 = vld [vmem:[%s0 + $0x150] sm:$0xff]
  %v66 = vld [vmem:[%s0 + $0x158] sm:$0xff]
  %v67 = vld [vmem:[%s0 + $0x160] sm:$0xff]
  %v68 = vld [vmem:[%s0 + $0x168] sm:$0xff]
  %v69 = vld [vmem:[%s0 + $0x170] sm:$0xff]
  %v70 = vld [vmem:[%s0 + $0x178] sm:$0xff]
  %v71 = vld [vmem:[%s0 + $0x180] sm:$0xff]
  %v72 = vld [vmem:[%s0 + $0x188] sm:$0xff]
  %v73 = vld [vmem:[%s0 + $0x190] sm:$0xff]
  %v74 = vld [vmem:[%s0 + $0x198] sm:$0xff]
  %v75 = vld [vmem:[%s0 + $0x1a0] sm:$0xff]
  %v76 = vld [vmem:[%s2] sm:$0xff]
  %v77 = vld [vmem:[%s0 + $0x1] sm:$0xff]
  %v78 = vld [vmem:[%s0 + $0x9] sm:$0xff]
  %v79 = vld [vmem:[%s0 + $0x11] sm:$0xff]
  %v80 = vld [vmem:[%s0 + $0x19] sm:$0xff]
  %v81 = vld [vmem:[%s0 + $0x21] sm:$0xff]
  %v82 = vld [vmem:[%s0 + $0x29] sm:$0xff]
  %v83 = vld [vmem:[%s0 + $0x31] sm:$0xff]
  %v84 = vld [vmem:[%s0 + $0x39] sm:$0xff]
  %v85 = vld [vmem:[%s0 + $0x41] sm:$0xff]
  %v86 = vld [vmem:[%s0 + $0x49] sm:$0xff]
  %v87 = vld [vmem:[%s0 + $0x51] sm:$0xff]
  %v88 = vld [vmem:[%s0 + $0x59] sm:$0xff]
  %v89 = vld [vmem:[%s0 + $0x61] sm:$0xff]
  %v90 = vld [vmem:[%s0 + $0x69] sm:$0xff]
  %v91 = vld [vmem:[%s0 + $0x71] sm:$0xff]
  %v92 = vld [vmem:[%s0 + $0x79] sm:$0xff]
  %v93 = vld [vmem:[%s0 + $0x81] sm:$0xff]
  %v94 = vld [vmem:[%s0 + $0x89] sm:$0xff]
  %v95 = vld [vmem:[%s0 + $0x91] sm:$0xff]
  %v96 = vld [vmem:[%s0 + $0x99] sm:$0xff]
  %v97 = vld [vmem:[%s0 + $0xa1] sm:$0xff]
  %v98 = vld [vmem:[%s0 + $0xa9] sm:$0xff]
  %v99 = vld [vmem:[%s0 + $0xb1] sm:$0xff]
  %v100 = vld [vmem:[%s0 + $0xb9] sm:$0xff]
  %v101 = vld [vmem:[%s0 + $0xc1] sm:$0xff]
  %v102 = vld [vmem:[%s0 + $0xc9] sm:$0xff]
  %v103 = vld [vmem:[%s0 + $0xd1] sm:$0xff]
  %v104 = vld [vmem:[%s0 + $0xd9] sm:$0xff]
  %v105 = vld [vmem:[%s0 + $0xe1] sm:$0xff]
  %v106 = vld [vmem:[%s0 + $0xe9] sm:$0xff]
  %v107 = vld [vmem:[%s0 + $0xf1] sm:$0xff]
  %v108 = vld [vmem:[%s0 + $0xf9] sm:$0xff]
  %v109 = vld [vmem:[%s0 + $0x101] sm:$0xff]
  %v110 = vld [vmem:[%s0 + $0x109] sm:$0xff]
  %v111 = vld [vmem:[%s0 + $0x111] sm:$0xff]
  %v112 = vld [vmem:[%s0 + $0x119] sm:$0xff]
  %v113 = vld [vmem:[%s0 + $0x121] sm:$0xff]
  %v114 = vld [vmem:[%s0 + $0x129] sm:$0xff]
  %v115 = vld [vmem:[%s0 + $0x131] sm:$0xff]
  %v116 = vld [vmem:[%s0 + $0x139] sm:$0xff]
  %v117 = vld [vmem:[%s0 + $0x141] sm:$0xff]
  %v118 = vld [vmem:[%s0 + $0x149] sm:$0xff]
  %v119 = vld [vmem:[%s0 + $0x151] sm:$0xff]
  %v120 = vld [vmem:[%s0 + $0x159] sm:$0xff]
  %v121 = vld [vmem:[%s0 + $0x161] sm:$0xff]
  %v122 = vld [vmem:[%s0 + $0x169] sm:$0xff]
  %v123 = vld [vmem:[%s0 + $0x171] sm:$0xff]
  %v124 = vld [vmem:[%s0 + $0x179] sm:$0xff]
  %v125 = vld [vmem:[%s0 + $0x181] sm:$0xff]
  %v126 = vld [vmem:[%s0 + $0x189] sm:$0xff]
  %v127 = vld [vmem:[%s0 + $0x191] sm:$0xff]
  %v128 = vld [vmem:[%s0 + $0x199] sm:$0xff]
  %v129 = vld [vmem:[%s0 + $0x1a1] sm:$0xff]
  %s130 = scalar_lea.vmem %s2, 8
  %v131 = vld [vmem:[%s130] sm:$0xff]
  %vm132 = vcmask 64512
  %v134 = vsel %vm132, %v77, 0
  %v137 = vsel %vm132, %v78, 0
  %v140 = vsel %vm132, %v79, 0
  %v143 = vsel %vm132, %v80, 0
  %v146 = vsel %vm132, %v81, 0
  %v149 = vsel %vm132, %v82, 0
  %v152 = vsel %vm132, %v83, 0
  %v155 = vsel %vm132, %v84, 0
  %v158 = vsel %vm132, %v85, 0
  %v161 = vsel %vm132, %v86, 0
  %v164 = vsel %vm132, %v87, 0
  %v167 = vsel %vm132, %v88, 0
  %v170 = vsel %vm132, %v89, 0
  %v173 = vsel %vm132, %v90, 0
  %v176 = vsel %vm132, %v91, 0
  %v179 = vsel %vm132, %v92, 0
  %v182 = vsel %vm132, %v93, 0
  %v185 = vsel %vm132, %v94, 0
  %v188 = vsel %vm132, %v95, 0
  %v191 = vsel %vm132, %v96, 0
  %v194 = vsel %vm132, %v97, 0
  %v197 = vsel %vm132, %v98, 0
  %v200 = vsel %vm132, %v99, 0
  %v203 = vsel %vm132, %v100, 0
  %v206 = vsel %vm132, %v101, 0
  %v209 = vsel %vm132, %v102, 0
  %v212 = vsel %vm132, %v103, 0
  %v215 = vsel %vm132, %v104, 0
  %v218 = vsel %vm132, %v105, 0
  %v221 = vsel %vm132, %v106, 0
  %v224 = vsel %vm132, %v107, 0
  %v227 = vsel %vm132, %v108, 0
  %v230 = vsel %vm132, %v109, 0
  %v233 = vsel %vm132, %v110, 0
  %v236 = vsel %vm132, %v111, 0
  %v239 = vsel %vm132, %v112, 0
  %v242 = vsel %vm132, %v113, 0
  %v245 = vsel %vm132, %v114, 0
  %v248 = vsel %vm132, %v115, 0
  %v251 = vsel %vm132, %v116, 0
  %v254 = vsel %vm132, %v117, 0
  %v257 = vsel %vm132, %v118, 0
  %v260 = vsel %vm132, %v119, 0
  %v263 = vsel %vm132, %v120, 0
  %v266 = vsel %vm132, %v121, 0
  %v269 = vsel %vm132, %v122, 0
  %v272 = vsel %vm132, %v123, 0
  %v275 = vsel %vm132, %v124, 0
  %v278 = vsel %vm132, %v125, 0
  %v281 = vsel %vm132, %v126, 0
  %v284 = vsel %vm132, %v127, 0
  %v287 = vsel %vm132, %v128, 0
  %v290 = vsel %vm132, %v129, 0
  %292 = vmatprep.subr.mxu0 0.0
  %293 = vmatpush1.msra.mxu0 0.0
  %294 = vmatprep.subr.mxu0 0.0
  %295 = vmatpush1.msra.mxu0 0.0
  %296 = vmatprep.subr.mxu0 0.0
  %297 = vmatpush1.msra.mxu0 0.0
  %298 = vmatprep.subr.mxu0 0.0
  %299 = vmatpush1.msra.mxu0 0.0
  %300 = vmatprep.subr.mxu0 0.0
  %301 = vmatpush1.msra.mxu0 0.0
  %302 = vmatprep.subr.mxu0 0.0
  %303 = vmatpush1.msra.mxu0 0.0
  %304 = vmatprep.subr.mxu0 0.0
  %305 = vmatpush1.msra.mxu0 0.0
  %306 = vmatprep.subr.mxu0 0.0
  %307 = vmatpush1.msra.mxu0 0.0
  %308 = vmatprep.subr.mxu0 0.0
  %309 = vmatpush1.msra.mxu0 0.0
  %310 = vmatprep.subr.mxu0 0.0
  %311 = vmatpush1.msra.mxu0 0.0
  %312 = vmatprep.subr.mxu0 0.0
  %313 = vmatpush1.msra.mxu0 0.0
  %314 = vmatprep.subr.mxu0 0.0
  %315 = vmatpush1.msra.mxu0 0.0
  %316 = vmatprep.subr.mxu0 0.0
  %317 = vmatpush1.msra.mxu0 0.0
  %318 = vmatprep.subr.mxu0 0.0
  %319 = vmatpush1.msra.mxu0 0.0
  %320 = vmatprep.subr.mxu0 0.0
  %321 = vmatpush1.msra.mxu0 0.0
  %322 = vmatprep.subr.mxu0 0.0
  %323 = vmatpush1.msra.mxu0 %v131
  %324 = vmatprep.subr.mxu0 0.0
  %325 = vmatpush2.msra.mxu0 0.0
  %326 = vmatprep.subr.mxu0 0.0
  %327 = vmatpush2.msra.mxu0 0.0
  %328 = vmatprep.subr.mxu0 0.0
  %329 = vmatpush2.msra.mxu0 0.0
  %330 = vmatprep.subr.mxu0 0.0
  %331 = vmatpush2.msra.mxu0 0.0
  %332 = vmatprep.subr.mxu0 0.0
  %333 = vmatpush2.msra.mxu0 0.0
  %334 = vmatprep.subr.mxu0 0.0
  %335 = vmatpush2.msra.mxu0 0.0
  %336 = vmatprep.subr.mxu0 0.0
  %337 = vmatpush2.msra.mxu0 0.0
  %338 = vmatprep.subr.mxu0 0.0
  %339 = vmatpush2.msra.mxu0 0.0
  %340 = vmatprep.subr.mxu0 0.0
  %341 = vmatpush2.msra.mxu0 0.0
  %342 = vmatprep.subr.mxu0 0.0
  %343 = vmatpush2.msra.mxu0 0.0
  %344 = vmatprep.subr.mxu0 0.0
  %345 = vmatpush2.msra.mxu0 0.0
  %346 = vmatprep.subr.mxu0 0.0
  %347 = vmatpush2.msra.mxu0 0.0
  %348 = vmatprep.subr.mxu0 0.0
  %349 = vmatpush2.msra.mxu0 0.0
  %350 = vmatprep.subr.mxu0 0.0
  %351 = vmatpush2.msra.mxu0 0.0
  %352 = vmatprep.subr.mxu0 0.0
  %353 = vmatpush2.msra.mxu0 0.0
  %354 = vmatprep.subr.mxu0 0.0
  %355 = vmatpush2.msra.mxu0 0.0
  %356 = vmatprep.mubr.f32.mxu0 0.0
  %357 = vmatmul.mubr.f32.gmra.mxu0 %v134
  %v358 = vpop.f32.mrf.mxu0
  %v359 = vadd.f32 0.0, %v358
  %v360 = vpop.f32.mrf.mxu0
  %361 = vmatprep.mubr.f32.mxu0 0.0
  %362 = vmatmul.mubr.f32.gmra.mxu0 %v137
  %v363 = vpop.f32.mrf.mxu0
  %v364 = vadd.f32 0.0, %v363
  %v365 = vpop.f32.mrf.mxu0
  %366 = vmatprep.mubr.f32.mxu0 0.0
  %367 = vmatmul.mubr.f32.gmra.mxu0 %v140
  %v368 = vpop.f32.mrf.mxu0
  %v369 = vadd.f32 0.0, %v368
  %v370 = vpop.f32.mrf.mxu0
  %371 = vmatprep.mubr.f32.mxu0 0.0
  %372 = vmatmul.mubr.f32.gmra.mxu0 %v143
  %v373 = vpop.f32.mrf.mxu0
  %v374 = vadd.f32 0.0, %v373
  %v375 = vpop.f32.mrf.mxu0
  %376 = vmatprep.mubr.f32.mxu0 0.0
  %377 = vmatmul.mubr.f32.gmra.mxu0 %v146
  %v378 = vpop.f32.mrf.mxu0
  %v379 = vadd.f32 0.0, %v378
  %v380 = vpop.f32.mrf.mxu0
  %381 = vmatprep.mubr.f32.mxu0 0.0
  %382 = vmatmul.mubr.f32.gmra.mxu0 %v149
  %v383 = vpop.f32.mrf.mxu0
  %v384 = vadd.f32 0.0, %v383
  %v385 = vpop.f32.mrf.mxu0
  %386 = vmatprep.mubr.f32.mxu0 0.0
  %387 = vmatmul.mubr.f32.gmra.mxu0 %v152
  %v388 = vpop.f32.mrf.mxu0
  %v389 = vadd.f32 0.0, %v388
  %v390 = vpop.f32.mrf.mxu0
  %391 = vmatprep.mubr.f32.mxu0 0.0
  %392 = vmatmul.mubr.f32.gmra.mxu0 %v155
  %v393 = vpop.f32.mrf.mxu0
  %v394 = vadd.f32 0.0, %v393
  %v395 = vpop.f32.mrf.mxu0
  %396 = vmatprep.mubr.f32.mxu0 0.0
  %397 = vmatmul.mubr.f32.gmra.mxu0 %v158
  %v398 = vpop.f32.mrf.mxu0
  %v399 = vadd.f32 0.0, %v398
  %v400 = vpop.f32.mrf.mxu0
  %401 = vmatprep.mubr.f32.mxu0 0.0
  %402 = vmatmul.mubr.f32.gmra.mxu0 %v161
  %v403 = vpop.f32.mrf.mxu0
  %v404 = vadd.f32 0.0, %v403
  %v405 = vpop.f32.mrf.mxu0
  %406 = vmatprep.mubr.f32.mxu0 0.0
  %407 = vmatmul.mubr.f32.gmra.mxu0 %v164
  %v408 = vpop.f32.mrf.mxu0
  %v409 = vadd.f32 0.0, %v408
  %v410 = vpop.f32.mrf.mxu0
  %411 = vmatprep.mubr.f32.mxu0 0.0
  %412 = vmatmul.mubr.f32.gmra.mxu0 %v167
  %v413 = vpop.f32.mrf.mxu0
  %v414 = vadd.f32 0.0, %v413
  %v415 = vpop.f32.mrf.mxu0
  %416 = vmatprep.mubr.f32.mxu0 0.0
  %417 = vmatmul.mubr.f32.gmra.mxu0 %v170
  %v418 = vpop.f32.mrf.mxu0
  %v419 = vadd.f32 0.0, %v418
  %v420 = vpop.f32.mrf.mxu0
  %421 = vmatprep.mubr.f32.mxu0 0.0
  %422 = vmatmul.mubr.f32.gmra.mxu0 %v173
  %v423 = vpop.f32.mrf.mxu0
  %v424 = vadd.f32 0.0, %v423
  %v425 = vpop.f32.mrf.mxu0
  %426 = vmatprep.mubr.f32.mxu0 0.0
  %427 = vmatmul.mubr.f32.gmra.mxu0 %v176
  %v428 = vpop.f32.mrf.mxu0
  %v429 = vadd.f32 0.0, %v428
  %v430 = vpop.f32.mrf.mxu0
  %431 = vmatprep.mubr.f32.mxu0 0.0
  %432 = vmatmul.mubr.f32.gmra.mxu0 %v179
  %v433 = vpop.f32.mrf.mxu0
  %v434 = vadd.f32 0.0, %v433
  %v435 = vpop.f32.mrf.mxu0
  %436 = vmatprep.mubr.f32.mxu0 0.0
  %437 = vmatmul.mubr.f32.gmra.mxu0 %v182
  %v438 = vpop.f32.mrf.mxu0
  %v439 = vadd.f32 0.0, %v438
  %v440 = vpop.f32.mrf.mxu0
  %441 = vmatprep.mubr.f32.mxu0 0.0
  %442 = vmatmul.mubr.f32.gmra.mxu0 %v185
  %v443 = vpop.f32.mrf.mxu0
  %v444 = vadd.f32 0.0, %v443
  %v445 = vpop.f32.mrf.mxu0
  %446 = vmatprep.mubr.f32.mxu0 0.0
  %447 = vmatmul.mubr.f32.gmra.mxu0 %v188
  %v448 = vpop.f32.mrf.mxu0
  %v449 = vadd.f32 0.0, %v448
  %v450 = vpop.f32.mrf.mxu0
  %451 = vmatprep.mubr.f32.mxu0 0.0
  %452 = vmatmul.mubr.f32.gmra.mxu0 %v191
  %v453 = vpop.f32.mrf.mxu0
  %v454 = vadd.f32 0.0, %v453
  %v455 = vpop.f32.mrf.mxu0
  %456 = vmatprep.mubr.f32.mxu0 0.0
  %457 = vmatmul.mubr.f32.gmra.mxu0 %v194
  %v458 = vpop.f32.mrf.mxu0
  %v459 = vadd.f32 0.0, %v458
  %v460 = vpop.f32.mrf.mxu0
  %461 = vmatprep.mubr.f32.mxu0 0.0
  %462 = vmatmul.mubr.f32.gmra.mxu0 %v197
  %v463 = vpop.f32.mrf.mxu0
  %v464 = vadd.f32 0.0, %v463
  %v465 = vpop.f32.mrf.mxu0
  %466 = vmatprep.mubr.f32.mxu0 0.0
  %467 = vmatmul.mubr.f32.gmra.mxu0 %v200
  %v468 = vpop.f32.mrf.mxu0
  %v469 = vadd.f32 0.0, %v468
  %v470 = vpop.f32.mrf.mxu0
  %471 = vmatprep.mubr.f32.mxu0 0.0
  %472 = vmatmul.mubr.f32.gmra.mxu0 %v203
  %v473 = vpop.f32.mrf.mxu0
  %v474 = vadd.f32 0.0, %v473
  %v475 = vpop.f32.mrf.mxu0
  %476 = vmatprep.mubr.f32.mxu0 0.0
  %477 = vmatmul.mubr.f32.gmra.mxu0 %v206
  %v478 = vpop.f32.mrf.mxu0
  %v479 = vadd.f32 0.0, %v478
  %v480 = vpop.f32.mrf.mxu0
  %481 = vmatprep.mubr.f32.mxu0 0.0
  %482 = vmatmul.mubr.f32.gmra.mxu0 %v209
  %v483 = vpop.f32.mrf.mxu0
  %v484 = vadd.f32 0.0, %v483
  %v485 = vpop.f32.mrf.mxu0
  %486 = vmatprep.mubr.f32.mxu0 0.0
  %487 = vmatmul.mubr.f32.gmra.mxu0 %v212
  %v488 = vpop.f32.mrf.mxu0
  %v489 = vadd.f32 0.0, %v488
  %v490 = vpop.f32.mrf.mxu0
  %491 = vmatprep.mubr.f32.mxu0 0.0
  %492 = vmatmul.mubr.f32.gmra.mxu0 %v215
  %v493 = vpop.f32.mrf.mxu0
  %v494 = vadd.f32 0.0, %v493
  %v495 = vpop.f32.mrf.mxu0
  %496 = vmatprep.mubr.f32.mxu0 0.0
  %497 = vmatmul.mubr.f32.gmra.mxu0 %v218
  %v498 = vpop.f32.mrf.mxu0
  %v499 = vadd.f32 0.0, %v498
  %v500 = vpop.f32.mrf.mxu0
  %501 = vmatprep.mubr.f32.mxu0 0.0
  %502 = vmatmul.mubr.f32.gmra.mxu0 %v221
  %v503 = vpop.f32.mrf.mxu0
  %v504 = vadd.f32 0.0, %v503
  %v505 = vpop.f32.mrf.mxu0
  %506 = vmatprep.mubr.f32.mxu0 0.0
  %507 = vmatmul.mubr.f32.gmra.mxu0 %v224
  %v508 = vpop.f32.mrf.mxu0
  %v509 = vadd.f32 0.0, %v508
  %v510 = vpop.f32.mrf.mxu0
  %511 = vmatprep.mubr.f32.mxu0 0.0
  %512 = vmatmul.mubr.f32.gmra.mxu0 %v227
  %v513 = vpop.f32.mrf.mxu0
  %v514 = vadd.f32 0.0, %v513
  %v515 = vpop.f32.mrf.mxu0
  %516 = vmatprep.mubr.f32.mxu0 0.0
  %517 = vmatmul.mubr.f32.gmra.mxu0 %v230
  %v518 = vpop.f32.mrf.mxu0
  %v519 = vadd.f32 0.0, %v518
  %v520 = vpop.f32.mrf.mxu0
  %521 = vmatprep.mubr.f32.mxu0 0.0
  %522 = vmatmul.mubr.f32.gmra.mxu0 %v233
  %v523 = vpop.f32.mrf.mxu0
  %v524 = vadd.f32 0.0, %v523
  %v525 = vpop.f32.mrf.mxu0
  %526 = vmatprep.mubr.f32.mxu0 0.0
  %527 = vmatmul.mubr.f32.gmra.mxu0 %v236
  %v528 = vpop.f32.mrf.mxu0
  %v529 = vadd.f32 0.0, %v528
  %v530 = vpop.f32.mrf.mxu0
  %531 = vmatprep.mubr.f32.mxu0 0.0
  %532 = vmatmul.mubr.f32.gmra.mxu0 %v239
  %v533 = vpop.f32.mrf.mxu0
  %v534 = vadd.f32 0.0, %v533
  %v535 = vpop.f32.mrf.mxu0
  %536 = vmatprep.mubr.f32.mxu0 0.0
  %537 = vmatmul.mubr.f32.gmra.mxu0 %v242
  %v538 = vpop.f32.mrf.mxu0
  %v539 = vadd.f32 0.0, %v538
  %v540 = vpop.f32.mrf.mxu0
  %541 = vmatprep.mubr.f32.mxu0 0.0
  %542 = vmatmul.mubr.f32.gmra.mxu0 %v245
  %v543 = vpop.f32.mrf.mxu0
  %v544 = vadd.f32 0.0, %v543
  %v545 = vpop.f32.mrf.mxu0
  %546 = vmatprep.mubr.f32.mxu0 0.0
  %547 = vmatmul.mubr.f32.gmra.mxu0 %v248
  %v548 = vpop.f32.mrf.mxu0
  %v549 = vadd.f32 0.0, %v548
  %v550 = vpop.f32.mrf.mxu0
  %551 = vmatprep.mubr.f32.mxu0 0.0
  %552 = vmatmul.mubr.f32.gmra.mxu0 %v251
  %v553 = vpop.f32.mrf.mxu0
  %v554 = vadd.f32 0.0, %v553
  %v555 = vpop.f32.mrf.mxu0
  %556 = vmatprep.mubr.f32.mxu0 0.0
  %557 = vmatmul.mubr.f32.gmra.mxu0 %v254
  %v558 = vpop.f32.mrf.mxu0
  %v559 = vadd.f32 0.0, %v558
  %v560 = vpop.f32.mrf.mxu0
  %561 = vmatprep.mubr.f32.mxu0 0.0
  %562 = vmatmul.mubr.f32.gmra.mxu0 %v257
  %v563 = vpop.f32.mrf.mxu0
  %v564 = vadd.f32 0.0, %v563
  %v565 = vpop.f32.mrf.mxu0
  %566 = vmatprep.mubr.f32.mxu0 0.0
  %567 = vmatmul.mubr.f32.gmra.mxu0 %v260
  %v568 = vpop.f32.mrf.mxu0
  %v569 = vadd.f32 0.0, %v568
  %v570 = vpop.f32.mrf.mxu0
  %571 = vmatprep.mubr.f32.mxu0 0.0
  %572 = vmatmul.mubr.f32.gmra.mxu0 %v263
  %v573 = vpop.f32.mrf.mxu0
  %v574 = vadd.f32 0.0, %v573
  %v575 = vpop.f32.mrf.mxu0
  %576 = vmatprep.mubr.f32.mxu0 0.0
  %577 = vmatmul.mubr.f32.gmra.mxu0 %v266
  %v578 = vpop.f32.mrf.mxu0
  %v579 = vadd.f32 0.0, %v578
  %v580 = vpop.f32.mrf.mxu0
  %581 = vmatprep.mubr.f32.mxu0 0.0
  %582 = vmatmul.mubr.f32.gmra.mxu0 %v269
  %v583 = vpop.f32.mrf.mxu0
  %v584 = vadd.f32 0.0, %v583
  %v585 = vpop.f32.mrf.mxu0
  %586 = vmatprep.mubr.f32.mxu0 0.0
  %587 = vmatmul.mubr.f32.gmra.mxu0 %v272
  %v588 = vpop.f32.mrf.mxu0
  %v589 = vadd.f32 0.0, %v588
  %v590 = vpop.f32.mrf.mxu0
  %591 = vmatprep.mubr.f32.mxu0 0.0
  %592 = vmatmul.mubr.f32.gmra.mxu0 %v275
  %v593 = vpop.f32.mrf.mxu0
  %v594 = vadd.f32 0.0, %v593
  %v595 = vpop.f32.mrf.mxu0
  %596 = vmatprep.mubr.f32.mxu0 0.0
  %597 = vmatmul.mubr.f32.gmra.mxu0 %v278
  %v598 = vpop.f32.mrf.mxu0
  %v599 = vadd.f32 0.0, %v598
  %v600 = vpop.f32.mrf.mxu0
  %601 = vmatprep.mubr.f32.mxu0 0.0
  %602 = vmatmul.mubr.f32.gmra.mxu0 %v281
  %v603 = vpop.f32.mrf.mxu0
  %v604 = vadd.f32 0.0, %v603
  %v605 = vpop.f32.mrf.mxu0
  %606 = vmatprep.mubr.f32.mxu0 0.0
  %607 = vmatmul.mubr.f32.gmra.mxu0 %v284
  %v608 = vpop.f32.mrf.mxu0
  %v609 = vadd.f32 0.0, %v608
  %v610 = vpop.f32.mrf.mxu0
  %611 = vmatprep.mubr.f32.mxu0 0.0
  %612 = vmatmul.mubr.f32.gmra.mxu0 %v287
  %v613 = vpop.f32.mrf.mxu0
  %v614 = vadd.f32 0.0, %v613
  %v615 = vpop.f32.mrf.mxu0
  %616 = vmatprep.mubr.f32.mxu0 0.0
  %617 = vmatmul.mubr.f32.gmra.mxu0 %v290
  %v618 = vpop.f32.mrf.mxu0
  %v619 = vadd.f32 0.0, %v618
  %v620 = vpop.f32.mrf.mxu0
  %621 = vdwg.mxu0
  %v623 = vsel %vm132, %v23, 0
  %v626 = vsel %vm132, %v24, 0
  %v629 = vsel %vm132, %v25, 0
  %v632 = vsel %vm132, %v26, 0
  %v635 = vsel %vm132, %v27, 0
  %v638 = vsel %vm132, %v28, 0
  %v641 = vsel %vm132, %v29, 0
  %v644 = vsel %vm132, %v30, 0
  %v647 = vsel %vm132, %v31, 0
  %v650 = vsel %vm132, %v32, 0
  %v653 = vsel %vm132, %v33, 0
  %v656 = vsel %vm132, %v34, 0
  %v659 = vsel %vm132, %v35, 0
  %v662 = vsel %vm132, %v36, 0
  %v665 = vsel %vm132, %v37, 0
  %v668 = vsel %vm132, %v38, 0
  %v671 = vsel %vm132, %v39, 0
  %v674 = vsel %vm132, %v40, 0
  %v677 = vsel %vm132, %v41, 0
  %v680 = vsel %vm132, %v42, 0
  %v683 = vsel %vm132, %v43, 0
  %v686 = vsel %vm132, %v44, 0
  %v689 = vsel %vm132, %v45, 0
  %v692 = vsel %vm132, %v46, 0
  %v695 = vsel %vm132, %v47, 0
  %v698 = vsel %vm132, %v48, 0
  %v701 = vsel %vm132, %v49, 0
  %v704 = vsel %vm132, %v50, 0
  %v707 = vsel %vm132, %v51, 0
  %v710 = vsel %vm132, %v52, 0
  %v713 = vsel %vm132, %v53, 0
  %v716 = vsel %vm132, %v54, 0
  %v719 = vsel %vm132, %v55, 0
  %v722 = vsel %vm132, %v56, 0
  %v725 = vsel %vm132, %v57, 0
  %v728 = vsel %vm132, %v58, 0
  %v731 = vsel %vm132, %v59, 0
  %v734 = vsel %vm132, %v60, 0
  %v737 = vsel %vm132, %v61, 0
  %v740 = vsel %vm132, %v62, 0
  %v743 = vsel %vm132, %v63, 0
  %v746 = vsel %vm132, %v64, 0
  %v749 = vsel %vm132, %v65, 0
  %v752 = vsel %vm132, %v66, 0
  %v755 = vsel %vm132, %v67, 0
  %v758 = vsel %vm132, %v68, 0
  %v761 = vsel %vm132, %v69, 0
  %v764 = vsel %vm132, %v70, 0
  %v767 = vsel %vm132, %v71, 0
  %v770 = vsel %vm132, %v72, 0
  %v773 = vsel %vm132, %v73, 0
  %v776 = vsel %vm132, %v74, 0
  %v779 = vsel %vm132, %v75, 0
  %781 = vmatprep.subr.mxu0 0.0
  %782 = vmatpush1.msra.mxu0 0.0
  %783 = vmatprep.subr.mxu0 0.0
  %784 = vmatpush1.msra.mxu0 0.0
  %785 = vmatprep.subr.mxu0 0.0
  %786 = vmatpush1.msra.mxu0 0.0
  %787 = vmatprep.subr.mxu0 0.0
  %788 = vmatpush1.msra.mxu0 0.0
  %789 = vmatprep.subr.mxu0 0.0
  %790 = vmatpush1.msra.mxu0 0.0
  %791 = vmatprep.subr.mxu0 0.0
  %792 = vmatpush1.msra.mxu0 0.0
  %793 = vmatprep.subr.mxu0 0.0
  %794 = vmatpush1.msra.mxu0 0.0
  %795 = vmatprep.subr.mxu0 0.0
  %796 = vmatpush1.msra.mxu0 0.0
  %797 = vmatprep.subr.mxu0 0.0
  %798 = vmatpush1.msra.mxu0 0.0
  %799 = vmatprep.subr.mxu0 0.0
  %800 = vmatpush1.msra.mxu0 0.0
  %801 = vmatprep.subr.mxu0 0.0
  %802 = vmatpush1.msra.mxu0 0.0
  %803 = vmatprep.subr.mxu0 0.0
  %804 = vmatpush1.msra.mxu0 0.0
  %805 = vmatprep.subr.mxu0 0.0
  %806 = vmatpush1.msra.mxu0 0.0
  %807 = vmatprep.subr.mxu0 0.0
  %808 = vmatpush1.msra.mxu0 0.0
  %809 = vmatprep.subr.mxu0 0.0
  %810 = vmatpush1.msra.mxu0 0.0
  %811 = vmatprep.subr.mxu0 0.0
  %812 = vmatpush1.msra.mxu0 %v76
  %813 = vmatprep.subr.mxu0 0.0
  %814 = vmatpush2.msra.mxu0 0.0
  %815 = vmatprep.subr.mxu0 0.0
  %816 = vmatpush2.msra.mxu0 0.0
  %817 = vmatprep.subr.mxu0 0.0
  %818 = vmatpush2.msra.mxu0 0.0
  %819 = vmatprep.subr.mxu0 0.0
  %820 = vmatpush2.msra.mxu0 0.0
  %821 = vmatprep.subr.mxu0 0.0
  %822 = vmatpush2.msra.mxu0 0.0
  %823 = vmatprep.subr.mxu0 0.0
  %824 = vmatpush2.msra.mxu0 0.0
  %825 = vmatprep.subr.mxu0 0.0
  %826 = vmatpush2.msra.mxu0 0.0
  %827 = vmatprep.subr.mxu0 0.0
  %828 = vmatpush2.msra.mxu0 0.0
  %829 = vmatprep.subr.mxu0 0.0
  %830 = vmatpush2.msra.mxu0 0.0
  %831 = vmatprep.subr.mxu0 0.0
  %832 = vmatpush2.msra.mxu0 0.0
  %833 = vmatprep.subr.mxu0 0.0
  %834 = vmatpush2.msra.mxu0 0.0
  %835 = vmatprep.subr.mxu0 0.0
  %836 = vmatpush2.msra.mxu0 0.0
  %837 = vmatprep.subr.mxu0 0.0
  %838 = vmatpush2.msra.mxu0 0.0
  %839 = vmatprep.subr.mxu0 0.0
  %840 = vmatpush2.msra.mxu0 0.0
  %841 = vmatprep.subr.mxu0 0.0
  %842 = vmatpush2.msra.mxu0 0.0
  %843 = vmatprep.subr.mxu0 0.0
  %844 = vmatpush2.msra.mxu0 0.0
  %845 = vmatprep.mubr.f32.mxu0 0.0
  %846 = vmatmul.mubr.f32.gmra.mxu0 %v623
  %v847 = vpop.f32.mrf.mxu0
  %v848 = vadd.f32 %v359, %v847
  %v849 = vpop.f32.mrf.mxu0
  %850 = vmatprep.mubr.f32.mxu0 0.0
  %851 = vmatmul.mubr.f32.gmra.mxu0 %v626
  %v852 = vpop.f32.mrf.mxu0
  %v853 = vadd.f32 %v364, %v852
  %v854 = vpop.f32.mrf.mxu0
  %855 = vmatprep.mubr.f32.mxu0 0.0
  %856 = vmatmul.mubr.f32.gmra.mxu0 %v629
  %v857 = vpop.f32.mrf.mxu0
  %v858 = vadd.f32 %v369, %v857
  %v859 = vpop.f32.mrf.mxu0
  %860 = vmatprep.mubr.f32.mxu0 0.0
  %861 = vmatmul.mubr.f32.gmra.mxu0 %v632
  %v862 = vpop.f32.mrf.mxu0
  %v863 = vadd.f32 %v374, %v862
  %v864 = vpop.f32.mrf.mxu0
  %865 = vmatprep.mubr.f32.mxu0 0.0
  %866 = vmatmul.mubr.f32.gmra.mxu0 %v635
  %v867 = vpop.f32.mrf.mxu0
  %v868 = vadd.f32 %v379, %v867
  %v869 = vpop.f32.mrf.mxu0
  %870 = vmatprep.mubr.f32.mxu0 0.0
  %871 = vmatmul.mubr.f32.gmra.mxu0 %v638
  %v872 = vpop.f32.mrf.mxu0
  %v873 = vadd.f32 %v384, %v872
  %v874 = vpop.f32.mrf.mxu0
  %875 = vmatprep.mubr.f32.mxu0 0.0
  %876 = vmatmul.mubr.f32.gmra.mxu0 %v641
  %v877 = vpop.f32.mrf.mxu0
  %v878 = vadd.f32 %v389, %v877
  %v879 = vpop.f32.mrf.mxu0
  %880 = vmatprep.mubr.f32.mxu0 0.0
  %881 = vmatmul.mubr.f32.gmra.mxu0 %v644
  %v882 = vpop.f32.mrf.mxu0
  %v883 = vadd.f32 %v394, %v882
  %v884 = vpop.f32.mrf.mxu0
  %885 = vmatprep.mubr.f32.mxu0 0.0
  %886 = vmatmul.mubr.f32.gmra.mxu0 %v647
  %v887 = vpop.f32.mrf.mxu0
  %v888 = vadd.f32 %v399, %v887
  %v889 = vpop.f32.mrf.mxu0
  %890 = vmatprep.mubr.f32.mxu0 0.0
  %891 = vmatmul.mubr.f32.gmra.mxu0 %v650
  %v892 = vpop.f32.mrf.mxu0
  %v893 = vadd.f32 %v404, %v892
  %v894 = vpop.f32.mrf.mxu0
  %895 = vmatprep.mubr.f32.mxu0 0.0
  %896 = vmatmul.mubr.f32.gmra.mxu0 %v653
  %v897 = vpop.f32.mrf.mxu0
  %v898 = vadd.f32 %v409, %v897
  %v899 = vpop.f32.mrf.mxu0
  %900 = vmatprep.mubr.f32.mxu0 0.0
  %901 = vmatmul.mubr.f32.gmra.mxu0 %v656
  %v902 = vpop.f32.mrf.mxu0
  %v903 = vadd.f32 %v414, %v902
  %v904 = vpop.f32.mrf.mxu0
  %905 = vmatprep.mubr.f32.mxu0 0.0
  %906 = vmatmul.mubr.f32.gmra.mxu0 %v659
  %v907 = vpop.f32.mrf.mxu0
  %v908 = vadd.f32 %v419, %v907
  %v909 = vpop.f32.mrf.mxu0
  %910 = vmatprep.mubr.f32.mxu0 0.0
  %911 = vmatmul.mubr.f32.gmra.mxu0 %v662
  %v912 = vpop.f32.mrf.mxu0
  %v913 = vadd.f32 %v424, %v912
  %v914 = vpop.f32.mrf.mxu0
  %915 = vmatprep.mubr.f32.mxu0 0.0
  %916 = vmatmul.mubr.f32.gmra.mxu0 %v665
  %v917 = vpop.f32.mrf.mxu0
  %v918 = vadd.f32 %v429, %v917
  %v919 = vpop.f32.mrf.mxu0
  %920 = vmatprep.mubr.f32.mxu0 0.0
  %921 = vmatmul.mubr.f32.gmra.mxu0 %v668
  %v922 = vpop.f32.mrf.mxu0
  %v923 = vadd.f32 %v434, %v922
  %v924 = vpop.f32.mrf.mxu0
  %925 = vmatprep.mubr.f32.mxu0 0.0
  %926 = vmatmul.mubr.f32.gmra.mxu0 %v671
  %v927 = vpop.f32.mrf.mxu0
  %v928 = vadd.f32 %v439, %v927
  %v929 = vpop.f32.mrf.mxu0
  %930 = vmatprep.mubr.f32.mxu0 0.0
  %931 = vmatmul.mubr.f32.gmra.mxu0 %v674
  %v932 = vpop.f32.mrf.mxu0
  %v933 = vadd.f32 %v444, %v932
  %v934 = vpop.f32.mrf.mxu0
  %935 = vmatprep.mubr.f32.mxu0 0.0
  %936 = vmatmul.mubr.f32.gmra.mxu0 %v677
  %v937 = vpop.f32.mrf.mxu0
  %v938 = vadd.f32 %v449, %v937
  %v939 = vpop.f32.mrf.mxu0
  %940 = vmatprep.mubr.f32.mxu0 0.0
  %941 = vmatmul.mubr.f32.gmra.mxu0 %v680
  %v942 = vpop.f32.mrf.mxu0
  %v943 = vadd.f32 %v454, %v942
  %v944 = vpop.f32.mrf.mxu0
  %945 = vmatprep.mubr.f32.mxu0 0.0
  %946 = vmatmul.mubr.f32.gmra.mxu0 %v683
  %v947 = vpop.f32.mrf.mxu0
  %v948 = vadd.f32 %v459, %v947
  %v949 = vpop.f32.mrf.mxu0
  %950 = vmatprep.mubr.f32.mxu0 0.0
  %951 = vmatmul.mubr.f32.gmra.mxu0 %v686
  %v952 = vpop.f32.mrf.mxu0
  %v953 = vadd.f32 %v464, %v952
  %v954 = vpop.f32.mrf.mxu0
  %955 = vmatprep.mubr.f32.mxu0 0.0
  %956 = vmatmul.mubr.f32.gmra.mxu0 %v689
  %v957 = vpop.f32.mrf.mxu0
  %v958 = vadd.f32 %v469, %v957
  %v959 = vpop.f32.mrf.mxu0
  %960 = vmatprep.mubr.f32.mxu0 0.0
  %961 = vmatmul.mubr.f32.gmra.mxu0 %v692
  %v962 = vpop.f32.mrf.mxu0
  %v963 = vadd.f32 %v474, %v962
  %v964 = vpop.f32.mrf.mxu0
  %965 = vmatprep.mubr.f32.mxu0 0.0
  %966 = vmatmul.mubr.f32.gmra.mxu0 %v695
  %v967 = vpop.f32.mrf.mxu0
  %v968 = vadd.f32 %v479, %v967
  %v969 = vpop.f32.mrf.mxu0
  %970 = vmatprep.mubr.f32.mxu0 0.0
  %971 = vmatmul.mubr.f32.gmra.mxu0 %v698
  %v972 = vpop.f32.mrf.mxu0
  %v973 = vadd.f32 %v484, %v972
  %v974 = vpop.f32.mrf.mxu0
  %975 = vmatprep.mubr.f32.mxu0 0.0
  %976 = vmatmul.mubr.f32.gmra.mxu0 %v701
  %v977 = vpop.f32.mrf.mxu0
  %v978 = vadd.f32 %v489, %v977
  %v979 = vpop.f32.mrf.mxu0
  %980 = vmatprep.mubr.f32.mxu0 0.0
  %981 = vmatmul.mubr.f32.gmra.mxu0 %v704
  %v982 = vpop.f32.mrf.mxu0
  %v983 = vadd.f32 %v494, %v982
  %v984 = vpop.f32.mrf.mxu0
  %985 = vmatprep.mubr.f32.mxu0 0.0
  %986 = vmatmul.mubr.f32.gmra.mxu0 %v707
  %v987 = vpop.f32.mrf.mxu0
  %v988 = vadd.f32 %v499, %v987
  %v989 = vpop.f32.mrf.mxu0
  %990 = vmatprep.mubr.f32.mxu0 0.0
  %991 = vmatmul.mubr.f32.gmra.mxu0 %v710
  %v992 = vpop.f32.mrf.mxu0
  %v993 = vadd.f32 %v504, %v992
  %v994 = vpop.f32.mrf.mxu0
  %995 = vmatprep.mubr.f32.mxu0 0.0
  %996 = vmatmul.mubr.f32.gmra.mxu0 %v713
  %v997 = vpop.f32.mrf.mxu0
  %v998 = vadd.f32 %v509, %v997
  %v999 = vpop.f32.mrf.mxu0
  %1000 = vmatprep.mubr.f32.mxu0 0.0
  %1001 = vmatmul.mubr.f32.gmra.mxu0 %v716
  %v1002 = vpop.f32.mrf.mxu0
  %v1003 = vadd.f32 %v514, %v1002
  %v1004 = vpop.f32.mrf.mxu0
  %1005 = vmatprep.mubr.f32.mxu0 0.0
  %1006 = vmatmul.mubr.f32.gmra.mxu0 %v719
  %v1007 = vpop.f32.mrf.mxu0
  %v1008 = vadd.f32 %v519, %v1007
  %v1009 = vpop.f32.mrf.mxu0
  %1010 = vmatprep.mubr.f32.mxu0 0.0
  %1011 = vmatmul.mubr.f32.gmra.mxu0 %v722
  %v1012 = vpop.f32.mrf.mxu0
  %v1013 = vadd.f32 %v524, %v1012
  %v1014 = vpop.f32.mrf.mxu0
  %1015 = vmatprep.mubr.f32.mxu0 0.0
  %1016 = vmatmul.mubr.f32.gmra.mxu0 %v725
  %v1017 = vpop.f32.mrf.mxu0
  %v1018 = vadd.f32 %v529, %v1017
  %v1019 = vpop.f32.mrf.mxu0
  %1020 = vmatprep.mubr.f32.mxu0 0.0
  %1021 = vmatmul.mubr.f32.gmra.mxu0 %v728
  %v1022 = vpop.f32.mrf.mxu0
  %v1023 = vadd.f32 %v534, %v1022
  %v1024 = vpop.f32.mrf.mxu0
  %1025 = vmatprep.mubr.f32.mxu0 0.0
  %1026 = vmatmul.mubr.f32.gmra.mxu0 %v731
  %v1027 = vpop.f32.mrf.mxu0
  %v1028 = vadd.f32 %v539, %v1027
  %v1029 = vpop.f32.mrf.mxu0
  %1030 = vmatprep.mubr.f32.mxu0 0.0
  %1031 = vmatmul.mubr.f32.gmra.mxu0 %v734
  %v1032 = vpop.f32.mrf.mxu0
  %v1033 = vadd.f32 %v544, %v1032
  %v1034 = vpop.f32.mrf.mxu0
  %1035 = vmatprep.mubr.f32.mxu0 0.0
  %1036 = vmatmul.mubr.f32.gmra.mxu0 %v737
  %v1037 = vpop.f32.mrf.mxu0
  %v1038 = vadd.f32 %v549, %v1037
  %v1039 = vpop.f32.mrf.mxu0
  %1040 = vmatprep.mubr.f32.mxu0 0.0
  %1041 = vmatmul.mubr.f32.gmra.mxu0 %v740
  %v1042 = vpop.f32.mrf.mxu0
  %v1043 = vadd.f32 %v554, %v1042
  %v1044 = vpop.f32.mrf.mxu0
  %1045 = vmatprep.mubr.f32.mxu0 0.0
  %1046 = vmatmul.mubr.f32.gmra.mxu0 %v743
  %v1047 = vpop.f32.mrf.mxu0
  %v1048 = vadd.f32 %v559, %v1047
  %v1049 = vpop.f32.mrf.mxu0
  %1050 = vmatprep.mubr.f32.mxu0 0.0
  %1051 = vmatmul.mubr.f32.gmra.mxu0 %v746
  %v1052 = vpop.f32.mrf.mxu0
  %v1053 = vadd.f32 %v564, %v1052
  %v1054 = vpop.f32.mrf.mxu0
  %1055 = vmatprep.mubr.f32.mxu0 0.0
  %1056 = vmatmul.mubr.f32.gmra.mxu0 %v749
  %v1057 = vpop.f32.mrf.mxu0
  %v1058 = vadd.f32 %v569, %v1057
  %v1059 = vpop.f32.mrf.mxu0
  %1060 = vmatprep.mubr.f32.mxu0 0.0
  %1061 = vmatmul.mubr.f32.gmra.mxu0 %v752
  %v1062 = vpop.f32.mrf.mxu0
  %v1063 = vadd.f32 %v574, %v1062
  %v1064 = vpop.f32.mrf.mxu0
  %1065 = vmatprep.mubr.f32.mxu0 0.0
  %1066 = vmatmul.mubr.f32.gmra.mxu0 %v755
  %v1067 = vpop.f32.mrf.mxu0
  %v1068 = vadd.f32 %v579, %v1067
  %v1069 = vpop.f32.mrf.mxu0
  %1070 = vmatprep.mubr.f32.mxu0 0.0
  %1071 = vmatmul.mubr.f32.gmra.mxu0 %v758
  %v1072 = vpop.f32.mrf.mxu0
  %v1073 = vadd.f32 %v584, %v1072
  %v1074 = vpop.f32.mrf.mxu0
  %1075 = vmatprep.mubr.f32.mxu0 0.0
  %1076 = vmatmul.mubr.f32.gmra.mxu0 %v761
  %v1077 = vpop.f32.mrf.mxu0
  %v1078 = vadd.f32 %v589, %v1077
  %v1079 = vpop.f32.mrf.mxu0
  %1080 = vmatprep.mubr.f32.mxu0 0.0
  %1081 = vmatmul.mubr.f32.gmra.mxu0 %v764
  %v1082 = vpop.f32.mrf.mxu0
  %v1083 = vadd.f32 %v594, %v1082
  %v1084 = vpop.f32.mrf.mxu0
  %1085 = vmatprep.mubr.f32.mxu0 0.0
  %1086 = vmatmul.mubr.f32.gmra.mxu0 %v767
  %v1087 = vpop.f32.mrf.mxu0
  %v1088 = vadd.f32 %v599, %v1087
  %v1089 = vpop.f32.mrf.mxu0
  %1090 = vmatprep.mubr.f32.mxu0 0.0
  %1091 = vmatmul.mubr.f32.gmra.mxu0 %v770
  %v1092 = vpop.f32.mrf.mxu0
  %v1093 = vadd.f32 %v604, %v1092
  %v1094 = vpop.f32.mrf.mxu0
  %1095 = vmatprep.mubr.f32.mxu0 0.0
  %1096 = vmatmul.mubr.f32.gmra.mxu0 %v773
  %v1097 = vpop.f32.mrf.mxu0
  %v1098 = vadd.f32 %v609, %v1097
  %v1099 = vpop.f32.mrf.mxu0
  %1100 = vmatprep.mubr.f32.mxu0 0.0
  %1101 = vmatmul.mubr.f32.gmra.mxu0 %v776
  %v1102 = vpop.f32.mrf.mxu0
  %v1103 = vadd.f32 %v614, %v1102
  %v1104 = vpop.f32.mrf.mxu0
  %1105 = vmatprep.mubr.f32.mxu0 0.0
  %1106 = vmatmul.mubr.f32.gmra.mxu0 %v779
  %v1107 = vpop.f32.mrf.mxu0
  %v1108 = vadd.f32 %v619, %v1107
  %v1109 = vpop.f32.mrf.mxu0
  %1110 = vdwg.mxu0
  %v1111 = vld [vmem:[%s0 + $0x2] sm:$0xff]
  %v1112 = vld [vmem:[%s0 + $0xa] sm:$0xff]
  %v1113 = vld [vmem:[%s0 + $0x12] sm:$0xff]
  %v1114 = vld [vmem:[%s0 + $0x1a] sm:$0xff]
  %v1115 = vld [vmem:[%s0 + $0x22] sm:$0xff]
  %v1116 = vld [vmem:[%s0 + $0x2a] sm:$0xff]
  %v1117 = vld [vmem:[%s0 + $0x32] sm:$0xff]
  %v1118 = vld [vmem:[%s0 + $0x3a] sm:$0xff]
  %v1119 = vld [vmem:[%s0 + $0x42] sm:$0xff]
  %v1120 = vld [vmem:[%s0 + $0x4a] sm:$0xff]
  %v1121 = vld [vmem:[%s0 + $0x52] sm:$0xff]
  %v1122 = vld [vmem:[%s0 + $0x5a] sm:$0xff]
  %v1123 = vld [vmem:[%s0 + $0x62] sm:$0xff]
  %v1124 = vld [vmem:[%s0 + $0x6a] sm:$0xff]
  %v1125 = vld [vmem:[%s0 + $0x72] sm:$0xff]
  %v1126 = vld [vmem:[%s0 + $0x7a] sm:$0xff]
  %v1127 = vld [vmem:[%s0 + $0x82] sm:$0xff]
  %v1128 = vld [vmem:[%s0 + $0x8a] sm:$0xff]
  %v1129 = vld [vmem:[%s0 + $0x92] sm:$0xff]
  %v1130 = vld [vmem:[%s0 + $0x9a] sm:$0xff]
  %v1131 = vld [vmem:[%s0 + $0xa2] sm:$0xff]
  %v1132 = vld [vmem:[%s0 + $0xaa] sm:$0xff]
  %v1133 = vld [vmem:[%s0 + $0xb2] sm:$0xff]
  %v1134 = vld [vmem:[%s0 + $0xba] sm:$0xff]
  %v1135 = vld [vmem:[%s0 + $0xc2] sm:$0xff]
  %v1136 = vld [vmem:[%s0 + $0xca] sm:$0xff]
  %v1137 = vld [vmem:[%s0 + $0xd2] sm:$0xff]
  %v1138 = vld [vmem:[%s0 + $0xda] sm:$0xff]
  %v1139 = vld [vmem:[%s0 + $0xe2] sm:$0xff]
  %v1140 = vld [vmem:[%s0 + $0xea] sm:$0xff]
  %v1141 = vld [vmem:[%s0 + $0xf2] sm:$0xff]
  %v1142 = vld [vmem:[%s0 + $0xfa] sm:$0xff]
  %v1143 = vld [vmem:[%s0 + $0x102] sm:$0xff]
  %v1144 = vld [vmem:[%s0 + $0x10a] sm:$0xff]
  %v1145 = vld [vmem:[%s0 + $0x112] sm:$0xff]
  %v1146 = vld [vmem:[%s0 + $0x11a] sm:$0xff]
  %v1147 = vld [vmem:[%s0 + $0x122] sm:$0xff]
  %v1148 = vld [vmem:[%s0 + $0x12a] sm:$0xff]
  %v1149 = vld [vmem:[%s0 + $0x132] sm:$0xff]
  %v1150 = vld [vmem:[%s0 + $0x13a] sm:$0xff]
  %v1151 = vld [vmem:[%s0 + $0x142] sm:$0xff]
  %v1152 = vld [vmem:[%s0 + $0x14a] sm:$0xff]
  %v1153 = vld [vmem:[%s0 + $0x152] sm:$0xff]
  %v1154 = vld [vmem:[%s0 + $0x15a] sm:$0xff]
  %v1155 = vld [vmem:[%s0 + $0x162] sm:$0xff]
  %v1156 = vld [vmem:[%s0 + $0x16a] sm:$0xff]
  %v1157 = vld [vmem:[%s0 + $0x172] sm:$0xff]
  %v1158 = vld [vmem:[%s0 + $0x17a] sm:$0xff]
  %v1159 = vld [vmem:[%s0 + $0x182] sm:$0xff]
  %v1160 = vld [vmem:[%s0 + $0x18a] sm:$0xff]
  %v1161 = vld [vmem:[%s0 + $0x192] sm:$0xff]
  %v1162 = vld [vmem:[%s0 + $0x19a] sm:$0xff]
  %v1163 = vld [vmem:[%s0 + $0x1a2] sm:$0xff]
  %s1164 = scalar_lea.vmem %s2, 16
  %v1165 = vld [vmem:[%s1164] sm:$0xff]
  %v1167 = vsel %vm132, %v1111, 0
  %v1170 = vsel %vm132, %v1112, 0
  %v1173 = vsel %vm132, %v1113, 0
  %v1176 = vsel %vm132, %v1114, 0
  %v1179 = vsel %vm132, %v1115, 0
  %v1182 = vsel %vm132, %v1116, 0
  %v1185 = vsel %vm132, %v1117, 0
  %v1188 = vsel %vm132, %v1118, 0
  %v1191 = vsel %vm132, %v1119, 0
  %v1194 = vsel %vm132, %v1120, 0
  %v1197 = vsel %vm132, %v1121, 0
  %v1200 = vsel %vm132, %v1122, 0
  %v1203 = vsel %vm132, %v1123, 0
  %v1206 = vsel %vm132, %v1124, 0
  %v1209 = vsel %vm132, %v1125, 0
  %v1212 = vsel %vm132, %v1126, 0
  %v1215 = vsel %vm132, %v1127, 0
  %v1218 = vsel %vm132, %v1128, 0
  %v1221 = vsel %vm132, %v1129, 0
  %v1224 = vsel %vm132, %v1130, 0
  %v1227 = vsel %vm132, %v1131, 0
  %v1230 = vsel %vm132, %v1132, 0
  %v1233 = vsel %vm132, %v1133, 0
  %v1236 = vsel %vm132, %v1134, 0
  %v1239 = vsel %vm132, %v1135, 0
  %v1242 = vsel %vm132, %v1136, 0
  %v1245 = vsel %vm132, %v1137, 0
  %v1248 = vsel %vm132, %v1138, 0
  %v1251 = vsel %vm132, %v1139, 0
  %v1254 = vsel %vm132, %v1140, 0
  %v1257 = vsel %vm132, %v1141, 0
  %v1260 = vsel %vm132, %v1142, 0
  %v1263 = vsel %vm132, %v1143, 0
  %v1266 = vsel %vm132, %v1144, 0
  %v1269 = vsel %vm132, %v1145, 0
  %v1272 = vsel %vm132, %v1146, 0
  %v1275 = vsel %vm132, %v1147, 0
  %v1278 = vsel %vm132, %v1148, 0
  %v1281 = vsel %vm132, %v1149, 0
  %v1284 = vsel %vm132, %v1150, 0
  %v1287 = vsel %vm132, %v1151, 0
  %v1290 = vsel %vm132, %v1152, 0
  %v1293 = vsel %vm132, %v1153, 0
  %v1296 = vsel %vm132, %v1154, 0
  %v1299 = vsel %vm132, %v1155, 0
  %v1302 = vsel %vm132, %v1156, 0
  %v1305 = vsel %vm132, %v1157, 0
  %v1308 = vsel %vm132, %v1158, 0
  %v1311 = vsel %vm132, %v1159, 0
  %v1314 = vsel %vm132, %v1160, 0
  %v1317 = vsel %vm132, %v1161, 0
  %v1320 = vsel %vm132, %v1162, 0
  %v1323 = vsel %vm132, %v1163, 0
  %1325 = vmatprep.subr.mxu0 0.0
  %1326 = vmatpush1.msra.mxu0 0.0
  %1327 = vmatprep.subr.mxu0 0.0
  %1328 = vmatpush1.msra.mxu0 0.0
  %1329 = vmatprep.subr.mxu0 0.0
  %1330 = vmatpush1.msra.mxu0 0.0
  %1331 = vmatprep.subr.mxu0 0.0
  %1332 = vmatpush1.msra.mxu0 0.0
  %1333 = vmatprep.subr.mxu0 0.0
  %1334 = vmatpush1.msra.mxu0 0.0
  %1335 = vmatprep.subr.mxu0 0.0
  %1336 = vmatpush1.msra.mxu0 0.0
  %1337 = vmatprep.subr.mxu0 0.0
  %1338 = vmatpush1.msra.mxu0 0.0
  %1339 = vmatprep.subr.mxu0 0.0
  %1340 = vmatpush1.msra.mxu0 0.0
  %1341 = vmatprep.subr.mxu0 0.0
  %1342 = vmatpush1.msra.mxu0 0.0
  %1343 = vmatprep.subr.mxu0 0.0
  %1344 = vmatpush1.msra.mxu0 0.0
  %1345 = vmatprep.subr.mxu0 0.0
  %1346 = vmatpush1.msra.mxu0 0.0
  %1347 = vmatprep.subr.mxu0 0.0
  %1348 = vmatpush1.msra.mxu0 0.0
  %1349 = vmatprep.subr.mxu0 0.0
  %1350 = vmatpush1.msra.mxu0 0.0
  %1351 = vmatprep.subr.mxu0 0.0
  %1352 = vmatpush1.msra.mxu0 0.0
  %1353 = vmatprep.subr.mxu0 0.0
  %1354 = vmatpush1.msra.mxu0 0.0
  %1355 = vmatprep.subr.mxu0 0.0
  %1356 = vmatpush1.msra.mxu0 %v1165
  %1357 = vmatprep.subr.mxu0 0.0
  %1358 = vmatpush2.msra.mxu0 0.0
  %1359 = vmatprep.subr.mxu0 0.0
  %1360 = vmatpush2.msra.mxu0 0.0
  %1361 = vmatprep.subr.mxu0 0.0
  %1362 = vmatpush2.msra.mxu0 0.0
  %1363 = vmatprep.subr.mxu0 0.0
  %1364 = vmatpush2.msra.mxu0 0.0
  %1365 = vmatprep.subr.mxu0 0.0
  %1366 = vmatpush2.msra.mxu0 0.0
  %1367 = vmatprep.subr.mxu0 0.0
  %1368 = vmatpush2.msra.mxu0 0.0
  %1369 = vmatprep.subr.mxu0 0.0
  %1370 = vmatpush2.msra.mxu0 0.0
  %1371 = vmatprep.subr.mxu0 0.0
  %1372 = vmatpush2.msra.mxu0 0.0
  %1373 = vmatprep.subr.mxu0 0.0
  %1374 = vmatpush2.msra.mxu0 0.0
  %1375 = vmatprep.subr.mxu0 0.0
  %1376 = vmatpush2.msra.mxu0 0.0
  %1377 = vmatprep.subr.mxu0 0.0
  %1378 = vmatpush2.msra.mxu0 0.0
  %1379 = vmatprep.subr.mxu0 0.0
  %1380 = vmatpush2.msra.mxu0 0.0
  %1381 = vmatprep.subr.mxu0 0.0
  %1382 = vmatpush2.msra.mxu0 0.0
  %1383 = vmatprep.subr.mxu0 0.0
  %1384 = vmatpush2.msra.mxu0 0.0
  %1385 = vmatprep.subr.mxu0 0.0
  %1386 = vmatpush2.msra.mxu0 0.0
  %1387 = vmatprep.subr.mxu0 0.0
  %1388 = vmatpush2.msra.mxu0 0.0
  %1389 = vmatprep.mubr.f32.mxu0 0.0
  %1390 = vmatmul.mubr.f32.gmra.mxu0 %v1167
  %v1391 = vpop.f32.mrf.mxu0
  %v1392 = vadd.f32 0.0, %v1391
  %v1393 = vpop.f32.mrf.mxu0
  %1394 = vmatprep.mubr.f32.mxu0 0.0
  %1395 = vmatmul.mubr.f32.gmra.mxu0 %v1170
  %v1396 = vpop.f32.mrf.mxu0
  %v1397 = vadd.f32 0.0, %v1396
  %v1398 = vpop.f32.mrf.mxu0
  %1399 = vmatprep.mubr.f32.mxu0 0.0
  %1400 = vmatmul.mubr.f32.gmra.mxu0 %v1173
  %v1401 = vpop.f32.mrf.mxu0
  %v1402 = vadd.f32 0.0, %v1401
  %v1403 = vpop.f32.mrf.mxu0
  %1404 = vmatprep.mubr.f32.mxu0 0.0
  %1405 = vmatmul.mubr.f32.gmra.mxu0 %v1176
  %v1406 = vpop.f32.mrf.mxu0
  %v1407 = vadd.f32 0.0, %v1406
  %v1408 = vpop.f32.mrf.mxu0
  %1409 = vmatprep.mubr.f32.mxu0 0.0
  %1410 = vmatmul.mubr.f32.gmra.mxu0 %v1179
  %v1411 = vpop.f32.mrf.mxu0
  %v1412 = vadd.f32 0.0, %v1411
  %v1413 = vpop.f32.mrf.mxu0
  %1414 = vmatprep.mubr.f32.mxu0 0.0
  %1415 = vmatmul.mubr.f32.gmra.mxu0 %v1182
  %v1416 = vpop.f32.mrf.mxu0
  %v1417 = vadd.f32 0.0, %v1416
  %v1418 = vpop.f32.mrf.mxu0
  %1419 = vmatprep.mubr.f32.mxu0 0.0
  %1420 = vmatmul.mubr.f32.gmra.mxu0 %v1185
  %v1421 = vpop.f32.mrf.mxu0
  %v1422 = vadd.f32 0.0, %v1421
  %v1423 = vpop.f32.mrf.mxu0
  %1424 = vmatprep.mubr.f32.mxu0 0.0
  %1425 = vmatmul.mubr.f32.gmra.mxu0 %v1188
  %v1426 = vpop.f32.mrf.mxu0
  %v1427 = vadd.f32 0.0, %v1426
  %v1428 = vpop.f32.mrf.mxu0
  %1429 = vmatprep.mubr.f32.mxu0 0.0
  %1430 = vmatmul.mubr.f32.gmra.mxu0 %v1191
  %v1431 = vpop.f32.mrf.mxu0
  %v1432 = vadd.f32 0.0, %v1431
  %v1433 = vpop.f32.mrf.mxu0
  %1434 = vmatprep.mubr.f32.mxu0 0.0
  %1435 = vmatmul.mubr.f32.gmra.mxu0 %v1194
  %v1436 = vpop.f32.mrf.mxu0
  %v1437 = vadd.f32 0.0, %v1436
  %v1438 = vpop.f32.mrf.mxu0
  %1439 = vmatprep.mubr.f32.mxu0 0.0
  %1440 = vmatmul.mubr.f32.gmra.mxu0 %v1197
  %v1441 = vpop.f32.mrf.mxu0
  %v1442 = vadd.f32 0.0, %v1441
  %v1443 = vpop.f32.mrf.mxu0
  %1444 = vmatprep.mubr.f32.mxu0 0.0
  %1445 = vmatmul.mubr.f32.gmra.mxu0 %v1200
  %v1446 = vpop.f32.mrf.mxu0
  %v1447 = vadd.f32 0.0, %v1446
  %v1448 = vpop.f32.mrf.mxu0
  %1449 = vmatprep.mubr.f32.mxu0 0.0
  %1450 = vmatmul.mubr.f32.gmra.mxu0 %v1203
  %v1451 = vpop.f32.mrf.mxu0
  %v1452 = vadd.f32 0.0, %v1451
  %v1453 = vpop.f32.mrf.mxu0
  %1454 = vmatprep.mubr.f32.mxu0 0.0
  %1455 = vmatmul.mubr.f32.gmra.mxu0 %v1206
  %v1456 = vpop.f32.mrf.mxu0
  %v1457 = vadd.f32 0.0, %v1456
  %v1458 = vpop.f32.mrf.mxu0
  %1459 = vmatprep.mubr.f32.mxu0 0.0
  %1460 = vmatmul.mubr.f32.gmra.mxu0 %v1209
  %v1461 = vpop.f32.mrf.mxu0
  %v1462 = vadd.f32 0.0, %v1461
  %v1463 = vpop.f32.mrf.mxu0
  %1464 = vmatprep.mubr.f32.mxu0 0.0
  %1465 = vmatmul.mubr.f32.gmra.mxu0 %v1212
  %v1466 = vpop.f32.mrf.mxu0
  %v1467 = vadd.f32 0.0, %v1466
  %v1468 = vpop.f32.mrf.mxu0
  %1469 = vmatprep.mubr.f32.mxu0 0.0
  %1470 = vmatmul.mubr.f32.gmra.mxu0 %v1215
  %v1471 = vpop.f32.mrf.mxu0
  %v1472 = vadd.f32 0.0, %v1471
  %v1473 = vpop.f32.mrf.mxu0
  %1474 = vmatprep.mubr.f32.mxu0 0.0
  %1475 = vmatmul.mubr.f32.gmra.mxu0 %v1218
  %v1476 = vpop.f32.mrf.mxu0
  %v1477 = vadd.f32 0.0, %v1476
  %v1478 = vpop.f32.mrf.mxu0
  %1479 = vmatprep.mubr.f32.mxu0 0.0
  %1480 = vmatmul.mubr.f32.gmra.mxu0 %v1221
  %v1481 = vpop.f32.mrf.mxu0
  %v1482 = vadd.f32 0.0, %v1481
  %v1483 = vpop.f32.mrf.mxu0
  %1484 = vmatprep.mubr.f32.mxu0 0.0
  %1485 = vmatmul.mubr.f32.gmra.mxu0 %v1224
  %v1486 = vpop.f32.mrf.mxu0
  %v1487 = vadd.f32 0.0, %v1486
  %v1488 = vpop.f32.mrf.mxu0
  %1489 = vmatprep.mubr.f32.mxu0 0.0
  %1490 = vmatmul.mubr.f32.gmra.mxu0 %v1227
  %v1491 = vpop.f32.mrf.mxu0
  %v1492 = vadd.f32 0.0, %v1491
  %v1493 = vpop.f32.mrf.mxu0
  %1494 = vmatprep.mubr.f32.mxu0 0.0
  %1495 = vmatmul.mubr.f32.gmra.mxu0 %v1230
  %v1496 = vpop.f32.mrf.mxu0
  %v1497 = vadd.f32 0.0, %v1496
  %v1498 = vpop.f32.mrf.mxu0
  %1499 = vmatprep.mubr.f32.mxu0 0.0
  %1500 = vmatmul.mubr.f32.gmra.mxu0 %v1233
  %v1501 = vpop.f32.mrf.mxu0
  %v1502 = vadd.f32 0.0, %v1501
  %v1503 = vpop.f32.mrf.mxu0
  %1504 = vmatprep.mubr.f32.mxu0 0.0
  %1505 = vmatmul.mubr.f32.gmra.mxu0 %v1236
  %v1506 = vpop.f32.mrf.mxu0
  %v1507 = vadd.f32 0.0, %v1506
  %v1508 = vpop.f32.mrf.mxu0
  %1509 = vmatprep.mubr.f32.mxu0 0.0
  %1510 = vmatmul.mubr.f32.gmra.mxu0 %v1239
  %v1511 = vpop.f32.mrf.mxu0
  %v1512 = vadd.f32 0.0, %v1511
  %v1513 = vpop.f32.mrf.mxu0
  %1514 = vmatprep.mubr.f32.mxu0 0.0
  %1515 = vmatmul.mubr.f32.gmra.mxu0 %v1242
  %v1516 = vpop.f32.mrf.mxu0
  %v1517 = vadd.f32 0.0, %v1516
  %v1518 = vpop.f32.mrf.mxu0
  %1519 = vmatprep.mubr.f32.mxu0 0.0
  %1520 = vmatmul.mubr.f32.gmra.mxu0 %v1245
  %v1521 = vpop.f32.mrf.mxu0
  %v1522 = vadd.f32 0.0, %v1521
  %v1523 = vpop.f32.mrf.mxu0
  %1524 = vmatprep.mubr.f32.mxu0 0.0
  %1525 = vmatmul.mubr.f32.gmra.mxu0 %v1248
  %v1526 = vpop.f32.mrf.mxu0
  %v1527 = vadd.f32 0.0, %v1526
  %v1528 = vpop.f32.mrf.mxu0
  %1529 = vmatprep.mubr.f32.mxu0 0.0
  %1530 = vmatmul.mubr.f32.gmra.mxu0 %v1251
  %v1531 = vpop.f32.mrf.mxu0
  %v1532 = vadd.f32 0.0, %v1531
  %v1533 = vpop.f32.mrf.mxu0
  %1534 = vmatprep.mubr.f32.mxu0 0.0
  %1535 = vmatmul.mubr.f32.gmra.mxu0 %v1254
  %v1536 = vpop.f32.mrf.mxu0
  %v1537 = vadd.f32 0.0, %v1536
  %v1538 = vpop.f32.mrf.mxu0
  %1539 = vmatprep.mubr.f32.mxu0 0.0
  %1540 = vmatmul.mubr.f32.gmra.mxu0 %v1257
  %v1541 = vpop.f32.mrf.mxu0
  %v1542 = vadd.f32 0.0, %v1541
  %v1543 = vpop.f32.mrf.mxu0
  %1544 = vmatprep.mubr.f32.mxu0 0.0
  %1545 = vmatmul.mubr.f32.gmra.mxu0 %v1260
  %v1546 = vpop.f32.mrf.mxu0
  %v1547 = vadd.f32 0.0, %v1546
  %v1548 = vpop.f32.mrf.mxu0
  %1549 = vmatprep.mubr.f32.mxu0 0.0
  %1550 = vmatmul.mubr.f32.gmra.mxu0 %v1263
  %v1551 = vpop.f32.mrf.mxu0
  %v1552 = vadd.f32 0.0, %v1551
  %v1553 = vpop.f32.mrf.mxu0
  %1554 = vmatprep.mubr.f32.mxu0 0.0
  %1555 = vmatmul.mubr.f32.gmra.mxu0 %v1266
  %v1556 = vpop.f32.mrf.mxu0
  %v1557 = vadd.f32 0.0, %v1556
  %v1558 = vpop.f32.mrf.mxu0
  %1559 = vmatprep.mubr.f32.mxu0 0.0
  %1560 = vmatmul.mubr.f32.gmra.mxu0 %v1269
  %v1561 = vpop.f32.mrf.mxu0
  %v1562 = vadd.f32 0.0, %v1561
  %v1563 = vpop.f32.mrf.mxu0
  %1564 = vmatprep.mubr.f32.mxu0 0.0
  %1565 = vmatmul.mubr.f32.gmra.mxu0 %v1272
  %v1566 = vpop.f32.mrf.mxu0
  %v1567 = vadd.f32 0.0, %v1566
  %v1568 = vpop.f32.mrf.mxu0
  %1569 = vmatprep.mubr.f32.mxu0 0.0
  %1570 = vmatmul.mubr.f32.gmra.mxu0 %v1275
  %v1571 = vpop.f32.mrf.mxu0
  %v1572 = vadd.f32 0.0, %v1571
  %v1573 = vpop.f32.mrf.mxu0
  %1574 = vmatprep.mubr.f32.mxu0 0.0
  %1575 = vmatmul.mubr.f32.gmra.mxu0 %v1278
  %v1576 = vpop.f32.mrf.mxu0
  %v1577 = vadd.f32 0.0, %v1576
  %v1578 = vpop.f32.mrf.mxu0
  %1579 = vmatprep.mubr.f32.mxu0 0.0
  %1580 = vmatmul.mubr.f32.gmra.mxu0 %v1281
  %v1581 = vpop.f32.mrf.mxu0
  %v1582 = vadd.f32 0.0, %v1581
  %v1583 = vpop.f32.mrf.mxu0
  %1584 = vmatprep.mubr.f32.mxu0 0.0
  %1585 = vmatmul.mubr.f32.gmra.mxu0 %v1284
  %v1586 = vpop.f32.mrf.mxu0
  %v1587 = vadd.f32 0.0, %v1586
  %v1588 = vpop.f32.mrf.mxu0
  %1589 = vmatprep.mubr.f32.mxu0 0.0
  %1590 = vmatmul.mubr.f32.gmra.mxu0 %v1287
  %v1591 = vpop.f32.mrf.mxu0
  %v1592 = vadd.f32 0.0, %v1591
  %v1593 = vpop.f32.mrf.mxu0
  %1594 = vmatprep.mubr.f32.mxu0 0.0
  %1595 = vmatmul.mubr.f32.gmra.mxu0 %v1290
  %v1596 = vpop.f32.mrf.mxu0
  %v1597 = vadd.f32 0.0, %v1596
  %v1598 = vpop.f32.mrf.mxu0
  %1599 = vmatprep.mubr.f32.mxu0 0.0
  %1600 = vmatmul.mubr.f32.gmra.mxu0 %v1293
  %v1601 = vpop.f32.mrf.mxu0
  %v1602 = vadd.f32 0.0, %v1601
  %v1603 = vpop.f32.mrf.mxu0
  %1604 = vmatprep.mubr.f32.mxu0 0.0
  %1605 = vmatmul.mubr.f32.gmra.mxu0 %v1296
  %v1606 = vpop.f32.mrf.mxu0
  %v1607 = vadd.f32 0.0, %v1606
  %v1608 = vpop.f32.mrf.mxu0
  %1609 = vmatprep.mubr.f32.mxu0 0.0
  %1610 = vmatmul.mubr.f32.gmra.mxu0 %v1299
  %v1611 = vpop.f32.mrf.mxu0
  %v1612 = vadd.f32 0.0, %v1611
  %v1613 = vpop.f32.mrf.mxu0
  %1614 = vmatprep.mubr.f32.mxu0 0.0
  %1615 = vmatmul.mubr.f32.gmra.mxu0 %v1302
  %v1616 = vpop.f32.mrf.mxu0
  %v1617 = vadd.f32 0.0, %v1616
  %v1618 = vpop.f32.mrf.mxu0
  %1619 = vmatprep.mubr.f32.mxu0 0.0
  %1620 = vmatmul.mubr.f32.gmra.mxu0 %v1305
  %v1621 = vpop.f32.mrf.mxu0
  %v1622 = vadd.f32 0.0, %v1621
  %v1623 = vpop.f32.mrf.mxu0
  %1624 = vmatprep.mubr.f32.mxu0 0.0
  %1625 = vmatmul.mubr.f32.gmra.mxu0 %v1308
  %v1626 = vpop.f32.mrf.mxu0
  %v1627 = vadd.f32 0.0, %v1626
  %v1628 = vpop.f32.mrf.mxu0
  %1629 = vmatprep.mubr.f32.mxu0 0.0
  %1630 = vmatmul.mubr.f32.gmra.mxu0 %v1311
  %v1631 = vpop.f32.mrf.mxu0
  %v1632 = vadd.f32 0.0, %v1631
  %v1633 = vpop.f32.mrf.mxu0
  %1634 = vmatprep.mubr.f32.mxu0 0.0
  %1635 = vmatmul.mubr.f32.gmra.mxu0 %v1314
  %v1636 = vpop.f32.mrf.mxu0
  %v1637 = vadd.f32 0.0, %v1636
  %v1638 = vpop.f32.mrf.mxu0
  %1639 = vmatprep.mubr.f32.mxu0 0.0
  %1640 = vmatmul.mubr.f32.gmra.mxu0 %v1317
  %v1641 = vpop.f32.mrf.mxu0
  %v1642 = vadd.f32 0.0, %v1641
  %v1643 = vpop.f32.mrf.mxu0
  %1644 = vmatprep.mubr.f32.mxu0 0.0
  %1645 = vmatmul.mubr.f32.gmra.mxu0 %v1320
  %v1646 = vpop.f32.mrf.mxu0
  %v1647 = vadd.f32 0.0, %v1646
  %v1648 = vpop.f32.mrf.mxu0
  %1649 = vmatprep.mubr.f32.mxu0 0.0
  %1650 = vmatmul.mubr.f32.gmra.mxu0 %v1323
  %v1651 = vpop.f32.mrf.mxu0
  %v1652 = vadd.f32 0.0, %v1651
  %v1653 = vpop.f32.mrf.mxu0
  %1654 = vdwg.mxu0
  %v1655 = vadd.f32 %v848, %v1392
  %v1656 = vadd.f32 %v853, %v1397
  %v1657 = vadd.f32 %v858, %v1402
  %v1658 = vadd.f32 %v863, %v1407
  %v1659 = vadd.f32 %v868, %v1412
  %v1660 = vadd.f32 %v873, %v1417
  %v1661 = vadd.f32 %v878, %v1422
  %v1662 = vadd.f32 %v883, %v1427
  %v1663 = vadd.f32 %v888, %v1432
  %v1664 = vadd.f32 %v893, %v1437
  %v1665 = vadd.f32 %v898, %v1442
  %v1666 = vadd.f32 %v903, %v1447
  %v1667 = vadd.f32 %v908, %v1452
  %v1668 = vadd.f32 %v913, %v1457
  %v1669 = vadd.f32 %v918, %v1462
  %v1670 = vadd.f32 %v923, %v1467
  %v1671 = vadd.f32 %v928, %v1472
  %v1672 = vadd.f32 %v933, %v1477
  %v1673 = vadd.f32 %v938, %v1482
  %v1674 = vadd.f32 %v943, %v1487
  %v1675 = vadd.f32 %v948, %v1492
  %v1676 = vadd.f32 %v953, %v1497
  %v1677 = vadd.f32 %v958, %v1502
  %v1678 = vadd.f32 %v963, %v1507
  %v1679 = vadd.f32 %v968, %v1512
  %v1680 = vadd.f32 %v973, %v1517
  %v1681 = vadd.f32 %v978, %v1522
  %v1682 = vadd.f32 %v983, %v1527
  %v1683 = vadd.f32 %v988, %v1532
  %v1684 = vadd.f32 %v993, %v1537
  %v1685 = vadd.f32 %v998, %v1542
  %v1686 = vadd.f32 %v1003, %v1547
  %v1687 = vadd.f32 %v1008, %v1552
  %v1688 = vadd.f32 %v1013, %v1557
  %v1689 = vadd.f32 %v1018, %v1562
  %v1690 = vadd.f32 %v1023, %v1567
  %v1691 = vadd.f32 %v1028, %v1572
  %v1692 = vadd.f32 %v1033, %v1577
  %v1693 = vadd.f32 %v1038, %v1582
  %v1694 = vadd.f32 %v1043, %v1587
  %v1695 = vadd.f32 %v1048, %v1592
  %v1696 = vadd.f32 %v1053, %v1597
  %v1697 = vadd.f32 %v1058, %v1602
  %v1698 = vadd.f32 %v1063, %v1607
  %v1699 = vadd.f32 %v1068, %v1612
  %v1700 = vadd.f32 %v1073, %v1617
  %v1701 = vadd.f32 %v1078, %v1622
  %v1702 = vadd.f32 %v1083, %v1627
  %v1703 = vadd.f32 %v1088, %v1632
  %v1704 = vadd.f32 %v1093, %v1637
  %v1705 = vadd.f32 %v1098, %v1642
  %v1706 = vadd.f32 %v1103, %v1647
  %v1707 = vadd.f32 %v1108, %v1652
  %v1708 = vld [vmem:[%s0 + $0xe] sm:$0xff]
  %v1709 = vld [vmem:[%s0 + $0x16] sm:$0xff]
  %v1710 = vld [vmem:[%s0 + $0x1e] sm:$0xff]
  %v1711 = vld [vmem:[%s0 + $0x26] sm:$0xff]
  %v1712 = vld [vmem:[%s0 + $0x2e] sm:$0xff]
  %v1713 = vld [vmem:[%s0 + $0x36] sm:$0xff]
  %v1714 = vld [vmem:[%s0 + $0x3e] sm:$0xff]
  %v1715 = vld [vmem:[%s0 + $0x46] sm:$0xff]
  %v1716 = vld [vmem:[%s0 + $0x4e] sm:$0xff]
  %v1717 = vld [vmem:[%s0 + $0x56] sm:$0xff]
  %v1718 = vld [vmem:[%s0 + $0x5e] sm:$0xff]
  %v1719 = vld [vmem:[%s0 + $0x66] sm:$0xff]
  %v1720 = vld [vmem:[%s0 + $0x6e] sm:$0xff]
  %v1721 = vld [vmem:[%s0 + $0x76] sm:$0xff]
  %v1722 = vld [vmem:[%s0 + $0x7e] sm:$0xff]
  %v1723 = vld [vmem:[%s0 + $0x86] sm:$0xff]
  %v1724 = vld [vmem:[%s0 + $0x8e] sm:$0xff]
  %v1725 = vld [vmem:[%s0 + $0x96] sm:$0xff]
  %v1726 = vld [vmem:[%s0 + $0x9e] sm:$0xff]
  %v1727 = vld [vmem:[%s0 + $0xa6] sm:$0xff]
  %v1728 = vld [vmem:[%s0 + $0xae] sm:$0xff]
  %v1729 = vld [vmem:[%s0 + $0xb6] sm:$0xff]
  %v1730 = vld [vmem:[%s0 + $0xbe] sm:$0xff]
  %v1731 = vld [vmem:[%s0 + $0xc6] sm:$0xff]
  %v1732 = vld [vmem:[%s0 + $0xce] sm:$0xff]
  %v1733 = vld [vmem:[%s0 + $0xd6] sm:$0xff]
  %v1734 = vld [vmem:[%s0 + $0xde] sm:$0xff]
  %v1735 = vld [vmem:[%s0 + $0xe6] sm:$0xff]
  %v1736 = vld [vmem:[%s0 + $0xee] sm:$0xff]
  %v1737 = vld [vmem:[%s0 + $0xf6] sm:$0xff]
  %v1738 = vld [vmem:[%s0 + $0xfe] sm:$0xff]
  %v1739 = vld [vmem:[%s0 + $0x106] sm:$0xff]
  %v1740 = vld [vmem:[%s0 + $0x10e] sm:$0xff]
  %v1741 = vld [vmem:[%s0 + $0x116] sm:$0xff]
  %v1742 = vld [vmem:[%s0 + $0x11e] sm:$0xff]
  %v1743 = vld [vmem:[%s0 + $0x126] sm:$0xff]
  %v1744 = vld [vmem:[%s0 + $0x12e] sm:$0xff]
  %v1745 = vld [vmem:[%s0 + $0x136] sm:$0xff]
  %v1746 = vld [vmem:[%s0 + $0x13e] sm:$0xff]
  %v1747 = vld [vmem:[%s0 + $0x146] sm:$0xff]
  %v1748 = vld [vmem:[%s0 + $0x14e] sm:$0xff]
  %v1749 = vld [vmem:[%s0 + $0x156] sm:$0xff]
  %v1750 = vld [vmem:[%s0 + $0x15e] sm:$0xff]
  %v1751 = vld [vmem:[%s0 + $0x166] sm:$0xff]
  %v1752 = vld [vmem:[%s0 + $0x16e] sm:$0xff]
  %v1753 = vld [vmem:[%s0 + $0x176] sm:$0xff]
  %v1754 = vld [vmem:[%s0 + $0x17e] sm:$0xff]
  %v1755 = vld [vmem:[%s0 + $0x186] sm:$0xff]
  %v1756 = vld [vmem:[%s0 + $0x18e] sm:$0xff]
  %v1757 = vld [vmem:[%s0 + $0x196] sm:$0xff]
  %v1758 = vld [vmem:[%s0 + $0x19e] sm:$0xff]
  %v1759 = vld [vmem:[%s0 + $0x1a6] sm:$0xff]
  %v1760 = vld [vmem:[%s0 + $0x1ae] sm:$0xff]
  %s1761 = scalar_lea.vmem %s2, 24
  %v1762 = vld [vmem:[%s1761] sm:$0xff]
  %v1764 = vsel %vm132, %v1708, 0
  %v1767 = vsel %vm132, %v1709, 0
  %v1770 = vsel %vm132, %v1710, 0
  %v1773 = vsel %vm132, %v1711, 0
  %v1776 = vsel %vm132, %v1712, 0
  %v1779 = vsel %vm132, %v1713, 0
  %v1782 = vsel %vm132, %v1714, 0
  %v1785 = vsel %vm132, %v1715, 0
  %v1788 = vsel %vm132, %v1716, 0
  %v1791 = vsel %vm132, %v1717, 0
  %v1794 = vsel %vm132, %v1718, 0
  %v1797 = vsel %vm132, %v1719, 0
  %v1800 = vsel %vm132, %v1720, 0
  %v1803 = vsel %vm132, %v1721, 0
  %v1806 = vsel %vm132, %v1722, 0
  %v1809 = vsel %vm132, %v1723, 0
  %v1812 = vsel %vm132, %v1724, 0
  %v1815 = vsel %vm132, %v1725, 0
  %v1818 = vsel %vm132, %v1726, 0
  %v1821 = vsel %vm132, %v1727, 0
  %v1824 = vsel %vm132, %v1728, 0
  %v1827 = vsel %vm132, %v1729, 0
  %v1830 = vsel %vm132, %v1730, 0
  %v1833 = vsel %vm132, %v1731, 0
  %v1836 = vsel %vm132, %v1732, 0
  %v1839 = vsel %vm132, %v1733, 0
  %v1842 = vsel %vm132, %v1734, 0
  %v1845 = vsel %vm132, %v1735, 0
  %v1848 = vsel %vm132, %v1736, 0
  %v1851 = vsel %vm132, %v1737, 0
  %v1854 = vsel %vm132, %v1738, 0
  %v1857 = vsel %vm132, %v1739, 0
  %v1860 = vsel %vm132, %v1740, 0
  %v1863 = vsel %vm132, %v1741, 0
  %v1866 = vsel %vm132, %v1742, 0
  %v1869 = vsel %vm132, %v1743, 0
  %v1872 = vsel %vm132, %v1744, 0
  %v1875 = vsel %vm132, %v1745, 0
  %v1878 = vsel %vm132, %v1746, 0
  %v1881 = vsel %vm132, %v1747, 0
  %v1884 = vsel %vm132, %v1748, 0
  %v1887 = vsel %vm132, %v1749, 0
  %v1890 = vsel %vm132, %v1750, 0
  %v1893 = vsel %vm132, %v1751, 0
  %v1896 = vsel %vm132, %v1752, 0
  %v1899 = vsel %vm132, %v1753, 0
  %v1902 = vsel %vm132, %v1754, 0
  %v1905 = vsel %vm132, %v1755, 0
  %v1908 = vsel %vm132, %v1756, 0
  %v1911 = vsel %vm132, %v1757, 0
  %v1914 = vsel %vm132, %v1758, 0
  %v1917 = vsel %vm132, %v1759, 0
  %v1920 = vsel %vm132, %v1760, 0
  %1922 = vmatprep.subr.mxu0 0.0
  %1923 = vmatpush1.msra.mxu0 0.0
  %1924 = vmatprep.subr.mxu0 0.0
  %1925 = vmatpush1.msra.mxu0 0.0
  %1926 = vmatprep.subr.mxu0 0.0
  %1927 = vmatpush1.msra.mxu0 0.0
  %1928 = vmatprep.subr.mxu0 0.0
  %1929 = vmatpush1.msra.mxu0 0.0
  %1930 = vmatprep.subr.mxu0 0.0
  %1931 = vmatpush1.msra.mxu0 0.0
  %1932 = vmatprep.subr.mxu0 0.0
  %1933 = vmatpush1.msra.mxu0 0.0
  %1934 = vmatprep.subr.mxu0 0.0
  %1935 = vmatpush1.msra.mxu0 0.0
  %1936 = vmatprep.subr.mxu0 0.0
  %1937 = vmatpush1.msra.mxu0 0.0
  %1938 = vmatprep.subr.mxu0 0.0
  %1939 = vmatpush1.msra.mxu0 0.0
  %1940 = vmatprep.subr.mxu0 0.0
  %1941 = vmatpush1.msra.mxu0 0.0
  %1942 = vmatprep.subr.mxu0 0.0
  %1943 = vmatpush1.msra.mxu0 0.0
  %1944 = vmatprep.subr.mxu0 0.0
  %1945 = vmatpush1.msra.mxu0 0.0
  %1946 = vmatprep.subr.mxu0 0.0
  %1947 = vmatpush1.msra.mxu0 0.0
  %1948 = vmatprep.subr.mxu0 0.0
  %1949 = vmatpush1.msra.mxu0 0.0
  %1950 = vmatprep.subr.mxu0 0.0
  %1951 = vmatpush1.msra.mxu0 0.0
  %1952 = vmatprep.subr.mxu0 0.0
  %1953 = vmatpush1.msra.mxu0 %v1762
  %1954 = vmatprep.subr.mxu0 0.0
  %1955 = vmatpush2.msra.mxu0 0.0
  %1956 = vmatprep.subr.mxu0 0.0
  %1957 = vmatpush2.msra.mxu0 0.0
  %1958 = vmatprep.subr.mxu0 0.0
  %1959 = vmatpush2.msra.mxu0 0.0
  %1960 = vmatprep.subr.mxu0 0.0
  %1961 = vmatpush2.msra.mxu0 0.0
  %1962 = vmatprep.subr.mxu0 0.0
  %1963 = vmatpush2.msra.mxu0 0.0
  %1964 = vmatprep.subr.mxu0 0.0
  %1965 = vmatpush2.msra.mxu0 0.0
  %1966 = vmatprep.subr.mxu0 0.0
  %1967 = vmatpush2.msra.mxu0 0.0
  %1968 = vmatprep.subr.mxu0 0.0
  %1969 = vmatpush2.msra.mxu0 0.0
  %1970 = vmatprep.subr.mxu0 0.0
  %1971 = vmatpush2.msra.mxu0 0.0
  %1972 = vmatprep.subr.mxu0 0.0
  %1973 = vmatpush2.msra.mxu0 0.0
  %1974 = vmatprep.subr.mxu0 0.0
  %1975 = vmatpush2.msra.mxu0 0.0
  %1976 = vmatprep.subr.mxu0 0.0
  %1977 = vmatpush2.msra.mxu0 0.0
  %1978 = vmatprep.subr.mxu0 0.0
  %1979 = vmatpush2.msra.mxu0 0.0
  %1980 = vmatprep.subr.mxu0 0.0
  %1981 = vmatpush2.msra.mxu0 0.0
  %1982 = vmatprep.subr.mxu0 0.0
  %1983 = vmatpush2.msra.mxu0 0.0
  %1984 = vmatprep.subr.mxu0 0.0
  %1985 = vmatpush2.msra.mxu0 0.0
  %1986 = vmatprep.mubr.f32.mxu0 0.0
  %1987 = vmatmul.mubr.f32.gmra.mxu0 %v1764
  %v1988 = vpop.f32.mrf.mxu0
  %v1989 = vadd.f32 0.0, %v1988
  %v1990 = vpop.f32.mrf.mxu0
  %1991 = vmatprep.mubr.f32.mxu0 0.0
  %1992 = vmatmul.mubr.f32.gmra.mxu0 %v1767
  %v1993 = vpop.f32.mrf.mxu0
  %v1994 = vadd.f32 0.0, %v1993
  %v1995 = vpop.f32.mrf.mxu0
  %1996 = vmatprep.mubr.f32.mxu0 0.0
  %1997 = vmatmul.mubr.f32.gmra.mxu0 %v1770
  %v1998 = vpop.f32.mrf.mxu0
  %v1999 = vadd.f32 0.0, %v1998
  %v2000 = vpop.f32.mrf.mxu0
  %2001 = vmatprep.mubr.f32.mxu0 0.0
  %2002 = vmatmul.mubr.f32.gmra.mxu0 %v1773
  %v2003 = vpop.f32.mrf.mxu0
  %v2004 = vadd.f32 0.0, %v2003
  %v2005 = vpop.f32.mrf.mxu0
  %2006 = vmatprep.mubr.f32.mxu0 0.0
  %2007 = vmatmul.mubr.f32.gmra.mxu0 %v1776
  %v2008 = vpop.f32.mrf.mxu0
  %v2009 = vadd.f32 0.0, %v2008
  %v2010 = vpop.f32.mrf.mxu0
  %2011 = vmatprep.mubr.f32.mxu0 0.0
  %2012 = vmatmul.mubr.f32.gmra.mxu0 %v1779
  %v2013 = vpop.f32.mrf.mxu0
  %v2014 = vadd.f32 0.0, %v2013
  %v2015 = vpop.f32.mrf.mxu0
  %2016 = vmatprep.mubr.f32.mxu0 0.0
  %2017 = vmatmul.mubr.f32.gmra.mxu0 %v1782
  %v2018 = vpop.f32.mrf.mxu0
  %v2019 = vadd.f32 0.0, %v2018
  %v2020 = vpop.f32.mrf.mxu0
  %2021 = vmatprep.mubr.f32.mxu0 0.0
  %2022 = vmatmul.mubr.f32.gmra.mxu0 %v1785
  %v2023 = vpop.f32.mrf.mxu0
  %v2024 = vadd.f32 0.0, %v2023
  %v2025 = vpop.f32.mrf.mxu0
  %2026 = vmatprep.mubr.f32.mxu0 0.0
  %2027 = vmatmul.mubr.f32.gmra.mxu0 %v1788
  %v2028 = vpop.f32.mrf.mxu0
  %v2029 = vadd.f32 0.0, %v2028
  %v2030 = vpop.f32.mrf.mxu0
  %2031 = vmatprep.mubr.f32.mxu0 0.0
  %2032 = vmatmul.mubr.f32.gmra.mxu0 %v1791
  %v2033 = vpop.f32.mrf.mxu0
  %v2034 = vadd.f32 0.0, %v2033
  %v2035 = vpop.f32.mrf.mxu0
  %2036 = vmatprep.mubr.f32.mxu0 0.0
  %2037 = vmatmul.mubr.f32.gmra.mxu0 %v1794
  %v2038 = vpop.f32.mrf.mxu0
  %v2039 = vadd.f32 0.0, %v2038
  %v2040 = vpop.f32.mrf.mxu0
  %2041 = vmatprep.mubr.f32.mxu0 0.0
  %2042 = vmatmul.mubr.f32.gmra.mxu0 %v1797
  %v2043 = vpop.f32.mrf.mxu0
  %v2044 = vadd.f32 0.0, %v2043
  %v2045 = vpop.f32.mrf.mxu0
  %2046 = vmatprep.mubr.f32.mxu0 0.0
  %2047 = vmatmul.mubr.f32.gmra.mxu0 %v1800
  %v2048 = vpop.f32.mrf.mxu0
  %v2049 = vadd.f32 0.0, %v2048
  %v2050 = vpop.f32.mrf.mxu0
  %2051 = vmatprep.mubr.f32.mxu0 0.0
  %2052 = vmatmul.mubr.f32.gmra.mxu0 %v1803
  %v2053 = vpop.f32.mrf.mxu0
  %v2054 = vadd.f32 0.0, %v2053
  %v2055 = vpop.f32.mrf.mxu0
  %2056 = vmatprep.mubr.f32.mxu0 0.0
  %2057 = vmatmul.mubr.f32.gmra.mxu0 %v1806
  %v2058 = vpop.f32.mrf.mxu0
  %v2059 = vadd.f32 0.0, %v2058
  %v2060 = vpop.f32.mrf.mxu0
  %2061 = vmatprep.mubr.f32.mxu0 0.0
  %2062 = vmatmul.mubr.f32.gmra.mxu0 %v1809
  %v2063 = vpop.f32.mrf.mxu0
  %v2064 = vadd.f32 0.0, %v2063
  %v2065 = vpop.f32.mrf.mxu0
  %2066 = vmatprep.mubr.f32.mxu0 0.0
  %2067 = vmatmul.mubr.f32.gmra.mxu0 %v1812
  %v2068 = vpop.f32.mrf.mxu0
  %v2069 = vadd.f32 0.0, %v2068
  %v2070 = vpop.f32.mrf.mxu0
  %2071 = vmatprep.mubr.f32.mxu0 0.0
  %2072 = vmatmul.mubr.f32.gmra.mxu0 %v1815
  %v2073 = vpop.f32.mrf.mxu0
  %v2074 = vadd.f32 0.0, %v2073
  %v2075 = vpop.f32.mrf.mxu0
  %2076 = vmatprep.mubr.f32.mxu0 0.0
  %2077 = vmatmul.mubr.f32.gmra.mxu0 %v1818
  %v2078 = vpop.f32.mrf.mxu0
  %v2079 = vadd.f32 0.0, %v2078
  %v2080 = vpop.f32.mrf.mxu0
  %2081 = vmatprep.mubr.f32.mxu0 0.0
  %2082 = vmatmul.mubr.f32.gmra.mxu0 %v1821
  %v2083 = vpop.f32.mrf.mxu0
  %v2084 = vadd.f32 0.0, %v2083
  %v2085 = vpop.f32.mrf.mxu0
  %2086 = vmatprep.mubr.f32.mxu0 0.0
  %2087 = vmatmul.mubr.f32.gmra.mxu0 %v1824
  %v2088 = vpop.f32.mrf.mxu0
  %v2089 = vadd.f32 0.0, %v2088
  %v2090 = vpop.f32.mrf.mxu0
  %2091 = vmatprep.mubr.f32.mxu0 0.0
  %2092 = vmatmul.mubr.f32.gmra.mxu0 %v1827
  %v2093 = vpop.f32.mrf.mxu0
  %v2094 = vadd.f32 0.0, %v2093
  %v2095 = vpop.f32.mrf.mxu0
  %2096 = vmatprep.mubr.f32.mxu0 0.0
  %2097 = vmatmul.mubr.f32.gmra.mxu0 %v1830
  %v2098 = vpop.f32.mrf.mxu0
  %v2099 = vadd.f32 0.0, %v2098
  %v2100 = vpop.f32.mrf.mxu0
  %2101 = vmatprep.mubr.f32.mxu0 0.0
  %2102 = vmatmul.mubr.f32.gmra.mxu0 %v1833
  %v2103 = vpop.f32.mrf.mxu0
  %v2104 = vadd.f32 0.0, %v2103
  %v2105 = vpop.f32.mrf.mxu0
  %2106 = vmatprep.mubr.f32.mxu0 0.0
  %2107 = vmatmul.mubr.f32.gmra.mxu0 %v1836
  %v2108 = vpop.f32.mrf.mxu0
  %v2109 = vadd.f32 0.0, %v2108
  %v2110 = vpop.f32.mrf.mxu0
  %2111 = vmatprep.mubr.f32.mxu0 0.0
  %2112 = vmatmul.mubr.f32.gmra.mxu0 %v1839
  %v2113 = vpop.f32.mrf.mxu0
  %v2114 = vadd.f32 0.0, %v2113
  %v2115 = vpop.f32.mrf.mxu0
  %2116 = vmatprep.mubr.f32.mxu0 0.0
  %2117 = vmatmul.mubr.f32.gmra.mxu0 %v1842
  %v2118 = vpop.f32.mrf.mxu0
  %v2119 = vadd.f32 0.0, %v2118
  %v2120 = vpop.f32.mrf.mxu0
  %2121 = vmatprep.mubr.f32.mxu0 0.0
  %2122 = vmatmul.mubr.f32.gmra.mxu0 %v1845
  %v2123 = vpop.f32.mrf.mxu0
  %v2124 = vadd.f32 0.0, %v2123
  %v2125 = vpop.f32.mrf.mxu0
  %2126 = vmatprep.mubr.f32.mxu0 0.0
  %2127 = vmatmul.mubr.f32.gmra.mxu0 %v1848
  %v2128 = vpop.f32.mrf.mxu0
  %v2129 = vadd.f32 0.0, %v2128
  %v2130 = vpop.f32.mrf.mxu0
  %2131 = vmatprep.mubr.f32.mxu0 0.0
  %2132 = vmatmul.mubr.f32.gmra.mxu0 %v1851
  %v2133 = vpop.f32.mrf.mxu0
  %v2134 = vadd.f32 0.0, %v2133
  %v2135 = vpop.f32.mrf.mxu0
  %2136 = vmatprep.mubr.f32.mxu0 0.0
  %2137 = vmatmul.mubr.f32.gmra.mxu0 %v1854
  %v2138 = vpop.f32.mrf.mxu0
  %v2139 = vadd.f32 0.0, %v2138
  %v2140 = vpop.f32.mrf.mxu0
  %2141 = vmatprep.mubr.f32.mxu0 0.0
  %2142 = vmatmul.mubr.f32.gmra.mxu0 %v1857
  %v2143 = vpop.f32.mrf.mxu0
  %v2144 = vadd.f32 0.0, %v2143
  %v2145 = vpop.f32.mrf.mxu0
  %2146 = vmatprep.mubr.f32.mxu0 0.0
  %2147 = vmatmul.mubr.f32.gmra.mxu0 %v1860
  %v2148 = vpop.f32.mrf.mxu0
  %v2149 = vadd.f32 0.0, %v2148
  %v2150 = vpop.f32.mrf.mxu0
  %2151 = vmatprep.mubr.f32.mxu0 0.0
  %2152 = vmatmul.mubr.f32.gmra.mxu0 %v1863
  %v2153 = vpop.f32.mrf.mxu0
  %v2154 = vadd.f32 0.0, %v2153
  %v2155 = vpop.f32.mrf.mxu0
  %2156 = vmatprep.mubr.f32.mxu0 0.0
  %2157 = vmatmul.mubr.f32.gmra.mxu0 %v1866
  %v2158 = vpop.f32.mrf.mxu0
  %v2159 = vadd.f32 0.0, %v2158
  %v2160 = vpop.f32.mrf.mxu0
  %2161 = vmatprep.mubr.f32.mxu0 0.0
  %2162 = vmatmul.mubr.f32.gmra.mxu0 %v1869
  %v2163 = vpop.f32.mrf.mxu0
  %v2164 = vadd.f32 0.0, %v2163
  %v2165 = vpop.f32.mrf.mxu0
  %2166 = vmatprep.mubr.f32.mxu0 0.0
  %2167 = vmatmul.mubr.f32.gmra.mxu0 %v1872
  %v2168 = vpop.f32.mrf.mxu0
  %v2169 = vadd.f32 0.0, %v2168
  %v2170 = vpop.f32.mrf.mxu0
  %2171 = vmatprep.mubr.f32.mxu0 0.0
  %2172 = vmatmul.mubr.f32.gmra.mxu0 %v1875
  %v2173 = vpop.f32.mrf.mxu0
  %v2174 = vadd.f32 0.0, %v2173
  %v2175 = vpop.f32.mrf.mxu0
  %2176 = vmatprep.mubr.f32.mxu0 0.0
  %2177 = vmatmul.mubr.f32.gmra.mxu0 %v1878
  %v2178 = vpop.f32.mrf.mxu0
  %v2179 = vadd.f32 0.0, %v2178
  %v2180 = vpop.f32.mrf.mxu0
  %2181 = vmatprep.mubr.f32.mxu0 0.0
  %2182 = vmatmul.mubr.f32.gmra.mxu0 %v1881
  %v2183 = vpop.f32.mrf.mxu0
  %v2184 = vadd.f32 0.0, %v2183
  %v2185 = vpop.f32.mrf.mxu0
  %2186 = vmatprep.mubr.f32.mxu0 0.0
  %2187 = vmatmul.mubr.f32.gmra.mxu0 %v1884
  %v2188 = vpop.f32.mrf.mxu0
  %v2189 = vadd.f32 0.0, %v2188
  %v2190 = vpop.f32.mrf.mxu0
  %2191 = vmatprep.mubr.f32.mxu0 0.0
  %2192 = vmatmul.mubr.f32.gmra.mxu0 %v1887
  %v2193 = vpop.f32.mrf.mxu0
  %v2194 = vadd.f32 0.0, %v2193
  %v2195 = vpop.f32.mrf.mxu0
  %2196 = vmatprep.mubr.f32.mxu0 0.0
  %2197 = vmatmul.mubr.f32.gmra.mxu0 %v1890
  %v2198 = vpop.f32.mrf.mxu0
  %v2199 = vadd.f32 0.0, %v2198
  %v2200 = vpop.f32.mrf.mxu0
  %2201 = vmatprep.mubr.f32.mxu0 0.0
  %2202 = vmatmul.mubr.f32.gmra.mxu0 %v1893
  %v2203 = vpop.f32.mrf.mxu0
  %v2204 = vadd.f32 0.0, %v2203
  %v2205 = vpop.f32.mrf.mxu0
  %2206 = vmatprep.mubr.f32.mxu0 0.0
  %2207 = vmatmul.mubr.f32.gmra.mxu0 %v1896
  %v2208 = vpop.f32.mrf.mxu0
  %v2209 = vadd.f32 0.0, %v2208
  %v2210 = vpop.f32.mrf.mxu0
  %2211 = vmatprep.mubr.f32.mxu0 0.0
  %2212 = vmatmul.mubr.f32.gmra.mxu0 %v1899
  %v2213 = vpop.f32.mrf.mxu0
  %v2214 = vadd.f32 0.0, %v2213
  %v2215 = vpop.f32.mrf.mxu0
  %2216 = vmatprep.mubr.f32.mxu0 0.0
  %2217 = vmatmul.mubr.f32.gmra.mxu0 %v1902
  %v2218 = vpop.f32.mrf.mxu0
  %v2219 = vadd.f32 0.0, %v2218
  %v2220 = vpop.f32.mrf.mxu0
  %2221 = vmatprep.mubr.f32.mxu0 0.0
  %2222 = vmatmul.mubr.f32.gmra.mxu0 %v1905
  %v2223 = vpop.f32.mrf.mxu0
  %v2224 = vadd.f32 0.0, %v2223
  %v2225 = vpop.f32.mrf.mxu0
  %2226 = vmatprep.mubr.f32.mxu0 0.0
  %2227 = vmatmul.mubr.f32.gmra.mxu0 %v1908
  %v2228 = vpop.f32.mrf.mxu0
  %v2229 = vadd.f32 0.0, %v2228
  %v2230 = vpop.f32.mrf.mxu0
  %2231 = vmatprep.mubr.f32.mxu0 0.0
  %2232 = vmatmul.mubr.f32.gmra.mxu0 %v1911
  %v2233 = vpop.f32.mrf.mxu0
  %v2234 = vadd.f32 0.0, %v2233
  %v2235 = vpop.f32.mrf.mxu0
  %2236 = vmatprep.mubr.f32.mxu0 0.0
  %2237 = vmatmul.mubr.f32.gmra.mxu0 %v1914
  %v2238 = vpop.f32.mrf.mxu0
  %v2239 = vadd.f32 0.0, %v2238
  %v2240 = vpop.f32.mrf.mxu0
  %2241 = vmatprep.mubr.f32.mxu0 0.0
  %2242 = vmatmul.mubr.f32.gmra.mxu0 %v1917
  %v2243 = vpop.f32.mrf.mxu0
  %v2244 = vadd.f32 0.0, %v2243
  %v2245 = vpop.f32.mrf.mxu0
  %2246 = vmatprep.mubr.f32.mxu0 0.0
  %2247 = vmatmul.mubr.f32.gmra.mxu0 %v1920
  %v2248 = vpop.f32.mrf.mxu0
  %v2249 = vadd.f32 0.0, %v2248
  %v2250 = vpop.f32.mrf.mxu0
  %2251 = vdwg.mxu0
  %v2252 = vadd.f32 %v1655, %v1989
  %v2253 = vadd.f32 %v1656, %v1994
  %v2254 = vadd.f32 %v1657, %v1999
  %v2255 = vadd.f32 %v1658, %v2004
  %v2256 = vadd.f32 %v1659, %v2009
  %v2257 = vadd.f32 %v1660, %v2014
  %v2258 = vadd.f32 %v1661, %v2019
  %v2259 = vadd.f32 %v1662, %v2024
  %v2260 = vadd.f32 %v1663, %v2029
  %v2261 = vadd.f32 %v1664, %v2034
  %v2262 = vadd.f32 %v1665, %v2039
  %v2263 = vadd.f32 %v1666, %v2044
  %v2264 = vadd.f32 %v1667, %v2049
  %v2265 = vadd.f32 %v1668, %v2054
  %v2266 = vadd.f32 %v1669, %v2059
  %v2267 = vadd.f32 %v1670, %v2064
  %v2268 = vadd.f32 %v1671, %v2069
  %v2269 = vadd.f32 %v1672, %v2074
  %v2270 = vadd.f32 %v1673, %v2079
  %v2271 = vadd.f32 %v1674, %v2084
  %v2272 = vadd.f32 %v1675, %v2089
  %v2273 = vadd.f32 %v1676, %v2094
  %v2274 = vadd.f32 %v1677, %v2099
  %v2275 = vadd.f32 %v1678, %v2104
  %v2276 = vadd.f32 %v1679, %v2109
  %v2277 = vadd.f32 %v1680, %v2114
  %v2278 = vadd.f32 %v1681, %v2119
  %v2279 = vadd.f32 %v1682, %v2124
  %v2280 = vadd.f32 %v1683, %v2129
  %v2281 = vadd.f32 %v1684, %v2134
  %v2282 = vadd.f32 %v1685, %v2139
  %v2283 = vadd.f32 %v1686, %v2144
  %v2284 = vadd.f32 %v1687, %v2149
  %v2285 = vadd.f32 %v1688, %v2154
  %v2286 = vadd.f32 %v1689, %v2159
  %v2287 = vadd.f32 %v1690, %v2164
  %v2288 = vadd.f32 %v1691, %v2169
  %v2289 = vadd.f32 %v1692, %v2174
  %v2290 = vadd.f32 %v1693, %v2179
  %v2291 = vadd.f32 %v1694, %v2184
  %v2292 = vadd.f32 %v1695, %v2189
  %v2293 = vadd.f32 %v1696, %v2194
  %v2294 = vadd.f32 %v1697, %v2199
  %v2295 = vadd.f32 %v1698, %v2204
  %v2296 = vadd.f32 %v1699, %v2209
  %v2297 = vadd.f32 %v1700, %v2214
  %v2298 = vadd.f32 %v1701, %v2219
  %v2299 = vadd.f32 %v1702, %v2224
  %v2300 = vadd.f32 %v1703, %v2229
  %v2301 = vadd.f32 %v1704, %v2234
  %v2302 = vadd.f32 %v1705, %v2239
  %v2303 = vadd.f32 %v1706, %v2244
  %v2304 = vadd.f32 %v1707, %v2249
  %v2305 = vld [vmem:[%s0 + $0xf] sm:$0xff]
  %v2306 = vld [vmem:[%s0 + $0x17] sm:$0xff]
  %v2307 = vld [vmem:[%s0 + $0x1f] sm:$0xff]
  %v2308 = vld [vmem:[%s0 + $0x27] sm:$0xff]
  %v2309 = vld [vmem:[%s0 + $0x2f] sm:$0xff]
  %v2310 = vld [vmem:[%s0 + $0x37] sm:$0xff]
  %v2311 = vld [vmem:[%s0 + $0x3f] sm:$0xff]
  %v2312 = vld [vmem:[%s0 + $0x47] sm:$0xff]
  %v2313 = vld [vmem:[%s0 + $0x4f] sm:$0xff]
  %v2314 = vld [vmem:[%s0 + $0x57] sm:$0xff]
  %v2315 = vld [vmem:[%s0 + $0x5f] sm:$0xff]
  %v2316 = vld [vmem:[%s0 + $0x67] sm:$0xff]
  %v2317 = vld [vmem:[%s0 + $0x6f] sm:$0xff]
  %v2318 = vld [vmem:[%s0 + $0x77] sm:$0xff]
  %v2319 = vld [vmem:[%s0 + $0x7f] sm:$0xff]
  %v2320 = vld [vmem:[%s0 + $0x87] sm:$0xff]
  %v2321 = vld [vmem:[%s0 + $0x8f] sm:$0xff]
  %v2322 = vld [vmem:[%s0 + $0x97] sm:$0xff]
  %v2323 = vld [vmem:[%s0 + $0x9f] sm:$0xff]
  %v2324 = vld [vmem:[%s0 + $0xa7] sm:$0xff]
  %v2325 = vld [vmem:[%s0 + $0xaf] sm:$0xff]
  %v2326 = vld [vmem:[%s0 + $0xb7] sm:$0xff]
  %v2327 = vld [vmem:[%s0 + $0xbf] sm:$0xff]
  %v2328 = vld [vmem:[%s0 + $0xc7] sm:$0xff]
  %v2329 = vld [vmem:[%s0 + $0xcf] sm:$0xff]
  %v2330 = vld [vmem:[%s0 + $0xd7] sm:$0xff]
  %v2331 = vld [vmem:[%s0 + $0xdf] sm:$0xff]
  %v2332 = vld [vmem:[%s0 + $0xe7] sm:$0xff]
  %v2333 = vld [vmem:[%s0 + $0xef] sm:$0xff]
  %v2334 = vld [vmem:[%s0 + $0xf7] sm:$0xff]
  %v2335 = vld [vmem:[%s0 + $0xff] sm:$0xff]
  %v2336 = vld [vmem:[%s0 + $0x107] sm:$0xff]
  %v2337 = vld [vmem:[%s0 + $0x10f] sm:$0xff]
  %v2338 = vld [vmem:[%s0 + $0x117] sm:$0xff]
  %v2339 = vld [vmem:[%s0 + $0x11f] sm:$0xff]
  %v2340 = vld [vmem:[%s0 + $0x127] sm:$0xff]
  %v2341 = vld [vmem:[%s0 + $0x12f] sm:$0xff]
  %v2342 = vld [vmem:[%s0 + $0x137] sm:$0xff]
  %v2343 = vld [vmem:[%s0 + $0x13f] sm:$0xff]
  %v2344 = vld [vmem:[%s0 + $0x147] sm:$0xff]
  %v2345 = vld [vmem:[%s0 + $0x14f] sm:$0xff]
  %v2346 = vld [vmem:[%s0 + $0x157] sm:$0xff]
  %v2347 = vld [vmem:[%s0 + $0x15f] sm:$0xff]
  %v2348 = vld [vmem:[%s0 + $0x167] sm:$0xff]
  %v2349 = vld [vmem:[%s0 + $0x16f] sm:$0xff]
  %v2350 = vld [vmem:[%s0 + $0x177] sm:$0xff]
  %v2351 = vld [vmem:[%s0 + $0x17f] sm:$0xff]
  %v2352 = vld [vmem:[%s0 + $0x187] sm:$0xff]
  %v2353 = vld [vmem:[%s0 + $0x18f] sm:$0xff]
  %v2354 = vld [vmem:[%s0 + $0x197] sm:$0xff]
  %v2355 = vld [vmem:[%s0 + $0x19f] sm:$0xff]
  %v2356 = vld [vmem:[%s0 + $0x1a7] sm:$0xff]
  %v2357 = vld [vmem:[%s0 + $0x1af] sm:$0xff]
  %s2358 = scalar_lea.vmem %s2, 32
  %v2359 = vld [vmem:[%s2358] sm:$0xff]
  %v2361 = vsel %vm132, %v2305, 0
  %v2364 = vsel %vm132, %v2306, 0
  %v2367 = vsel %vm132, %v2307, 0
  %v2370 = vsel %vm132, %v2308, 0
  %v2373 = vsel %vm132, %v2309, 0
  %v2376 = vsel %vm132, %v2310, 0
  %v2379 = vsel %vm132, %v2311, 0
  %v2382 = vsel %vm132, %v2312, 0
  %v2385 = vsel %vm132, %v2313, 0
  %v2388 = vsel %vm132, %v2314, 0
  %v2391 = vsel %vm132, %v2315, 0
  %v2394 = vsel %vm132, %v2316, 0
  %v2397 = vsel %vm132, %v2317, 0
  %v2400 = vsel %vm132, %v2318, 0
  %v2403 = vsel %vm132, %v2319, 0
  %v2406 = vsel %vm132, %v2320, 0
  %v2409 = vsel %vm132, %v2321, 0
  %v2412 = vsel %vm132, %v2322, 0
  %v2415 = vsel %vm132, %v2323, 0
  %v2418 = vsel %vm132, %v2324, 0
  %v2421 = vsel %vm132, %v2325, 0
  %v2424 = vsel %vm132, %v2326, 0
  %v2427 = vsel %vm132, %v2327, 0
  %v2430 = vsel %vm132, %v2328, 0
  %v2433 = vsel %vm132, %v2329, 0
  %v2436 = vsel %vm132, %v2330, 0
  %v2439 = vsel %vm132, %v2331, 0
  %v2442 = vsel %vm132, %v2332, 0
  %v2445 = vsel %vm132, %v2333, 0
  %v2448 = vsel %vm132, %v2334, 0
  %v2451 = vsel %vm132, %v2335, 0
  %v2454 = vsel %vm132, %v2336, 0
  %v2457 = vsel %vm132, %v2337, 0
  %v2460 = vsel %vm132, %v2338, 0
  %v2463 = vsel %vm132, %v2339, 0
  %v2466 = vsel %vm132, %v2340, 0
  %v2469 = vsel %vm132, %v2341, 0
  %v2472 = vsel %vm132, %v2342, 0
  %v2475 = vsel %vm132, %v2343, 0
  %v2478 = vsel %vm132, %v2344, 0
  %v2481 = vsel %vm132, %v2345, 0
  %v2484 = vsel %vm132, %v2346, 0
  %v2487 = vsel %vm132, %v2347, 0
  %v2490 = vsel %vm132, %v2348, 0
  %v2493 = vsel %vm132, %v2349, 0
  %v2496 = vsel %vm132, %v2350, 0
  %v2499 = vsel %vm132, %v2351, 0
  %v2502 = vsel %vm132, %v2352, 0
  %v2505 = vsel %vm132, %v2353, 0
  %v2508 = vsel %vm132, %v2354, 0
  %v2511 = vsel %vm132, %v2355, 0
  %v2514 = vsel %vm132, %v2356, 0
  %v2517 = vsel %vm132, %v2357, 0
  %2519 = vmatprep.subr.mxu0 0.0
  %2520 = vmatpush1.msra.mxu0 0.0
  %2521 = vmatprep.subr.mxu0 0.0
  %2522 = vmatpush1.msra.mxu0 0.0
  %2523 = vmatprep.subr.mxu0 0.0
  %2524 = vmatpush1.msra.mxu0 0.0
  %2525 = vmatprep.subr.mxu0 0.0
  %2526 = vmatpush1.msra.mxu0 0.0
  %2527 = vmatprep.subr.mxu0 0.0
  %2528 = vmatpush1.msra.mxu0 0.0
  %2529 = vmatprep.subr.mxu0 0.0
  %2530 = vmatpush1.msra.mxu0 0.0
  %2531 = vmatprep.subr.mxu0 0.0
  %2532 = vmatpush1.msra.mxu0 0.0
  %2533 = vmatprep.subr.mxu0 0.0
  %2534 = vmatpush1.msra.mxu0 0.0
  %2535 = vmatprep.subr.mxu0 0.0
  %2536 = vmatpush1.msra.mxu0 0.0
  %2537 = vmatprep.subr.mxu0 0.0
  %2538 = vmatpush1.msra.mxu0 0.0
  %2539 = vmatprep.subr.mxu0 0.0
  %2540 = vmatpush1.msra.mxu0 0.0
  %2541 = vmatprep.subr.mxu0 0.0
  %2542 = vmatpush1.msra.mxu0 0.0
  %2543 = vmatprep.subr.mxu0 0.0
  %2544 = vmatpush1.msra.mxu0 0.0
  %2545 = vmatprep.subr.mxu0 0.0
  %2546 = vmatpush1.msra.mxu0 0.0
  %2547 = vmatprep.subr.mxu0 0.0
  %2548 = vmatpush1.msra.mxu0 0.0
  %2549 = vmatprep.subr.mxu0 0.0
  %2550 = vmatpush1.msra.mxu0 %v2359
  %2551 = vmatprep.subr.mxu0 0.0
  %2552 = vmatpush2.msra.mxu0 0.0
  %2553 = vmatprep.subr.mxu0 0.0
  %2554 = vmatpush2.msra.mxu0 0.0
  %2555 = vmatprep.subr.mxu0 0.0
  %2556 = vmatpush2.msra.mxu0 0.0
  %2557 = vmatprep.subr.mxu0 0.0
  %2558 = vmatpush2.msra.mxu0 0.0
  %2559 = vmatprep.subr.mxu0 0.0
  %2560 = vmatpush2.msra.mxu0 0.0
  %2561 = vmatprep.subr.mxu0 0.0
  %2562 = vmatpush2.msra.mxu0 0.0
  %2563 = vmatprep.subr.mxu0 0.0
  %2564 = vmatpush2.msra.mxu0 0.0
  %2565 = vmatprep.subr.mxu0 0.0
  %2566 = vmatpush2.msra.mxu0 0.0
  %2567 = vmatprep.subr.mxu0 0.0
  %2568 = vmatpush2.msra.mxu0 0.0
  %2569 = vmatprep.subr.mxu0 0.0
  %2570 = vmatpush2.msra.mxu0 0.0
  %2571 = vmatprep.subr.mxu0 0.0
  %2572 = vmatpush2.msra.mxu0 0.0
  %2573 = vmatprep.subr.mxu0 0.0
  %2574 = vmatpush2.msra.mxu0 0.0
  %2575 = vmatprep.subr.mxu0 0.0
  %2576 = vmatpush2.msra.mxu0 0.0
  %2577 = vmatprep.subr.mxu0 0.0
  %2578 = vmatpush2.msra.mxu0 0.0
  %2579 = vmatprep.subr.mxu0 0.0
  %2580 = vmatpush2.msra.mxu0 0.0
  %2581 = vmatprep.subr.mxu0 0.0
  %2582 = vmatpush2.msra.mxu0 0.0
  %2583 = vmatprep.mubr.f32.mxu0 0.0
  %2584 = vmatmul.mubr.f32.gmra.mxu0 %v2361
  %v2585 = vpop.f32.mrf.mxu0
  %v2586 = vadd.f32 0.0, %v2585
  %v2587 = vpop.f32.mrf.mxu0
  %2588 = vmatprep.mubr.f32.mxu0 0.0
  %2589 = vmatmul.mubr.f32.gmra.mxu0 %v2364
  %v2590 = vpop.f32.mrf.mxu0
  %v2591 = vadd.f32 0.0, %v2590
  %v2592 = vpop.f32.mrf.mxu0
  %2593 = vmatprep.mubr.f32.mxu0 0.0
  %2594 = vmatmul.mubr.f32.gmra.mxu0 %v2367
  %v2595 = vpop.f32.mrf.mxu0
  %v2596 = vadd.f32 0.0, %v2595
  %v2597 = vpop.f32.mrf.mxu0
  %2598 = vmatprep.mubr.f32.mxu0 0.0
  %2599 = vmatmul.mubr.f32.gmra.mxu0 %v2370
  %v2600 = vpop.f32.mrf.mxu0
  %v2601 = vadd.f32 0.0, %v2600
  %v2602 = vpop.f32.mrf.mxu0
  %2603 = vmatprep.mubr.f32.mxu0 0.0
  %2604 = vmatmul.mubr.f32.gmra.mxu0 %v2373
  %v2605 = vpop.f32.mrf.mxu0
  %v2606 = vadd.f32 0.0, %v2605
  %v2607 = vpop.f32.mrf.mxu0
  %2608 = vmatprep.mubr.f32.mxu0 0.0
  %2609 = vmatmul.mubr.f32.gmra.mxu0 %v2376
  %v2610 = vpop.f32.mrf.mxu0
  %v2611 = vadd.f32 0.0, %v2610
  %v2612 = vpop.f32.mrf.mxu0
  %2613 = vmatprep.mubr.f32.mxu0 0.0
  %2614 = vmatmul.mubr.f32.gmra.mxu0 %v2379
  %v2615 = vpop.f32.mrf.mxu0
  %v2616 = vadd.f32 0.0, %v2615
  %v2617 = vpop.f32.mrf.mxu0
  %2618 = vmatprep.mubr.f32.mxu0 0.0
  %2619 = vmatmul.mubr.f32.gmra.mxu0 %v2382
  %v2620 = vpop.f32.mrf.mxu0
  %v2621 = vadd.f32 0.0, %v2620
  %v2622 = vpop.f32.mrf.mxu0
  %2623 = vmatprep.mubr.f32.mxu0 0.0
  %2624 = vmatmul.mubr.f32.gmra.mxu0 %v2385
  %v2625 = vpop.f32.mrf.mxu0
  %v2626 = vadd.f32 0.0, %v2625
  %v2627 = vpop.f32.mrf.mxu0
  %2628 = vmatprep.mubr.f32.mxu0 0.0
  %2629 = vmatmul.mubr.f32.gmra.mxu0 %v2388
  %v2630 = vpop.f32.mrf.mxu0
  %v2631 = vadd.f32 0.0, %v2630
  %v2632 = vpop.f32.mrf.mxu0
  %2633 = vmatprep.mubr.f32.mxu0 0.0
  %2634 = vmatmul.mubr.f32.gmra.mxu0 %v2391
  %v2635 = vpop.f32.mrf.mxu0
  %v2636 = vadd.f32 0.0, %v2635
  %v2637 = vpop.f32.mrf.mxu0
  %2638 = vmatprep.mubr.f32.mxu0 0.0
  %2639 = vmatmul.mubr.f32.gmra.mxu0 %v2394
  %v2640 = vpop.f32.mrf.mxu0
  %v2641 = vadd.f32 0.0, %v2640
  %v2642 = vpop.f32.mrf.mxu0
  %2643 = vmatprep.mubr.f32.mxu0 0.0
  %2644 = vmatmul.mubr.f32.gmra.mxu0 %v2397
  %v2645 = vpop.f32.mrf.mxu0
  %v2646 = vadd.f32 0.0, %v2645
  %v2647 = vpop.f32.mrf.mxu0
  %2648 = vmatprep.mubr.f32.mxu0 0.0
  %2649 = vmatmul.mubr.f32.gmra.mxu0 %v2400
  %v2650 = vpop.f32.mrf.mxu0
  %v2651 = vadd.f32 0.0, %v2650
  %v2652 = vpop.f32.mrf.mxu0
  %2653 = vmatprep.mubr.f32.mxu0 0.0
  %2654 = vmatmul.mubr.f32.gmra.mxu0 %v2403
  %v2655 = vpop.f32.mrf.mxu0
  %v2656 = vadd.f32 0.0, %v2655
  %v2657 = vpop.f32.mrf.mxu0
  %2658 = vmatprep.mubr.f32.mxu0 0.0
  %2659 = vmatmul.mubr.f32.gmra.mxu0 %v2406
  %v2660 = vpop.f32.mrf.mxu0
  %v2661 = vadd.f32 0.0, %v2660
  %v2662 = vpop.f32.mrf.mxu0
  %2663 = vmatprep.mubr.f32.mxu0 0.0
  %2664 = vmatmul.mubr.f32.gmra.mxu0 %v2409
  %v2665 = vpop.f32.mrf.mxu0
  %v2666 = vadd.f32 0.0, %v2665
  %v2667 = vpop.f32.mrf.mxu0
  %2668 = vmatprep.mubr.f32.mxu0 0.0
  %2669 = vmatmul.mubr.f32.gmra.mxu0 %v2412
  %v2670 = vpop.f32.mrf.mxu0
  %v2671 = vadd.f32 0.0, %v2670
  %v2672 = vpop.f32.mrf.mxu0
  %2673 = vmatprep.mubr.f32.mxu0 0.0
  %2674 = vmatmul.mubr.f32.gmra.mxu0 %v2415
  %v2675 = vpop.f32.mrf.mxu0
  %v2676 = vadd.f32 0.0, %v2675
  %v2677 = vpop.f32.mrf.mxu0
  %2678 = vmatprep.mubr.f32.mxu0 0.0
  %2679 = vmatmul.mubr.f32.gmra.mxu0 %v2418
  %v2680 = vpop.f32.mrf.mxu0
  %v2681 = vadd.f32 0.0, %v2680
  %v2682 = vpop.f32.mrf.mxu0
  %2683 = vmatprep.mubr.f32.mxu0 0.0
  %2684 = vmatmul.mubr.f32.gmra.mxu0 %v2421
  %v2685 = vpop.f32.mrf.mxu0
  %v2686 = vadd.f32 0.0, %v2685
  %v2687 = vpop.f32.mrf.mxu0
  %2688 = vmatprep.mubr.f32.mxu0 0.0
  %2689 = vmatmul.mubr.f32.gmra.mxu0 %v2424
  %v2690 = vpop.f32.mrf.mxu0
  %v2691 = vadd.f32 0.0, %v2690
  %v2692 = vpop.f32.mrf.mxu0
  %2693 = vmatprep.mubr.f32.mxu0 0.0
  %2694 = vmatmul.mubr.f32.gmra.mxu0 %v2427
  %v2695 = vpop.f32.mrf.mxu0
  %v2696 = vadd.f32 0.0, %v2695
  %v2697 = vpop.f32.mrf.mxu0
  %2698 = vmatprep.mubr.f32.mxu0 0.0
  %2699 = vmatmul.mubr.f32.gmra.mxu0 %v2430
  %v2700 = vpop.f32.mrf.mxu0
  %v2701 = vadd.f32 0.0, %v2700
  %v2702 = vpop.f32.mrf.mxu0
  %2703 = vmatprep.mubr.f32.mxu0 0.0
  %2704 = vmatmul.mubr.f32.gmra.mxu0 %v2433
  %v2705 = vpop.f32.mrf.mxu0
  %v2706 = vadd.f32 0.0, %v2705
  %v2707 = vpop.f32.mrf.mxu0
  %2708 = vmatprep.mubr.f32.mxu0 0.0
  %2709 = vmatmul.mubr.f32.gmra.mxu0 %v2436
  %v2710 = vpop.f32.mrf.mxu0
  %v2711 = vadd.f32 0.0, %v2710
  %v2712 = vpop.f32.mrf.mxu0
  %2713 = vmatprep.mubr.f32.mxu0 0.0
  %2714 = vmatmul.mubr.f32.gmra.mxu0 %v2439
  %v2715 = vpop.f32.mrf.mxu0
  %v2716 = vadd.f32 0.0, %v2715
  %v2717 = vpop.f32.mrf.mxu0
  %2718 = vmatprep.mubr.f32.mxu0 0.0
  %2719 = vmatmul.mubr.f32.gmra.mxu0 %v2442
  %v2720 = vpop.f32.mrf.mxu0
  %v2721 = vadd.f32 0.0, %v2720
  %v2722 = vpop.f32.mrf.mxu0
  %2723 = vmatprep.mubr.f32.mxu0 0.0
  %2724 = vmatmul.mubr.f32.gmra.mxu0 %v2445
  %v2725 = vpop.f32.mrf.mxu0
  %v2726 = vadd.f32 0.0, %v2725
  %v2727 = vpop.f32.mrf.mxu0
  %2728 = vmatprep.mubr.f32.mxu0 0.0
  %2729 = vmatmul.mubr.f32.gmra.mxu0 %v2448
  %v2730 = vpop.f32.mrf.mxu0
  %v2731 = vadd.f32 0.0, %v2730
  %v2732 = vpop.f32.mrf.mxu0
  %2733 = vmatprep.mubr.f32.mxu0 0.0
  %2734 = vmatmul.mubr.f32.gmra.mxu0 %v2451
  %v2735 = vpop.f32.mrf.mxu0
  %v2736 = vadd.f32 0.0, %v2735
  %v2737 = vpop.f32.mrf.mxu0
  %2738 = vmatprep.mubr.f32.mxu0 0.0
  %2739 = vmatmul.mubr.f32.gmra.mxu0 %v2454
  %v2740 = vpop.f32.mrf.mxu0
  %v2741 = vadd.f32 0.0, %v2740
  %v2742 = vpop.f32.mrf.mxu0
  %2743 = vmatprep.mubr.f32.mxu0 0.0
  %2744 = vmatmul.mubr.f32.gmra.mxu0 %v2457
  %v2745 = vpop.f32.mrf.mxu0
  %v2746 = vadd.f32 0.0, %v2745
  %v2747 = vpop.f32.mrf.mxu0
  %2748 = vmatprep.mubr.f32.mxu0 0.0
  %2749 = vmatmul.mubr.f32.gmra.mxu0 %v2460
  %v2750 = vpop.f32.mrf.mxu0
  %v2751 = vadd.f32 0.0, %v2750
  %v2752 = vpop.f32.mrf.mxu0
  %2753 = vmatprep.mubr.f32.mxu0 0.0
  %2754 = vmatmul.mubr.f32.gmra.mxu0 %v2463
  %v2755 = vpop.f32.mrf.mxu0
  %v2756 = vadd.f32 0.0, %v2755
  %v2757 = vpop.f32.mrf.mxu0
  %2758 = vmatprep.mubr.f32.mxu0 0.0
  %2759 = vmatmul.mubr.f32.gmra.mxu0 %v2466
  %v2760 = vpop.f32.mrf.mxu0
  %v2761 = vadd.f32 0.0, %v2760
  %v2762 = vpop.f32.mrf.mxu0
  %2763 = vmatprep.mubr.f32.mxu0 0.0
  %2764 = vmatmul.mubr.f32.gmra.mxu0 %v2469
  %v2765 = vpop.f32.mrf.mxu0
  %v2766 = vadd.f32 0.0, %v2765
  %v2767 = vpop.f32.mrf.mxu0
  %2768 = vmatprep.mubr.f32.mxu0 0.0
  %2769 = vmatmul.mubr.f32.gmra.mxu0 %v2472
  %v2770 = vpop.f32.mrf.mxu0
  %v2771 = vadd.f32 0.0, %v2770
  %v2772 = vpop.f32.mrf.mxu0
  %2773 = vmatprep.mubr.f32.mxu0 0.0
  %2774 = vmatmul.mubr.f32.gmra.mxu0 %v2475
  %v2775 = vpop.f32.mrf.mxu0
  %v2776 = vadd.f32 0.0, %v2775
  %v2777 = vpop.f32.mrf.mxu0
  %2778 = vmatprep.mubr.f32.mxu0 0.0
  %2779 = vmatmul.mubr.f32.gmra.mxu0 %v2478
  %v2780 = vpop.f32.mrf.mxu0
  %v2781 = vadd.f32 0.0, %v2780
  %v2782 = vpop.f32.mrf.mxu0
  %2783 = vmatprep.mubr.f32.mxu0 0.0
  %2784 = vmatmul.mubr.f32.gmra.mxu0 %v2481
  %v2785 = vpop.f32.mrf.mxu0
  %v2786 = vadd.f32 0.0, %v2785
  %v2787 = vpop.f32.mrf.mxu0
  %2788 = vmatprep.mubr.f32.mxu0 0.0
  %2789 = vmatmul.mubr.f32.gmra.mxu0 %v2484
  %v2790 = vpop.f32.mrf.mxu0
  %v2791 = vadd.f32 0.0, %v2790
  %v2792 = vpop.f32.mrf.mxu0
  %2793 = vmatprep.mubr.f32.mxu0 0.0
  %2794 = vmatmul.mubr.f32.gmra.mxu0 %v2487
  %v2795 = vpop.f32.mrf.mxu0
  %v2796 = vadd.f32 0.0, %v2795
  %v2797 = vpop.f32.mrf.mxu0
  %2798 = vmatprep.mubr.f32.mxu0 0.0
  %2799 = vmatmul.mubr.f32.gmra.mxu0 %v2490
  %v2800 = vpop.f32.mrf.mxu0
  %v2801 = vadd.f32 0.0, %v2800
  %v2802 = vpop.f32.mrf.mxu0
  %2803 = vmatprep.mubr.f32.mxu0 0.0
  %2804 = vmatmul.mubr.f32.gmra.mxu0 %v2493
  %v2805 = vpop.f32.mrf.mxu0
  %v2806 = vadd.f32 0.0, %v2805
  %v2807 = vpop.f32.mrf.mxu0
  %2808 = vmatprep.mubr.f32.mxu0 0.0
  %2809 = vmatmul.mubr.f32.gmra.mxu0 %v2496
  %v2810 = vpop.f32.mrf.mxu0
  %v2811 = vadd.f32 0.0, %v2810
  %v2812 = vpop.f32.mrf.mxu0
  %2813 = vmatprep.mubr.f32.mxu0 0.0
  %2814 = vmatmul.mubr.f32.gmra.mxu0 %v2499
  %v2815 = vpop.f32.mrf.mxu0
  %v2816 = vadd.f32 0.0, %v2815
  %v2817 = vpop.f32.mrf.mxu0
  %2818 = vmatprep.mubr.f32.mxu0 0.0
  %2819 = vmatmul.mubr.f32.gmra.mxu0 %v2502
  %v2820 = vpop.f32.mrf.mxu0
  %v2821 = vadd.f32 0.0, %v2820
  %v2822 = vpop.f32.mrf.mxu0
  %2823 = vmatprep.mubr.f32.mxu0 0.0
  %2824 = vmatmul.mubr.f32.gmra.mxu0 %v2505
  %v2825 = vpop.f32.mrf.mxu0
  %v2826 = vadd.f32 0.0, %v2825
  %v2827 = vpop.f32.mrf.mxu0
  %2828 = vmatprep.mubr.f32.mxu0 0.0
  %2829 = vmatmul.mubr.f32.gmra.mxu0 %v2508
  %v2830 = vpop.f32.mrf.mxu0
  %v2831 = vadd.f32 0.0, %v2830
  %v2832 = vpop.f32.mrf.mxu0
  %2833 = vmatprep.mubr.f32.mxu0 0.0
  %2834 = vmatmul.mubr.f32.gmra.mxu0 %v2511
  %v2835 = vpop.f32.mrf.mxu0
  %v2836 = vadd.f32 0.0, %v2835
  %v2837 = vpop.f32.mrf.mxu0
  %2838 = vmatprep.mubr.f32.mxu0 0.0
  %2839 = vmatmul.mubr.f32.gmra.mxu0 %v2514
  %v2840 = vpop.f32.mrf.mxu0
  %v2841 = vadd.f32 0.0, %v2840
  %v2842 = vpop.f32.mrf.mxu0
  %2843 = vmatprep.mubr.f32.mxu0 0.0
  %2844 = vmatmul.mubr.f32.gmra.mxu0 %v2517
  %v2845 = vpop.f32.mrf.mxu0
  %v2846 = vadd.f32 0.0, %v2845
  %v2847 = vpop.f32.mrf.mxu0
  %2848 = vdwg.mxu0
  %v2849 = vadd.f32 %v2252, %v2586
  %v2850 = vadd.f32 %v2253, %v2591
  %v2851 = vadd.f32 %v2254, %v2596
  %v2852 = vadd.f32 %v2255, %v2601
  %v2853 = vadd.f32 %v2256, %v2606
  %v2854 = vadd.f32 %v2257, %v2611
  %v2855 = vadd.f32 %v2258, %v2616
  %v2856 = vadd.f32 %v2259, %v2621
  %v2857 = vadd.f32 %v2260, %v2626
  %v2858 = vadd.f32 %v2261, %v2631
  %v2859 = vadd.f32 %v2262, %v2636
  %v2860 = vadd.f32 %v2263, %v2641
  %v2861 = vadd.f32 %v2264, %v2646
  %v2862 = vadd.f32 %v2265, %v2651
  %v2863 = vadd.f32 %v2266, %v2656
  %v2864 = vadd.f32 %v2267, %v2661
  %v2865 = vadd.f32 %v2268, %v2666
  %v2866 = vadd.f32 %v2269, %v2671
  %v2867 = vadd.f32 %v2270, %v2676
  %v2868 = vadd.f32 %v2271, %v2681
  %v2869 = vadd.f32 %v2272, %v2686
  %v2870 = vadd.f32 %v2273, %v2691
  %v2871 = vadd.f32 %v2274, %v2696
  %v2872 = vadd.f32 %v2275, %v2701
  %v2873 = vadd.f32 %v2276, %v2706
  %v2874 = vadd.f32 %v2277, %v2711
  %v2875 = vadd.f32 %v2278, %v2716
  %v2876 = vadd.f32 %v2279, %v2721
  %v2877 = vadd.f32 %v2280, %v2726
  %v2878 = vadd.f32 %v2281, %v2731
  %v2879 = vadd.f32 %v2282, %v2736
  %v2880 = vadd.f32 %v2283, %v2741
  %v2881 = vadd.f32 %v2284, %v2746
  %v2882 = vadd.f32 %v2285, %v2751
  %v2883 = vadd.f32 %v2286, %v2756
  %v2884 = vadd.f32 %v2287, %v2761
  %v2885 = vadd.f32 %v2288, %v2766
  %v2886 = vadd.f32 %v2289, %v2771
  %v2887 = vadd.f32 %v2290, %v2776
  %v2888 = vadd.f32 %v2291, %v2781
  %v2889 = vadd.f32 %v2292, %v2786
  %v2890 = vadd.f32 %v2293, %v2791
  %v2891 = vadd.f32 %v2294, %v2796
  %v2892 = vadd.f32 %v2295, %v2801
  %v2893 = vadd.f32 %v2296, %v2806
  %v2894 = vadd.f32 %v2297, %v2811
  %v2895 = vadd.f32 %v2298, %v2816
  %v2896 = vadd.f32 %v2299, %v2821
  %v2897 = vadd.f32 %v2300, %v2826
  %v2898 = vadd.f32 %v2301, %v2831
  %v2899 = vadd.f32 %v2302, %v2836
  %v2900 = vadd.f32 %v2303, %v2841
  %v2901 = vadd.f32 %v2304, %v2846
  %v2902 = vld [vmem:[%s0 + $0x10] sm:$0xff]
  %v2903 = vld [vmem:[%s0 + $0x18] sm:$0xff]
  %v2904 = vld [vmem:[%s0 + $0x20] sm:$0xff]
  %v2905 = vld [vmem:[%s0 + $0x28] sm:$0xff]
  %v2906 = vld [vmem:[%s0 + $0x30] sm:$0xff]
  %v2907 = vld [vmem:[%s0 + $0x38] sm:$0xff]
  %v2908 = vld [vmem:[%s0 + $0x40] sm:$0xff]
  %v2909 = vld [vmem:[%s0 + $0x48] sm:$0xff]
  %v2910 = vld [vmem:[%s0 + $0x50] sm:$0xff]
  %v2911 = vld [vmem:[%s0 + $0x58] sm:$0xff]
  %v2912 = vld [vmem:[%s0 + $0x60] sm:$0xff]
  %v2913 = vld [vmem:[%s0 + $0x68] sm:$0xff]
  %v2914 = vld [vmem:[%s0 + $0x70] sm:$0xff]
  %v2915 = vld [vmem:[%s0 + $0x78] sm:$0xff]
  %v2916 = vld [vmem:[%s0 + $0x80] sm:$0xff]
  %v2917 = vld [vmem:[%s0 + $0x88] sm:$0xff]
  %v2918 = vld [vmem:[%s0 + $0x90] sm:$0xff]
  %v2919 = vld [vmem:[%s0 + $0x98] sm:$0xff]
  %v2920 = vld [vmem:[%s0 + $0xa0] sm:$0xff]
  %v2921 = vld [vmem:[%s0 + $0xa8] sm:$0xff]
  %v2922 = vld [vmem:[%s0 + $0xb0] sm:$0xff]
  %v2923 = vld [vmem:[%s0 + $0xb8] sm:$0xff]
  %v2924 = vld [vmem:[%s0 + $0xc0] sm:$0xff]
  %v2925 = vld [vmem:[%s0 + $0xc8] sm:$0xff]
  %v2926 = vld [vmem:[%s0 + $0xd0] sm:$0xff]
  %v2927 = vld [vmem:[%s0 + $0xd8] sm:$0xff]
  %v2928 = vld [vmem:[%s0 + $0xe0] sm:$0xff]
  %v2929 = vld [vmem:[%s0 + $0xe8] sm:$0xff]
  %v2930 = vld [vmem:[%s0 + $0xf0] sm:$0xff]
  %v2931 = vld [vmem:[%s0 + $0xf8] sm:$0xff]
  %v2932 = vld [vmem:[%s0 + $0x100] sm:$0xff]
  %v2933 = vld [vmem:[%s0 + $0x108] sm:$0xff]
  %v2934 = vld [vmem:[%s0 + $0x110] sm:$0xff]
  %v2935 = vld [vmem:[%s0 + $0x118] sm:$0xff]
  %v2936 = vld [vmem:[%s0 + $0x120] sm:$0xff]
  %v2937 = vld [vmem:[%s0 + $0x128] sm:$0xff]
  %v2938 = vld [vmem:[%s0 + $0x130] sm:$0xff]
  %v2939 = vld [vmem:[%s0 + $0x138] sm:$0xff]
  %v2940 = vld [vmem:[%s0 + $0x140] sm:$0xff]
  %v2941 = vld [vmem:[%s0 + $0x148] sm:$0xff]
  %v2942 = vld [vmem:[%s0 + $0x150] sm:$0xff]
  %v2943 = vld [vmem:[%s0 + $0x158] sm:$0xff]
  %v2944 = vld [vmem:[%s0 + $0x160] sm:$0xff]
  %v2945 = vld [vmem:[%s0 + $0x168] sm:$0xff]
  %v2946 = vld [vmem:[%s0 + $0x170] sm:$0xff]
  %v2947 = vld [vmem:[%s0 + $0x178] sm:$0xff]
  %v2948 = vld [vmem:[%s0 + $0x180] sm:$0xff]
  %v2949 = vld [vmem:[%s0 + $0x188] sm:$0xff]
  %v2950 = vld [vmem:[%s0 + $0x190] sm:$0xff]
  %v2951 = vld [vmem:[%s0 + $0x198] sm:$0xff]
  %v2952 = vld [vmem:[%s0 + $0x1a0] sm:$0xff]
  %v2953 = vld [vmem:[%s0 + $0x1a8] sm:$0xff]
  %v2954 = vld [vmem:[%s0 + $0x1b0] sm:$0xff]
  %s2955 = scalar_lea.vmem %s2, 40
  %v2956 = vld [vmem:[%s2955] sm:$0xff]
  %v2958 = vsel %vm132, %v2902, 0
  %v2961 = vsel %vm132, %v2903, 0
  %v2964 = vsel %vm132, %v2904, 0
  %v2967 = vsel %vm132, %v2905, 0
  %v2970 = vsel %vm132, %v2906, 0
  %v2973 = vsel %vm132, %v2907, 0
  %v2976 = vsel %vm132, %v2908, 0
  %v2979 = vsel %vm132, %v2909, 0
  %v2982 = vsel %vm132, %v2910, 0
  %v2985 = vsel %vm132, %v2911, 0
  %v2988 = vsel %vm132, %v2912, 0
  %v2991 = vsel %vm132, %v2913, 0
  %v2994 = vsel %vm132, %v2914, 0
  %v2997 = vsel %vm132, %v2915, 0
  %v3000 = vsel %vm132, %v2916, 0
  %v3003 = vsel %vm132, %v2917, 0
  %v3006 = vsel %vm132, %v2918, 0
  %v3009 = vsel %vm132, %v2919, 0
  %v3012 = vsel %vm132, %v2920, 0
  %v3015 = vsel %vm132, %v2921, 0
  %v3018 = vsel %vm132, %v2922, 0
  %v3021 = vsel %vm132, %v2923, 0
  %v3024 = vsel %vm132, %v2924, 0
  %v3027 = vsel %vm132, %v2925, 0
  %v3030 = vsel %vm132, %v2926, 0
  %v3033 = vsel %vm132, %v2927, 0
  %v3036 = vsel %vm132, %v2928, 0
  %v3039 = vsel %vm132, %v2929, 0
  %v3042 = vsel %vm132, %v2930, 0
  %v3045 = vsel %vm132, %v2931, 0
  %v3048 = vsel %vm132, %v2932, 0
  %v3051 = vsel %vm132, %v2933, 0
  %v3054 = vsel %vm132, %v2934, 0
  %v3057 = vsel %vm132, %v2935, 0
  %v3060 = vsel %vm132, %v2936, 0
  %v3063 = vsel %vm132, %v2937, 0
  %v3066 = vsel %vm132, %v2938, 0
  %v3069 = vsel %vm132, %v2939, 0
  %v3072 = vsel %vm132, %v2940, 0
  %v3075 = vsel %vm132, %v2941, 0
  %v3078 = vsel %vm132, %v2942, 0
  %v3081 = vsel %vm132, %v2943, 0
  %v3084 = vsel %vm132, %v2944, 0
  %v3087 = vsel %vm132, %v2945, 0
  %v3090 = vsel %vm132, %v2946, 0
  %v3093 = vsel %vm132, %v2947, 0
  %v3096 = vsel %vm132, %v2948, 0
  %v3099 = vsel %vm132, %v2949, 0
  %v3102 = vsel %vm132, %v2950, 0
  %v3105 = vsel %vm132, %v2951, 0
  %v3108 = vsel %vm132, %v2952, 0
  %v3111 = vsel %vm132, %v2953, 0
  %v3114 = vsel %vm132, %v2954, 0
  %3116 = vmatprep.subr.mxu0 0.0
  %3117 = vmatpush1.msra.mxu0 0.0
  %3118 = vmatprep.subr.mxu0 0.0
  %3119 = vmatpush1.msra.mxu0 0.0
  %3120 = vmatprep.subr.mxu0 0.0
  %3121 = vmatpush1.msra.mxu0 0.0
  %3122 = vmatprep.subr.mxu0 0.0
  %3123 = vmatpush1.msra.mxu0 0.0
  %3124 = vmatprep.subr.mxu0 0.0
  %3125 = vmatpush1.msra.mxu0 0.0
  %3126 = vmatprep.subr.mxu0 0.0
  %3127 = vmatpush1.msra.mxu0 0.0
  %3128 = vmatprep.subr.mxu0 0.0
  %3129 = vmatpush1.msra.mxu0 0.0
  %3130 = vmatprep.subr.mxu0 0.0
  %3131 = vmatpush1.msra.mxu0 0.0
  %3132 = vmatprep.subr.mxu0 0.0
  %3133 = vmatpush1.msra.mxu0 0.0
  %3134 = vmatprep.subr.mxu0 0.0
  %3135 = vmatpush1.msra.mxu0 0.0
  %3136 = vmatprep.subr.mxu0 0.0
  %3137 = vmatpush1.msra.mxu0 0.0
  %3138 = vmatprep.subr.mxu0 0.0
  %3139 = vmatpush1.msra.mxu0 0.0
  %3140 = vmatprep.subr.mxu0 0.0
  %3141 = vmatpush1.msra.mxu0 0.0
  %3142 = vmatprep.subr.mxu0 0.0
  %3143 = vmatpush1.msra.mxu0 0.0
  %3144 = vmatprep.subr.mxu0 0.0
  %3145 = vmatpush1.msra.mxu0 0.0
  %3146 = vmatprep.subr.mxu0 0.0
  %3147 = vmatpush1.msra.mxu0 %v2956
  %3148 = vmatprep.subr.mxu0 0.0
  %3149 = vmatpush2.msra.mxu0 0.0
  %3150 = vmatprep.subr.mxu0 0.0
  %3151 = vmatpush2.msra.mxu0 0.0
  %3152 = vmatprep.subr.mxu0 0.0
  %3153 = vmatpush2.msra.mxu0 0.0
  %3154 = vmatprep.subr.mxu0 0.0
  %3155 = vmatpush2.msra.mxu0 0.0
  %3156 = vmatprep.subr.mxu0 0.0
  %3157 = vmatpush2.msra.mxu0 0.0
  %3158 = vmatprep.subr.mxu0 0.0
  %3159 = vmatpush2.msra.mxu0 0.0
  %3160 = vmatprep.subr.mxu0 0.0
  %3161 = vmatpush2.msra.mxu0 0.0
  %3162 = vmatprep.subr.mxu0 0.0
  %3163 = vmatpush2.msra.mxu0 0.0
  %3164 = vmatprep.subr.mxu0 0.0
  %3165 = vmatpush2.msra.mxu0 0.0
  %3166 = vmatprep.subr.mxu0 0.0
  %3167 = vmatpush2.msra.mxu0 0.0
  %3168 = vmatprep.subr.mxu0 0.0
  %3169 = vmatpush2.msra.mxu0 0.0
  %3170 = vmatprep.subr.mxu0 0.0
  %3171 = vmatpush2.msra.mxu0 0.0
  %3172 = vmatprep.subr.mxu0 0.0
  %3173 = vmatpush2.msra.mxu0 0.0
  %3174 = vmatprep.subr.mxu0 0.0
  %3175 = vmatpush2.msra.mxu0 0.0
  %3176 = vmatprep.subr.mxu0 0.0
  %3177 = vmatpush2.msra.mxu0 0.0
  %3178 = vmatprep.subr.mxu0 0.0
  %3179 = vmatpush2.msra.mxu0 0.0
  %3180 = vmatprep.mubr.f32.mxu0 0.0
  %3181 = vmatmul.mubr.f32.gmra.mxu0 %v2958
  %v3182 = vpop.f32.mrf.mxu0
  %v3183 = vadd.f32 0.0, %v3182
  %v3184 = vpop.f32.mrf.mxu0
  %3185 = vmatprep.mubr.f32.mxu0 0.0
  %3186 = vmatmul.mubr.f32.gmra.mxu0 %v2961
  %v3187 = vpop.f32.mrf.mxu0
  %v3188 = vadd.f32 0.0, %v3187
  %v3189 = vpop.f32.mrf.mxu0
  %3190 = vmatprep.mubr.f32.mxu0 0.0
  %3191 = vmatmul.mubr.f32.gmra.mxu0 %v2964
  %v3192 = vpop.f32.mrf.mxu0
  %v3193 = vadd.f32 0.0, %v3192
  %v3194 = vpop.f32.mrf.mxu0
  %3195 = vmatprep.mubr.f32.mxu0 0.0
  %3196 = vmatmul.mubr.f32.gmra.mxu0 %v2967
  %v3197 = vpop.f32.mrf.mxu0
  %v3198 = vadd.f32 0.0, %v3197
  %v3199 = vpop.f32.mrf.mxu0
  %3200 = vmatprep.mubr.f32.mxu0 0.0
  %3201 = vmatmul.mubr.f32.gmra.mxu0 %v2970
  %v3202 = vpop.f32.mrf.mxu0
  %v3203 = vadd.f32 0.0, %v3202
  %v3204 = vpop.f32.mrf.mxu0
  %3205 = vmatprep.mubr.f32.mxu0 0.0
  %3206 = vmatmul.mubr.f32.gmra.mxu0 %v2973
  %v3207 = vpop.f32.mrf.mxu0
  %v3208 = vadd.f32 0.0, %v3207
  %v3209 = vpop.f32.mrf.mxu0
  %3210 = vmatprep.mubr.f32.mxu0 0.0
  %3211 = vmatmul.mubr.f32.gmra.mxu0 %v2976
  %v3212 = vpop.f32.mrf.mxu0
  %v3213 = vadd.f32 0.0, %v3212
  %v3214 = vpop.f32.mrf.mxu0
  %3215 = vmatprep.mubr.f32.mxu0 0.0
  %3216 = vmatmul.mubr.f32.gmra.mxu0 %v2979
  %v3217 = vpop.f32.mrf.mxu0
  %v3218 = vadd.f32 0.0, %v3217
  %v3219 = vpop.f32.mrf.mxu0
  %3220 = vmatprep.mubr.f32.mxu0 0.0
  %3221 = vmatmul.mubr.f32.gmra.mxu0 %v2982
  %v3222 = vpop.f32.mrf.mxu0
  %v3223 = vadd.f32 0.0, %v3222
  %v3224 = vpop.f32.mrf.mxu0
  %3225 = vmatprep.mubr.f32.mxu0 0.0
  %3226 = vmatmul.mubr.f32.gmra.mxu0 %v2985
  %v3227 = vpop.f32.mrf.mxu0
  %v3228 = vadd.f32 0.0, %v3227
  %v3229 = vpop.f32.mrf.mxu0
  %3230 = vmatprep.mubr.f32.mxu0 0.0
  %3231 = vmatmul.mubr.f32.gmra.mxu0 %v2988
  %v3232 = vpop.f32.mrf.mxu0
  %v3233 = vadd.f32 0.0, %v3232
  %v3234 = vpop.f32.mrf.mxu0
  %3235 = vmatprep.mubr.f32.mxu0 0.0
  %3236 = vmatmul.mubr.f32.gmra.mxu0 %v2991
  %v3237 = vpop.f32.mrf.mxu0
  %v3238 = vadd.f32 0.0, %v3237
  %v3239 = vpop.f32.mrf.mxu0
  %3240 = vmatprep.mubr.f32.mxu0 0.0
  %3241 = vmatmul.mubr.f32.gmra.mxu0 %v2994
  %v3242 = vpop.f32.mrf.mxu0
  %v3243 = vadd.f32 0.0, %v3242
  %v3244 = vpop.f32.mrf.mxu0
  %3245 = vmatprep.mubr.f32.mxu0 0.0
  %3246 = vmatmul.mubr.f32.gmra.mxu0 %v2997
  %v3247 = vpop.f32.mrf.mxu0
  %v3248 = vadd.f32 0.0, %v3247
  %v3249 = vpop.f32.mrf.mxu0
  %3250 = vmatprep.mubr.f32.mxu0 0.0
  %3251 = vmatmul.mubr.f32.gmra.mxu0 %v3000
  %v3252 = vpop.f32.mrf.mxu0
  %v3253 = vadd.f32 0.0, %v3252
  %v3254 = vpop.f32.mrf.mxu0
  %3255 = vmatprep.mubr.f32.mxu0 0.0
  %3256 = vmatmul.mubr.f32.gmra.mxu0 %v3003
  %v3257 = vpop.f32.mrf.mxu0
  %v3258 = vadd.f32 0.0, %v3257
  %v3259 = vpop.f32.mrf.mxu0
  %3260 = vmatprep.mubr.f32.mxu0 0.0
  %3261 = vmatmul.mubr.f32.gmra.mxu0 %v3006
  %v3262 = vpop.f32.mrf.mxu0
  %v3263 = vadd.f32 0.0, %v3262
  %v3264 = vpop.f32.mrf.mxu0
  %3265 = vmatprep.mubr.f32.mxu0 0.0
  %3266 = vmatmul.mubr.f32.gmra.mxu0 %v3009
  %v3267 = vpop.f32.mrf.mxu0
  %v3268 = vadd.f32 0.0, %v3267
  %v3269 = vpop.f32.mrf.mxu0
  %3270 = vmatprep.mubr.f32.mxu0 0.0
  %3271 = vmatmul.mubr.f32.gmra.mxu0 %v3012
  %v3272 = vpop.f32.mrf.mxu0
  %v3273 = vadd.f32 0.0, %v3272
  %v3274 = vpop.f32.mrf.mxu0
  %3275 = vmatprep.mubr.f32.mxu0 0.0
  %3276 = vmatmul.mubr.f32.gmra.mxu0 %v3015
  %v3277 = vpop.f32.mrf.mxu0
  %v3278 = vadd.f32 0.0, %v3277
  %v3279 = vpop.f32.mrf.mxu0
  %3280 = vmatprep.mubr.f32.mxu0 0.0
  %3281 = vmatmul.mubr.f32.gmra.mxu0 %v3018
  %v3282 = vpop.f32.mrf.mxu0
  %v3283 = vadd.f32 0.0, %v3282
  %v3284 = vpop.f32.mrf.mxu0
  %3285 = vmatprep.mubr.f32.mxu0 0.0
  %3286 = vmatmul.mubr.f32.gmra.mxu0 %v3021
  %v3287 = vpop.f32.mrf.mxu0
  %v3288 = vadd.f32 0.0, %v3287
  %v3289 = vpop.f32.mrf.mxu0
  %3290 = vmatprep.mubr.f32.mxu0 0.0
  %3291 = vmatmul.mubr.f32.gmra.mxu0 %v3024
  %v3292 = vpop.f32.mrf.mxu0
  %v3293 = vadd.f32 0.0, %v3292
  %v3294 = vpop.f32.mrf.mxu0
  %3295 = vmatprep.mubr.f32.mxu0 0.0
  %3296 = vmatmul.mubr.f32.gmra.mxu0 %v3027
  %v3297 = vpop.f32.mrf.mxu0
  %v3298 = vadd.f32 0.0, %v3297
  %v3299 = vpop.f32.mrf.mxu0
  %3300 = vmatprep.mubr.f32.mxu0 0.0
  %3301 = vmatmul.mubr.f32.gmra.mxu0 %v3030
  %v3302 = vpop.f32.mrf.mxu0
  %v3303 = vadd.f32 0.0, %v3302
  %v3304 = vpop.f32.mrf.mxu0
  %3305 = vmatprep.mubr.f32.mxu0 0.0
  %3306 = vmatmul.mubr.f32.gmra.mxu0 %v3033
  %v3307 = vpop.f32.mrf.mxu0
  %v3308 = vadd.f32 0.0, %v3307
  %v3309 = vpop.f32.mrf.mxu0
  %3310 = vmatprep.mubr.f32.mxu0 0.0
  %3311 = vmatmul.mubr.f32.gmra.mxu0 %v3036
  %v3312 = vpop.f32.mrf.mxu0
  %v3313 = vadd.f32 0.0, %v3312
  %v3314 = vpop.f32.mrf.mxu0
  %3315 = vmatprep.mubr.f32.mxu0 0.0
  %3316 = vmatmul.mubr.f32.gmra.mxu0 %v3039
  %v3317 = vpop.f32.mrf.mxu0
  %v3318 = vadd.f32 0.0, %v3317
  %v3319 = vpop.f32.mrf.mxu0
  %3320 = vmatprep.mubr.f32.mxu0 0.0
  %3321 = vmatmul.mubr.f32.gmra.mxu0 %v3042
  %v3322 = vpop.f32.mrf.mxu0
  %v3323 = vadd.f32 0.0, %v3322
  %v3324 = vpop.f32.mrf.mxu0
  %3325 = vmatprep.mubr.f32.mxu0 0.0
  %3326 = vmatmul.mubr.f32.gmra.mxu0 %v3045
  %v3327 = vpop.f32.mrf.mxu0
  %v3328 = vadd.f32 0.0, %v3327
  %v3329 = vpop.f32.mrf.mxu0
  %3330 = vmatprep.mubr.f32.mxu0 0.0
  %3331 = vmatmul.mubr.f32.gmra.mxu0 %v3048
  %v3332 = vpop.f32.mrf.mxu0
  %v3333 = vadd.f32 0.0, %v3332
  %v3334 = vpop.f32.mrf.mxu0
  %3335 = vmatprep.mubr.f32.mxu0 0.0
  %3336 = vmatmul.mubr.f32.gmra.mxu0 %v3051
  %v3337 = vpop.f32.mrf.mxu0
  %v3338 = vadd.f32 0.0, %v3337
  %v3339 = vpop.f32.mrf.mxu0
  %3340 = vmatprep.mubr.f32.mxu0 0.0
  %3341 = vmatmul.mubr.f32.gmra.mxu0 %v3054
  %v3342 = vpop.f32.mrf.mxu0
  %v3343 = vadd.f32 0.0, %v3342
  %v3344 = vpop.f32.mrf.mxu0
  %3345 = vmatprep.mubr.f32.mxu0 0.0
  %3346 = vmatmul.mubr.f32.gmra.mxu0 %v3057
  %v3347 = vpop.f32.mrf.mxu0
  %v3348 = vadd.f32 0.0, %v3347
  %v3349 = vpop.f32.mrf.mxu0
  %3350 = vmatprep.mubr.f32.mxu0 0.0
  %3351 = vmatmul.mubr.f32.gmra.mxu0 %v3060
  %v3352 = vpop.f32.mrf.mxu0
  %v3353 = vadd.f32 0.0, %v3352
  %v3354 = vpop.f32.mrf.mxu0
  %3355 = vmatprep.mubr.f32.mxu0 0.0
  %3356 = vmatmul.mubr.f32.gmra.mxu0 %v3063
  %v3357 = vpop.f32.mrf.mxu0
  %v3358 = vadd.f32 0.0, %v3357
  %v3359 = vpop.f32.mrf.mxu0
  %3360 = vmatprep.mubr.f32.mxu0 0.0
  %3361 = vmatmul.mubr.f32.gmra.mxu0 %v3066
  %v3362 = vpop.f32.mrf.mxu0
  %v3363 = vadd.f32 0.0, %v3362
  %v3364 = vpop.f32.mrf.mxu0
  %3365 = vmatprep.mubr.f32.mxu0 0.0
  %3366 = vmatmul.mubr.f32.gmra.mxu0 %v3069
  %v3367 = vpop.f32.mrf.mxu0
  %v3368 = vadd.f32 0.0, %v3367
  %v3369 = vpop.f32.mrf.mxu0
  %3370 = vmatprep.mubr.f32.mxu0 0.0
  %3371 = vmatmul.mubr.f32.gmra.mxu0 %v3072
  %v3372 = vpop.f32.mrf.mxu0
  %v3373 = vadd.f32 0.0, %v3372
  %v3374 = vpop.f32.mrf.mxu0
  %3375 = vmatprep.mubr.f32.mxu0 0.0
  %3376 = vmatmul.mubr.f32.gmra.mxu0 %v3075
  %v3377 = vpop.f32.mrf.mxu0
  %v3378 = vadd.f32 0.0, %v3377
  %v3379 = vpop.f32.mrf.mxu0
  %3380 = vmatprep.mubr.f32.mxu0 0.0
  %3381 = vmatmul.mubr.f32.gmra.mxu0 %v3078
  %v3382 = vpop.f32.mrf.mxu0
  %v3383 = vadd.f32 0.0, %v3382
  %v3384 = vpop.f32.mrf.mxu0
  %3385 = vmatprep.mubr.f32.mxu0 0.0
  %3386 = vmatmul.mubr.f32.gmra.mxu0 %v3081
  %v3387 = vpop.f32.mrf.mxu0
  %v3388 = vadd.f32 0.0, %v3387
  %v3389 = vpop.f32.mrf.mxu0
  %3390 = vmatprep.mubr.f32.mxu0 0.0
  %3391 = vmatmul.mubr.f32.gmra.mxu0 %v3084
  %v3392 = vpop.f32.mrf.mxu0
  %v3393 = vadd.f32 0.0, %v3392
  %v3394 = vpop.f32.mrf.mxu0
  %3395 = vmatprep.mubr.f32.mxu0 0.0
  %3396 = vmatmul.mubr.f32.gmra.mxu0 %v3087
  %v3397 = vpop.f32.mrf.mxu0
  %v3398 = vadd.f32 0.0, %v3397
  %v3399 = vpop.f32.mrf.mxu0
  %3400 = vmatprep.mubr.f32.mxu0 0.0
  %3401 = vmatmul.mubr.f32.gmra.mxu0 %v3090
  %v3402 = vpop.f32.mrf.mxu0
  %v3403 = vadd.f32 0.0, %v3402
  %v3404 = vpop.f32.mrf.mxu0
  %3405 = vmatprep.mubr.f32.mxu0 0.0
  %3406 = vmatmul.mubr.f32.gmra.mxu0 %v3093
  %v3407 = vpop.f32.mrf.mxu0
  %v3408 = vadd.f32 0.0, %v3407
  %v3409 = vpop.f32.mrf.mxu0
  %3410 = vmatprep.mubr.f32.mxu0 0.0
  %3411 = vmatmul.mubr.f32.gmra.mxu0 %v3096
  %v3412 = vpop.f32.mrf.mxu0
  %v3413 = vadd.f32 0.0, %v3412
  %v3414 = vpop.f32.mrf.mxu0
  %3415 = vmatprep.mubr.f32.mxu0 0.0
  %3416 = vmatmul.mubr.f32.gmra.mxu0 %v3099
  %v3417 = vpop.f32.mrf.mxu0
  %v3418 = vadd.f32 0.0, %v3417
  %v3419 = vpop.f32.mrf.mxu0
  %3420 = vmatprep.mubr.f32.mxu0 0.0
  %3421 = vmatmul.mubr.f32.gmra.mxu0 %v3102
  %v3422 = vpop.f32.mrf.mxu0
  %v3423 = vadd.f32 0.0, %v3422
  %v3424 = vpop.f32.mrf.mxu0
  %3425 = vmatprep.mubr.f32.mxu0 0.0
  %3426 = vmatmul.mubr.f32.gmra.mxu0 %v3105
  %v3427 = vpop.f32.mrf.mxu0
  %v3428 = vadd.f32 0.0, %v3427
  %v3429 = vpop.f32.mrf.mxu0
  %3430 = vmatprep.mubr.f32.mxu0 0.0
  %3431 = vmatmul.mubr.f32.gmra.mxu0 %v3108
  %v3432 = vpop.f32.mrf.mxu0
  %v3433 = vadd.f32 0.0, %v3432
  %v3434 = vpop.f32.mrf.mxu0
  %3435 = vmatprep.mubr.f32.mxu0 0.0
  %3436 = vmatmul.mubr.f32.gmra.mxu0 %v3111
  %v3437 = vpop.f32.mrf.mxu0
  %v3438 = vadd.f32 0.0, %v3437
  %v3439 = vpop.f32.mrf.mxu0
  %3440 = vmatprep.mubr.f32.mxu0 0.0
  %3441 = vmatmul.mubr.f32.gmra.mxu0 %v3114
  %v3442 = vpop.f32.mrf.mxu0
  %v3443 = vadd.f32 0.0, %v3442
  %v3444 = vpop.f32.mrf.mxu0
  %3445 = vdwg.mxu0
  %v3446 = vadd.f32 %v2849, %v3183
  %v3447 = vadd.f32 %v2850, %v3188
  %v3448 = vadd.f32 %v2851, %v3193
  %v3449 = vadd.f32 %v2852, %v3198
  %v3450 = vadd.f32 %v2853, %v3203
  %v3451 = vadd.f32 %v2854, %v3208
  %v3452 = vadd.f32 %v2855, %v3213
  %v3453 = vadd.f32 %v2856, %v3218
  %v3454 = vadd.f32 %v2857, %v3223
  %v3455 = vadd.f32 %v2858, %v3228
  %v3456 = vadd.f32 %v2859, %v3233
  %v3457 = vadd.f32 %v2860, %v3238
  %v3458 = vadd.f32 %v2861, %v3243
  %v3459 = vadd.f32 %v2862, %v3248
  %v3460 = vadd.f32 %v2863, %v3253
  %v3461 = vadd.f32 %v2864, %v3258
  %v3462 = vadd.f32 %v2865, %v3263
  %v3463 = vadd.f32 %v2866, %v3268
  %v3464 = vadd.f32 %v2867, %v3273
  %v3465 = vadd.f32 %v2868, %v3278
  %v3466 = vadd.f32 %v2869, %v3283
  %v3467 = vadd.f32 %v2870, %v3288
  %v3468 = vadd.f32 %v2871, %v3293
  %v3469 = vadd.f32 %v2872, %v3298
  %v3470 = vadd.f32 %v2873, %v3303
  %v3471 = vadd.f32 %v2874, %v3308
  %v3472 = vadd.f32 %v2875, %v3313
  %v3473 = vadd.f32 %v2876, %v3318
  %v3474 = vadd.f32 %v2877, %v3323
  %v3475 = vadd.f32 %v2878, %v3328
  %v3476 = vadd.f32 %v2879, %v3333
  %v3477 = vadd.f32 %v2880, %v3338
  %v3478 = vadd.f32 %v2881, %v3343
  %v3479 = vadd.f32 %v2882, %v3348
  %v3480 = vadd.f32 %v2883, %v3353
  %v3481 = vadd.f32 %v2884, %v3358
  %v3482 = vadd.f32 %v2885, %v3363
  %v3483 = vadd.f32 %v2886, %v3368
  %v3484 = vadd.f32 %v2887, %v3373
  %v3485 = vadd.f32 %v2888, %v3378
  %v3486 = vadd.f32 %v2889, %v3383
  %v3487 = vadd.f32 %v2890, %v3388
  %v3488 = vadd.f32 %v2891, %v3393
  %v3489 = vadd.f32 %v2892, %v3398
  %v3490 = vadd.f32 %v2893, %v3403
  %v3491 = vadd.f32 %v2894, %v3408
  %v3492 = vadd.f32 %v2895, %v3413
  %v3493 = vadd.f32 %v2896, %v3418
  %v3494 = vadd.f32 %v2897, %v3423
  %v3495 = vadd.f32 %v2898, %v3428
  %v3496 = vadd.f32 %v2899, %v3433
  %v3497 = vadd.f32 %v2900, %v3438
  %v3498 = vadd.f32 %v2901, %v3443
  %v3499 = vld [vmem:[%s0 + $0x1c] sm:$0xff]
  %v3500 = vld [vmem:[%s0 + $0x24] sm:$0xff]
  %v3501 = vld [vmem:[%s0 + $0x2c] sm:$0xff]
  %v3502 = vld [vmem:[%s0 + $0x34] sm:$0xff]
  %v3503 = vld [vmem:[%s0 + $0x3c] sm:$0xff]
  %v3504 = vld [vmem:[%s0 + $0x44] sm:$0xff]
  %v3505 = vld [vmem:[%s0 + $0x4c] sm:$0xff]
  %v3506 = vld [vmem:[%s0 + $0x54] sm:$0xff]
  %v3507 = vld [vmem:[%s0 + $0x5c] sm:$0xff]
  %v3508 = vld [vmem:[%s0 + $0x64] sm:$0xff]
  %v3509 = vld [vmem:[%s0 + $0x6c] sm:$0xff]
  %v3510 = vld [vmem:[%s0 + $0x74] sm:$0xff]
  %v3511 = vld [vmem:[%s0 + $0x7c] sm:$0xff]
  %v3512 = vld [vmem:[%s0 + $0x84] sm:$0xff]
  %v3513 = vld [vmem:[%s0 + $0x8c] sm:$0xff]
  %v3514 = vld [vmem:[%s0 + $0x94] sm:$0xff]
  %v3515 = vld [vmem:[%s0 + $0x9c] sm:$0xff]
  %v3516 = vld [vmem:[%s0 + $0xa4] sm:$0xff]
  %v3517 = vld [vmem:[%s0 + $0xac] sm:$0xff]
  %v3518 = vld [vmem:[%s0 + $0xb4] sm:$0xff]
  %v3519 = vld [vmem:[%s0 + $0xbc] sm:$0xff]
  %v3520 = vld [vmem:[%s0 + $0xc4] sm:$0xff]
  %v3521 = vld [vmem:[%s0 + $0xcc] sm:$0xff]
  %v3522 = vld [vmem:[%s0 + $0xd4] sm:$0xff]
  %v3523 = vld [vmem:[%s0 + $0xdc] sm:$0xff]
  %v3524 = vld [vmem:[%s0 + $0xe4] sm:$0xff]
  %v3525 = vld [vmem:[%s0 + $0xec] sm:$0xff]
  %v3526 = vld [vmem:[%s0 + $0xf4] sm:$0xff]
  %v3527 = vld [vmem:[%s0 + $0xfc] sm:$0xff]
  %v3528 = vld [vmem:[%s0 + $0x104] sm:$0xff]
  %v3529 = vld [vmem:[%s0 + $0x10c] sm:$0xff]
  %v3530 = vld [vmem:[%s0 + $0x114] sm:$0xff]
  %v3531 = vld [vmem:[%s0 + $0x11c] sm:$0xff]
  %v3532 = vld [vmem:[%s0 + $0x124] sm:$0xff]
  %v3533 = vld [vmem:[%s0 + $0x12c] sm:$0xff]
  %v3534 = vld [vmem:[%s0 + $0x134] sm:$0xff]
  %v3535 = vld [vmem:[%s0 + $0x13c] sm:$0xff]
  %v3536 = vld [vmem:[%s0 + $0x144] sm:$0xff]
  %v3537 = vld [vmem:[%s0 + $0x14c] sm:$0xff]
  %v3538 = vld [vmem:[%s0 + $0x154] sm:$0xff]
  %v3539 = vld [vmem:[%s0 + $0x15c] sm:$0xff]
  %v3540 = vld [vmem:[%s0 + $0x164] sm:$0xff]
  %v3541 = vld [vmem:[%s0 + $0x16c] sm:$0xff]
  %v3542 = vld [vmem:[%s0 + $0x174] sm:$0xff]
  %v3543 = vld [vmem:[%s0 + $0x17c] sm:$0xff]
  %v3544 = vld [vmem:[%s0 + $0x184] sm:$0xff]
  %v3545 = vld [vmem:[%s0 + $0x18c] sm:$0xff]
  %v3546 = vld [vmem:[%s0 + $0x194] sm:$0xff]
  %v3547 = vld [vmem:[%s0 + $0x19c] sm:$0xff]
  %v3548 = vld [vmem:[%s0 + $0x1a4] sm:$0xff]
  %v3549 = vld [vmem:[%s0 + $0x1ac] sm:$0xff]
  %v3550 = vld [vmem:[%s0 + $0x1b4] sm:$0xff]
  %v3551 = vld [vmem:[%s0 + $0x1bc] sm:$0xff]
  %s3552 = scalar_lea.vmem %s2, 48
  %v3553 = vld [vmem:[%s3552] sm:$0xff]
  %v3555 = vsel %vm132, %v3499, 0
  %v3558 = vsel %vm132, %v3500, 0
  %v3561 = vsel %vm132, %v3501, 0
  %v3564 = vsel %vm132, %v3502, 0
  %v3567 = vsel %vm132, %v3503, 0
  %v3570 = vsel %vm132, %v3504, 0
  %v3573 = vsel %vm132, %v3505, 0
  %v3576 = vsel %vm132, %v3506, 0
  %v3579 = vsel %vm132, %v3507, 0
  %v3582 = vsel %vm132, %v3508, 0
  %v3585 = vsel %vm132, %v3509, 0
  %v3588 = vsel %vm132, %v3510, 0
  %v3591 = vsel %vm132, %v3511, 0
  %v3594 = vsel %vm132, %v3512, 0
  %v3597 = vsel %vm132, %v3513, 0
  %v3600 = vsel %vm132, %v3514, 0
  %v3603 = vsel %vm132, %v3515, 0
  %v3606 = vsel %vm132, %v3516, 0
  %v3609 = vsel %vm132, %v3517, 0
  %v3612 = vsel %vm132, %v3518, 0
  %v3615 = vsel %vm132, %v3519, 0
  %v3618 = vsel %vm132, %v3520, 0
  %v3621 = vsel %vm132, %v3521, 0
  %v3624 = vsel %vm132, %v3522, 0
  %v3627 = vsel %vm132, %v3523, 0
  %v3630 = vsel %vm132, %v3524, 0
  %v3633 = vsel %vm132, %v3525, 0
  %v3636 = vsel %vm132, %v3526, 0
  %v3639 = vsel %vm132, %v3527, 0
  %v3642 = vsel %vm132, %v3528, 0
  %v3645 = vsel %vm132, %v3529, 0
  %v3648 = vsel %vm132, %v3530, 0
  %v3651 = vsel %vm132, %v3531, 0
  %v3654 = vsel %vm132, %v3532, 0
  %v3657 = vsel %vm132, %v3533, 0
  %v3660 = vsel %vm132, %v3534, 0
  %v3663 = vsel %vm132, %v3535, 0
  %v3666 = vsel %vm132, %v3536, 0
  %v3669 = vsel %vm132, %v3537, 0
  %v3672 = vsel %vm132, %v3538, 0
  %v3675 = vsel %vm132, %v3539, 0
  %v3678 = vsel %vm132, %v3540, 0
  %v3681 = vsel %vm132, %v3541, 0
  %v3684 = vsel %vm132, %v3542, 0
  %v3687 = vsel %vm132, %v3543, 0
  %v3690 = vsel %vm132, %v3544, 0
  %v3693 = vsel %vm132, %v3545, 0
  %v3696 = vsel %vm132, %v3546, 0
  %v3699 = vsel %vm132, %v3547, 0
  %v3702 = vsel %vm132, %v3548, 0
  %v3705 = vsel %vm132, %v3549, 0
  %v3708 = vsel %vm132, %v3550, 0
  %v3711 = vsel %vm132, %v3551, 0
  %3713 = vmatprep.subr.mxu0 0.0
  %3714 = vmatpush1.msra.mxu0 0.0
  %3715 = vmatprep.subr.mxu0 0.0
  %3716 = vmatpush1.msra.mxu0 0.0
  %3717 = vmatprep.subr.mxu0 0.0
  %3718 = vmatpush1.msra.mxu0 0.0
  %3719 = vmatprep.subr.mxu0 0.0
  %3720 = vmatpush1.msra.mxu0 0.0
  %3721 = vmatprep.subr.mxu0 0.0
  %3722 = vmatpush1.msra.mxu0 0.0
  %3723 = vmatprep.subr.mxu0 0.0
  %3724 = vmatpush1.msra.mxu0 0.0
  %3725 = vmatprep.subr.mxu0 0.0
  %3726 = vmatpush1.msra.mxu0 0.0
  %3727 = vmatprep.subr.mxu0 0.0
  %3728 = vmatpush1.msra.mxu0 0.0
  %3729 = vmatprep.subr.mxu0 0.0
  %3730 = vmatpush1.msra.mxu0 0.0
  %3731 = vmatprep.subr.mxu0 0.0
  %3732 = vmatpush1.msra.mxu0 0.0
  %3733 = vmatprep.subr.mxu0 0.0
  %3734 = vmatpush1.msra.mxu0 0.0
  %3735 = vmatprep.subr.mxu0 0.0
  %3736 = vmatpush1.msra.mxu0 0.0
  %3737 = vmatprep.subr.mxu0 0.0
  %3738 = vmatpush1.msra.mxu0 0.0
  %3739 = vmatprep.subr.mxu0 0.0
  %3740 = vmatpush1.msra.mxu0 0.0
  %3741 = vmatprep.subr.mxu0 0.0
  %3742 = vmatpush1.msra.mxu0 0.0
  %3743 = vmatprep.subr.mxu0 0.0
  %3744 = vmatpush1.msra.mxu0 %v3553
  %3745 = vmatprep.subr.mxu0 0.0
  %3746 = vmatpush2.msra.mxu0 0.0
  %3747 = vmatprep.subr.mxu0 0.0
  %3748 = vmatpush2.msra.mxu0 0.0
  %3749 = vmatprep.subr.mxu0 0.0
  %3750 = vmatpush2.msra.mxu0 0.0
  %3751 = vmatprep.subr.mxu0 0.0
  %3752 = vmatpush2.msra.mxu0 0.0
  %3753 = vmatprep.subr.mxu0 0.0
  %3754 = vmatpush2.msra.mxu0 0.0
  %3755 = vmatprep.subr.mxu0 0.0
  %3756 = vmatpush2.msra.mxu0 0.0
  %3757 = vmatprep.subr.mxu0 0.0
  %3758 = vmatpush2.msra.mxu0 0.0
  %3759 = vmatprep.subr.mxu0 0.0
  %3760 = vmatpush2.msra.mxu0 0.0
  %3761 = vmatprep.subr.mxu0 0.0
  %3762 = vmatpush2.msra.mxu0 0.0
  %3763 = vmatprep.subr.mxu0 0.0
  %3764 = vmatpush2.msra.mxu0 0.0
  %3765 = vmatprep.subr.mxu0 0.0
  %3766 = vmatpush2.msra.mxu0 0.0
  %3767 = vmatprep.subr.mxu0 0.0
  %3768 = vmatpush2.msra.mxu0 0.0
  %3769 = vmatprep.subr.mxu0 0.0
  %3770 = vmatpush2.msra.mxu0 0.0
  %3771 = vmatprep.subr.mxu0 0.0
  %3772 = vmatpush2.msra.mxu0 0.0
  %3773 = vmatprep.subr.mxu0 0.0
  %3774 = vmatpush2.msra.mxu0 0.0
  %3775 = vmatprep.subr.mxu0 0.0
  %3776 = vmatpush2.msra.mxu0 0.0
  %3777 = vmatprep.mubr.f32.mxu0 0.0
  %3778 = vmatmul.mubr.f32.gmra.mxu0 %v3555
  %v3779 = vpop.f32.mrf.mxu0
  %v3780 = vadd.f32 0.0, %v3779
  %v3781 = vpop.f32.mrf.mxu0
  %3782 = vmatprep.mubr.f32.mxu0 0.0
  %3783 = vmatmul.mubr.f32.gmra.mxu0 %v3558
  %v3784 = vpop.f32.mrf.mxu0
  %v3785 = vadd.f32 0.0, %v3784
  %v3786 = vpop.f32.mrf.mxu0
  %3787 = vmatprep.mubr.f32.mxu0 0.0
  %3788 = vmatmul.mubr.f32.gmra.mxu0 %v3561
  %v3789 = vpop.f32.mrf.mxu0
  %v3790 = vadd.f32 0.0, %v3789
  %v3791 = vpop.f32.mrf.mxu0
  %3792 = vmatprep.mubr.f32.mxu0 0.0
  %3793 = vmatmul.mubr.f32.gmra.mxu0 %v3564
  %v3794 = vpop.f32.mrf.mxu0
  %v3795 = vadd.f32 0.0, %v3794
  %v3796 = vpop.f32.mrf.mxu0
  %3797 = vmatprep.mubr.f32.mxu0 0.0
  %3798 = vmatmul.mubr.f32.gmra.mxu0 %v3567
  %v3799 = vpop.f32.mrf.mxu0
  %v3800 = vadd.f32 0.0, %v3799
  %v3801 = vpop.f32.mrf.mxu0
  %3802 = vmatprep.mubr.f32.mxu0 0.0
  %3803 = vmatmul.mubr.f32.gmra.mxu0 %v3570
  %v3804 = vpop.f32.mrf.mxu0
  %v3805 = vadd.f32 0.0, %v3804
  %v3806 = vpop.f32.mrf.mxu0
  %3807 = vmatprep.mubr.f32.mxu0 0.0
  %3808 = vmatmul.mubr.f32.gmra.mxu0 %v3573
  %v3809 = vpop.f32.mrf.mxu0
  %v3810 = vadd.f32 0.0, %v3809
  %v3811 = vpop.f32.mrf.mxu0
  %3812 = vmatprep.mubr.f32.mxu0 0.0
  %3813 = vmatmul.mubr.f32.gmra.mxu0 %v3576
  %v3814 = vpop.f32.mrf.mxu0
  %v3815 = vadd.f32 0.0, %v3814
  %v3816 = vpop.f32.mrf.mxu0
  %3817 = vmatprep.mubr.f32.mxu0 0.0
  %3818 = vmatmul.mubr.f32.gmra.mxu0 %v3579
  %v3819 = vpop.f32.mrf.mxu0
  %v3820 = vadd.f32 0.0, %v3819
  %v3821 = vpop.f32.mrf.mxu0
  %3822 = vmatprep.mubr.f32.mxu0 0.0
  %3823 = vmatmul.mubr.f32.gmra.mxu0 %v3582
  %v3824 = vpop.f32.mrf.mxu0
  %v3825 = vadd.f32 0.0, %v3824
  %v3826 = vpop.f32.mrf.mxu0
  %3827 = vmatprep.mubr.f32.mxu0 0.0
  %3828 = vmatmul.mubr.f32.gmra.mxu0 %v3585
  %v3829 = vpop.f32.mrf.mxu0
  %v3830 = vadd.f32 0.0, %v3829
  %v3831 = vpop.f32.mrf.mxu0
  %3832 = vmatprep.mubr.f32.mxu0 0.0
  %3833 = vmatmul.mubr.f32.gmra.mxu0 %v3588
  %v3834 = vpop.f32.mrf.mxu0
  %v3835 = vadd.f32 0.0, %v3834
  %v3836 = vpop.f32.mrf.mxu0
  %3837 = vmatprep.mubr.f32.mxu0 0.0
  %3838 = vmatmul.mubr.f32.gmra.mxu0 %v3591
  %v3839 = vpop.f32.mrf.mxu0
  %v3840 = vadd.f32 0.0, %v3839
  %v3841 = vpop.f32.mrf.mxu0
  %3842 = vmatprep.mubr.f32.mxu0 0.0
  %3843 = vmatmul.mubr.f32.gmra.mxu0 %v3594
  %v3844 = vpop.f32.mrf.mxu0
  %v3845 = vadd.f32 0.0, %v3844
  %v3846 = vpop.f32.mrf.mxu0
  %3847 = vmatprep.mubr.f32.mxu0 0.0
  %3848 = vmatmul.mubr.f32.gmra.mxu0 %v3597
  %v3849 = vpop.f32.mrf.mxu0
  %v3850 = vadd.f32 0.0, %v3849
  %v3851 = vpop.f32.mrf.mxu0
  %3852 = vmatprep.mubr.f32.mxu0 0.0
  %3853 = vmatmul.mubr.f32.gmra.mxu0 %v3600
  %v3854 = vpop.f32.mrf.mxu0
  %v3855 = vadd.f32 0.0, %v3854
  %v3856 = vpop.f32.mrf.mxu0
  %3857 = vmatprep.mubr.f32.mxu0 0.0
  %3858 = vmatmul.mubr.f32.gmra.mxu0 %v3603
  %v3859 = vpop.f32.mrf.mxu0
  %v3860 = vadd.f32 0.0, %v3859
  %v3861 = vpop.f32.mrf.mxu0
  %3862 = vmatprep.mubr.f32.mxu0 0.0
  %3863 = vmatmul.mubr.f32.gmra.mxu0 %v3606
  %v3864 = vpop.f32.mrf.mxu0
  %v3865 = vadd.f32 0.0, %v3864
  %v3866 = vpop.f32.mrf.mxu0
  %3867 = vmatprep.mubr.f32.mxu0 0.0
  %3868 = vmatmul.mubr.f32.gmra.mxu0 %v3609
  %v3869 = vpop.f32.mrf.mxu0
  %v3870 = vadd.f32 0.0, %v3869
  %v3871 = vpop.f32.mrf.mxu0
  %3872 = vmatprep.mubr.f32.mxu0 0.0
  %3873 = vmatmul.mubr.f32.gmra.mxu0 %v3612
  %v3874 = vpop.f32.mrf.mxu0
  %v3875 = vadd.f32 0.0, %v3874
  %v3876 = vpop.f32.mrf.mxu0
  %3877 = vmatprep.mubr.f32.mxu0 0.0
  %3878 = vmatmul.mubr.f32.gmra.mxu0 %v3615
  %v3879 = vpop.f32.mrf.mxu0
  %v3880 = vadd.f32 0.0, %v3879
  %v3881 = vpop.f32.mrf.mxu0
  %3882 = vmatprep.mubr.f32.mxu0 0.0
  %3883 = vmatmul.mubr.f32.gmra.mxu0 %v3618
  %v3884 = vpop.f32.mrf.mxu0
  %v3885 = vadd.f32 0.0, %v3884
  %v3886 = vpop.f32.mrf.mxu0
  %3887 = vmatprep.mubr.f32.mxu0 0.0
  %3888 = vmatmul.mubr.f32.gmra.mxu0 %v3621
  %v3889 = vpop.f32.mrf.mxu0
  %v3890 = vadd.f32 0.0, %v3889
  %v3891 = vpop.f32.mrf.mxu0
  %3892 = vmatprep.mubr.f32.mxu0 0.0
  %3893 = vmatmul.mubr.f32.gmra.mxu0 %v3624
  %v3894 = vpop.f32.mrf.mxu0
  %v3895 = vadd.f32 0.0, %v3894
  %v3896 = vpop.f32.mrf.mxu0
  %3897 = vmatprep.mubr.f32.mxu0 0.0
  %3898 = vmatmul.mubr.f32.gmra.mxu0 %v3627
  %v3899 = vpop.f32.mrf.mxu0
  %v3900 = vadd.f32 0.0, %v3899
  %v3901 = vpop.f32.mrf.mxu0
  %3902 = vmatprep.mubr.f32.mxu0 0.0
  %3903 = vmatmul.mubr.f32.gmra.mxu0 %v3630
  %v3904 = vpop.f32.mrf.mxu0
  %v3905 = vadd.f32 0.0, %v3904
  %v3906 = vpop.f32.mrf.mxu0
  %3907 = vmatprep.mubr.f32.mxu0 0.0
  %3908 = vmatmul.mubr.f32.gmra.mxu0 %v3633
  %v3909 = vpop.f32.mrf.mxu0
  %v3910 = vadd.f32 0.0, %v3909
  %v3911 = vpop.f32.mrf.mxu0
  %3912 = vmatprep.mubr.f32.mxu0 0.0
  %3913 = vmatmul.mubr.f32.gmra.mxu0 %v3636
  %v3914 = vpop.f32.mrf.mxu0
  %v3915 = vadd.f32 0.0, %v3914
  %v3916 = vpop.f32.mrf.mxu0
  %3917 = vmatprep.mubr.f32.mxu0 0.0
  %3918 = vmatmul.mubr.f32.gmra.mxu0 %v3639
  %v3919 = vpop.f32.mrf.mxu0
  %v3920 = vadd.f32 0.0, %v3919
  %v3921 = vpop.f32.mrf.mxu0
  %3922 = vmatprep.mubr.f32.mxu0 0.0
  %3923 = vmatmul.mubr.f32.gmra.mxu0 %v3642
  %v3924 = vpop.f32.mrf.mxu0
  %v3925 = vadd.f32 0.0, %v3924
  %v3926 = vpop.f32.mrf.mxu0
  %3927 = vmatprep.mubr.f32.mxu0 0.0
  %3928 = vmatmul.mubr.f32.gmra.mxu0 %v3645
  %v3929 = vpop.f32.mrf.mxu0
  %v3930 = vadd.f32 0.0, %v3929
  %v3931 = vpop.f32.mrf.mxu0
  %3932 = vmatprep.mubr.f32.mxu0 0.0
  %3933 = vmatmul.mubr.f32.gmra.mxu0 %v3648
  %v3934 = vpop.f32.mrf.mxu0
  %v3935 = vadd.f32 0.0, %v3934
  %v3936 = vpop.f32.mrf.mxu0
  %3937 = vmatprep.mubr.f32.mxu0 0.0
  %3938 = vmatmul.mubr.f32.gmra.mxu0 %v3651
  %v3939 = vpop.f32.mrf.mxu0
  %v3940 = vadd.f32 0.0, %v3939
  %v3941 = vpop.f32.mrf.mxu0
  %3942 = vmatprep.mubr.f32.mxu0 0.0
  %3943 = vmatmul.mubr.f32.gmra.mxu0 %v3654
  %v3944 = vpop.f32.mrf.mxu0
  %v3945 = vadd.f32 0.0, %v3944
  %v3946 = vpop.f32.mrf.mxu0
  %3947 = vmatprep.mubr.f32.mxu0 0.0
  %3948 = vmatmul.mubr.f32.gmra.mxu0 %v3657
  %v3949 = vpop.f32.mrf.mxu0
  %v3950 = vadd.f32 0.0, %v3949
  %v3951 = vpop.f32.mrf.mxu0
  %3952 = vmatprep.mubr.f32.mxu0 0.0
  %3953 = vmatmul.mubr.f32.gmra.mxu0 %v3660
  %v3954 = vpop.f32.mrf.mxu0
  %v3955 = vadd.f32 0.0, %v3954
  %v3956 = vpop.f32.mrf.mxu0
  %3957 = vmatprep.mubr.f32.mxu0 0.0
  %3958 = vmatmul.mubr.f32.gmra.mxu0 %v3663
  %v3959 = vpop.f32.mrf.mxu0
  %v3960 = vadd.f32 0.0, %v3959
  %v3961 = vpop.f32.mrf.mxu0
  %3962 = vmatprep.mubr.f32.mxu0 0.0
  %3963 = vmatmul.mubr.f32.gmra.mxu0 %v3666
  %v3964 = vpop.f32.mrf.mxu0
  %v3965 = vadd.f32 0.0, %v3964
  %v3966 = vpop.f32.mrf.mxu0
  %3967 = vmatprep.mubr.f32.mxu0 0.0
  %3968 = vmatmul.mubr.f32.gmra.mxu0 %v3669
  %v3969 = vpop.f32.mrf.mxu0
  %v3970 = vadd.f32 0.0, %v3969
  %v3971 = vpop.f32.mrf.mxu0
  %3972 = vmatprep.mubr.f32.mxu0 0.0
  %3973 = vmatmul.mubr.f32.gmra.mxu0 %v3672
  %v3974 = vpop.f32.mrf.mxu0
  %v3975 = vadd.f32 0.0, %v3974
  %v3976 = vpop.f32.mrf.mxu0
  %3977 = vmatprep.mubr.f32.mxu0 0.0
  %3978 = vmatmul.mubr.f32.gmra.mxu0 %v3675
  %v3979 = vpop.f32.mrf.mxu0
  %v3980 = vadd.f32 0.0, %v3979
  %v3981 = vpop.f32.mrf.mxu0
  %3982 = vmatprep.mubr.f32.mxu0 0.0
  %3983 = vmatmul.mubr.f32.gmra.mxu0 %v3678
  %v3984 = vpop.f32.mrf.mxu0
  %v3985 = vadd.f32 0.0, %v3984
  %v3986 = vpop.f32.mrf.mxu0
  %3987 = vmatprep.mubr.f32.mxu0 0.0
  %3988 = vmatmul.mubr.f32.gmra.mxu0 %v3681
  %v3989 = vpop.f32.mrf.mxu0
  %v3990 = vadd.f32 0.0, %v3989
  %v3991 = vpop.f32.mrf.mxu0
  %3992 = vmatprep.mubr.f32.mxu0 0.0
  %3993 = vmatmul.mubr.f32.gmra.mxu0 %v3684
  %v3994 = vpop.f32.mrf.mxu0
  %v3995 = vadd.f32 0.0, %v3994
  %v3996 = vpop.f32.mrf.mxu0
  %3997 = vmatprep.mubr.f32.mxu0 0.0
  %3998 = vmatmul.mubr.f32.gmra.mxu0 %v3687
  %v3999 = vpop.f32.mrf.mxu0
  %v4000 = vadd.f32 0.0, %v3999
  %v4001 = vpop.f32.mrf.mxu0
  %4002 = vmatprep.mubr.f32.mxu0 0.0
  %4003 = vmatmul.mubr.f32.gmra.mxu0 %v3690
  %v4004 = vpop.f32.mrf.mxu0
  %v4005 = vadd.f32 0.0, %v4004
  %v4006 = vpop.f32.mrf.mxu0
  %4007 = vmatprep.mubr.f32.mxu0 0.0
  %4008 = vmatmul.mubr.f32.gmra.mxu0 %v3693
  %v4009 = vpop.f32.mrf.mxu0
  %v4010 = vadd.f32 0.0, %v4009
  %v4011 = vpop.f32.mrf.mxu0
  %4012 = vmatprep.mubr.f32.mxu0 0.0
  %4013 = vmatmul.mubr.f32.gmra.mxu0 %v3696
  %v4014 = vpop.f32.mrf.mxu0
  %v4015 = vadd.f32 0.0, %v4014
  %v4016 = vpop.f32.mrf.mxu0
  %4017 = vmatprep.mubr.f32.mxu0 0.0
  %4018 = vmatmul.mubr.f32.gmra.mxu0 %v3699
  %v4019 = vpop.f32.mrf.mxu0
  %v4020 = vadd.f32 0.0, %v4019
  %v4021 = vpop.f32.mrf.mxu0
  %4022 = vmatprep.mubr.f32.mxu0 0.0
  %4023 = vmatmul.mubr.f32.gmra.mxu0 %v3702
  %v4024 = vpop.f32.mrf.mxu0
  %v4025 = vadd.f32 0.0, %v4024
  %v4026 = vpop.f32.mrf.mxu0
  %4027 = vmatprep.mubr.f32.mxu0 0.0
  %4028 = vmatmul.mubr.f32.gmra.mxu0 %v3705
  %v4029 = vpop.f32.mrf.mxu0
  %v4030 = vadd.f32 0.0, %v4029
  %v4031 = vpop.f32.mrf.mxu0
  %4032 = vmatprep.mubr.f32.mxu0 0.0
  %4033 = vmatmul.mubr.f32.gmra.mxu0 %v3708
  %v4034 = vpop.f32.mrf.mxu0
  %v4035 = vadd.f32 0.0, %v4034
  %v4036 = vpop.f32.mrf.mxu0
  %4037 = vmatprep.mubr.f32.mxu0 0.0
  %4038 = vmatmul.mubr.f32.gmra.mxu0 %v3711
  %v4039 = vpop.f32.mrf.mxu0
  %v4040 = vadd.f32 0.0, %v4039
  %v4041 = vpop.f32.mrf.mxu0
  %4042 = vdwg.mxu0
  %v4043 = vadd.f32 %v3446, %v3780
  %v4044 = vadd.f32 %v3447, %v3785
  %v4045 = vadd.f32 %v3448, %v3790
  %v4046 = vadd.f32 %v3449, %v3795
  %v4047 = vadd.f32 %v3450, %v3800
  %v4048 = vadd.f32 %v3451, %v3805
  %v4049 = vadd.f32 %v3452, %v3810
  %v4050 = vadd.f32 %v3453, %v3815
  %v4051 = vadd.f32 %v3454, %v3820
  %v4052 = vadd.f32 %v3455, %v3825
  %v4053 = vadd.f32 %v3456, %v3830
  %v4054 = vadd.f32 %v3457, %v3835
  %v4055 = vadd.f32 %v3458, %v3840
  %v4056 = vadd.f32 %v3459, %v3845
  %v4057 = vadd.f32 %v3460, %v3850
  %v4058 = vadd.f32 %v3461, %v3855
  %v4059 = vadd.f32 %v3462, %v3860
  %v4060 = vadd.f32 %v3463, %v3865
  %v4061 = vadd.f32 %v3464, %v3870
  %v4062 = vadd.f32 %v3465, %v3875
  %v4063 = vadd.f32 %v3466, %v3880
  %v4064 = vadd.f32 %v3467, %v3885
  %v4065 = vadd.f32 %v3468, %v3890
  %v4066 = vadd.f32 %v3469, %v3895
  %v4067 = vadd.f32 %v3470, %v3900
  %v4068 = vadd.f32 %v3471, %v3905
  %v4069 = vadd.f32 %v3472, %v3910
  %v4070 = vadd.f32 %v3473, %v3915
  %v4071 = vadd.f32 %v3474, %v3920
  %v4072 = vadd.f32 %v3475, %v3925
  %v4073 = vadd.f32 %v3476, %v3930
  %v4074 = vadd.f32 %v3477, %v3935
  %v4075 = vadd.f32 %v3478, %v3940
  %v4076 = vadd.f32 %v3479, %v3945
  %v4077 = vadd.f32 %v3480, %v3950
  %v4078 = vadd.f32 %v3481, %v3955
  %v4079 = vadd.f32 %v3482, %v3960
  %v4080 = vadd.f32 %v3483, %v3965
  %v4081 = vadd.f32 %v3484, %v3970
  %v4082 = vadd.f32 %v3485, %v3975
  %v4083 = vadd.f32 %v3486, %v3980
  %v4084 = vadd.f32 %v3487, %v3985
  %v4085 = vadd.f32 %v3488, %v3990
  %v4086 = vadd.f32 %v3489, %v3995
  %v4087 = vadd.f32 %v3490, %v4000
  %v4088 = vadd.f32 %v3491, %v4005
  %v4089 = vadd.f32 %v3492, %v4010
  %v4090 = vadd.f32 %v3493, %v4015
  %v4091 = vadd.f32 %v3494, %v4020
  %v4092 = vadd.f32 %v3495, %v4025
  %v4093 = vadd.f32 %v3496, %v4030
  %v4094 = vadd.f32 %v3497, %v4035
  %v4095 = vadd.f32 %v3498, %v4040
  %v4096 = vld [vmem:[%s0 + $0x1d] sm:$0xff]
  %v4097 = vld [vmem:[%s0 + $0x25] sm:$0xff]
  %v4098 = vld [vmem:[%s0 + $0x2d] sm:$0xff]
  %v4099 = vld [vmem:[%s0 + $0x35] sm:$0xff]
  %v4100 = vld [vmem:[%s0 + $0x3d] sm:$0xff]
  %v4101 = vld [vmem:[%s0 + $0x45] sm:$0xff]
  %v4102 = vld [vmem:[%s0 + $0x4d] sm:$0xff]
  %v4103 = vld [vmem:[%s0 + $0x55] sm:$0xff]
  %v4104 = vld [vmem:[%s0 + $0x5d] sm:$0xff]
  %v4105 = vld [vmem:[%s0 + $0x65] sm:$0xff]
  %v4106 = vld [vmem:[%s0 + $0x6d] sm:$0xff]
  %v4107 = vld [vmem:[%s0 + $0x75] sm:$0xff]
  %v4108 = vld [vmem:[%s0 + $0x7d] sm:$0xff]
  %v4109 = vld [vmem:[%s0 + $0x85] sm:$0xff]
  %v4110 = vld [vmem:[%s0 + $0x8d] sm:$0xff]
  %v4111 = vld [vmem:[%s0 + $0x95] sm:$0xff]
  %v4112 = vld [vmem:[%s0 + $0x9d] sm:$0xff]
  %v4113 = vld [vmem:[%s0 + $0xa5] sm:$0xff]
  %v4114 = vld [vmem:[%s0 + $0xad] sm:$0xff]
  %v4115 = vld [vmem:[%s0 + $0xb5] sm:$0xff]
  %v4116 = vld [vmem:[%s0 + $0xbd] sm:$0xff]
  %v4117 = vld [vmem:[%s0 + $0xc5] sm:$0xff]
  %v4118 = vld [vmem:[%s0 + $0xcd] sm:$0xff]
  %v4119 = vld [vmem:[%s0 + $0xd5] sm:$0xff]
  %v4120 = vld [vmem:[%s0 + $0xdd] sm:$0xff]
  %v4121 = vld [vmem:[%s0 + $0xe5] sm:$0xff]
  %v4122 = vld [vmem:[%s0 + $0xed] sm:$0xff]
  %v4123 = vld [vmem:[%s0 + $0xf5] sm:$0xff]
  %v4124 = vld [vmem:[%s0 + $0xfd] sm:$0xff]
  %v4125 = vld [vmem:[%s0 + $0x105] sm:$0xff]
  %v4126 = vld [vmem:[%s0 + $0x10d] sm:$0xff]
  %v4127 = vld [vmem:[%s0 + $0x115] sm:$0xff]
  %v4128 = vld [vmem:[%s0 + $0x11d] sm:$0xff]
  %v4129 = vld [vmem:[%s0 + $0x125] sm:$0xff]
  %v4130 = vld [vmem:[%s0 + $0x12d] sm:$0xff]
  %v4131 = vld [vmem:[%s0 + $0x135] sm:$0xff]
  %v4132 = vld [vmem:[%s0 + $0x13d] sm:$0xff]
  %v4133 = vld [vmem:[%s0 + $0x145] sm:$0xff]
  %v4134 = vld [vmem:[%s0 + $0x14d] sm:$0xff]
  %v4135 = vld [vmem:[%s0 + $0x155] sm:$0xff]
  %v4136 = vld [vmem:[%s0 + $0x15d] sm:$0xff]
  %v4137 = vld [vmem:[%s0 + $0x165] sm:$0xff]
  %v4138 = vld [vmem:[%s0 + $0x16d] sm:$0xff]
  %v4139 = vld [vmem:[%s0 + $0x175] sm:$0xff]
  %v4140 = vld [vmem:[%s0 + $0x17d] sm:$0xff]
  %v4141 = vld [vmem:[%s0 + $0x185] sm:$0xff]
  %v4142 = vld [vmem:[%s0 + $0x18d] sm:$0xff]
  %v4143 = vld [vmem:[%s0 + $0x195] sm:$0xff]
  %v4144 = vld [vmem:[%s0 + $0x19d] sm:$0xff]
  %v4145 = vld [vmem:[%s0 + $0x1a5] sm:$0xff]
  %v4146 = vld [vmem:[%s0 + $0x1ad] sm:$0xff]
  %v4147 = vld [vmem:[%s0 + $0x1b5] sm:$0xff]
  %v4148 = vld [vmem:[%s0 + $0x1bd] sm:$0xff]
  %s4149 = scalar_lea.vmem %s2, 56
  %v4150 = vld [vmem:[%s4149] sm:$0xff]
  %v4152 = vsel %vm132, %v4096, 0
  %v4155 = vsel %vm132, %v4097, 0
  %v4158 = vsel %vm132, %v4098, 0
  %v4161 = vsel %vm132, %v4099, 0
  %v4164 = vsel %vm132, %v4100, 0
  %v4167 = vsel %vm132, %v4101, 0
  %v4170 = vsel %vm132, %v4102, 0
  %v4173 = vsel %vm132, %v4103, 0
  %v4176 = vsel %vm132, %v4104, 0
  %v4179 = vsel %vm132, %v4105, 0
  %v4182 = vsel %vm132, %v4106, 0
  %v4185 = vsel %vm132, %v4107, 0
  %v4188 = vsel %vm132, %v4108, 0
  %v4191 = vsel %vm132, %v4109, 0
  %v4194 = vsel %vm132, %v4110, 0
  %v4197 = vsel %vm132, %v4111, 0
  %v4200 = vsel %vm132, %v4112, 0
  %v4203 = vsel %vm132, %v4113, 0
  %v4206 = vsel %vm132, %v4114, 0
  %v4209 = vsel %vm132, %v4115, 0
  %v4212 = vsel %vm132, %v4116, 0
  %v4215 = vsel %vm132, %v4117, 0
  %v4218 = vsel %vm132, %v4118, 0
  %v4221 = vsel %vm132, %v4119, 0
  %v4224 = vsel %vm132, %v4120, 0
  %v4227 = vsel %vm132, %v4121, 0
  %v4230 = vsel %vm132, %v4122, 0
  %v4233 = vsel %vm132, %v4123, 0
  %v4236 = vsel %vm132, %v4124, 0
  %v4239 = vsel %vm132, %v4125, 0
  %v4242 = vsel %vm132, %v4126, 0
  %v4245 = vsel %vm132, %v4127, 0
  %v4248 = vsel %vm132, %v4128, 0
  %v4251 = vsel %vm132, %v4129, 0
  %v4254 = vsel %vm132, %v4130, 0
  %v4257 = vsel %vm132, %v4131, 0
  %v4260 = vsel %vm132, %v4132, 0
  %v4263 = vsel %vm132, %v4133, 0
  %v4266 = vsel %vm132, %v4134, 0
  %v4269 = vsel %vm132, %v4135, 0
  %v4272 = vsel %vm132, %v4136, 0
  %v4275 = vsel %vm132, %v4137, 0
  %v4278 = vsel %vm132, %v4138, 0
  %v4281 = vsel %vm132, %v4139, 0
  %v4284 = vsel %vm132, %v4140, 0
  %v4287 = vsel %vm132, %v4141, 0
  %v4290 = vsel %vm132, %v4142, 0
  %v4293 = vsel %vm132, %v4143, 0
  %v4296 = vsel %vm132, %v4144, 0
  %v4299 = vsel %vm132, %v4145, 0
  %v4302 = vsel %vm132, %v4146, 0
  %v4305 = vsel %vm132, %v4147, 0
  %v4308 = vsel %vm132, %v4148, 0
  %4310 = vmatprep.subr.mxu0 0.0
  %4311 = vmatpush1.msra.mxu0 0.0
  %4312 = vmatprep.subr.mxu0 0.0
  %4313 = vmatpush1.msra.mxu0 0.0
  %4314 = vmatprep.subr.mxu0 0.0
  %4315 = vmatpush1.msra.mxu0 0.0
  %4316 = vmatprep.subr.mxu0 0.0
  %4317 = vmatpush1.msra.mxu0 0.0
  %4318 = vmatprep.subr.mxu0 0.0
  %4319 = vmatpush1.msra.mxu0 0.0
  %4320 = vmatprep.subr.mxu0 0.0
  %4321 = vmatpush1.msra.mxu0 0.0
  %4322 = vmatprep.subr.mxu0 0.0
  %4323 = vmatpush1.msra.mxu0 0.0
  %4324 = vmatprep.subr.mxu0 0.0
  %4325 = vmatpush1.msra.mxu0 0.0
  %4326 = vmatprep.subr.mxu0 0.0
  %4327 = vmatpush1.msra.mxu0 0.0
  %4328 = vmatprep.subr.mxu0 0.0
  %4329 = vmatpush1.msra.mxu0 0.0
  %4330 = vmatprep.subr.mxu0 0.0
  %4331 = vmatpush1.msra.mxu0 0.0
  %4332 = vmatprep.subr.mxu0 0.0
  %4333 = vmatpush1.msra.mxu0 0.0
  %4334 = vmatprep.subr.mxu0 0.0
  %4335 = vmatpush1.msra.mxu0 0.0
  %4336 = vmatprep.subr.mxu0 0.0
  %4337 = vmatpush1.msra.mxu0 0.0
  %4338 = vmatprep.subr.mxu0 0.0
  %4339 = vmatpush1.msra.mxu0 0.0
  %4340 = vmatprep.subr.mxu0 0.0
  %4341 = vmatpush1.msra.mxu0 %v4150
  %4342 = vmatprep.subr.mxu0 0.0
  %4343 = vmatpush2.msra.mxu0 0.0
  %4344 = vmatprep.subr.mxu0 0.0
  %4345 = vmatpush2.msra.mxu0 0.0
  %4346 = vmatprep.subr.mxu0 0.0
  %4347 = vmatpush2.msra.mxu0 0.0
  %4348 = vmatprep.subr.mxu0 0.0
  %4349 = vmatpush2.msra.mxu0 0.0
  %4350 = vmatprep.subr.mxu0 0.0
  %4351 = vmatpush2.msra.mxu0 0.0
  %4352 = vmatprep.subr.mxu0 0.0
  %4353 = vmatpush2.msra.mxu0 0.0
  %4354 = vmatprep.subr.mxu0 0.0
  %4355 = vmatpush2.msra.mxu0 0.0
  %4356 = vmatprep.subr.mxu0 0.0
  %4357 = vmatpush2.msra.mxu0 0.0
  %4358 = vmatprep.subr.mxu0 0.0
  %4359 = vmatpush2.msra.mxu0 0.0
  %4360 = vmatprep.subr.mxu0 0.0
  %4361 = vmatpush2.msra.mxu0 0.0
  %4362 = vmatprep.subr.mxu0 0.0
  %4363 = vmatpush2.msra.mxu0 0.0
  %4364 = vmatprep.subr.mxu0 0.0
  %4365 = vmatpush2.msra.mxu0 0.0
  %4366 = vmatprep.subr.mxu0 0.0
  %4367 = vmatpush2.msra.mxu0 0.0
  %4368 = vmatprep.subr.mxu0 0.0
  %4369 = vmatpush2.msra.mxu0 0.0
  %4370 = vmatprep.subr.mxu0 0.0
  %4371 = vmatpush2.msra.mxu0 0.0
  %4372 = vmatprep.subr.mxu0 0.0
  %4373 = vmatpush2.msra.mxu0 0.0
  %4374 = vmatprep.mubr.f32.mxu0 0.0
  %4375 = vmatmul.mubr.f32.gmra.mxu0 %v4152
  %v4376 = vpop.f32.mrf.mxu0
  %v4377 = vadd.f32 0.0, %v4376
  %v4378 = vpop.f32.mrf.mxu0
  %4379 = vmatprep.mubr.f32.mxu0 0.0
  %4380 = vmatmul.mubr.f32.gmra.mxu0 %v4155
  %v4381 = vpop.f32.mrf.mxu0
  %v4382 = vadd.f32 0.0, %v4381
  %v4383 = vpop.f32.mrf.mxu0
  %4384 = vmatprep.mubr.f32.mxu0 0.0
  %4385 = vmatmul.mubr.f32.gmra.mxu0 %v4158
  %v4386 = vpop.f32.mrf.mxu0
  %v4387 = vadd.f32 0.0, %v4386
  %v4388 = vpop.f32.mrf.mxu0
  %4389 = vmatprep.mubr.f32.mxu0 0.0
  %4390 = vmatmul.mubr.f32.gmra.mxu0 %v4161
  %v4391 = vpop.f32.mrf.mxu0
  %v4392 = vadd.f32 0.0, %v4391
  %v4393 = vpop.f32.mrf.mxu0
  %4394 = vmatprep.mubr.f32.mxu0 0.0
  %4395 = vmatmul.mubr.f32.gmra.mxu0 %v4164
  %v4396 = vpop.f32.mrf.mxu0
  %v4397 = vadd.f32 0.0, %v4396
  %v4398 = vpop.f32.mrf.mxu0
  %4399 = vmatprep.mubr.f32.mxu0 0.0
  %4400 = vmatmul.mubr.f32.gmra.mxu0 %v4167
  %v4401 = vpop.f32.mrf.mxu0
  %v4402 = vadd.f32 0.0, %v4401
  %v4403 = vpop.f32.mrf.mxu0
  %4404 = vmatprep.mubr.f32.mxu0 0.0
  %4405 = vmatmul.mubr.f32.gmra.mxu0 %v4170
  %v4406 = vpop.f32.mrf.mxu0
  %v4407 = vadd.f32 0.0, %v4406
  %v4408 = vpop.f32.mrf.mxu0
  %4409 = vmatprep.mubr.f32.mxu0 0.0
  %4410 = vmatmul.mubr.f32.gmra.mxu0 %v4173
  %v4411 = vpop.f32.mrf.mxu0
  %v4412 = vadd.f32 0.0, %v4411
  %v4413 = vpop.f32.mrf.mxu0
  %4414 = vmatprep.mubr.f32.mxu0 0.0
  %4415 = vmatmul.mubr.f32.gmra.mxu0 %v4176
  %v4416 = vpop.f32.mrf.mxu0
  %v4417 = vadd.f32 0.0, %v4416
  %v4418 = vpop.f32.mrf.mxu0
  %4419 = vmatprep.mubr.f32.mxu0 0.0
  %4420 = vmatmul.mubr.f32.gmra.mxu0 %v4179
  %v4421 = vpop.f32.mrf.mxu0
  %v4422 = vadd.f32 0.0, %v4421
  %v4423 = vpop.f32.mrf.mxu0
  %4424 = vmatprep.mubr.f32.mxu0 0.0
  %4425 = vmatmul.mubr.f32.gmra.mxu0 %v4182
  %v4426 = vpop.f32.mrf.mxu0
  %v4427 = vadd.f32 0.0, %v4426
  %v4428 = vpop.f32.mrf.mxu0
  %4429 = vmatprep.mubr.f32.mxu0 0.0
  %4430 = vmatmul.mubr.f32.gmra.mxu0 %v4185
  %v4431 = vpop.f32.mrf.mxu0
  %v4432 = vadd.f32 0.0, %v4431
  %v4433 = vpop.f32.mrf.mxu0
  %4434 = vmatprep.mubr.f32.mxu0 0.0
  %4435 = vmatmul.mubr.f32.gmra.mxu0 %v4188
  %v4436 = vpop.f32.mrf.mxu0
  %v4437 = vadd.f32 0.0, %v4436
  %v4438 = vpop.f32.mrf.mxu0
  %4439 = vmatprep.mubr.f32.mxu0 0.0
  %4440 = vmatmul.mubr.f32.gmra.mxu0 %v4191
  %v4441 = vpop.f32.mrf.mxu0
  %v4442 = vadd.f32 0.0, %v4441
  %v4443 = vpop.f32.mrf.mxu0
  %4444 = vmatprep.mubr.f32.mxu0 0.0
  %4445 = vmatmul.mubr.f32.gmra.mxu0 %v4194
  %v4446 = vpop.f32.mrf.mxu0
  %v4447 = vadd.f32 0.0, %v4446
  %v4448 = vpop.f32.mrf.mxu0
  %4449 = vmatprep.mubr.f32.mxu0 0.0
  %4450 = vmatmul.mubr.f32.gmra.mxu0 %v4197
  %v4451 = vpop.f32.mrf.mxu0
  %v4452 = vadd.f32 0.0, %v4451
  %v4453 = vpop.f32.mrf.mxu0
  %4454 = vmatprep.mubr.f32.mxu0 0.0
  %4455 = vmatmul.mubr.f32.gmra.mxu0 %v4200
  %v4456 = vpop.f32.mrf.mxu0
  %v4457 = vadd.f32 0.0, %v4456
  %v4458 = vpop.f32.mrf.mxu0
  %4459 = vmatprep.mubr.f32.mxu0 0.0
  %4460 = vmatmul.mubr.f32.gmra.mxu0 %v4203
  %v4461 = vpop.f32.mrf.mxu0
  %v4462 = vadd.f32 0.0, %v4461
  %v4463 = vpop.f32.mrf.mxu0
  %4464 = vmatprep.mubr.f32.mxu0 0.0
  %4465 = vmatmul.mubr.f32.gmra.mxu0 %v4206
  %v4466 = vpop.f32.mrf.mxu0
  %v4467 = vadd.f32 0.0, %v4466
  %v4468 = vpop.f32.mrf.mxu0
  %4469 = vmatprep.mubr.f32.mxu0 0.0
  %4470 = vmatmul.mubr.f32.gmra.mxu0 %v4209
  %v4471 = vpop.f32.mrf.mxu0
  %v4472 = vadd.f32 0.0, %v4471
  %v4473 = vpop.f32.mrf.mxu0
  %4474 = vmatprep.mubr.f32.mxu0 0.0
  %4475 = vmatmul.mubr.f32.gmra.mxu0 %v4212
  %v4476 = vpop.f32.mrf.mxu0
  %v4477 = vadd.f32 0.0, %v4476
  %v4478 = vpop.f32.mrf.mxu0
  %4479 = vmatprep.mubr.f32.mxu0 0.0
  %4480 = vmatmul.mubr.f32.gmra.mxu0 %v4215
  %v4481 = vpop.f32.mrf.mxu0
  %v4482 = vadd.f32 0.0, %v4481
  %v4483 = vpop.f32.mrf.mxu0
  %4484 = vmatprep.mubr.f32.mxu0 0.0
  %4485 = vmatmul.mubr.f32.gmra.mxu0 %v4218
  %v4486 = vpop.f32.mrf.mxu0
  %v4487 = vadd.f32 0.0, %v4486
  %v4488 = vpop.f32.mrf.mxu0
  %4489 = vmatprep.mubr.f32.mxu0 0.0
  %4490 = vmatmul.mubr.f32.gmra.mxu0 %v4221
  %v4491 = vpop.f32.mrf.mxu0
  %v4492 = vadd.f32 0.0, %v4491
  %v4493 = vpop.f32.mrf.mxu0
  %4494 = vmatprep.mubr.f32.mxu0 0.0
  %4495 = vmatmul.mubr.f32.gmra.mxu0 %v4224
  %v4496 = vpop.f32.mrf.mxu0
  %v4497 = vadd.f32 0.0, %v4496
  %v4498 = vpop.f32.mrf.mxu0
  %4499 = vmatprep.mubr.f32.mxu0 0.0
  %4500 = vmatmul.mubr.f32.gmra.mxu0 %v4227
  %v4501 = vpop.f32.mrf.mxu0
  %v4502 = vadd.f32 0.0, %v4501
  %v4503 = vpop.f32.mrf.mxu0
  %4504 = vmatprep.mubr.f32.mxu0 0.0
  %4505 = vmatmul.mubr.f32.gmra.mxu0 %v4230
  %v4506 = vpop.f32.mrf.mxu0
  %v4507 = vadd.f32 0.0, %v4506
  %v4508 = vpop.f32.mrf.mxu0
  %4509 = vmatprep.mubr.f32.mxu0 0.0
  %4510 = vmatmul.mubr.f32.gmra.mxu0 %v4233
  %v4511 = vpop.f32.mrf.mxu0
  %v4512 = vadd.f32 0.0, %v4511
  %v4513 = vpop.f32.mrf.mxu0
  %4514 = vmatprep.mubr.f32.mxu0 0.0
  %4515 = vmatmul.mubr.f32.gmra.mxu0 %v4236
  %v4516 = vpop.f32.mrf.mxu0
  %v4517 = vadd.f32 0.0, %v4516
  %v4518 = vpop.f32.mrf.mxu0
  %4519 = vmatprep.mubr.f32.mxu0 0.0
  %4520 = vmatmul.mubr.f32.gmra.mxu0 %v4239
  %v4521 = vpop.f32.mrf.mxu0
  %v4522 = vadd.f32 0.0, %v4521
  %v4523 = vpop.f32.mrf.mxu0
  %4524 = vmatprep.mubr.f32.mxu0 0.0
  %4525 = vmatmul.mubr.f32.gmra.mxu0 %v4242
  %v4526 = vpop.f32.mrf.mxu0
  %v4527 = vadd.f32 0.0, %v4526
  %v4528 = vpop.f32.mrf.mxu0
  %4529 = vmatprep.mubr.f32.mxu0 0.0
  %4530 = vmatmul.mubr.f32.gmra.mxu0 %v4245
  %v4531 = vpop.f32.mrf.mxu0
  %v4532 = vadd.f32 0.0, %v4531
  %v4533 = vpop.f32.mrf.mxu0
  %4534 = vmatprep.mubr.f32.mxu0 0.0
  %4535 = vmatmul.mubr.f32.gmra.mxu0 %v4248
  %v4536 = vpop.f32.mrf.mxu0
  %v4537 = vadd.f32 0.0, %v4536
  %v4538 = vpop.f32.mrf.mxu0
  %4539 = vmatprep.mubr.f32.mxu0 0.0
  %4540 = vmatmul.mubr.f32.gmra.mxu0 %v4251
  %v4541 = vpop.f32.mrf.mxu0
  %v4542 = vadd.f32 0.0, %v4541
  %v4543 = vpop.f32.mrf.mxu0
  %4544 = vmatprep.mubr.f32.mxu0 0.0
  %4545 = vmatmul.mubr.f32.gmra.mxu0 %v4254
  %v4546 = vpop.f32.mrf.mxu0
  %v4547 = vadd.f32 0.0, %v4546
  %v4548 = vpop.f32.mrf.mxu0
  %4549 = vmatprep.mubr.f32.mxu0 0.0
  %4550 = vmatmul.mubr.f32.gmra.mxu0 %v4257
  %v4551 = vpop.f32.mrf.mxu0
  %v4552 = vadd.f32 0.0, %v4551
  %v4553 = vpop.f32.mrf.mxu0
  %4554 = vmatprep.mubr.f32.mxu0 0.0
  %4555 = vmatmul.mubr.f32.gmra.mxu0 %v4260
  %v4556 = vpop.f32.mrf.mxu0
  %v4557 = vadd.f32 0.0, %v4556
  %v4558 = vpop.f32.mrf.mxu0
  %4559 = vmatprep.mubr.f32.mxu0 0.0
  %4560 = vmatmul.mubr.f32.gmra.mxu0 %v4263
  %v4561 = vpop.f32.mrf.mxu0
  %v4562 = vadd.f32 0.0, %v4561
  %v4563 = vpop.f32.mrf.mxu0
  %4564 = vmatprep.mubr.f32.mxu0 0.0
  %4565 = vmatmul.mubr.f32.gmra.mxu0 %v4266
  %v4566 = vpop.f32.mrf.mxu0
  %v4567 = vadd.f32 0.0, %v4566
  %v4568 = vpop.f32.mrf.mxu0
  %4569 = vmatprep.mubr.f32.mxu0 0.0
  %4570 = vmatmul.mubr.f32.gmra.mxu0 %v4269
  %v4571 = vpop.f32.mrf.mxu0
  %v4572 = vadd.f32 0.0, %v4571
  %v4573 = vpop.f32.mrf.mxu0
  %4574 = vmatprep.mubr.f32.mxu0 0.0
  %4575 = vmatmul.mubr.f32.gmra.mxu0 %v4272
  %v4576 = vpop.f32.mrf.mxu0
  %v4577 = vadd.f32 0.0, %v4576
  %v4578 = vpop.f32.mrf.mxu0
  %4579 = vmatprep.mubr.f32.mxu0 0.0
  %4580 = vmatmul.mubr.f32.gmra.mxu0 %v4275
  %v4581 = vpop.f32.mrf.mxu0
  %v4582 = vadd.f32 0.0, %v4581
  %v4583 = vpop.f32.mrf.mxu0
  %4584 = vmatprep.mubr.f32.mxu0 0.0
  %4585 = vmatmul.mubr.f32.gmra.mxu0 %v4278
  %v4586 = vpop.f32.mrf.mxu0
  %v4587 = vadd.f32 0.0, %v4586
  %v4588 = vpop.f32.mrf.mxu0
  %4589 = vmatprep.mubr.f32.mxu0 0.0
  %4590 = vmatmul.mubr.f32.gmra.mxu0 %v4281
  %v4591 = vpop.f32.mrf.mxu0
  %v4592 = vadd.f32 0.0, %v4591
  %v4593 = vpop.f32.mrf.mxu0
  %4594 = vmatprep.mubr.f32.mxu0 0.0
  %4595 = vmatmul.mubr.f32.gmra.mxu0 %v4284
  %v4596 = vpop.f32.mrf.mxu0
  %v4597 = vadd.f32 0.0, %v4596
  %v4598 = vpop.f32.mrf.mxu0
  %4599 = vmatprep.mubr.f32.mxu0 0.0
  %4600 = vmatmul.mubr.f32.gmra.mxu0 %v4287
  %v4601 = vpop.f32.mrf.mxu0
  %v4602 = vadd.f32 0.0, %v4601
  %v4603 = vpop.f32.mrf.mxu0
  %4604 = vmatprep.mubr.f32.mxu0 0.0
  %4605 = vmatmul.mubr.f32.gmra.mxu0 %v4290
  %v4606 = vpop.f32.mrf.mxu0
  %v4607 = vadd.f32 0.0, %v4606
  %v4608 = vpop.f32.mrf.mxu0
  %4609 = vmatprep.mubr.f32.mxu0 0.0
  %4610 = vmatmul.mubr.f32.gmra.mxu0 %v4293
  %v4611 = vpop.f32.mrf.mxu0
  %v4612 = vadd.f32 0.0, %v4611
  %v4613 = vpop.f32.mrf.mxu0
  %4614 = vmatprep.mubr.f32.mxu0 0.0
  %4615 = vmatmul.mubr.f32.gmra.mxu0 %v4296
  %v4616 = vpop.f32.mrf.mxu0
  %v4617 = vadd.f32 0.0, %v4616
  %v4618 = vpop.f32.mrf.mxu0
  %4619 = vmatprep.mubr.f32.mxu0 0.0
  %4620 = vmatmul.mubr.f32.gmra.mxu0 %v4299
  %v4621 = vpop.f32.mrf.mxu0
  %v4622 = vadd.f32 0.0, %v4621
  %v4623 = vpop.f32.mrf.mxu0
  %4624 = vmatprep.mubr.f32.mxu0 0.0
  %4625 = vmatmul.mubr.f32.gmra.mxu0 %v4302
  %v4626 = vpop.f32.mrf.mxu0
  %v4627 = vadd.f32 0.0, %v4626
  %v4628 = vpop.f32.mrf.mxu0
  %4629 = vmatprep.mubr.f32.mxu0 0.0
  %4630 = vmatmul.mubr.f32.gmra.mxu0 %v4305
  %v4631 = vpop.f32.mrf.mxu0
  %v4632 = vadd.f32 0.0, %v4631
  %v4633 = vpop.f32.mrf.mxu0
  %4634 = vmatprep.mubr.f32.mxu0 0.0
  %4635 = vmatmul.mubr.f32.gmra.mxu0 %v4308
  %v4636 = vpop.f32.mrf.mxu0
  %v4637 = vadd.f32 0.0, %v4636
  %v4638 = vpop.f32.mrf.mxu0
  %4639 = vdwg.mxu0
  %v4640 = vadd.f32 %v4043, %v4377
  %v4641 = vadd.f32 %v4044, %v4382
  %v4642 = vadd.f32 %v4045, %v4387
  %v4643 = vadd.f32 %v4046, %v4392
  %v4644 = vadd.f32 %v4047, %v4397
  %v4645 = vadd.f32 %v4048, %v4402
  %v4646 = vadd.f32 %v4049, %v4407
  %v4647 = vadd.f32 %v4050, %v4412
  %v4648 = vadd.f32 %v4051, %v4417
  %v4649 = vadd.f32 %v4052, %v4422
  %v4650 = vadd.f32 %v4053, %v4427
  %v4651 = vadd.f32 %v4054, %v4432
  %v4652 = vadd.f32 %v4055, %v4437
  %v4653 = vadd.f32 %v4056, %v4442
  %v4654 = vadd.f32 %v4057, %v4447
  %v4655 = vadd.f32 %v4058, %v4452
  %v4656 = vadd.f32 %v4059, %v4457
  %v4657 = vadd.f32 %v4060, %v4462
  %v4658 = vadd.f32 %v4061, %v4467
  %v4659 = vadd.f32 %v4062, %v4472
  %v4660 = vadd.f32 %v4063, %v4477
  %v4661 = vadd.f32 %v4064, %v4482
  %v4662 = vadd.f32 %v4065, %v4487
  %v4663 = vadd.f32 %v4066, %v4492
  %v4664 = vadd.f32 %v4067, %v4497
  %v4665 = vadd.f32 %v4068, %v4502
  %v4666 = vadd.f32 %v4069, %v4507
  %v4667 = vadd.f32 %v4070, %v4512
  %v4668 = vadd.f32 %v4071, %v4517
  %v4669 = vadd.f32 %v4072, %v4522
  %v4670 = vadd.f32 %v4073, %v4527
  %v4671 = vadd.f32 %v4074, %v4532
  %v4672 = vadd.f32 %v4075, %v4537
  %v4673 = vadd.f32 %v4076, %v4542
  %v4674 = vadd.f32 %v4077, %v4547
  %v4675 = vadd.f32 %v4078, %v4552
  %v4676 = vadd.f32 %v4079, %v4557
  %v4677 = vadd.f32 %v4080, %v4562
  %v4678 = vadd.f32 %v4081, %v4567
  %v4679 = vadd.f32 %v4082, %v4572
  %v4680 = vadd.f32 %v4083, %v4577
  %v4681 = vadd.f32 %v4084, %v4582
  %v4682 = vadd.f32 %v4085, %v4587
  %v4683 = vadd.f32 %v4086, %v4592
  %v4684 = vadd.f32 %v4087, %v4597
  %v4685 = vadd.f32 %v4088, %v4602
  %v4686 = vadd.f32 %v4089, %v4607
  %v4687 = vadd.f32 %v4090, %v4612
  %v4688 = vadd.f32 %v4091, %v4617
  %v4689 = vadd.f32 %v4092, %v4622
  %v4690 = vadd.f32 %v4093, %v4627
  %v4691 = vadd.f32 %v4094, %v4632
  %v4692 = vadd.f32 %v4095, %v4637
  %v4693 = vld [vmem:[%s0 + $0x1e] sm:$0xff]
  %v4694 = vld [vmem:[%s0 + $0x26] sm:$0xff]
  %v4695 = vld [vmem:[%s0 + $0x2e] sm:$0xff]
  %v4696 = vld [vmem:[%s0 + $0x36] sm:$0xff]
  %v4697 = vld [vmem:[%s0 + $0x3e] sm:$0xff]
  %v4698 = vld [vmem:[%s0 + $0x46] sm:$0xff]
  %v4699 = vld [vmem:[%s0 + $0x4e] sm:$0xff]
  %v4700 = vld [vmem:[%s0 + $0x56] sm:$0xff]
  %v4701 = vld [vmem:[%s0 + $0x5e] sm:$0xff]
  %v4702 = vld [vmem:[%s0 + $0x66] sm:$0xff]
  %v4703 = vld [vmem:[%s0 + $0x6e] sm:$0xff]
  %v4704 = vld [vmem:[%s0 + $0x76] sm:$0xff]
  %v4705 = vld [vmem:[%s0 + $0x7e] sm:$0xff]
  %v4706 = vld [vmem:[%s0 + $0x86] sm:$0xff]
  %v4707 = vld [vmem:[%s0 + $0x8e] sm:$0xff]
  %v4708 = vld [vmem:[%s0 + $0x96] sm:$0xff]
  %v4709 = vld [vmem:[%s0 + $0x9e] sm:$0xff]
  %v4710 = vld [vmem:[%s0 + $0xa6] sm:$0xff]
  %v4711 = vld [vmem:[%s0 + $0xae] sm:$0xff]
  %v4712 = vld [vmem:[%s0 + $0xb6] sm:$0xff]
  %v4713 = vld [vmem:[%s0 + $0xbe] sm:$0xff]
  %v4714 = vld [vmem:[%s0 + $0xc6] sm:$0xff]
  %v4715 = vld [vmem:[%s0 + $0xce] sm:$0xff]
  %v4716 = vld [vmem:[%s0 + $0xd6] sm:$0xff]
  %v4717 = vld [vmem:[%s0 + $0xde] sm:$0xff]
  %v4718 = vld [vmem:[%s0 + $0xe6] sm:$0xff]
  %v4719 = vld [vmem:[%s0 + $0xee] sm:$0xff]
  %v4720 = vld [vmem:[%s0 + $0xf6] sm:$0xff]
  %v4721 = vld [vmem:[%s0 + $0xfe] sm:$0xff]
  %v4722 = vld [vmem:[%s0 + $0x106] sm:$0xff]
  %v4723 = vld [vmem:[%s0 + $0x10e] sm:$0xff]
  %v4724 = vld [vmem:[%s0 + $0x116] sm:$0xff]
  %v4725 = vld [vmem:[%s0 + $0x11e] sm:$0xff]
  %v4726 = vld [vmem:[%s0 + $0x126] sm:$0xff]
  %v4727 = vld [vmem:[%s0 + $0x12e] sm:$0xff]
  %v4728 = vld [vmem:[%s0 + $0x136] sm:$0xff]
  %v4729 = vld [vmem:[%s0 + $0x13e] sm:$0xff]
  %v4730 = vld [vmem:[%s0 + $0x146] sm:$0xff]
  %v4731 = vld [vmem:[%s0 + $0x14e] sm:$0xff]
  %v4732 = vld [vmem:[%s0 + $0x156] sm:$0xff]
  %v4733 = vld [vmem:[%s0 + $0x15e] sm:$0xff]
  %v4734 = vld [vmem:[%s0 + $0x166] sm:$0xff]
  %v4735 = vld [vmem:[%s0 + $0x16e] sm:$0xff]
  %v4736 = vld [vmem:[%s0 + $0x176] sm:$0xff]
  %v4737 = vld [vmem:[%s0 + $0x17e] sm:$0xff]
  %v4738 = vld [vmem:[%s0 + $0x186] sm:$0xff]
  %v4739 = vld [vmem:[%s0 + $0x18e] sm:$0xff]
  %v4740 = vld [vmem:[%s0 + $0x196] sm:$0xff]
  %v4741 = vld [vmem:[%s0 + $0x19e] sm:$0xff]
  %v4742 = vld [vmem:[%s0 + $0x1a6] sm:$0xff]
  %v4743 = vld [vmem:[%s0 + $0x1ae] sm:$0xff]
  %v4744 = vld [vmem:[%s0 + $0x1b6] sm:$0xff]
  %v4745 = vld [vmem:[%s0 + $0x1be] sm:$0xff]
  %s4746 = scalar_lea.vmem %s2, 64
  %v4747 = vld [vmem:[%s4746] sm:$0xff]
  %v4749 = vsel %vm132, %v4693, 0
  %v4752 = vsel %vm132, %v4694, 0
  %v4755 = vsel %vm132, %v4695, 0
  %v4758 = vsel %vm132, %v4696, 0
  %v4761 = vsel %vm132, %v4697, 0
  %v4764 = vsel %vm132, %v4698, 0
  %v4767 = vsel %vm132, %v4699, 0
  %v4770 = vsel %vm132, %v4700, 0
  %v4773 = vsel %vm132, %v4701, 0
  %v4776 = vsel %vm132, %v4702, 0
  %v4779 = vsel %vm132, %v4703, 0
  %v4782 = vsel %vm132, %v4704, 0
  %v4785 = vsel %vm132, %v4705, 0
  %v4788 = vsel %vm132, %v4706, 0
  %v4791 = vsel %vm132, %v4707, 0
  %v4794 = vsel %vm132, %v4708, 0
  %v4797 = vsel %vm132, %v4709, 0
  %v4800 = vsel %vm132, %v4710, 0
  %v4803 = vsel %vm132, %v4711, 0
  %v4806 = vsel %vm132, %v4712, 0
  %v4809 = vsel %vm132, %v4713, 0
  %v4812 = vsel %vm132, %v4714, 0
  %v4815 = vsel %vm132, %v4715, 0
  %v4818 = vsel %vm132, %v4716, 0
  %v4821 = vsel %vm132, %v4717, 0
  %v4824 = vsel %vm132, %v4718, 0
  %v4827 = vsel %vm132, %v4719, 0
  %v4830 = vsel %vm132, %v4720, 0
  %v4833 = vsel %vm132, %v4721, 0
  %v4836 = vsel %vm132, %v4722, 0
  %v4839 = vsel %vm132, %v4723, 0
  %v4842 = vsel %vm132, %v4724, 0
  %v4845 = vsel %vm132, %v4725, 0
  %v4848 = vsel %vm132, %v4726, 0
  %v4851 = vsel %vm132, %v4727, 0
  %v4854 = vsel %vm132, %v4728, 0
  %v4857 = vsel %vm132, %v4729, 0
  %v4860 = vsel %vm132, %v4730, 0
  %v4863 = vsel %vm132, %v4731, 0
  %v4866 = vsel %vm132, %v4732, 0
  %v4869 = vsel %vm132, %v4733, 0
  %v4872 = vsel %vm132, %v4734, 0
  %v4875 = vsel %vm132, %v4735, 0
  %v4878 = vsel %vm132, %v4736, 0
  %v4881 = vsel %vm132, %v4737, 0
  %v4884 = vsel %vm132, %v4738, 0
  %v4887 = vsel %vm132, %v4739, 0
  %v4890 = vsel %vm132, %v4740, 0
  %v4893 = vsel %vm132, %v4741, 0
  %v4896 = vsel %vm132, %v4742, 0
  %v4899 = vsel %vm132, %v4743, 0
  %v4902 = vsel %vm132, %v4744, 0
  %v4905 = vsel %vm132, %v4745, 0
  %4907 = vmatprep.subr.mxu0 0.0
  %4908 = vmatpush1.msra.mxu0 0.0
  %4909 = vmatprep.subr.mxu0 0.0
  %4910 = vmatpush1.msra.mxu0 0.0
  %4911 = vmatprep.subr.mxu0 0.0
  %4912 = vmatpush1.msra.mxu0 0.0
  %4913 = vmatprep.subr.mxu0 0.0
  %4914 = vmatpush1.msra.mxu0 0.0
  %4915 = vmatprep.subr.mxu0 0.0
  %4916 = vmatpush1.msra.mxu0 0.0
  %4917 = vmatprep.subr.mxu0 0.0
  %4918 = vmatpush1.msra.mxu0 0.0
  %4919 = vmatprep.subr.mxu0 0.0
  %4920 = vmatpush1.msra.mxu0 0.0
  %4921 = vmatprep.subr.mxu0 0.0
  %4922 = vmatpush1.msra.mxu0 0.0
  %4923 = vmatprep.subr.mxu0 0.0
  %4924 = vmatpush1.msra.mxu0 0.0
  %4925 = vmatprep.subr.mxu0 0.0
  %4926 = vmatpush1.msra.mxu0 0.0
  %4927 = vmatprep.subr.mxu0 0.0
  %4928 = vmatpush1.msra.mxu0 0.0
  %4929 = vmatprep.subr.mxu0 0.0
  %4930 = vmatpush1.msra.mxu0 0.0
  %4931 = vmatprep.subr.mxu0 0.0
  %4932 = vmatpush1.msra.mxu0 0.0
  %4933 = vmatprep.subr.mxu0 0.0
  %4934 = vmatpush1.msra.mxu0 0.0
  %4935 = vmatprep.subr.mxu0 0.0
  %4936 = vmatpush1.msra.mxu0 0.0
  %4937 = vmatprep.subr.mxu0 0.0
  %4938 = vmatpush1.msra.mxu0 %v4747
  %4939 = vmatprep.subr.mxu0 0.0
  %4940 = vmatpush2.msra.mxu0 0.0
  %4941 = vmatprep.subr.mxu0 0.0
  %4942 = vmatpush2.msra.mxu0 0.0
  %4943 = vmatprep.subr.mxu0 0.0
  %4944 = vmatpush2.msra.mxu0 0.0
  %4945 = vmatprep.subr.mxu0 0.0
  %4946 = vmatpush2.msra.mxu0 0.0
  %4947 = vmatprep.subr.mxu0 0.0
  %4948 = vmatpush2.msra.mxu0 0.0
  %4949 = vmatprep.subr.mxu0 0.0
  %4950 = vmatpush2.msra.mxu0 0.0
  %4951 = vmatprep.subr.mxu0 0.0
  %4952 = vmatpush2.msra.mxu0 0.0
  %4953 = vmatprep.subr.mxu0 0.0
  %4954 = vmatpush2.msra.mxu0 0.0
  %4955 = vmatprep.subr.mxu0 0.0
  %4956 = vmatpush2.msra.mxu0 0.0
  %4957 = vmatprep.subr.mxu0 0.0
  %4958 = vmatpush2.msra.mxu0 0.0
  %4959 = vmatprep.subr.mxu0 0.0
  %4960 = vmatpush2.msra.mxu0 0.0
  %4961 = vmatprep.subr.mxu0 0.0
  %4962 = vmatpush2.msra.mxu0 0.0
  %4963 = vmatprep.subr.mxu0 0.0
  %4964 = vmatpush2.msra.mxu0 0.0
  %4965 = vmatprep.subr.mxu0 0.0
  %4966 = vmatpush2.msra.mxu0 0.0
  %4967 = vmatprep.subr.mxu0 0.0
  %4968 = vmatpush2.msra.mxu0 0.0
  %4969 = vmatprep.subr.mxu0 0.0
  %4970 = vmatpush2.msra.mxu0 0.0
  %4971 = vmatprep.mubr.f32.mxu0 0.0
  %4972 = vmatmul.mubr.f32.gmra.mxu0 %v4749
  %v4973 = vpop.f32.mrf.mxu0
  %v4974 = vadd.f32 0.0, %v4973
  %v4975 = vpop.f32.mrf.mxu0
  %4976 = vmatprep.mubr.f32.mxu0 0.0
  %4977 = vmatmul.mubr.f32.gmra.mxu0 %v4752
  %v4978 = vpop.f32.mrf.mxu0
  %v4979 = vadd.f32 0.0, %v4978
  %v4980 = vpop.f32.mrf.mxu0
  %4981 = vmatprep.mubr.f32.mxu0 0.0
  %4982 = vmatmul.mubr.f32.gmra.mxu0 %v4755
  %v4983 = vpop.f32.mrf.mxu0
  %v4984 = vadd.f32 0.0, %v4983
  %v4985 = vpop.f32.mrf.mxu0
  %4986 = vmatprep.mubr.f32.mxu0 0.0
  %4987 = vmatmul.mubr.f32.gmra.mxu0 %v4758
  %v4988 = vpop.f32.mrf.mxu0
  %v4989 = vadd.f32 0.0, %v4988
  %v4990 = vpop.f32.mrf.mxu0
  %4991 = vmatprep.mubr.f32.mxu0 0.0
  %4992 = vmatmul.mubr.f32.gmra.mxu0 %v4761
  %v4993 = vpop.f32.mrf.mxu0
  %v4994 = vadd.f32 0.0, %v4993
  %v4995 = vpop.f32.mrf.mxu0
  %4996 = vmatprep.mubr.f32.mxu0 0.0
  %4997 = vmatmul.mubr.f32.gmra.mxu0 %v4764
  %v4998 = vpop.f32.mrf.mxu0
  %v4999 = vadd.f32 0.0, %v4998
  %v5000 = vpop.f32.mrf.mxu0
  %5001 = vmatprep.mubr.f32.mxu0 0.0
  %5002 = vmatmul.mubr.f32.gmra.mxu0 %v4767
  %v5003 = vpop.f32.mrf.mxu0
  %v5004 = vadd.f32 0.0, %v5003
  %v5005 = vpop.f32.mrf.mxu0
  %5006 = vmatprep.mubr.f32.mxu0 0.0
  %5007 = vmatmul.mubr.f32.gmra.mxu0 %v4770
  %v5008 = vpop.f32.mrf.mxu0
  %v5009 = vadd.f32 0.0, %v5008
  %v5010 = vpop.f32.mrf.mxu0
  %5011 = vmatprep.mubr.f32.mxu0 0.0
  %5012 = vmatmul.mubr.f32.gmra.mxu0 %v4773
  %v5013 = vpop.f32.mrf.mxu0
  %v5014 = vadd.f32 0.0, %v5013
  %v5015 = vpop.f32.mrf.mxu0
  %5016 = vmatprep.mubr.f32.mxu0 0.0
  %5017 = vmatmul.mubr.f32.gmra.mxu0 %v4776
  %v5018 = vpop.f32.mrf.mxu0
  %v5019 = vadd.f32 0.0, %v5018
  %v5020 = vpop.f32.mrf.mxu0
  %5021 = vmatprep.mubr.f32.mxu0 0.0
  %5022 = vmatmul.mubr.f32.gmra.mxu0 %v4779
  %v5023 = vpop.f32.mrf.mxu0
  %v5024 = vadd.f32 0.0, %v5023
  %v5025 = vpop.f32.mrf.mxu0
  %5026 = vmatprep.mubr.f32.mxu0 0.0
  %5027 = vmatmul.mubr.f32.gmra.mxu0 %v4782
  %v5028 = vpop.f32.mrf.mxu0
  %v5029 = vadd.f32 0.0, %v5028
  %v5030 = vpop.f32.mrf.mxu0
  %5031 = vmatprep.mubr.f32.mxu0 0.0
  %5032 = vmatmul.mubr.f32.gmra.mxu0 %v4785
  %v5033 = vpop.f32.mrf.mxu0
  %v5034 = vadd.f32 0.0, %v5033
  %v5035 = vpop.f32.mrf.mxu0
  %5036 = vmatprep.mubr.f32.mxu0 0.0
  %5037 = vmatmul.mubr.f32.gmra.mxu0 %v4788
  %v5038 = vpop.f32.mrf.mxu0
  %v5039 = vadd.f32 0.0, %v5038
  %v5040 = vpop.f32.mrf.mxu0
  %5041 = vmatprep.mubr.f32.mxu0 0.0
  %5042 = vmatmul.mubr.f32.gmra.mxu0 %v4791
  %v5043 = vpop.f32.mrf.mxu0
  %v5044 = vadd.f32 0.0, %v5043
  %v5045 = vpop.f32.mrf.mxu0
  %5046 = vmatprep.mubr.f32.mxu0 0.0
  %5047 = vmatmul.mubr.f32.gmra.mxu0 %v4794
  %v5048 = vpop.f32.mrf.mxu0
  %v5049 = vadd.f32 0.0, %v5048
  %v5050 = vpop.f32.mrf.mxu0
  %5051 = vmatprep.mubr.f32.mxu0 0.0
  %5052 = vmatmul.mubr.f32.gmra.mxu0 %v4797
  %v5053 = vpop.f32.mrf.mxu0
  %v5054 = vadd.f32 0.0, %v5053
  %v5055 = vpop.f32.mrf.mxu0
  %5056 = vmatprep.mubr.f32.mxu0 0.0
  %5057 = vmatmul.mubr.f32.gmra.mxu0 %v4800
  %v5058 = vpop.f32.mrf.mxu0
  %v5059 = vadd.f32 0.0, %v5058
  %v5060 = vpop.f32.mrf.mxu0
  %5061 = vmatprep.mubr.f32.mxu0 0.0
  %5062 = vmatmul.mubr.f32.gmra.mxu0 %v4803
  %v5063 = vpop.f32.mrf.mxu0
  %v5064 = vadd.f32 0.0, %v5063
  %v5065 = vpop.f32.mrf.mxu0
  %5066 = vmatprep.mubr.f32.mxu0 0.0
  %5067 = vmatmul.mubr.f32.gmra.mxu0 %v4806
  %v5068 = vpop.f32.mrf.mxu0
  %v5069 = vadd.f32 0.0, %v5068
  %v5070 = vpop.f32.mrf.mxu0
  %5071 = vmatprep.mubr.f32.mxu0 0.0
  %5072 = vmatmul.mubr.f32.gmra.mxu0 %v4809
  %v5073 = vpop.f32.mrf.mxu0
  %v5074 = vadd.f32 0.0, %v5073
  %v5075 = vpop.f32.mrf.mxu0
  %5076 = vmatprep.mubr.f32.mxu0 0.0
  %5077 = vmatmul.mubr.f32.gmra.mxu0 %v4812
  %v5078 = vpop.f32.mrf.mxu0
  %v5079 = vadd.f32 0.0, %v5078
  %v5080 = vpop.f32.mrf.mxu0
  %5081 = vmatprep.mubr.f32.mxu0 0.0
  %5082 = vmatmul.mubr.f32.gmra.mxu0 %v4815
  %v5083 = vpop.f32.mrf.mxu0
  %v5084 = vadd.f32 0.0, %v5083
  %v5085 = vpop.f32.mrf.mxu0
  %5086 = vmatprep.mubr.f32.mxu0 0.0
  %5087 = vmatmul.mubr.f32.gmra.mxu0 %v4818
  %v5088 = vpop.f32.mrf.mxu0
  %v5089 = vadd.f32 0.0, %v5088
  %v5090 = vpop.f32.mrf.mxu0
  %5091 = vmatprep.mubr.f32.mxu0 0.0
  %5092 = vmatmul.mubr.f32.gmra.mxu0 %v4821
  %v5093 = vpop.f32.mrf.mxu0
  %v5094 = vadd.f32 0.0, %v5093
  %v5095 = vpop.f32.mrf.mxu0
  %5096 = vmatprep.mubr.f32.mxu0 0.0
  %5097 = vmatmul.mubr.f32.gmra.mxu0 %v4824
  %v5098 = vpop.f32.mrf.mxu0
  %v5099 = vadd.f32 0.0, %v5098
  %v5100 = vpop.f32.mrf.mxu0
  %5101 = vmatprep.mubr.f32.mxu0 0.0
  %5102 = vmatmul.mubr.f32.gmra.mxu0 %v4827
  %v5103 = vpop.f32.mrf.mxu0
  %v5104 = vadd.f32 0.0, %v5103
  %v5105 = vpop.f32.mrf.mxu0
  %5106 = vmatprep.mubr.f32.mxu0 0.0
  %5107 = vmatmul.mubr.f32.gmra.mxu0 %v4830
  %v5108 = vpop.f32.mrf.mxu0
  %v5109 = vadd.f32 0.0, %v5108
  %v5110 = vpop.f32.mrf.mxu0
  %5111 = vmatprep.mubr.f32.mxu0 0.0
  %5112 = vmatmul.mubr.f32.gmra.mxu0 %v4833
  %v5113 = vpop.f32.mrf.mxu0
  %v5114 = vadd.f32 0.0, %v5113
  %v5115 = vpop.f32.mrf.mxu0
  %5116 = vmatprep.mubr.f32.mxu0 0.0
  %5117 = vmatmul.mubr.f32.gmra.mxu0 %v4836
  %v5118 = vpop.f32.mrf.mxu0
  %v5119 = vadd.f32 0.0, %v5118
  %v5120 = vpop.f32.mrf.mxu0
  %5121 = vmatprep.mubr.f32.mxu0 0.0
  %5122 = vmatmul.mubr.f32.gmra.mxu0 %v4839
  %v5123 = vpop.f32.mrf.mxu0
  %v5124 = vadd.f32 0.0, %v5123
  %v5125 = vpop.f32.mrf.mxu0
  %5126 = vmatprep.mubr.f32.mxu0 0.0
  %5127 = vmatmul.mubr.f32.gmra.mxu0 %v4842
  %v5128 = vpop.f32.mrf.mxu0
  %v5129 = vadd.f32 0.0, %v5128
  %v5130 = vpop.f32.mrf.mxu0
  %5131 = vmatprep.mubr.f32.mxu0 0.0
  %5132 = vmatmul.mubr.f32.gmra.mxu0 %v4845
  %v5133 = vpop.f32.mrf.mxu0
  %v5134 = vadd.f32 0.0, %v5133
  %v5135 = vpop.f32.mrf.mxu0
  %5136 = vmatprep.mubr.f32.mxu0 0.0
  %5137 = vmatmul.mubr.f32.gmra.mxu0 %v4848
  %v5138 = vpop.f32.mrf.mxu0
  %v5139 = vadd.f32 0.0, %v5138
  %v5140 = vpop.f32.mrf.mxu0
  %5141 = vmatprep.mubr.f32.mxu0 0.0
  %5142 = vmatmul.mubr.f32.gmra.mxu0 %v4851
  %v5143 = vpop.f32.mrf.mxu0
  %v5144 = vadd.f32 0.0, %v5143
  %v5145 = vpop.f32.mrf.mxu0
  %5146 = vmatprep.mubr.f32.mxu0 0.0
  %5147 = vmatmul.mubr.f32.gmra.mxu0 %v4854
  %v5148 = vpop.f32.mrf.mxu0
  %v5149 = vadd.f32 0.0, %v5148
  %v5150 = vpop.f32.mrf.mxu0
  %5151 = vmatprep.mubr.f32.mxu0 0.0
  %5152 = vmatmul.mubr.f32.gmra.mxu0 %v4857
  %v5153 = vpop.f32.mrf.mxu0
  %v5154 = vadd.f32 0.0, %v5153
  %v5155 = vpop.f32.mrf.mxu0
  %5156 = vmatprep.mubr.f32.mxu0 0.0
  %5157 = vmatmul.mubr.f32.gmra.mxu0 %v4860
  %v5158 = vpop.f32.mrf.mxu0
  %v5159 = vadd.f32 0.0, %v5158
  %v5160 = vpop.f32.mrf.mxu0
  %5161 = vmatprep.mubr.f32.mxu0 0.0
  %5162 = vmatmul.mubr.f32.gmra.mxu0 %v4863
  %v5163 = vpop.f32.mrf.mxu0
  %v5164 = vadd.f32 0.0, %v5163
  %v5165 = vpop.f32.mrf.mxu0
  %5166 = vmatprep.mubr.f32.mxu0 0.0
  %5167 = vmatmul.mubr.f32.gmra.mxu0 %v4866
  %v5168 = vpop.f32.mrf.mxu0
  %v5169 = vadd.f32 0.0, %v5168
  %v5170 = vpop.f32.mrf.mxu0
  %5171 = vmatprep.mubr.f32.mxu0 0.0
  %5172 = vmatmul.mubr.f32.gmra.mxu0 %v4869
  %v5173 = vpop.f32.mrf.mxu0
  %v5174 = vadd.f32 0.0, %v5173
  %v5175 = vpop.f32.mrf.mxu0
  %5176 = vmatprep.mubr.f32.mxu0 0.0
  %5177 = vmatmul.mubr.f32.gmra.mxu0 %v4872
  %v5178 = vpop.f32.mrf.mxu0
  %v5179 = vadd.f32 0.0, %v5178
  %v5180 = vpop.f32.mrf.mxu0
  %5181 = vmatprep.mubr.f32.mxu0 0.0
  %5182 = vmatmul.mubr.f32.gmra.mxu0 %v4875
  %v5183 = vpop.f32.mrf.mxu0
  %v5184 = vadd.f32 0.0, %v5183
  %v5185 = vpop.f32.mrf.mxu0
  %5186 = vmatprep.mubr.f32.mxu0 0.0
  %5187 = vmatmul.mubr.f32.gmra.mxu0 %v4878
  %v5188 = vpop.f32.mrf.mxu0
  %v5189 = vadd.f32 0.0, %v5188
  %v5190 = vpop.f32.mrf.mxu0
  %5191 = vmatprep.mubr.f32.mxu0 0.0
  %5192 = vmatmul.mubr.f32.gmra.mxu0 %v4881
  %v5193 = vpop.f32.mrf.mxu0
  %v5194 = vadd.f32 0.0, %v5193
  %v5195 = vpop.f32.mrf.mxu0
  %5196 = vmatprep.mubr.f32.mxu0 0.0
  %5197 = vmatmul.mubr.f32.gmra.mxu0 %v4884
  %v5198 = vpop.f32.mrf.mxu0
  %v5199 = vadd.f32 0.0, %v5198
  %v5200 = vpop.f32.mrf.mxu0
  %5201 = vmatprep.mubr.f32.mxu0 0.0
  %5202 = vmatmul.mubr.f32.gmra.mxu0 %v4887
  %v5203 = vpop.f32.mrf.mxu0
  %v5204 = vadd.f32 0.0, %v5203
  %v5205 = vpop.f32.mrf.mxu0
  %5206 = vmatprep.mubr.f32.mxu0 0.0
  %5207 = vmatmul.mubr.f32.gmra.mxu0 %v4890
  %v5208 = vpop.f32.mrf.mxu0
  %v5209 = vadd.f32 0.0, %v5208
  %v5210 = vpop.f32.mrf.mxu0
  %5211 = vmatprep.mubr.f32.mxu0 0.0
  %5212 = vmatmul.mubr.f32.gmra.mxu0 %v4893
  %v5213 = vpop.f32.mrf.mxu0
  %v5214 = vadd.f32 0.0, %v5213
  %v5215 = vpop.f32.mrf.mxu0
  %5216 = vmatprep.mubr.f32.mxu0 0.0
  %5217 = vmatmul.mubr.f32.gmra.mxu0 %v4896
  %v5218 = vpop.f32.mrf.mxu0
  %v5219 = vadd.f32 0.0, %v5218
  %v5220 = vpop.f32.mrf.mxu0
  %5221 = vmatprep.mubr.f32.mxu0 0.0
  %5222 = vmatmul.mubr.f32.gmra.mxu0 %v4899
  %v5223 = vpop.f32.mrf.mxu0
  %v5224 = vadd.f32 0.0, %v5223
  %v5225 = vpop.f32.mrf.mxu0
  %5226 = vmatprep.mubr.f32.mxu0 0.0
  %5227 = vmatmul.mubr.f32.gmra.mxu0 %v4902
  %v5228 = vpop.f32.mrf.mxu0
  %v5229 = vadd.f32 0.0, %v5228
  %v5230 = vpop.f32.mrf.mxu0
  %5231 = vmatprep.mubr.f32.mxu0 0.0
  %5232 = vmatmul.mubr.f32.gmra.mxu0 %v4905
  %v5233 = vpop.f32.mrf.mxu0
  %v5234 = vadd.f32 0.0, %v5233
  %v5235 = vpop.f32.mrf.mxu0
  %5236 = vdwg.mxu0
  %v5237 = vadd.f32 %v4640, %v4974
  %v5238 = vadd.f32 %v4641, %v4979
  %v5239 = vadd.f32 %v4642, %v4984
  %v5240 = vadd.f32 %v4643, %v4989
  %v5241 = vadd.f32 %v4644, %v4994
  %v5242 = vadd.f32 %v4645, %v4999
  %v5243 = vadd.f32 %v4646, %v5004
  %v5244 = vadd.f32 %v4647, %v5009
  %v5245 = vadd.f32 %v4648, %v5014
  %v5246 = vadd.f32 %v4649, %v5019
  %v5247 = vadd.f32 %v4650, %v5024
  %v5248 = vadd.f32 %v4651, %v5029
  %v5249 = vadd.f32 %v4652, %v5034
  %v5250 = vadd.f32 %v4653, %v5039
  %v5251 = vadd.f32 %v4654, %v5044
  %v5252 = vadd.f32 %v4655, %v5049
  %v5253 = vadd.f32 %v4656, %v5054
  %v5254 = vadd.f32 %v4657, %v5059
  %v5255 = vadd.f32 %v4658, %v5064
  %v5256 = vadd.f32 %v4659, %v5069
  %v5257 = vadd.f32 %v4660, %v5074
  %v5258 = vadd.f32 %v4661, %v5079
  %v5259 = vadd.f32 %v4662, %v5084
  %v5260 = vadd.f32 %v4663, %v5089
  %v5261 = vadd.f32 %v4664, %v5094
  %v5262 = vadd.f32 %v4665, %v5099
  %v5263 = vadd.f32 %v4666, %v5104
  %v5264 = vadd.f32 %v4667, %v5109
  %v5265 = vadd.f32 %v4668, %v5114
  %v5266 = vadd.f32 %v4669, %v5119
  %v5267 = vadd.f32 %v4670, %v5124
  %v5268 = vadd.f32 %v4671, %v5129
  %v5269 = vadd.f32 %v4672, %v5134
  %v5270 = vadd.f32 %v4673, %v5139
  %v5271 = vadd.f32 %v4674, %v5144
  %v5272 = vadd.f32 %v4675, %v5149
  %v5273 = vadd.f32 %v4676, %v5154
  %v5274 = vadd.f32 %v4677, %v5159
  %v5275 = vadd.f32 %v4678, %v5164
  %v5276 = vadd.f32 %v4679, %v5169
  %v5277 = vadd.f32 %v4680, %v5174
  %v5278 = vadd.f32 %v4681, %v5179
  %v5279 = vadd.f32 %v4682, %v5184
  %v5280 = vadd.f32 %v4683, %v5189
  %v5281 = vadd.f32 %v4684, %v5194
  %v5282 = vadd.f32 %v4685, %v5199
  %v5283 = vadd.f32 %v4686, %v5204
  %v5284 = vadd.f32 %v4687, %v5209
  %v5285 = vadd.f32 %v4688, %v5214
  %v5286 = vadd.f32 %v4689, %v5219
  %v5287 = vadd.f32 %v4690, %v5224
  %v5288 = vadd.f32 %v4691, %v5229
  %v5289 = vadd.f32 %v4692, %v5234
  %v5290 = vld [vmem:[%s3] sm:$0x1]
  %v5292 = vlaneseq
  %v5293 = vshrl.u32 %v5292, 7
  %v5294 = vsub.s32 0, %v5293
  %v5295 = vrot.slane %v5290, %v5294
  %v5297 = vadd.f32 %v5237, %v5295
  %v5298 = vadd.f32 %v5238, %v5295
  %v5299 = vadd.f32 %v5239, %v5295
  %v5300 = vadd.f32 %v5240, %v5295
  %v5301 = vadd.f32 %v5241, %v5295
  %v5302 = vadd.f32 %v5242, %v5295
  %v5303 = vadd.f32 %v5243, %v5295
  %v5304 = vadd.f32 %v5244, %v5295
  %v5305 = vadd.f32 %v5245, %v5295
  %v5306 = vadd.f32 %v5246, %v5295
  %v5307 = vadd.f32 %v5247, %v5295
  %v5308 = vadd.f32 %v5248, %v5295
  %v5309 = vadd.f32 %v5249, %v5295
  %v5310 = vadd.f32 %v5250, %v5295
  %v5311 = vadd.f32 %v5251, %v5295
  %v5312 = vadd.f32 %v5252, %v5295
  %v5313 = vadd.f32 %v5253, %v5295
  %v5314 = vadd.f32 %v5254, %v5295
  %v5315 = vadd.f32 %v5255, %v5295
  %v5316 = vadd.f32 %v5256, %v5295
  %v5317 = vadd.f32 %v5257, %v5295
  %v5318 = vadd.f32 %v5258, %v5295
  %v5319 = vadd.f32 %v5259, %v5295
  %v5320 = vadd.f32 %v5260, %v5295
  %v5321 = vadd.f32 %v5261, %v5295
  %v5322 = vadd.f32 %v5262, %v5295
  %v5323 = vadd.f32 %v5263, %v5295
  %v5324 = vadd.f32 %v5264, %v5295
  %v5325 = vadd.f32 %v5265, %v5295
  %v5326 = vadd.f32 %v5266, %v5295
  %v5327 = vadd.f32 %v5267, %v5295
  %v5328 = vadd.f32 %v5268, %v5295
  %v5329 = vadd.f32 %v5269, %v5295
  %v5330 = vadd.f32 %v5270, %v5295
  %v5331 = vadd.f32 %v5271, %v5295
  %v5332 = vadd.f32 %v5272, %v5295
  %v5333 = vadd.f32 %v5273, %v5295
  %v5334 = vadd.f32 %v5274, %v5295
  %v5335 = vadd.f32 %v5275, %v5295
  %v5336 = vadd.f32 %v5276, %v5295
  %v5337 = vadd.f32 %v5277, %v5295
  %v5338 = vadd.f32 %v5278, %v5295
  %v5339 = vadd.f32 %v5279, %v5295
  %v5340 = vadd.f32 %v5280, %v5295
  %v5341 = vadd.f32 %v5281, %v5295
  %v5342 = vadd.f32 %v5282, %v5295
  %v5343 = vadd.f32 %v5283, %v5295
  %v5344 = vadd.f32 %v5284, %v5295
  %v5345 = vadd.f32 %v5285, %v5295
  %v5346 = vadd.f32 %v5286, %v5295
  %v5347 = vadd.f32 %v5287, %v5295
  %v5348 = vadd.f32 %v5288, %v5295
  %v5349 = vadd.f32 %v5289, %v5295
  %v5350 = vmax.f32 %v5297, 0.0
  %v5351 = vmax.f32 %v5298, 0.0
  %v5352 = vmax.f32 %v5299, 0.0
  %v5353 = vmax.f32 %v5300, 0.0
  %v5354 = vmax.f32 %v5301, 0.0
  %v5355 = vmax.f32 %v5302, 0.0
  %v5356 = vmax.f32 %v5303, 0.0
  %v5357 = vmax.f32 %v5304, 0.0
  %v5358 = vmax.f32 %v5305, 0.0
  %v5359 = vmax.f32 %v5306, 0.0
  %v5360 = vmax.f32 %v5307, 0.0
  %v5361 = vmax.f32 %v5308, 0.0
  %v5362 = vmax.f32 %v5309, 0.0
  %v5363 = vmax.f32 %v5310, 0.0
  %v5364 = vmax.f32 %v5311, 0.0
  %v5365 = vmax.f32 %v5312, 0.0
  %v5366 = vmax.f32 %v5313, 0.0
  %v5367 = vmax.f32 %v5314, 0.0
  %v5368 = vmax.f32 %v5315, 0.0
  %v5369 = vmax.f32 %v5316, 0.0
  %v5370 = vmax.f32 %v5317, 0.0
  %v5371 = vmax.f32 %v5318, 0.0
  %v5372 = vmax.f32 %v5319, 0.0
  %v5373 = vmax.f32 %v5320, 0.0
  %v5374 = vmax.f32 %v5321, 0.0
  %v5375 = vmax.f32 %v5322, 0.0
  %v5376 = vmax.f32 %v5323, 0.0
  %v5377 = vmax.f32 %v5324, 0.0
  %v5378 = vmax.f32 %v5325, 0.0
  %v5379 = vmax.f32 %v5326, 0.0
  %v5380 = vmax.f32 %v5327, 0.0
  %v5381 = vmax.f32 %v5328, 0.0
  %v5382 = vmax.f32 %v5329, 0.0
  %v5383 = vmax.f32 %v5330, 0.0
  %v5384 = vmax.f32 %v5331, 0.0
  %v5385 = vmax.f32 %v5332, 0.0
  %v5386 = vmax.f32 %v5333, 0.0
  %v5387 = vmax.f32 %v5334, 0.0
  %v5388 = vmax.f32 %v5335, 0.0
  %v5389 = vmax.f32 %v5336, 0.0
  %v5390 = vmax.f32 %v5337, 0.0
  %v5391 = vmax.f32 %v5338, 0.0
  %v5392 = vmax.f32 %v5339, 0.0
  %v5393 = vmax.f32 %v5340, 0.0
  %v5394 = vmax.f32 %v5341, 0.0
  %v5395 = vmax.f32 %v5342, 0.0
  %v5396 = vmax.f32 %v5343, 0.0
  %v5397 = vmax.f32 %v5344, 0.0
  %v5398 = vmax.f32 %v5345, 0.0
  %v5399 = vmax.f32 %v5346, 0.0
  %v5400 = vmax.f32 %v5347, 0.0
  %v5401 = vmax.f32 %v5348, 0.0
  %v5402 = vmax.f32 %v5349, 0.0
  %v5403 = vld [vmem:[%s1] sm:$0xff]
  %v5404 = vld [vmem:[%s1 + $0x8] sm:$0xff]
  %v5405 = vld [vmem:[%s1 + $0x10] sm:$0xff]
  %v5406 = vld [vmem:[%s1 + $0x18] sm:$0xff]
  %v5407 = vld [vmem:[%s1 + $0x20] sm:$0xff]
  %v5408 = vld [vmem:[%s1 + $0x28] sm:$0xff]
  %v5409 = vld [vmem:[%s1 + $0x30] sm:$0xff]
  %v5410 = vld [vmem:[%s1 + $0x38] sm:$0xff]
  %v5411 = vld [vmem:[%s1 + $0x40] sm:$0xff]
  %v5412 = vld [vmem:[%s1 + $0x48] sm:$0xff]
  %v5413 = vld [vmem:[%s1 + $0x50] sm:$0xff]
  %v5414 = vld [vmem:[%s1 + $0x58] sm:$0xff]
  %v5415 = vld [vmem:[%s1 + $0x60] sm:$0xff]
  %v5416 = vld [vmem:[%s1 + $0x68] sm:$0xff]
  %v5417 = vld [vmem:[%s1 + $0x70] sm:$0xff]
  %v5418 = vld [vmem:[%s1 + $0x78] sm:$0xff]
  %v5419 = vld [vmem:[%s1 + $0x80] sm:$0xff]
  %v5420 = vld [vmem:[%s1 + $0x88] sm:$0xff]
  %v5421 = vld [vmem:[%s1 + $0x90] sm:$0xff]
  %v5422 = vld [vmem:[%s1 + $0x98] sm:$0xff]
  %v5423 = vld [vmem:[%s1 + $0xa0] sm:$0xff]
  %v5424 = vld [vmem:[%s1 + $0xa8] sm:$0xff]
  %v5425 = vld [vmem:[%s1 + $0xb0] sm:$0xff]
  %v5426 = vld [vmem:[%s1 + $0xb8] sm:$0xff]
  %v5427 = vld [vmem:[%s1 + $0xc0] sm:$0xff]
  %v5428 = vld [vmem:[%s1 + $0xc8] sm:$0xff]
  %v5429 = vld [vmem:[%s1 + $0xd0] sm:$0xff]
  %v5430 = vld [vmem:[%s1 + $0xd8] sm:$0xff]
  %v5431 = vld [vmem:[%s1 + $0xe0] sm:$0xff]
  %v5432 = vld [vmem:[%s1 + $0xe8] sm:$0xff]
  %v5433 = vld [vmem:[%s1 + $0xf0] sm:$0xff]
  %v5434 = vld [vmem:[%s1 + $0xf8] sm:$0xff]
  %v5435 = vld [vmem:[%s1 + $0x100] sm:$0xff]
  %v5436 = vld [vmem:[%s1 + $0x108] sm:$0xff]
  %v5437 = vld [vmem:[%s1 + $0x110] sm:$0xff]
  %v5438 = vld [vmem:[%s1 + $0x118] sm:$0xff]
  %v5439 = vld [vmem:[%s1 + $0x120] sm:$0xff]
  %v5440 = vld [vmem:[%s1 + $0x128] sm:$0xff]
  %v5441 = vld [vmem:[%s1 + $0x130] sm:$0xff]
  %v5442 = vld [vmem:[%s1 + $0x138] sm:$0xff]
  %v5443 = vld [vmem:[%s1 + $0x140] sm:$0xff]
  %v5444 = vld [vmem:[%s1 + $0x148] sm:$0xff]
  %v5445 = vld [vmem:[%s1 + $0x150] sm:$0xff]
  %v5446 = vld [vmem:[%s1 + $0x158] sm:$0xff]
  %v5447 = vld [vmem:[%s1 + $0x160] sm:$0xff]
  %v5448 = vld [vmem:[%s1 + $0x168] sm:$0xff]
  %v5449 = vld [vmem:[%s1 + $0x170] sm:$0xff]
  %v5450 = vld [vmem:[%s1 + $0x178] sm:$0xff]
  %v5451 = vld [vmem:[%s1 + $0x180] sm:$0xff]
  %v5452 = vld [vmem:[%s1 + $0x188] sm:$0xff]
  %v5453 = vld [vmem:[%s1 + $0x190] sm:$0xff]
  %v5454 = vld [vmem:[%s1 + $0x198] sm:$0xff]
  %v5455 = vld [vmem:[%s1 + $0x1a0] sm:$0xff]
  %5457 = vset.pattern.permute.xlu0 0
  %5458 = vperm.xlu0 %5457, %v5403
  %v5459 = vpop.permute.xlu0 %5458
  %5462 = vset.pattern.permute.xlu0 0
  %5463 = vperm.xlu0 %5462, %v5404
  %v5464 = vpop.permute.xlu0 %5463
  %5467 = vset.pattern.permute.xlu0 0
  %5468 = vperm.xlu0 %5467, %v5405
  %v5469 = vpop.permute.xlu0 %5468
  %5472 = vset.pattern.permute.xlu0 0
  %5473 = vperm.xlu0 %5472, %v5406
  %v5474 = vpop.permute.xlu0 %5473
  %5477 = vset.pattern.permute.xlu0 0
  %5478 = vperm.xlu0 %5477, %v5407
  %v5479 = vpop.permute.xlu0 %5478
  %5482 = vset.pattern.permute.xlu0 0
  %5483 = vperm.xlu0 %5482, %v5408
  %v5484 = vpop.permute.xlu0 %5483
  %5487 = vset.pattern.permute.xlu0 0
  %5488 = vperm.xlu0 %5487, %v5409
  %v5489 = vpop.permute.xlu0 %5488
  %5492 = vset.pattern.permute.xlu0 0
  %5493 = vperm.xlu0 %5492, %v5410
  %v5494 = vpop.permute.xlu0 %5493
  %5497 = vset.pattern.permute.xlu0 0
  %5498 = vperm.xlu0 %5497, %v5411
  %v5499 = vpop.permute.xlu0 %5498
  %5502 = vset.pattern.permute.xlu0 0
  %5503 = vperm.xlu0 %5502, %v5412
  %v5504 = vpop.permute.xlu0 %5503
  %5507 = vset.pattern.permute.xlu0 0
  %5508 = vperm.xlu0 %5507, %v5413
  %v5509 = vpop.permute.xlu0 %5508
  %5512 = vset.pattern.permute.xlu0 0
  %5513 = vperm.xlu0 %5512, %v5414
  %v5514 = vpop.permute.xlu0 %5513
  %5517 = vset.pattern.permute.xlu0 0
  %5518 = vperm.xlu0 %5517, %v5415
  %v5519 = vpop.permute.xlu0 %5518
  %5522 = vset.pattern.permute.xlu0 0
  %5523 = vperm.xlu0 %5522, %v5416
  %v5524 = vpop.permute.xlu0 %5523
  %5527 = vset.pattern.permute.xlu0 0
  %5528 = vperm.xlu0 %5527, %v5417
  %v5529 = vpop.permute.xlu0 %5528
  %5532 = vset.pattern.permute.xlu0 0
  %5533 = vperm.xlu0 %5532, %v5418
  %v5534 = vpop.permute.xlu0 %5533
  %5537 = vset.pattern.permute.xlu0 0
  %5538 = vperm.xlu0 %5537, %v5419
  %v5539 = vpop.permute.xlu0 %5538
  %5542 = vset.pattern.permute.xlu0 0
  %5543 = vperm.xlu0 %5542, %v5420
  %v5544 = vpop.permute.xlu0 %5543
  %5547 = vset.pattern.permute.xlu0 0
  %5548 = vperm.xlu0 %5547, %v5421
  %v5549 = vpop.permute.xlu0 %5548
  %5552 = vset.pattern.permute.xlu0 0
  %5553 = vperm.xlu0 %5552, %v5422
  %v5554 = vpop.permute.xlu0 %5553
  %5557 = vset.pattern.permute.xlu0 0
  %5558 = vperm.xlu0 %5557, %v5423
  %v5559 = vpop.permute.xlu0 %5558
  %5562 = vset.pattern.permute.xlu0 0
  %5563 = vperm.xlu0 %5562, %v5424
  %v5564 = vpop.permute.xlu0 %5563
  %5567 = vset.pattern.permute.xlu0 0
  %5568 = vperm.xlu0 %5567, %v5425
  %v5569 = vpop.permute.xlu0 %5568
  %5572 = vset.pattern.permute.xlu0 0
  %5573 = vperm.xlu0 %5572, %v5426
  %v5574 = vpop.permute.xlu0 %5573
  %5577 = vset.pattern.permute.xlu0 0
  %5578 = vperm.xlu0 %5577, %v5427
  %v5579 = vpop.permute.xlu0 %5578
  %5582 = vset.pattern.permute.xlu0 0
  %5583 = vperm.xlu0 %5582, %v5428
  %v5584 = vpop.permute.xlu0 %5583
  %5587 = vset.pattern.permute.xlu0 0
  %5588 = vperm.xlu0 %5587, %v5429
  %v5589 = vpop.permute.xlu0 %5588
  %5592 = vset.pattern.permute.xlu0 0
  %5593 = vperm.xlu0 %5592, %v5430
  %v5594 = vpop.permute.xlu0 %5593
  %5597 = vset.pattern.permute.xlu0 0
  %5598 = vperm.xlu0 %5597, %v5431
  %v5599 = vpop.permute.xlu0 %5598
  %5602 = vset.pattern.permute.xlu0 0
  %5603 = vperm.xlu0 %5602, %v5432
  %v5604 = vpop.permute.xlu0 %5603
  %5607 = vset.pattern.permute.xlu0 0
  %5608 = vperm.xlu0 %5607, %v5433
  %v5609 = vpop.permute.xlu0 %5608
  %5612 = vset.pattern.permute.xlu0 0
  %5613 = vperm.xlu0 %5612, %v5434
  %v5614 = vpop.permute.xlu0 %5613
  %5617 = vset.pattern.permute.xlu0 0
  %5618 = vperm.xlu0 %5617, %v5435
  %v5619 = vpop.permute.xlu0 %5618
  %5622 = vset.pattern.permute.xlu0 0
  %5623 = vperm.xlu0 %5622, %v5436
  %v5624 = vpop.permute.xlu0 %5623
  %5627 = vset.pattern.permute.xlu0 0
  %5628 = vperm.xlu0 %5627, %v5437
  %v5629 = vpop.permute.xlu0 %5628
  %5632 = vset.pattern.permute.xlu0 0
  %5633 = vperm.xlu0 %5632, %v5438
  %v5634 = vpop.permute.xlu0 %5633
  %5637 = vset.pattern.permute.xlu0 0
  %5638 = vperm.xlu0 %5637, %v5439
  %v5639 = vpop.permute.xlu0 %5638
  %5642 = vset.pattern.permute.xlu0 0
  %5643 = vperm.xlu0 %5642, %v5440
  %v5644 = vpop.permute.xlu0 %5643
  %5647 = vset.pattern.permute.xlu0 0
  %5648 = vperm.xlu0 %5647, %v5441
  %v5649 = vpop.permute.xlu0 %5648
  %5652 = vset.pattern.permute.xlu0 0
  %5653 = vperm.xlu0 %5652, %v5442
  %v5654 = vpop.permute.xlu0 %5653
  %5657 = vset.pattern.permute.xlu0 0
  %5658 = vperm.xlu0 %5657, %v5443
  %v5659 = vpop.permute.xlu0 %5658
  %5662 = vset.pattern.permute.xlu0 0
  %5663 = vperm.xlu0 %5662, %v5444
  %v5664 = vpop.permute.xlu0 %5663
  %5667 = vset.pattern.permute.xlu0 0
  %5668 = vperm.xlu0 %5667, %v5445
  %v5669 = vpop.permute.xlu0 %5668
  %5672 = vset.pattern.permute.xlu0 0
  %5673 = vperm.xlu0 %5672, %v5446
  %v5674 = vpop.permute.xlu0 %5673
  %5677 = vset.pattern.permute.xlu0 0
  %5678 = vperm.xlu0 %5677, %v5447
  %v5679 = vpop.permute.xlu0 %5678
  %5682 = vset.pattern.permute.xlu0 0
  %5683 = vperm.xlu0 %5682, %v5448
  %v5684 = vpop.permute.xlu0 %5683
  %5687 = vset.pattern.permute.xlu0 0
  %5688 = vperm.xlu0 %5687, %v5449
  %v5689 = vpop.permute.xlu0 %5688
  %5692 = vset.pattern.permute.xlu0 0
  %5693 = vperm.xlu0 %5692, %v5450
  %v5694 = vpop.permute.xlu0 %5693
  %5697 = vset.pattern.permute.xlu0 0
  %5698 = vperm.xlu0 %5697, %v5451
  %v5699 = vpop.permute.xlu0 %5698
  %5702 = vset.pattern.permute.xlu0 0
  %5703 = vperm.xlu0 %5702, %v5452
  %v5704 = vpop.permute.xlu0 %5703
  %5707 = vset.pattern.permute.xlu0 0
  %5708 = vperm.xlu0 %5707, %v5453
  %v5709 = vpop.permute.xlu0 %5708
  %5712 = vset.pattern.permute.xlu0 0
  %5713 = vperm.xlu0 %5712, %v5454
  %v5714 = vpop.permute.xlu0 %5713
  %5717 = vset.pattern.permute.xlu0 0
  %5718 = vperm.xlu0 %5717, %v5455
  %v5719 = vpop.permute.xlu0 %5718
  %v5721 = vmul.f32 %v5350, %v5459
  %v5722 = vmul.f32 %v5351, %v5464
  %v5723 = vmul.f32 %v5352, %v5469
  %v5724 = vmul.f32 %v5353, %v5474
  %v5725 = vmul.f32 %v5354, %v5479
  %v5726 = vmul.f32 %v5355, %v5484
  %v5727 = vmul.f32 %v5356, %v5489
  %v5728 = vmul.f32 %v5357, %v5494
  %v5729 = vmul.f32 %v5358, %v5499
  %v5730 = vmul.f32 %v5359, %v5504
  %v5731 = vmul.f32 %v5360, %v5509
  %v5732 = vmul.f32 %v5361, %v5514
  %v5733 = vmul.f32 %v5362, %v5519
  %v5734 = vmul.f32 %v5363, %v5524
  %v5735 = vmul.f32 %v5364, %v5529
  %v5736 = vmul.f32 %v5365, %v5534
  %v5737 = vmul.f32 %v5366, %v5539
  %v5738 = vmul.f32 %v5367, %v5544
  %v5739 = vmul.f32 %v5368, %v5549
  %v5740 = vmul.f32 %v5369, %v5554
  %v5741 = vmul.f32 %v5370, %v5559
  %v5742 = vmul.f32 %v5371, %v5564
  %v5743 = vmul.f32 %v5372, %v5569
  %v5744 = vmul.f32 %v5373, %v5574
  %v5745 = vmul.f32 %v5374, %v5579
  %v5746 = vmul.f32 %v5375, %v5584
  %v5747 = vmul.f32 %v5376, %v5589
  %v5748 = vmul.f32 %v5377, %v5594
  %v5749 = vmul.f32 %v5378, %v5599
  %v5750 = vmul.f32 %v5379, %v5604
  %v5751 = vmul.f32 %v5380, %v5609
  %v5752 = vmul.f32 %v5381, %v5614
  %v5753 = vmul.f32 %v5382, %v5619
  %v5754 = vmul.f32 %v5383, %v5624
  %v5755 = vmul.f32 %v5384, %v5629
  %v5756 = vmul.f32 %v5385, %v5634
  %v5757 = vmul.f32 %v5386, %v5639
  %v5758 = vmul.f32 %v5387, %v5644
  %v5759 = vmul.f32 %v5388, %v5649
  %v5760 = vmul.f32 %v5389, %v5654
  %v5761 = vmul.f32 %v5390, %v5659
  %v5762 = vmul.f32 %v5391, %v5664
  %v5763 = vmul.f32 %v5392, %v5669
  %v5764 = vmul.f32 %v5393, %v5674
  %v5765 = vmul.f32 %v5394, %v5679
  %v5766 = vmul.f32 %v5395, %v5684
  %v5767 = vmul.f32 %v5396, %v5689
  %v5768 = vmul.f32 %v5397, %v5694
  %v5769 = vmul.f32 %v5398, %v5699
  %v5770 = vmul.f32 %v5399, %v5704
  %v5771 = vmul.f32 %v5400, %v5709
  %v5772 = vmul.f32 %v5401, %v5714
  %v5773 = vmul.f32 %v5402, %v5719
  %5774 = vst.msk [vmem:[#allocation2] sm:$0xff] %vm132, %v5721
  %5775 = vst.msk [vmem:[#allocation2 + $0x8] sm:$0xff] %vm132, %v5722
  %5776 = vst.msk [vmem:[#allocation2 + $0x10] sm:$0xff] %vm132, %v5723
  %5777 = vst.msk [vmem:[#allocation2 + $0x18] sm:$0xff] %vm132, %v5724
  %5778 = vst.msk [vmem:[#allocation2 + $0x20] sm:$0xff] %vm132, %v5725
  %5779 = vst.msk [vmem:[#allocation2 + $0x28] sm:$0xff] %vm132, %v5726
  %5780 = vst.msk [vmem:[#allocation2 + $0x30] sm:$0xff] %vm132, %v5727
  %5781 = vst.msk [vmem:[#allocation2 + $0x38] sm:$0xff] %vm132, %v5728
  %5782 = vst.msk [vmem:[#allocation2 + $0x40] sm:$0xff] %vm132, %v5729
  %5783 = vst.msk [vmem:[#allocation2 + $0x48] sm:$0xff] %vm132, %v5730
  %5784 = vst.msk [vmem:[#allocation2 + $0x50] sm:$0xff] %vm132, %v5731
  %5785 = vst.msk [vmem:[#allocation2 + $0x58] sm:$0xff] %vm132, %v5732
  %5786 = vst.msk [vmem:[#allocation2 + $0x60] sm:$0xff] %vm132, %v5733
  %5787 = vst.msk [vmem:[#allocation2 + $0x68] sm:$0xff] %vm132, %v5734
  %5788 = vst.msk [vmem:[#allocation2 + $0x70] sm:$0xff] %vm132, %v5735
  %5789 = vst.msk [vmem:[#allocation2 + $0x78] sm:$0xff] %vm132, %v5736
  %5790 = vst.msk [vmem:[#allocation2 + $0x80] sm:$0xff] %vm132, %v5737
  %5791 = vst.msk [vmem:[#allocation2 + $0x88] sm:$0xff] %vm132, %v5738
  %5792 = vst.msk [vmem:[#allocation2 + $0x90] sm:$0xff] %vm132, %v5739
  %5793 = vst.msk [vmem:[#allocation2 + $0x98] sm:$0xff] %vm132, %v5740
  %5794 = vst.msk [vmem:[#allocation2 + $0xa0] sm:$0xff] %vm132, %v5741
  %5795 = vst.msk [vmem:[#allocation2 + $0xa8] sm:$0xff] %vm132, %v5742
  %5796 = vst.msk [vmem:[#allocation2 + $0xb0] sm:$0xff] %vm132, %v5743
  %5797 = vst.msk [vmem:[#allocation2 + $0xb8] sm:$0xff] %vm132, %v5744
  %5798 = vst.msk [vmem:[#allocation2 + $0xc0] sm:$0xff] %vm132, %v5745
  %5799 = vst.msk [vmem:[#allocation2 + $0xc8] sm:$0xff] %vm132, %v5746
  %5800 = vst.msk [vmem:[#allocation2 + $0xd0] sm:$0xff] %vm132, %v5747
  %5801 = vst.msk [vmem:[#allocation2 + $0xd8] sm:$0xff] %vm132, %v5748
  %5802 = vst.msk [vmem:[#allocation2 + $0xe0] sm:$0xff] %vm132, %v5749
  %5803 = vst.msk [vmem:[#allocation2 + $0xe8] sm:$0xff] %vm132, %v5750
  %5804 = vst.msk [vmem:[#allocation2 + $0xf0] sm:$0xff] %vm132, %v5751
  %5805 = vst.msk [vmem:[#allocation2 + $0xf8] sm:$0xff] %vm132, %v5752
  %5806 = vst.msk [vmem:[#allocation2 + $0x100] sm:$0xff] %vm132, %v5753
  %5807 = vst.msk [vmem:[#allocation2 + $0x108] sm:$0xff] %vm132, %v5754
  %5808 = vst.msk [vmem:[#allocation2 + $0x110] sm:$0xff] %vm132, %v5755
  %5809 = vst.msk [vmem:[#allocation2 + $0x118] sm:$0xff] %vm132, %v5756
  %5810 = vst.msk [vmem:[#allocation2 + $0x120] sm:$0xff] %vm132, %v5757
  %5811 = vst.msk [vmem:[#allocation2 + $0x128] sm:$0xff] %vm132, %v5758
  %5812 = vst.msk [vmem:[#allocation2 + $0x130] sm:$0xff] %vm132, %v5759
  %5813 = vst.msk [vmem:[#allocation2 + $0x138] sm:$0xff] %vm132, %v5760
  %5814 = vst.msk [vmem:[#allocation2 + $0x140] sm:$0xff] %vm132, %v5761
  %5815 = vst.msk [vmem:[#allocation2 + $0x148] sm:$0xff] %vm132, %v5762
  %5816 = vst.msk [vmem:[#allocation2 + $0x150] sm:$0xff] %vm132, %v5763
  %5817 = vst.msk [vmem:[#allocation2 + $0x158] sm:$0xff] %vm132, %v5764
  %5818 = vst.msk [vmem:[#allocation2 + $0x160] sm:$0xff] %vm132, %v5765
  %5819 = vst.msk [vmem:[#allocation2 + $0x168] sm:$0xff] %vm132, %v5766
  %5820 = vst.msk [vmem:[#allocation2 + $0x170] sm:$0xff] %vm132, %v5767
  %5821 = vst.msk [vmem:[#allocation2 + $0x178] sm:$0xff] %vm132, %v5768
  %5822 = vst.msk [vmem:[#allocation2 + $0x180] sm:$0xff] %vm132, %v5769
  %5823 = vst.msk [vmem:[#allocation2 + $0x188] sm:$0xff] %vm132, %v5770
  %5824 = vst.msk [vmem:[#allocation2 + $0x190] sm:$0xff] %vm132, %v5771
  %5825 = vst.msk [vmem:[#allocation2 + $0x198] sm:$0xff] %vm132, %v5772
  %5826 = vst.msk [vmem:[#allocation2 + $0x1a0] sm:$0xff] %vm132, %v5773
  %v5827 = vld [vmem:[#allocation2] sm:$0xff]
  %v5828 = vld [vmem:[#allocation2 + $0x8] sm:$0xff]
  %v5829 = vld [vmem:[#allocation2 + $0x10] sm:$0xff]
  %v5830 = vld [vmem:[#allocation2 + $0x18] sm:$0xff]
  %v5831 = vld [vmem:[#allocation2 + $0x20] sm:$0xff]
  %v5832 = vld [vmem:[#allocation2 + $0x28] sm:$0xff]
  %v5833 = vld [vmem:[#allocation2 + $0x30] sm:$0xff]
  %v5834 = vld [vmem:[#allocation2 + $0x38] sm:$0xff]
  %v5835 = vld [vmem:[#allocation2 + $0x40] sm:$0xff]
  %v5836 = vld [vmem:[#allocation2 + $0x48] sm:$0xff]
  %v5837 = vld [vmem:[#allocation2 + $0x50] sm:$0xff]
  %v5838 = vld [vmem:[#allocation2 + $0x58] sm:$0xff]
  %v5839 = vld [vmem:[#allocation2 + $0x60] sm:$0xff]
  %v5840 = vld [vmem:[#allocation2 + $0x68] sm:$0xff]
  %v5841 = vld [vmem:[#allocation2 + $0x70] sm:$0xff]
  %v5842 = vld [vmem:[#allocation2 + $0x78] sm:$0xff]
  %v5843 = vld [vmem:[#allocation2 + $0x80] sm:$0xff]
  %v5844 = vld [vmem:[#allocation2 + $0x88] sm:$0xff]
  %v5845 = vld [vmem:[#allocation2 + $0x90] sm:$0xff]
  %v5846 = vld [vmem:[#allocation2 + $0x98] sm:$0xff]
  %v5847 = vld [vmem:[#allocation2 + $0xa0] sm:$0xff]
  %v5848 = vld [vmem:[#allocation2 + $0xa8] sm:$0xff]
  %v5849 = vld [vmem:[#allocation2 + $0xb0] sm:$0xff]
  %v5850 = vld [vmem:[#allocation2 + $0xb8] sm:$0xff]
  %v5851 = vld [vmem:[#allocation2 + $0xc0] sm:$0xff]
  %v5852 = vld [vmem:[#allocation2 + $0xc8] sm:$0xff]
  %v5853 = vld [vmem:[#allocation2 + $0xd0] sm:$0xff]
  %v5854 = vld [vmem:[#allocation2 + $0xd8] sm:$0xff]
  %v5855 = vld [vmem:[#allocation2 + $0xe0] sm:$0xff]
  %v5856 = vld [vmem:[#allocation2 + $0xe8] sm:$0xff]
  %v5857 = vld [vmem:[#allocation2 + $0xf0] sm:$0xff]
  %v5858 = vld [vmem:[#allocation2 + $0xf8] sm:$0xff]
  %v5859 = vld [vmem:[#allocation2 + $0x100] sm:$0xff]
  %v5860 = vld [vmem:[#allocation2 + $0x108] sm:$0xff]
  %v5861 = vld [vmem:[#allocation2 + $0x110] sm:$0xff]
  %v5862 = vld [vmem:[#allocation2 + $0x118] sm:$0xff]
  %v5863 = vld [vmem:[#allocation2 + $0x120] sm:$0xff]
  %v5864 = vld [vmem:[#allocation2 + $0x128] sm:$0xff]
  %v5865 = vld [vmem:[#allocation2 + $0x130] sm:$0xff]
  %v5866 = vld [vmem:[#allocation2 + $0x138] sm:$0xff]
  %v5867 = vld [vmem:[#allocation2 + $0x140] sm:$0xff]
  %v5868 = vld [vmem:[#allocation2 + $0x148] sm:$0xff]
  %v5869 = vld [vmem:[#allocation2 + $0x150] sm:$0xff]
  %v5870 = vld [vmem:[#allocation2 + $0x158] sm:$0xff]
  %v5871 = vld [vmem:[#allocation2 + $0x160] sm:$0xff]
  %v5872 = vld [vmem:[#allocation2 + $0x168] sm:$0xff]
  %v5873 = vld [vmem:[#allocation2 + $0x170] sm:$0xff]
  %v5874 = vld [vmem:[#allocation2 + $0x178] sm:$0xff]
  %v5875 = vld [vmem:[#allocation2 + $0x180] sm:$0xff]
  %v5876 = vld [vmem:[%s4] sm:$0xff]
  %v5877 = vld [vmem:[#allocation2 + $0x1] sm:$0xff]
  %v5878 = vld [vmem:[#allocation2 + $0x9] sm:$0xff]
  %v5879 = vld [vmem:[#allocation2 + $0x11] sm:$0xff]
  %v5880 = vld [vmem:[#allocation2 + $0x19] sm:$0xff]
  %v5881 = vld [vmem:[#allocation2 + $0x21] sm:$0xff]
  %v5882 = vld [vmem:[#allocation2 + $0x29] sm:$0xff]
  %v5883 = vld [vmem:[#allocation2 + $0x31] sm:$0xff]
  %v5884 = vld [vmem:[#allocation2 + $0x39] sm:$0xff]
  %v5885 = vld [vmem:[#allocation2 + $0x41] sm:$0xff]
  %v5886 = vld [vmem:[#allocation2 + $0x49] sm:$0xff]
  %v5887 = vld [vmem:[#allocation2 + $0x51] sm:$0xff]
  %v5888 = vld [vmem:[#allocation2 + $0x59] sm:$0xff]
  %v5889 = vld [vmem:[#allocation2 + $0x61] sm:$0xff]
  %v5890 = vld [vmem:[#allocation2 + $0x69] sm:$0xff]
  %v5891 = vld [vmem:[#allocation2 + $0x71] sm:$0xff]
  %v5892 = vld [vmem:[#allocation2 + $0x79] sm:$0xff]
  %v5893 = vld [vmem:[#allocation2 + $0x81] sm:$0xff]
  %v5894 = vld [vmem:[#allocation2 + $0x89] sm:$0xff]
  %v5895 = vld [vmem:[#allocation2 + $0x91] sm:$0xff]
  %v5896 = vld [vmem:[#allocation2 + $0x99] sm:$0xff]
  %v5897 = vld [vmem:[#allocation2 + $0xa1] sm:$0xff]
  %v5898 = vld [vmem:[#allocation2 + $0xa9] sm:$0xff]
  %v5899 = vld [vmem:[#allocation2 + $0xb1] sm:$0xff]
  %v5900 = vld [vmem:[#allocation2 + $0xb9] sm:$0xff]
  %v5901 = vld [vmem:[#allocation2 + $0xc1] sm:$0xff]
  %v5902 = vld [vmem:[#allocation2 + $0xc9] sm:$0xff]
  %v5903 = vld [vmem:[#allocation2 + $0xd1] sm:$0xff]
  %v5904 = vld [vmem:[#allocation2 + $0xd9] sm:$0xff]
  %v5905 = vld [vmem:[#allocation2 + $0xe1] sm:$0xff]
  %v5906 = vld [vmem:[#allocation2 + $0xe9] sm:$0xff]
  %v5907 = vld [vmem:[#allocation2 + $0xf1] sm:$0xff]
  %v5908 = vld [vmem:[#allocation2 + $0xf9] sm:$0xff]
  %v5909 = vld [vmem:[#allocation2 + $0x101] sm:$0xff]
  %v5910 = vld [vmem:[#allocation2 + $0x109] sm:$0xff]
  %v5911 = vld [vmem:[#allocation2 + $0x111] sm:$0xff]
  %v5912 = vld [vmem:[#allocation2 + $0x119] sm:$0xff]
  %v5913 = vld [vmem:[#allocation2 + $0x121] sm:$0xff]
  %v5914 = vld [vmem:[#allocation2 + $0x129] sm:$0xff]
  %v5915 = vld [vmem:[#allocation2 + $0x131] sm:$0xff]
  %v5916 = vld [vmem:[#allocation2 + $0x139] sm:$0xff]
  %v5917 = vld [vmem:[#allocation2 + $0x141] sm:$0xff]
  %v5918 = vld [vmem:[#allocation2 + $0x149] sm:$0xff]
  %v5919 = vld [vmem:[#allocation2 + $0x151] sm:$0xff]
  %v5920 = vld [vmem:[#allocation2 + $0x159] sm:$0xff]
  %v5921 = vld [vmem:[#allocation2 + $0x161] sm:$0xff]
  %v5922 = vld [vmem:[#allocation2 + $0x169] sm:$0xff]
  %v5923 = vld [vmem:[#allocation2 + $0x171] sm:$0xff]
  %v5924 = vld [vmem:[#allocation2 + $0x179] sm:$0xff]
  %v5925 = vld [vmem:[#allocation2 + $0x181] sm:$0xff]
  %s5926 = scalar_lea.vmem %s4, 8
  %v5927 = vld [vmem:[%s5926] sm:$0xff]
  %v5929 = vsel %vm132, %v5877, 0
  %v5932 = vsel %vm132, %v5878, 0
  %v5935 = vsel %vm132, %v5879, 0
  %v5938 = vsel %vm132, %v5880, 0
  %v5941 = vsel %vm132, %v5881, 0
  %v5944 = vsel %vm132, %v5882, 0
  %v5947 = vsel %vm132, %v5883, 0
  %v5950 = vsel %vm132, %v5884, 0
  %v5953 = vsel %vm132, %v5885, 0
  %v5956 = vsel %vm132, %v5886, 0
  %v5959 = vsel %vm132, %v5887, 0
  %v5962 = vsel %vm132, %v5888, 0
  %v5965 = vsel %vm132, %v5889, 0
  %v5968 = vsel %vm132, %v5890, 0
  %v5971 = vsel %vm132, %v5891, 0
  %v5974 = vsel %vm132, %v5892, 0
  %v5977 = vsel %vm132, %v5893, 0
  %v5980 = vsel %vm132, %v5894, 0
  %v5983 = vsel %vm132, %v5895, 0
  %v5986 = vsel %vm132, %v5896, 0
  %v5989 = vsel %vm132, %v5897, 0
  %v5992 = vsel %vm132, %v5898, 0
  %v5995 = vsel %vm132, %v5899, 0
  %v5998 = vsel %vm132, %v5900, 0
  %v6001 = vsel %vm132, %v5901, 0
  %v6004 = vsel %vm132, %v5902, 0
  %v6007 = vsel %vm132, %v5903, 0
  %v6010 = vsel %vm132, %v5904, 0
  %v6013 = vsel %vm132, %v5905, 0
  %v6016 = vsel %vm132, %v5906, 0
  %v6019 = vsel %vm132, %v5907, 0
  %v6022 = vsel %vm132, %v5908, 0
  %v6025 = vsel %vm132, %v5909, 0
  %v6028 = vsel %vm132, %v5910, 0
  %v6031 = vsel %vm132, %v5911, 0
  %v6034 = vsel %vm132, %v5912, 0
  %v6037 = vsel %vm132, %v5913, 0
  %v6040 = vsel %vm132, %v5914, 0
  %v6043 = vsel %vm132, %v5915, 0
  %v6046 = vsel %vm132, %v5916, 0
  %v6049 = vsel %vm132, %v5917, 0
  %v6052 = vsel %vm132, %v5918, 0
  %v6055 = vsel %vm132, %v5919, 0
  %v6058 = vsel %vm132, %v5920, 0
  %v6061 = vsel %vm132, %v5921, 0
  %v6064 = vsel %vm132, %v5922, 0
  %v6067 = vsel %vm132, %v5923, 0
  %v6070 = vsel %vm132, %v5924, 0
  %v6073 = vsel %vm132, %v5925, 0
  %6075 = vmatprep.subr.mxu0 0.0
  %6076 = vmatpush1.msra.mxu0 0.0
  %6077 = vmatprep.subr.mxu0 0.0
  %6078 = vmatpush1.msra.mxu0 0.0
  %6079 = vmatprep.subr.mxu0 0.0
  %6080 = vmatpush1.msra.mxu0 0.0
  %6081 = vmatprep.subr.mxu0 0.0
  %6082 = vmatpush1.msra.mxu0 0.0
  %6083 = vmatprep.subr.mxu0 0.0
  %6084 = vmatpush1.msra.mxu0 0.0
  %6085 = vmatprep.subr.mxu0 0.0
  %6086 = vmatpush1.msra.mxu0 0.0
  %6087 = vmatprep.subr.mxu0 0.0
  %6088 = vmatpush1.msra.mxu0 0.0
  %6089 = vmatprep.subr.mxu0 0.0
  %6090 = vmatpush1.msra.mxu0 0.0
  %6091 = vmatprep.subr.mxu0 0.0
  %6092 = vmatpush1.msra.mxu0 0.0
  %6093 = vmatprep.subr.mxu0 0.0
  %6094 = vmatpush1.msra.mxu0 0.0
  %6095 = vmatprep.subr.mxu0 0.0
  %6096 = vmatpush1.msra.mxu0 0.0
  %6097 = vmatprep.subr.mxu0 0.0
  %6098 = vmatpush1.msra.mxu0 0.0
  %6099 = vmatprep.subr.mxu0 0.0
  %6100 = vmatpush1.msra.mxu0 0.0
  %6101 = vmatprep.subr.mxu0 0.0
  %6102 = vmatpush1.msra.mxu0 0.0
  %6103 = vmatprep.subr.mxu0 0.0
  %6104 = vmatpush1.msra.mxu0 0.0
  %6105 = vmatprep.subr.mxu0 0.0
  %6106 = vmatpush1.msra.mxu0 %v5927
  %6107 = vmatprep.subr.mxu0 0.0
  %6108 = vmatpush2.msra.mxu0 0.0
  %6109 = vmatprep.subr.mxu0 0.0
  %6110 = vmatpush2.msra.mxu0 0.0
  %6111 = vmatprep.subr.mxu0 0.0
  %6112 = vmatpush2.msra.mxu0 0.0
  %6113 = vmatprep.subr.mxu0 0.0
  %6114 = vmatpush2.msra.mxu0 0.0
  %6115 = vmatprep.subr.mxu0 0.0
  %6116 = vmatpush2.msra.mxu0 0.0
  %6117 = vmatprep.subr.mxu0 0.0
  %6118 = vmatpush2.msra.mxu0 0.0
  %6119 = vmatprep.subr.mxu0 0.0
  %6120 = vmatpush2.msra.mxu0 0.0
  %6121 = vmatprep.subr.mxu0 0.0
  %6122 = vmatpush2.msra.mxu0 0.0
  %6123 = vmatprep.subr.mxu0 0.0
  %6124 = vmatpush2.msra.mxu0 0.0
  %6125 = vmatprep.subr.mxu0 0.0
  %6126 = vmatpush2.msra.mxu0 0.0
  %6127 = vmatprep.subr.mxu0 0.0
  %6128 = vmatpush2.msra.mxu0 0.0
  %6129 = vmatprep.subr.mxu0 0.0
  %6130 = vmatpush2.msra.mxu0 0.0
  %6131 = vmatprep.subr.mxu0 0.0
  %6132 = vmatpush2.msra.mxu0 0.0
  %6133 = vmatprep.subr.mxu0 0.0
  %6134 = vmatpush2.msra.mxu0 0.0
  %6135 = vmatprep.subr.mxu0 0.0
  %6136 = vmatpush2.msra.mxu0 0.0
  %6137 = vmatprep.subr.mxu0 0.0
  %6138 = vmatpush2.msra.mxu0 0.0
  %6139 = vmatprep.mubr.f32.mxu0 0.0
  %6140 = vmatmul.mubr.f32.gmra.mxu0 %v5929
  %v6141 = vpop.f32.mrf.mxu0
  %v6142 = vadd.f32 0.0, %v6141
  %v6143 = vpop.f32.mrf.mxu0
  %6144 = vmatprep.mubr.f32.mxu0 0.0
  %6145 = vmatmul.mubr.f32.gmra.mxu0 %v5932
  %v6146 = vpop.f32.mrf.mxu0
  %v6147 = vadd.f32 0.0, %v6146
  %v6148 = vpop.f32.mrf.mxu0
  %6149 = vmatprep.mubr.f32.mxu0 0.0
  %6150 = vmatmul.mubr.f32.gmra.mxu0 %v5935
  %v6151 = vpop.f32.mrf.mxu0
  %v6152 = vadd.f32 0.0, %v6151
  %v6153 = vpop.f32.mrf.mxu0
  %6154 = vmatprep.mubr.f32.mxu0 0.0
  %6155 = vmatmul.mubr.f32.gmra.mxu0 %v5938
  %v6156 = vpop.f32.mrf.mxu0
  %v6157 = vadd.f32 0.0, %v6156
  %v6158 = vpop.f32.mrf.mxu0
  %6159 = vmatprep.mubr.f32.mxu0 0.0
  %6160 = vmatmul.mubr.f32.gmra.mxu0 %v5941
  %v6161 = vpop.f32.mrf.mxu0
  %v6162 = vadd.f32 0.0, %v6161
  %v6163 = vpop.f32.mrf.mxu0
  %6164 = vmatprep.mubr.f32.mxu0 0.0
  %6165 = vmatmul.mubr.f32.gmra.mxu0 %v5944
  %v6166 = vpop.f32.mrf.mxu0
  %v6167 = vadd.f32 0.0, %v6166
  %v6168 = vpop.f32.mrf.mxu0
  %6169 = vmatprep.mubr.f32.mxu0 0.0
  %6170 = vmatmul.mubr.f32.gmra.mxu0 %v5947
  %v6171 = vpop.f32.mrf.mxu0
  %v6172 = vadd.f32 0.0, %v6171
  %v6173 = vpop.f32.mrf.mxu0
  %6174 = vmatprep.mubr.f32.mxu0 0.0
  %6175 = vmatmul.mubr.f32.gmra.mxu0 %v5950
  %v6176 = vpop.f32.mrf.mxu0
  %v6177 = vadd.f32 0.0, %v6176
  %v6178 = vpop.f32.mrf.mxu0
  %6179 = vmatprep.mubr.f32.mxu0 0.0
  %6180 = vmatmul.mubr.f32.gmra.mxu0 %v5953
  %v6181 = vpop.f32.mrf.mxu0
  %v6182 = vadd.f32 0.0, %v6181
  %v6183 = vpop.f32.mrf.mxu0
  %6184 = vmatprep.mubr.f32.mxu0 0.0
  %6185 = vmatmul.mubr.f32.gmra.mxu0 %v5956
  %v6186 = vpop.f32.mrf.mxu0
  %v6187 = vadd.f32 0.0, %v6186
  %v6188 = vpop.f32.mrf.mxu0
  %6189 = vmatprep.mubr.f32.mxu0 0.0
  %6190 = vmatmul.mubr.f32.gmra.mxu0 %v5959
  %v6191 = vpop.f32.mrf.mxu0
  %v6192 = vadd.f32 0.0, %v6191
  %v6193 = vpop.f32.mrf.mxu0
  %6194 = vmatprep.mubr.f32.mxu0 0.0
  %6195 = vmatmul.mubr.f32.gmra.mxu0 %v5962
  %v6196 = vpop.f32.mrf.mxu0
  %v6197 = vadd.f32 0.0, %v6196
  %v6198 = vpop.f32.mrf.mxu0
  %6199 = vmatprep.mubr.f32.mxu0 0.0
  %6200 = vmatmul.mubr.f32.gmra.mxu0 %v5965
  %v6201 = vpop.f32.mrf.mxu0
  %v6202 = vadd.f32 0.0, %v6201
  %v6203 = vpop.f32.mrf.mxu0
  %6204 = vmatprep.mubr.f32.mxu0 0.0
  %6205 = vmatmul.mubr.f32.gmra.mxu0 %v5968
  %v6206 = vpop.f32.mrf.mxu0
  %v6207 = vadd.f32 0.0, %v6206
  %v6208 = vpop.f32.mrf.mxu0
  %6209 = vmatprep.mubr.f32.mxu0 0.0
  %6210 = vmatmul.mubr.f32.gmra.mxu0 %v5971
  %v6211 = vpop.f32.mrf.mxu0
  %v6212 = vadd.f32 0.0, %v6211
  %v6213 = vpop.f32.mrf.mxu0
  %6214 = vmatprep.mubr.f32.mxu0 0.0
  %6215 = vmatmul.mubr.f32.gmra.mxu0 %v5974
  %v6216 = vpop.f32.mrf.mxu0
  %v6217 = vadd.f32 0.0, %v6216
  %v6218 = vpop.f32.mrf.mxu0
  %6219 = vmatprep.mubr.f32.mxu0 0.0
  %6220 = vmatmul.mubr.f32.gmra.mxu0 %v5977
  %v6221 = vpop.f32.mrf.mxu0
  %v6222 = vadd.f32 0.0, %v6221
  %v6223 = vpop.f32.mrf.mxu0
  %6224 = vmatprep.mubr.f32.mxu0 0.0
  %6225 = vmatmul.mubr.f32.gmra.mxu0 %v5980
  %v6226 = vpop.f32.mrf.mxu0
  %v6227 = vadd.f32 0.0, %v6226
  %v6228 = vpop.f32.mrf.mxu0
  %6229 = vmatprep.mubr.f32.mxu0 0.0
  %6230 = vmatmul.mubr.f32.gmra.mxu0 %v5983
  %v6231 = vpop.f32.mrf.mxu0
  %v6232 = vadd.f32 0.0, %v6231
  %v6233 = vpop.f32.mrf.mxu0
  %6234 = vmatprep.mubr.f32.mxu0 0.0
  %6235 = vmatmul.mubr.f32.gmra.mxu0 %v5986
  %v6236 = vpop.f32.mrf.mxu0
  %v6237 = vadd.f32 0.0, %v6236
  %v6238 = vpop.f32.mrf.mxu0
  %6239 = vmatprep.mubr.f32.mxu0 0.0
  %6240 = vmatmul.mubr.f32.gmra.mxu0 %v5989
  %v6241 = vpop.f32.mrf.mxu0
  %v6242 = vadd.f32 0.0, %v6241
  %v6243 = vpop.f32.mrf.mxu0
  %6244 = vmatprep.mubr.f32.mxu0 0.0
  %6245 = vmatmul.mubr.f32.gmra.mxu0 %v5992
  %v6246 = vpop.f32.mrf.mxu0
  %v6247 = vadd.f32 0.0, %v6246
  %v6248 = vpop.f32.mrf.mxu0
  %6249 = vmatprep.mubr.f32.mxu0 0.0
  %6250 = vmatmul.mubr.f32.gmra.mxu0 %v5995
  %v6251 = vpop.f32.mrf.mxu0
  %v6252 = vadd.f32 0.0, %v6251
  %v6253 = vpop.f32.mrf.mxu0
  %6254 = vmatprep.mubr.f32.mxu0 0.0
  %6255 = vmatmul.mubr.f32.gmra.mxu0 %v5998
  %v6256 = vpop.f32.mrf.mxu0
  %v6257 = vadd.f32 0.0, %v6256
  %v6258 = vpop.f32.mrf.mxu0
  %6259 = vmatprep.mubr.f32.mxu0 0.0
  %6260 = vmatmul.mubr.f32.gmra.mxu0 %v6001
  %v6261 = vpop.f32.mrf.mxu0
  %v6262 = vadd.f32 0.0, %v6261
  %v6263 = vpop.f32.mrf.mxu0
  %6264 = vmatprep.mubr.f32.mxu0 0.0
  %6265 = vmatmul.mubr.f32.gmra.mxu0 %v6004
  %v6266 = vpop.f32.mrf.mxu0
  %v6267 = vadd.f32 0.0, %v6266
  %v6268 = vpop.f32.mrf.mxu0
  %6269 = vmatprep.mubr.f32.mxu0 0.0
  %6270 = vmatmul.mubr.f32.gmra.mxu0 %v6007
  %v6271 = vpop.f32.mrf.mxu0
  %v6272 = vadd.f32 0.0, %v6271
  %v6273 = vpop.f32.mrf.mxu0
  %6274 = vmatprep.mubr.f32.mxu0 0.0
  %6275 = vmatmul.mubr.f32.gmra.mxu0 %v6010
  %v6276 = vpop.f32.mrf.mxu0
  %v6277 = vadd.f32 0.0, %v6276
  %v6278 = vpop.f32.mrf.mxu0
  %6279 = vmatprep.mubr.f32.mxu0 0.0
  %6280 = vmatmul.mubr.f32.gmra.mxu0 %v6013
  %v6281 = vpop.f32.mrf.mxu0
  %v6282 = vadd.f32 0.0, %v6281
  %v6283 = vpop.f32.mrf.mxu0
  %6284 = vmatprep.mubr.f32.mxu0 0.0
  %6285 = vmatmul.mubr.f32.gmra.mxu0 %v6016
  %v6286 = vpop.f32.mrf.mxu0
  %v6287 = vadd.f32 0.0, %v6286
  %v6288 = vpop.f32.mrf.mxu0
  %6289 = vmatprep.mubr.f32.mxu0 0.0
  %6290 = vmatmul.mubr.f32.gmra.mxu0 %v6019
  %v6291 = vpop.f32.mrf.mxu0
  %v6292 = vadd.f32 0.0, %v6291
  %v6293 = vpop.f32.mrf.mxu0
  %6294 = vmatprep.mubr.f32.mxu0 0.0
  %6295 = vmatmul.mubr.f32.gmra.mxu0 %v6022
  %v6296 = vpop.f32.mrf.mxu0
  %v6297 = vadd.f32 0.0, %v6296
  %v6298 = vpop.f32.mrf.mxu0
  %6299 = vmatprep.mubr.f32.mxu0 0.0
  %6300 = vmatmul.mubr.f32.gmra.mxu0 %v6025
  %v6301 = vpop.f32.mrf.mxu0
  %v6302 = vadd.f32 0.0, %v6301
  %v6303 = vpop.f32.mrf.mxu0
  %6304 = vmatprep.mubr.f32.mxu0 0.0
  %6305 = vmatmul.mubr.f32.gmra.mxu0 %v6028
  %v6306 = vpop.f32.mrf.mxu0
  %v6307 = vadd.f32 0.0, %v6306
  %v6308 = vpop.f32.mrf.mxu0
  %6309 = vmatprep.mubr.f32.mxu0 0.0
  %6310 = vmatmul.mubr.f32.gmra.mxu0 %v6031
  %v6311 = vpop.f32.mrf.mxu0
  %v6312 = vadd.f32 0.0, %v6311
  %v6313 = vpop.f32.mrf.mxu0
  %6314 = vmatprep.mubr.f32.mxu0 0.0
  %6315 = vmatmul.mubr.f32.gmra.mxu0 %v6034
  %v6316 = vpop.f32.mrf.mxu0
  %v6317 = vadd.f32 0.0, %v6316
  %v6318 = vpop.f32.mrf.mxu0
  %6319 = vmatprep.mubr.f32.mxu0 0.0
  %6320 = vmatmul.mubr.f32.gmra.mxu0 %v6037
  %v6321 = vpop.f32.mrf.mxu0
  %v6322 = vadd.f32 0.0, %v6321
  %v6323 = vpop.f32.mrf.mxu0
  %6324 = vmatprep.mubr.f32.mxu0 0.0
  %6325 = vmatmul.mubr.f32.gmra.mxu0 %v6040
  %v6326 = vpop.f32.mrf.mxu0
  %v6327 = vadd.f32 0.0, %v6326
  %v6328 = vpop.f32.mrf.mxu0
  %6329 = vmatprep.mubr.f32.mxu0 0.0
  %6330 = vmatmul.mubr.f32.gmra.mxu0 %v6043
  %v6331 = vpop.f32.mrf.mxu0
  %v6332 = vadd.f32 0.0, %v6331
  %v6333 = vpop.f32.mrf.mxu0
  %6334 = vmatprep.mubr.f32.mxu0 0.0
  %6335 = vmatmul.mubr.f32.gmra.mxu0 %v6046
  %v6336 = vpop.f32.mrf.mxu0
  %v6337 = vadd.f32 0.0, %v6336
  %v6338 = vpop.f32.mrf.mxu0
  %6339 = vmatprep.mubr.f32.mxu0 0.0
  %6340 = vmatmul.mubr.f32.gmra.mxu0 %v6049
  %v6341 = vpop.f32.mrf.mxu0
  %v6342 = vadd.f32 0.0, %v6341
  %v6343 = vpop.f32.mrf.mxu0
  %6344 = vmatprep.mubr.f32.mxu0 0.0
  %6345 = vmatmul.mubr.f32.gmra.mxu0 %v6052
  %v6346 = vpop.f32.mrf.mxu0
  %v6347 = vadd.f32 0.0, %v6346
  %v6348 = vpop.f32.mrf.mxu0
  %6349 = vmatprep.mubr.f32.mxu0 0.0
  %6350 = vmatmul.mubr.f32.gmra.mxu0 %v6055
  %v6351 = vpop.f32.mrf.mxu0
  %v6352 = vadd.f32 0.0, %v6351
  %v6353 = vpop.f32.mrf.mxu0
  %6354 = vmatprep.mubr.f32.mxu0 0.0
  %6355 = vmatmul.mubr.f32.gmra.mxu0 %v6058
  %v6356 = vpop.f32.mrf.mxu0
  %v6357 = vadd.f32 0.0, %v6356
  %v6358 = vpop.f32.mrf.mxu0
  %6359 = vmatprep.mubr.f32.mxu0 0.0
  %6360 = vmatmul.mubr.f32.gmra.mxu0 %v6061
  %v6361 = vpop.f32.mrf.mxu0
  %v6362 = vadd.f32 0.0, %v6361
  %v6363 = vpop.f32.mrf.mxu0
  %6364 = vmatprep.mubr.f32.mxu0 0.0
  %6365 = vmatmul.mubr.f32.gmra.mxu0 %v6064
  %v6366 = vpop.f32.mrf.mxu0
  %v6367 = vadd.f32 0.0, %v6366
  %v6368 = vpop.f32.mrf.mxu0
  %6369 = vmatprep.mubr.f32.mxu0 0.0
  %6370 = vmatmul.mubr.f32.gmra.mxu0 %v6067
  %v6371 = vpop.f32.mrf.mxu0
  %v6372 = vadd.f32 0.0, %v6371
  %v6373 = vpop.f32.mrf.mxu0
  %6374 = vmatprep.mubr.f32.mxu0 0.0
  %6375 = vmatmul.mubr.f32.gmra.mxu0 %v6070
  %v6376 = vpop.f32.mrf.mxu0
  %v6377 = vadd.f32 0.0, %v6376
  %v6378 = vpop.f32.mrf.mxu0
  %6379 = vmatprep.mubr.f32.mxu0 0.0
  %6380 = vmatmul.mubr.f32.gmra.mxu0 %v6073
  %v6381 = vpop.f32.mrf.mxu0
  %v6382 = vadd.f32 0.0, %v6381
  %v6383 = vpop.f32.mrf.mxu0
  %6384 = vdwg.mxu0
  %v6386 = vsel %vm132, %v5827, 0
  %v6389 = vsel %vm132, %v5828, 0
  %v6392 = vsel %vm132, %v5829, 0
  %v6395 = vsel %vm132, %v5830, 0
  %v6398 = vsel %vm132, %v5831, 0
  %v6401 = vsel %vm132, %v5832, 0
  %v6404 = vsel %vm132, %v5833, 0
  %v6407 = vsel %vm132, %v5834, 0
  %v6410 = vsel %vm132, %v5835, 0
  %v6413 = vsel %vm132, %v5836, 0
  %v6416 = vsel %vm132, %v5837, 0
  %v6419 = vsel %vm132, %v5838, 0
  %v6422 = vsel %vm132, %v5839, 0
  %v6425 = vsel %vm132, %v5840, 0
  %v6428 = vsel %vm132, %v5841, 0
  %v6431 = vsel %vm132, %v5842, 0
  %v6434 = vsel %vm132, %v5843, 0
  %v6437 = vsel %vm132, %v5844, 0
  %v6440 = vsel %vm132, %v5845, 0
  %v6443 = vsel %vm132, %v5846, 0
  %v6446 = vsel %vm132, %v5847, 0
  %v6449 = vsel %vm132, %v5848, 0
  %v6452 = vsel %vm132, %v5849, 0
  %v6455 = vsel %vm132, %v5850, 0
  %v6458 = vsel %vm132, %v5851, 0
  %v6461 = vsel %vm132, %v5852, 0
  %v6464 = vsel %vm132, %v5853, 0
  %v6467 = vsel %vm132, %v5854, 0
  %v6470 = vsel %vm132, %v5855, 0
  %v6473 = vsel %vm132, %v5856, 0
  %v6476 = vsel %vm132, %v5857, 0
  %v6479 = vsel %vm132, %v5858, 0
  %v6482 = vsel %vm132, %v5859, 0
  %v6485 = vsel %vm132, %v5860, 0
  %v6488 = vsel %vm132, %v5861, 0
  %v6491 = vsel %vm132, %v5862, 0
  %v6494 = vsel %vm132, %v5863, 0
  %v6497 = vsel %vm132, %v5864, 0
  %v6500 = vsel %vm132, %v5865, 0
  %v6503 = vsel %vm132, %v5866, 0
  %v6506 = vsel %vm132, %v5867, 0
  %v6509 = vsel %vm132, %v5868, 0
  %v6512 = vsel %vm132, %v5869, 0
  %v6515 = vsel %vm132, %v5870, 0
  %v6518 = vsel %vm132, %v5871, 0
  %v6521 = vsel %vm132, %v5872, 0
  %v6524 = vsel %vm132, %v5873, 0
  %v6527 = vsel %vm132, %v5874, 0
  %v6530 = vsel %vm132, %v5875, 0
  %6532 = vmatprep.subr.mxu0 0.0
  %6533 = vmatpush1.msra.mxu0 0.0
  %6534 = vmatprep.subr.mxu0 0.0
  %6535 = vmatpush1.msra.mxu0 0.0
  %6536 = vmatprep.subr.mxu0 0.0
  %6537 = vmatpush1.msra.mxu0 0.0
  %6538 = vmatprep.subr.mxu0 0.0
  %6539 = vmatpush1.msra.mxu0 0.0
  %6540 = vmatprep.subr.mxu0 0.0
  %6541 = vmatpush1.msra.mxu0 0.0
  %6542 = vmatprep.subr.mxu0 0.0
  %6543 = vmatpush1.msra.mxu0 0.0
  %6544 = vmatprep.subr.mxu0 0.0
  %6545 = vmatpush1.msra.mxu0 0.0
  %6546 = vmatprep.subr.mxu0 0.0
  %6547 = vmatpush1.msra.mxu0 0.0
  %6548 = vmatprep.subr.mxu0 0.0
  %6549 = vmatpush1.msra.mxu0 0.0
  %6550 = vmatprep.subr.mxu0 0.0
  %6551 = vmatpush1.msra.mxu0 0.0
  %6552 = vmatprep.subr.mxu0 0.0
  %6553 = vmatpush1.msra.mxu0 0.0
  %6554 = vmatprep.subr.mxu0 0.0
  %6555 = vmatpush1.msra.mxu0 0.0
  %6556 = vmatprep.subr.mxu0 0.0
  %6557 = vmatpush1.msra.mxu0 0.0
  %6558 = vmatprep.subr.mxu0 0.0
  %6559 = vmatpush1.msra.mxu0 0.0
  %6560 = vmatprep.subr.mxu0 0.0
  %6561 = vmatpush1.msra.mxu0 0.0
  %6562 = vmatprep.subr.mxu0 0.0
  %6563 = vmatpush1.msra.mxu0 %v5876
  %6564 = vmatprep.subr.mxu0 0.0
  %6565 = vmatpush2.msra.mxu0 0.0
  %6566 = vmatprep.subr.mxu0 0.0
  %6567 = vmatpush2.msra.mxu0 0.0
  %6568 = vmatprep.subr.mxu0 0.0
  %6569 = vmatpush2.msra.mxu0 0.0
  %6570 = vmatprep.subr.mxu0 0.0
  %6571 = vmatpush2.msra.mxu0 0.0
  %6572 = vmatprep.subr.mxu0 0.0
  %6573 = vmatpush2.msra.mxu0 0.0
  %6574 = vmatprep.subr.mxu0 0.0
  %6575 = vmatpush2.msra.mxu0 0.0
  %6576 = vmatprep.subr.mxu0 0.0
  %6577 = vmatpush2.msra.mxu0 0.0
  %6578 = vmatprep.subr.mxu0 0.0
  %6579 = vmatpush2.msra.mxu0 0.0
  %6580 = vmatprep.subr.mxu0 0.0
  %6581 = vmatpush2.msra.mxu0 0.0
  %6582 = vmatprep.subr.mxu0 0.0
  %6583 = vmatpush2.msra.mxu0 0.0
  %6584 = vmatprep.subr.mxu0 0.0
  %6585 = vmatpush2.msra.mxu0 0.0
  %6586 = vmatprep.subr.mxu0 0.0
  %6587 = vmatpush2.msra.mxu0 0.0
  %6588 = vmatprep.subr.mxu0 0.0
  %6589 = vmatpush2.msra.mxu0 0.0
  %6590 = vmatprep.subr.mxu0 0.0
  %6591 = vmatpush2.msra.mxu0 0.0
  %6592 = vmatprep.subr.mxu0 0.0
  %6593 = vmatpush2.msra.mxu0 0.0
  %6594 = vmatprep.subr.mxu0 0.0
  %6595 = vmatpush2.msra.mxu0 0.0
  %6596 = vmatprep.mubr.f32.mxu0 0.0
  %6597 = vmatmul.mubr.f32.gmra.mxu0 %v6386
  %v6598 = vpop.f32.mrf.mxu0
  %v6599 = vadd.f32 %v6142, %v6598
  %v6600 = vpop.f32.mrf.mxu0
  %6601 = vmatprep.mubr.f32.mxu0 0.0
  %6602 = vmatmul.mubr.f32.gmra.mxu0 %v6389
  %v6603 = vpop.f32.mrf.mxu0
  %v6604 = vadd.f32 %v6147, %v6603
  %v6605 = vpop.f32.mrf.mxu0
  %6606 = vmatprep.mubr.f32.mxu0 0.0
  %6607 = vmatmul.mubr.f32.gmra.mxu0 %v6392
  %v6608 = vpop.f32.mrf.mxu0
  %v6609 = vadd.f32 %v6152, %v6608
  %v6610 = vpop.f32.mrf.mxu0
  %6611 = vmatprep.mubr.f32.mxu0 0.0
  %6612 = vmatmul.mubr.f32.gmra.mxu0 %v6395
  %v6613 = vpop.f32.mrf.mxu0
  %v6614 = vadd.f32 %v6157, %v6613
  %v6615 = vpop.f32.mrf.mxu0
  %6616 = vmatprep.mubr.f32.mxu0 0.0
  %6617 = vmatmul.mubr.f32.gmra.mxu0 %v6398
  %v6618 = vpop.f32.mrf.mxu0
  %v6619 = vadd.f32 %v6162, %v6618
  %v6620 = vpop.f32.mrf.mxu0
  %6621 = vmatprep.mubr.f32.mxu0 0.0
  %6622 = vmatmul.mubr.f32.gmra.mxu0 %v6401
  %v6623 = vpop.f32.mrf.mxu0
  %v6624 = vadd.f32 %v6167, %v6623
  %v6625 = vpop.f32.mrf.mxu0
  %6626 = vmatprep.mubr.f32.mxu0 0.0
  %6627 = vmatmul.mubr.f32.gmra.mxu0 %v6404
  %v6628 = vpop.f32.mrf.mxu0
  %v6629 = vadd.f32 %v6172, %v6628
  %v6630 = vpop.f32.mrf.mxu0
  %6631 = vmatprep.mubr.f32.mxu0 0.0
  %6632 = vmatmul.mubr.f32.gmra.mxu0 %v6407
  %v6633 = vpop.f32.mrf.mxu0
  %v6634 = vadd.f32 %v6177, %v6633
  %v6635 = vpop.f32.mrf.mxu0
  %6636 = vmatprep.mubr.f32.mxu0 0.0
  %6637 = vmatmul.mubr.f32.gmra.mxu0 %v6410
  %v6638 = vpop.f32.mrf.mxu0
  %v6639 = vadd.f32 %v6182, %v6638
  %v6640 = vpop.f32.mrf.mxu0
  %6641 = vmatprep.mubr.f32.mxu0 0.0
  %6642 = vmatmul.mubr.f32.gmra.mxu0 %v6413
  %v6643 = vpop.f32.mrf.mxu0
  %v6644 = vadd.f32 %v6187, %v6643
  %v6645 = vpop.f32.mrf.mxu0
  %6646 = vmatprep.mubr.f32.mxu0 0.0
  %6647 = vmatmul.mubr.f32.gmra.mxu0 %v6416
  %v6648 = vpop.f32.mrf.mxu0
  %v6649 = vadd.f32 %v6192, %v6648
  %v6650 = vpop.f32.mrf.mxu0
  %6651 = vmatprep.mubr.f32.mxu0 0.0
  %6652 = vmatmul.mubr.f32.gmra.mxu0 %v6419
  %v6653 = vpop.f32.mrf.mxu0
  %v6654 = vadd.f32 %v6197, %v6653
  %v6655 = vpop.f32.mrf.mxu0
  %6656 = vmatprep.mubr.f32.mxu0 0.0
  %6657 = vmatmul.mubr.f32.gmra.mxu0 %v6422
  %v6658 = vpop.f32.mrf.mxu0
  %v6659 = vadd.f32 %v6202, %v6658
  %v6660 = vpop.f32.mrf.mxu0
  %6661 = vmatprep.mubr.f32.mxu0 0.0
  %6662 = vmatmul.mubr.f32.gmra.mxu0 %v6425
  %v6663 = vpop.f32.mrf.mxu0
  %v6664 = vadd.f32 %v6207, %v6663
  %v6665 = vpop.f32.mrf.mxu0
  %6666 = vmatprep.mubr.f32.mxu0 0.0
  %6667 = vmatmul.mubr.f32.gmra.mxu0 %v6428
  %v6668 = vpop.f32.mrf.mxu0
  %v6669 = vadd.f32 %v6212, %v6668
  %v6670 = vpop.f32.mrf.mxu0
  %6671 = vmatprep.mubr.f32.mxu0 0.0
  %6672 = vmatmul.mubr.f32.gmra.mxu0 %v6431
  %v6673 = vpop.f32.mrf.mxu0
  %v6674 = vadd.f32 %v6217, %v6673
  %v6675 = vpop.f32.mrf.mxu0
  %6676 = vmatprep.mubr.f32.mxu0 0.0
  %6677 = vmatmul.mubr.f32.gmra.mxu0 %v6434
  %v6678 = vpop.f32.mrf.mxu0
  %v6679 = vadd.f32 %v6222, %v6678
  %v6680 = vpop.f32.mrf.mxu0
  %6681 = vmatprep.mubr.f32.mxu0 0.0
  %6682 = vmatmul.mubr.f32.gmra.mxu0 %v6437
  %v6683 = vpop.f32.mrf.mxu0
  %v6684 = vadd.f32 %v6227, %v6683
  %v6685 = vpop.f32.mrf.mxu0
  %6686 = vmatprep.mubr.f32.mxu0 0.0
  %6687 = vmatmul.mubr.f32.gmra.mxu0 %v6440
  %v6688 = vpop.f32.mrf.mxu0
  %v6689 = vadd.f32 %v6232, %v6688
  %v6690 = vpop.f32.mrf.mxu0
  %6691 = vmatprep.mubr.f32.mxu0 0.0
  %6692 = vmatmul.mubr.f32.gmra.mxu0 %v6443
  %v6693 = vpop.f32.mrf.mxu0
  %v6694 = vadd.f32 %v6237, %v6693
  %v6695 = vpop.f32.mrf.mxu0
  %6696 = vmatprep.mubr.f32.mxu0 0.0
  %6697 = vmatmul.mubr.f32.gmra.mxu0 %v6446
  %v6698 = vpop.f32.mrf.mxu0
  %v6699 = vadd.f32 %v6242, %v6698
  %v6700 = vpop.f32.mrf.mxu0
  %6701 = vmatprep.mubr.f32.mxu0 0.0
  %6702 = vmatmul.mubr.f32.gmra.mxu0 %v6449
  %v6703 = vpop.f32.mrf.mxu0
  %v6704 = vadd.f32 %v6247, %v6703
  %v6705 = vpop.f32.mrf.mxu0
  %6706 = vmatprep.mubr.f32.mxu0 0.0
  %6707 = vmatmul.mubr.f32.gmra.mxu0 %v6452
  %v6708 = vpop.f32.mrf.mxu0
  %v6709 = vadd.f32 %v6252, %v6708
  %v6710 = vpop.f32.mrf.mxu0
  %6711 = vmatprep.mubr.f32.mxu0 0.0
  %6712 = vmatmul.mubr.f32.gmra.mxu0 %v6455
  %v6713 = vpop.f32.mrf.mxu0
  %v6714 = vadd.f32 %v6257, %v6713
  %v6715 = vpop.f32.mrf.mxu0
  %6716 = vmatprep.mubr.f32.mxu0 0.0
  %6717 = vmatmul.mubr.f32.gmra.mxu0 %v6458
  %v6718 = vpop.f32.mrf.mxu0
  %v6719 = vadd.f32 %v6262, %v6718
  %v6720 = vpop.f32.mrf.mxu0
  %6721 = vmatprep.mubr.f32.mxu0 0.0
  %6722 = vmatmul.mubr.f32.gmra.mxu0 %v6461
  %v6723 = vpop.f32.mrf.mxu0
  %v6724 = vadd.f32 %v6267, %v6723
  %v6725 = vpop.f32.mrf.mxu0
  %6726 = vmatprep.mubr.f32.mxu0 0.0
  %6727 = vmatmul.mubr.f32.gmra.mxu0 %v6464
  %v6728 = vpop.f32.mrf.mxu0
  %v6729 = vadd.f32 %v6272, %v6728
  %v6730 = vpop.f32.mrf.mxu0
  %6731 = vmatprep.mubr.f32.mxu0 0.0
  %6732 = vmatmul.mubr.f32.gmra.mxu0 %v6467
  %v6733 = vpop.f32.mrf.mxu0
  %v6734 = vadd.f32 %v6277, %v6733
  %v6735 = vpop.f32.mrf.mxu0
  %6736 = vmatprep.mubr.f32.mxu0 0.0
  %6737 = vmatmul.mubr.f32.gmra.mxu0 %v6470
  %v6738 = vpop.f32.mrf.mxu0
  %v6739 = vadd.f32 %v6282, %v6738
  %v6740 = vpop.f32.mrf.mxu0
  %6741 = vmatprep.mubr.f32.mxu0 0.0
  %6742 = vmatmul.mubr.f32.gmra.mxu0 %v6473
  %v6743 = vpop.f32.mrf.mxu0
  %v6744 = vadd.f32 %v6287, %v6743
  %v6745 = vpop.f32.mrf.mxu0
  %6746 = vmatprep.mubr.f32.mxu0 0.0
  %6747 = vmatmul.mubr.f32.gmra.mxu0 %v6476
  %v6748 = vpop.f32.mrf.mxu0
  %v6749 = vadd.f32 %v6292, %v6748
  %v6750 = vpop.f32.mrf.mxu0
  %6751 = vmatprep.mubr.f32.mxu0 0.0
  %6752 = vmatmul.mubr.f32.gmra.mxu0 %v6479
  %v6753 = vpop.f32.mrf.mxu0
  %v6754 = vadd.f32 %v6297, %v6753
  %v6755 = vpop.f32.mrf.mxu0
  %6756 = vmatprep.mubr.f32.mxu0 0.0
  %6757 = vmatmul.mubr.f32.gmra.mxu0 %v6482
  %v6758 = vpop.f32.mrf.mxu0
  %v6759 = vadd.f32 %v6302, %v6758
  %v6760 = vpop.f32.mrf.mxu0
  %6761 = vmatprep.mubr.f32.mxu0 0.0
  %6762 = vmatmul.mubr.f32.gmra.mxu0 %v6485
  %v6763 = vpop.f32.mrf.mxu0
  %v6764 = vadd.f32 %v6307, %v6763
  %v6765 = vpop.f32.mrf.mxu0
  %6766 = vmatprep.mubr.f32.mxu0 0.0
  %6767 = vmatmul.mubr.f32.gmra.mxu0 %v6488
  %v6768 = vpop.f32.mrf.mxu0
  %v6769 = vadd.f32 %v6312, %v6768
  %v6770 = vpop.f32.mrf.mxu0
  %6771 = vmatprep.mubr.f32.mxu0 0.0
  %6772 = vmatmul.mubr.f32.gmra.mxu0 %v6491
  %v6773 = vpop.f32.mrf.mxu0
  %v6774 = vadd.f32 %v6317, %v6773
  %v6775 = vpop.f32.mrf.mxu0
  %6776 = vmatprep.mubr.f32.mxu0 0.0
  %6777 = vmatmul.mubr.f32.gmra.mxu0 %v6494
  %v6778 = vpop.f32.mrf.mxu0
  %v6779 = vadd.f32 %v6322, %v6778
  %v6780 = vpop.f32.mrf.mxu0
  %6781 = vmatprep.mubr.f32.mxu0 0.0
  %6782 = vmatmul.mubr.f32.gmra.mxu0 %v6497
  %v6783 = vpop.f32.mrf.mxu0
  %v6784 = vadd.f32 %v6327, %v6783
  %v6785 = vpop.f32.mrf.mxu0
  %6786 = vmatprep.mubr.f32.mxu0 0.0
  %6787 = vmatmul.mubr.f32.gmra.mxu0 %v6500
  %v6788 = vpop.f32.mrf.mxu0
  %v6789 = vadd.f32 %v6332, %v6788
  %v6790 = vpop.f32.mrf.mxu0
  %6791 = vmatprep.mubr.f32.mxu0 0.0
  %6792 = vmatmul.mubr.f32.gmra.mxu0 %v6503
  %v6793 = vpop.f32.mrf.mxu0
  %v6794 = vadd.f32 %v6337, %v6793
  %v6795 = vpop.f32.mrf.mxu0
  %6796 = vmatprep.mubr.f32.mxu0 0.0
  %6797 = vmatmul.mubr.f32.gmra.mxu0 %v6506
  %v6798 = vpop.f32.mrf.mxu0
  %v6799 = vadd.f32 %v6342, %v6798
  %v6800 = vpop.f32.mrf.mxu0
  %6801 = vmatprep.mubr.f32.mxu0 0.0
  %6802 = vmatmul.mubr.f32.gmra.mxu0 %v6509
  %v6803 = vpop.f32.mrf.mxu0
  %v6804 = vadd.f32 %v6347, %v6803
  %v6805 = vpop.f32.mrf.mxu0
  %6806 = vmatprep.mubr.f32.mxu0 0.0
  %6807 = vmatmul.mubr.f32.gmra.mxu0 %v6512
  %v6808 = vpop.f32.mrf.mxu0
  %v6809 = vadd.f32 %v6352, %v6808
  %v6810 = vpop.f32.mrf.mxu0
  %6811 = vmatprep.mubr.f32.mxu0 0.0
  %6812 = vmatmul.mubr.f32.gmra.mxu0 %v6515
  %v6813 = vpop.f32.mrf.mxu0
  %v6814 = vadd.f32 %v6357, %v6813
  %v6815 = vpop.f32.mrf.mxu0
  %6816 = vmatprep.mubr.f32.mxu0 0.0
  %6817 = vmatmul.mubr.f32.gmra.mxu0 %v6518
  %v6818 = vpop.f32.mrf.mxu0
  %v6819 = vadd.f32 %v6362, %v6818
  %v6820 = vpop.f32.mrf.mxu0
  %6821 = vmatprep.mubr.f32.mxu0 0.0
  %6822 = vmatmul.mubr.f32.gmra.mxu0 %v6521
  %v6823 = vpop.f32.mrf.mxu0
  %v6824 = vadd.f32 %v6367, %v6823
  %v6825 = vpop.f32.mrf.mxu0
  %6826 = vmatprep.mubr.f32.mxu0 0.0
  %6827 = vmatmul.mubr.f32.gmra.mxu0 %v6524
  %v6828 = vpop.f32.mrf.mxu0
  %v6829 = vadd.f32 %v6372, %v6828
  %v6830 = vpop.f32.mrf.mxu0
  %6831 = vmatprep.mubr.f32.mxu0 0.0
  %6832 = vmatmul.mubr.f32.gmra.mxu0 %v6527
  %v6833 = vpop.f32.mrf.mxu0
  %v6834 = vadd.f32 %v6377, %v6833
  %v6835 = vpop.f32.mrf.mxu0
  %6836 = vmatprep.mubr.f32.mxu0 0.0
  %6837 = vmatmul.mubr.f32.gmra.mxu0 %v6530
  %v6838 = vpop.f32.mrf.mxu0
  %v6839 = vadd.f32 %v6382, %v6838
  %v6840 = vpop.f32.mrf.mxu0
  %6841 = vdwg.mxu0
  %v6842 = vld [vmem:[#allocation2 + $0x2] sm:$0xff]
  %v6843 = vld [vmem:[#allocation2 + $0xa] sm:$0xff]
  %v6844 = vld [vmem:[#allocation2 + $0x12] sm:$0xff]
  %v6845 = vld [vmem:[#allocation2 + $0x1a] sm:$0xff]
  %v6846 = vld [vmem:[#allocation2 + $0x22] sm:$0xff]
  %v6847 = vld [vmem:[#allocation2 + $0x2a] sm:$0xff]
  %v6848 = vld [vmem:[#allocation2 + $0x32] sm:$0xff]
  %v6849 = vld [vmem:[#allocation2 + $0x3a] sm:$0xff]
  %v6850 = vld [vmem:[#allocation2 + $0x42] sm:$0xff]
  %v6851 = vld [vmem:[#allocation2 + $0x4a] sm:$0xff]
  %v6852 = vld [vmem:[#allocation2 + $0x52] sm:$0xff]
  %v6853 = vld [vmem:[#allocation2 + $0x5a] sm:$0xff]
  %v6854 = vld [vmem:[#allocation2 + $0x62] sm:$0xff]
  %v6855 = vld [vmem:[#allocation2 + $0x6a] sm:$0xff]
  %v6856 = vld [vmem:[#allocation2 + $0x72] sm:$0xff]
  %v6857 = vld [vmem:[#allocation2 + $0x7a] sm:$0xff]
  %v6858 = vld [vmem:[#allocation2 + $0x82] sm:$0xff]
  %v6859 = vld [vmem:[#allocation2 + $0x8a] sm:$0xff]
  %v6860 = vld [vmem:[#allocation2 + $0x92] sm:$0xff]
  %v6861 = vld [vmem:[#allocation2 + $0x9a] sm:$0xff]
  %v6862 = vld [vmem:[#allocation2 + $0xa2] sm:$0xff]
  %v6863 = vld [vmem:[#allocation2 + $0xaa] sm:$0xff]
  %v6864 = vld [vmem:[#allocation2 + $0xb2] sm:$0xff]
  %v6865 = vld [vmem:[#allocation2 + $0xba] sm:$0xff]
  %v6866 = vld [vmem:[#allocation2 + $0xc2] sm:$0xff]
  %v6867 = vld [vmem:[#allocation2 + $0xca] sm:$0xff]
  %v6868 = vld [vmem:[#allocation2 + $0xd2] sm:$0xff]
  %v6869 = vld [vmem:[#allocation2 + $0xda] sm:$0xff]
  %v6870 = vld [vmem:[#allocation2 + $0xe2] sm:$0xff]
  %v6871 = vld [vmem:[#allocation2 + $0xea] sm:$0xff]
  %v6872 = vld [vmem:[#allocation2 + $0xf2] sm:$0xff]
  %v6873 = vld [vmem:[#allocation2 + $0xfa] sm:$0xff]
  %v6874 = vld [vmem:[#allocation2 + $0x102] sm:$0xff]
  %v6875 = vld [vmem:[#allocation2 + $0x10a] sm:$0xff]
  %v6876 = vld [vmem:[#allocation2 + $0x112] sm:$0xff]
  %v6877 = vld [vmem:[#allocation2 + $0x11a] sm:$0xff]
  %v6878 = vld [vmem:[#allocation2 + $0x122] sm:$0xff]
  %v6879 = vld [vmem:[#allocation2 + $0x12a] sm:$0xff]
  %v6880 = vld [vmem:[#allocation2 + $0x132] sm:$0xff]
  %v6881 = vld [vmem:[#allocation2 + $0x13a] sm:$0xff]
  %v6882 = vld [vmem:[#allocation2 + $0x142] sm:$0xff]
  %v6883 = vld [vmem:[#allocation2 + $0x14a] sm:$0xff]
  %v6884 = vld [vmem:[#allocation2 + $0x152] sm:$0xff]
  %v6885 = vld [vmem:[#allocation2 + $0x15a] sm:$0xff]
  %v6886 = vld [vmem:[#allocation2 + $0x162] sm:$0xff]
  %v6887 = vld [vmem:[#allocation2 + $0x16a] sm:$0xff]
  %v6888 = vld [vmem:[#allocation2 + $0x172] sm:$0xff]
  %v6889 = vld [vmem:[#allocation2 + $0x17a] sm:$0xff]
  %v6890 = vld [vmem:[#allocation2 + $0x182] sm:$0xff]
  %s6891 = scalar_lea.vmem %s4, 16
  %v6892 = vld [vmem:[%s6891] sm:$0xff]
  %v6894 = vsel %vm132, %v6842, 0
  %v6897 = vsel %vm132, %v6843, 0
  %v6900 = vsel %vm132, %v6844, 0
  %v6903 = vsel %vm132, %v6845, 0
  %v6906 = vsel %vm132, %v6846, 0
  %v6909 = vsel %vm132, %v6847, 0
  %v6912 = vsel %vm132, %v6848, 0
  %v6915 = vsel %vm132, %v6849, 0
  %v6918 = vsel %vm132, %v6850, 0
  %v6921 = vsel %vm132, %v6851, 0
  %v6924 = vsel %vm132, %v6852, 0
  %v6927 = vsel %vm132, %v6853, 0
  %v6930 = vsel %vm132, %v6854, 0
  %v6933 = vsel %vm132, %v6855, 0
  %v6936 = vsel %vm132, %v6856, 0
  %v6939 = vsel %vm132, %v6857, 0
  %v6942 = vsel %vm132, %v6858, 0
  %v6945 = vsel %vm132, %v6859, 0
  %v6948 = vsel %vm132, %v6860, 0
  %v6951 = vsel %vm132, %v6861, 0
  %v6954 = vsel %vm132, %v6862, 0
  %v6957 = vsel %vm132, %v6863, 0
  %v6960 = vsel %vm132, %v6864, 0
  %v6963 = vsel %vm132, %v6865, 0
  %v6966 = vsel %vm132, %v6866, 0
  %v6969 = vsel %vm132, %v6867, 0
  %v6972 = vsel %vm132, %v6868, 0
  %v6975 = vsel %vm132, %v6869, 0
  %v6978 = vsel %vm132, %v6870, 0
  %v6981 = vsel %vm132, %v6871, 0
  %v6984 = vsel %vm132, %v6872, 0
  %v6987 = vsel %vm132, %v6873, 0
  %v6990 = vsel %vm132, %v6874, 0
  %v6993 = vsel %vm132, %v6875, 0
  %v6996 = vsel %vm132, %v6876, 0
  %v6999 = vsel %vm132, %v6877, 0
  %v7002 = vsel %vm132, %v6878, 0
  %v7005 = vsel %vm132, %v6879, 0
  %v7008 = vsel %vm132, %v6880, 0
  %v7011 = vsel %vm132, %v6881, 0
  %v7014 = vsel %vm132, %v6882, 0
  %v7017 = vsel %vm132, %v6883, 0
  %v7020 = vsel %vm132, %v6884, 0
  %v7023 = vsel %vm132, %v6885, 0
  %v7026 = vsel %vm132, %v6886, 0
  %v7029 = vsel %vm132, %v6887, 0
  %v7032 = vsel %vm132, %v6888, 0
  %v7035 = vsel %vm132, %v6889, 0
  %v7038 = vsel %vm132, %v6890, 0
  %7040 = vmatprep.subr.mxu0 0.0
  %7041 = vmatpush1.msra.mxu0 0.0
  %7042 = vmatprep.subr.mxu0 0.0
  %7043 = vmatpush1.msra.mxu0 0.0
  %7044 = vmatprep.subr.mxu0 0.0
  %7045 = vmatpush1.msra.mxu0 0.0
  %7046 = vmatprep.subr.mxu0 0.0
  %7047 = vmatpush1.msra.mxu0 0.0
  %7048 = vmatprep.subr.mxu0 0.0
  %7049 = vmatpush1.msra.mxu0 0.0
  %7050 = vmatprep.subr.mxu0 0.0
  %7051 = vmatpush1.msra.mxu0 0.0
  %7052 = vmatprep.subr.mxu0 0.0
  %7053 = vmatpush1.msra.mxu0 0.0
  %7054 = vmatprep.subr.mxu0 0.0
  %7055 = vmatpush1.msra.mxu0 0.0
  %7056 = vmatprep.subr.mxu0 0.0
  %7057 = vmatpush1.msra.mxu0 0.0
  %7058 = vmatprep.subr.mxu0 0.0
  %7059 = vmatpush1.msra.mxu0 0.0
  %7060 = vmatprep.subr.mxu0 0.0
  %7061 = vmatpush1.msra.mxu0 0.0
  %7062 = vmatprep.subr.mxu0 0.0
  %7063 = vmatpush1.msra.mxu0 0.0
  %7064 = vmatprep.subr.mxu0 0.0
  %7065 = vmatpush1.msra.mxu0 0.0
  %7066 = vmatprep.subr.mxu0 0.0
  %7067 = vmatpush1.msra.mxu0 0.0
  %7068 = vmatprep.subr.mxu0 0.0
  %7069 = vmatpush1.msra.mxu0 0.0
  %7070 = vmatprep.subr.mxu0 0.0
  %7071 = vmatpush1.msra.mxu0 %v6892
  %7072 = vmatprep.subr.mxu0 0.0
  %7073 = vmatpush2.msra.mxu0 0.0
  %7074 = vmatprep.subr.mxu0 0.0
  %7075 = vmatpush2.msra.mxu0 0.0
  %7076 = vmatprep.subr.mxu0 0.0
  %7077 = vmatpush2.msra.mxu0 0.0
  %7078 = vmatprep.subr.mxu0 0.0
  %7079 = vmatpush2.msra.mxu0 0.0
  %7080 = vmatprep.subr.mxu0 0.0
  %7081 = vmatpush2.msra.mxu0 0.0
  %7082 = vmatprep.subr.mxu0 0.0
  %7083 = vmatpush2.msra.mxu0 0.0
  %7084 = vmatprep.subr.mxu0 0.0
  %7085 = vmatpush2.msra.mxu0 0.0
  %7086 = vmatprep.subr.mxu0 0.0
  %7087 = vmatpush2.msra.mxu0 0.0
  %7088 = vmatprep.subr.mxu0 0.0
  %7089 = vmatpush2.msra.mxu0 0.0
  %7090 = vmatprep.subr.mxu0 0.0
  %7091 = vmatpush2.msra.mxu0 0.0
  %7092 = vmatprep.subr.mxu0 0.0
  %7093 = vmatpush2.msra.mxu0 0.0
  %7094 = vmatprep.subr.mxu0 0.0
  %7095 = vmatpush2.msra.mxu0 0.0
  %7096 = vmatprep.subr.mxu0 0.0
  %7097 = vmatpush2.msra.mxu0 0.0
  %7098 = vmatprep.subr.mxu0 0.0
  %7099 = vmatpush2.msra.mxu0 0.0
  %7100 = vmatprep.subr.mxu0 0.0
  %7101 = vmatpush2.msra.mxu0 0.0
  %7102 = vmatprep.subr.mxu0 0.0
  %7103 = vmatpush2.msra.mxu0 0.0
  %7104 = vmatprep.mubr.f32.mxu0 0.0
  %7105 = vmatmul.mubr.f32.gmra.mxu0 %v6894
  %v7106 = vpop.f32.mrf.mxu0
  %v7107 = vadd.f32 0.0, %v7106
  %v7108 = vpop.f32.mrf.mxu0
  %7109 = vmatprep.mubr.f32.mxu0 0.0
  %7110 = vmatmul.mubr.f32.gmra.mxu0 %v6897
  %v7111 = vpop.f32.mrf.mxu0
  %v7112 = vadd.f32 0.0, %v7111
  %v7113 = vpop.f32.mrf.mxu0
  %7114 = vmatprep.mubr.f32.mxu0 0.0
  %7115 = vmatmul.mubr.f32.gmra.mxu0 %v6900
  %v7116 = vpop.f32.mrf.mxu0
  %v7117 = vadd.f32 0.0, %v7116
  %v7118 = vpop.f32.mrf.mxu0
  %7119 = vmatprep.mubr.f32.mxu0 0.0
  %7120 = vmatmul.mubr.f32.gmra.mxu0 %v6903
  %v7121 = vpop.f32.mrf.mxu0
  %v7122 = vadd.f32 0.0, %v7121
  %v7123 = vpop.f32.mrf.mxu0
  %7124 = vmatprep.mubr.f32.mxu0 0.0
  %7125 = vmatmul.mubr.f32.gmra.mxu0 %v6906
  %v7126 = vpop.f32.mrf.mxu0
  %v7127 = vadd.f32 0.0, %v7126
  %v7128 = vpop.f32.mrf.mxu0
  %7129 = vmatprep.mubr.f32.mxu0 0.0
  %7130 = vmatmul.mubr.f32.gmra.mxu0 %v6909
  %v7131 = vpop.f32.mrf.mxu0
  %v7132 = vadd.f32 0.0, %v7131
  %v7133 = vpop.f32.mrf.mxu0
  %7134 = vmatprep.mubr.f32.mxu0 0.0
  %7135 = vmatmul.mubr.f32.gmra.mxu0 %v6912
  %v7136 = vpop.f32.mrf.mxu0
  %v7137 = vadd.f32 0.0, %v7136
  %v7138 = vpop.f32.mrf.mxu0
  %7139 = vmatprep.mubr.f32.mxu0 0.0
  %7140 = vmatmul.mubr.f32.gmra.mxu0 %v6915
  %v7141 = vpop.f32.mrf.mxu0
  %v7142 = vadd.f32 0.0, %v7141
  %v7143 = vpop.f32.mrf.mxu0
  %7144 = vmatprep.mubr.f32.mxu0 0.0
  %7145 = vmatmul.mubr.f32.gmra.mxu0 %v6918
  %v7146 = vpop.f32.mrf.mxu0
  %v7147 = vadd.f32 0.0, %v7146
  %v7148 = vpop.f32.mrf.mxu0
  %7149 = vmatprep.mubr.f32.mxu0 0.0
  %7150 = vmatmul.mubr.f32.gmra.mxu0 %v6921
  %v7151 = vpop.f32.mrf.mxu0
  %v7152 = vadd.f32 0.0, %v7151
  %v7153 = vpop.f32.mrf.mxu0
  %7154 = vmatprep.mubr.f32.mxu0 0.0
  %7155 = vmatmul.mubr.f32.gmra.mxu0 %v6924
  %v7156 = vpop.f32.mrf.mxu0
  %v7157 = vadd.f32 0.0, %v7156
  %v7158 = vpop.f32.mrf.mxu0
  %7159 = vmatprep.mubr.f32.mxu0 0.0
  %7160 = vmatmul.mubr.f32.gmra.mxu0 %v6927
  %v7161 = vpop.f32.mrf.mxu0
  %v7162 = vadd.f32 0.0, %v7161
  %v7163 = vpop.f32.mrf.mxu0
  %7164 = vmatprep.mubr.f32.mxu0 0.0
  %7165 = vmatmul.mubr.f32.gmra.mxu0 %v6930
  %v7166 = vpop.f32.mrf.mxu0
  %v7167 = vadd.f32 0.0, %v7166
  %v7168 = vpop.f32.mrf.mxu0
  %7169 = vmatprep.mubr.f32.mxu0 0.0
  %7170 = vmatmul.mubr.f32.gmra.mxu0 %v6933
  %v7171 = vpop.f32.mrf.mxu0
  %v7172 = vadd.f32 0.0, %v7171
  %v7173 = vpop.f32.mrf.mxu0
  %7174 = vmatprep.mubr.f32.mxu0 0.0
  %7175 = vmatmul.mubr.f32.gmra.mxu0 %v6936
  %v7176 = vpop.f32.mrf.mxu0
  %v7177 = vadd.f32 0.0, %v7176
  %v7178 = vpop.f32.mrf.mxu0
  %7179 = vmatprep.mubr.f32.mxu0 0.0
  %7180 = vmatmul.mubr.f32.gmra.mxu0 %v6939
  %v7181 = vpop.f32.mrf.mxu0
  %v7182 = vadd.f32 0.0, %v7181
  %v7183 = vpop.f32.mrf.mxu0
  %7184 = vmatprep.mubr.f32.mxu0 0.0
  %7185 = vmatmul.mubr.f32.gmra.mxu0 %v6942
  %v7186 = vpop.f32.mrf.mxu0
  %v7187 = vadd.f32 0.0, %v7186
  %v7188 = vpop.f32.mrf.mxu0
  %7189 = vmatprep.mubr.f32.mxu0 0.0
  %7190 = vmatmul.mubr.f32.gmra.mxu0 %v6945
  %v7191 = vpop.f32.mrf.mxu0
  %v7192 = vadd.f32 0.0, %v7191
  %v7193 = vpop.f32.mrf.mxu0
  %7194 = vmatprep.mubr.f32.mxu0 0.0
  %7195 = vmatmul.mubr.f32.gmra.mxu0 %v6948
  %v7196 = vpop.f32.mrf.mxu0
  %v7197 = vadd.f32 0.0, %v7196
  %v7198 = vpop.f32.mrf.mxu0
  %7199 = vmatprep.mubr.f32.mxu0 0.0
  %7200 = vmatmul.mubr.f32.gmra.mxu0 %v6951
  %v7201 = vpop.f32.mrf.mxu0
  %v7202 = vadd.f32 0.0, %v7201
  %v7203 = vpop.f32.mrf.mxu0
  %7204 = vmatprep.mubr.f32.mxu0 0.0
  %7205 = vmatmul.mubr.f32.gmra.mxu0 %v6954
  %v7206 = vpop.f32.mrf.mxu0
  %v7207 = vadd.f32 0.0, %v7206
  %v7208 = vpop.f32.mrf.mxu0
  %7209 = vmatprep.mubr.f32.mxu0 0.0
  %7210 = vmatmul.mubr.f32.gmra.mxu0 %v6957
  %v7211 = vpop.f32.mrf.mxu0
  %v7212 = vadd.f32 0.0, %v7211
  %v7213 = vpop.f32.mrf.mxu0
  %7214 = vmatprep.mubr.f32.mxu0 0.0
  %7215 = vmatmul.mubr.f32.gmra.mxu0 %v6960
  %v7216 = vpop.f32.mrf.mxu0
  %v7217 = vadd.f32 0.0, %v7216
  %v7218 = vpop.f32.mrf.mxu0
  %7219 = vmatprep.mubr.f32.mxu0 0.0
  %7220 = vmatmul.mubr.f32.gmra.mxu0 %v6963
  %v7221 = vpop.f32.mrf.mxu0
  %v7222 = vadd.f32 0.0, %v7221
  %v7223 = vpop.f32.mrf.mxu0
  %7224 = vmatprep.mubr.f32.mxu0 0.0
  %7225 = vmatmul.mubr.f32.gmra.mxu0 %v6966
  %v7226 = vpop.f32.mrf.mxu0
  %v7227 = vadd.f32 0.0, %v7226
  %v7228 = vpop.f32.mrf.mxu0
  %7229 = vmatprep.mubr.f32.mxu0 0.0
  %7230 = vmatmul.mubr.f32.gmra.mxu0 %v6969
  %v7231 = vpop.f32.mrf.mxu0
  %v7232 = vadd.f32 0.0, %v7231
  %v7233 = vpop.f32.mrf.mxu0
  %7234 = vmatprep.mubr.f32.mxu0 0.0
  %7235 = vmatmul.mubr.f32.gmra.mxu0 %v6972
  %v7236 = vpop.f32.mrf.mxu0
  %v7237 = vadd.f32 0.0, %v7236
  %v7238 = vpop.f32.mrf.mxu0
  %7239 = vmatprep.mubr.f32.mxu0 0.0
  %7240 = vmatmul.mubr.f32.gmra.mxu0 %v6975
  %v7241 = vpop.f32.mrf.mxu0
  %v7242 = vadd.f32 0.0, %v7241
  %v7243 = vpop.f32.mrf.mxu0
  %7244 = vmatprep.mubr.f32.mxu0 0.0
  %7245 = vmatmul.mubr.f32.gmra.mxu0 %v6978
  %v7246 = vpop.f32.mrf.mxu0
  %v7247 = vadd.f32 0.0, %v7246
  %v7248 = vpop.f32.mrf.mxu0
  %7249 = vmatprep.mubr.f32.mxu0 0.0
  %7250 = vmatmul.mubr.f32.gmra.mxu0 %v6981
  %v7251 = vpop.f32.mrf.mxu0
  %v7252 = vadd.f32 0.0, %v7251
  %v7253 = vpop.f32.mrf.mxu0
  %7254 = vmatprep.mubr.f32.mxu0 0.0
  %7255 = vmatmul.mubr.f32.gmra.mxu0 %v6984
  %v7256 = vpop.f32.mrf.mxu0
  %v7257 = vadd.f32 0.0, %v7256
  %v7258 = vpop.f32.mrf.mxu0
  %7259 = vmatprep.mubr.f32.mxu0 0.0
  %7260 = vmatmul.mubr.f32.gmra.mxu0 %v6987
  %v7261 = vpop.f32.mrf.mxu0
  %v7262 = vadd.f32 0.0, %v7261
  %v7263 = vpop.f32.mrf.mxu0
  %7264 = vmatprep.mubr.f32.mxu0 0.0
  %7265 = vmatmul.mubr.f32.gmra.mxu0 %v6990
  %v7266 = vpop.f32.mrf.mxu0
  %v7267 = vadd.f32 0.0, %v7266
  %v7268 = vpop.f32.mrf.mxu0
  %7269 = vmatprep.mubr.f32.mxu0 0.0
  %7270 = vmatmul.mubr.f32.gmra.mxu0 %v6993
  %v7271 = vpop.f32.mrf.mxu0
  %v7272 = vadd.f32 0.0, %v7271
  %v7273 = vpop.f32.mrf.mxu0
  %7274 = vmatprep.mubr.f32.mxu0 0.0
  %7275 = vmatmul.mubr.f32.gmra.mxu0 %v6996
  %v7276 = vpop.f32.mrf.mxu0
  %v7277 = vadd.f32 0.0, %v7276
  %v7278 = vpop.f32.mrf.mxu0
  %7279 = vmatprep.mubr.f32.mxu0 0.0
  %7280 = vmatmul.mubr.f32.gmra.mxu0 %v6999
  %v7281 = vpop.f32.mrf.mxu0
  %v7282 = vadd.f32 0.0, %v7281
  %v7283 = vpop.f32.mrf.mxu0
  %7284 = vmatprep.mubr.f32.mxu0 0.0
  %7285 = vmatmul.mubr.f32.gmra.mxu0 %v7002
  %v7286 = vpop.f32.mrf.mxu0
  %v7287 = vadd.f32 0.0, %v7286
  %v7288 = vpop.f32.mrf.mxu0
  %7289 = vmatprep.mubr.f32.mxu0 0.0
  %7290 = vmatmul.mubr.f32.gmra.mxu0 %v7005
  %v7291 = vpop.f32.mrf.mxu0
  %v7292 = vadd.f32 0.0, %v7291
  %v7293 = vpop.f32.mrf.mxu0
  %7294 = vmatprep.mubr.f32.mxu0 0.0
  %7295 = vmatmul.mubr.f32.gmra.mxu0 %v7008
  %v7296 = vpop.f32.mrf.mxu0
  %v7297 = vadd.f32 0.0, %v7296
  %v7298 = vpop.f32.mrf.mxu0
  %7299 = vmatprep.mubr.f32.mxu0 0.0
  %7300 = vmatmul.mubr.f32.gmra.mxu0 %v7011
  %v7301 = vpop.f32.mrf.mxu0
  %v7302 = vadd.f32 0.0, %v7301
  %v7303 = vpop.f32.mrf.mxu0
  %7304 = vmatprep.mubr.f32.mxu0 0.0
  %7305 = vmatmul.mubr.f32.gmra.mxu0 %v7014
  %v7306 = vpop.f32.mrf.mxu0
  %v7307 = vadd.f32 0.0, %v7306
  %v7308 = vpop.f32.mrf.mxu0
  %7309 = vmatprep.mubr.f32.mxu0 0.0
  %7310 = vmatmul.mubr.f32.gmra.mxu0 %v7017
  %v7311 = vpop.f32.mrf.mxu0
  %v7312 = vadd.f32 0.0, %v7311
  %v7313 = vpop.f32.mrf.mxu0
  %7314 = vmatprep.mubr.f32.mxu0 0.0
  %7315 = vmatmul.mubr.f32.gmra.mxu0 %v7020
  %v7316 = vpop.f32.mrf.mxu0
  %v7317 = vadd.f32 0.0, %v7316
  %v7318 = vpop.f32.mrf.mxu0
  %7319 = vmatprep.mubr.f32.mxu0 0.0
  %7320 = vmatmul.mubr.f32.gmra.mxu0 %v7023
  %v7321 = vpop.f32.mrf.mxu0
  %v7322 = vadd.f32 0.0, %v7321
  %v7323 = vpop.f32.mrf.mxu0
  %7324 = vmatprep.mubr.f32.mxu0 0.0
  %7325 = vmatmul.mubr.f32.gmra.mxu0 %v7026
  %v7326 = vpop.f32.mrf.mxu0
  %v7327 = vadd.f32 0.0, %v7326
  %v7328 = vpop.f32.mrf.mxu0
  %7329 = vmatprep.mubr.f32.mxu0 0.0
  %7330 = vmatmul.mubr.f32.gmra.mxu0 %v7029
  %v7331 = vpop.f32.mrf.mxu0
  %v7332 = vadd.f32 0.0, %v7331
  %v7333 = vpop.f32.mrf.mxu0
  %7334 = vmatprep.mubr.f32.mxu0 0.0
  %7335 = vmatmul.mubr.f32.gmra.mxu0 %v7032
  %v7336 = vpop.f32.mrf.mxu0
  %v7337 = vadd.f32 0.0, %v7336
  %v7338 = vpop.f32.mrf.mxu0
  %7339 = vmatprep.mubr.f32.mxu0 0.0
  %7340 = vmatmul.mubr.f32.gmra.mxu0 %v7035
  %v7341 = vpop.f32.mrf.mxu0
  %v7342 = vadd.f32 0.0, %v7341
  %v7343 = vpop.f32.mrf.mxu0
  %7344 = vmatprep.mubr.f32.mxu0 0.0
  %7345 = vmatmul.mubr.f32.gmra.mxu0 %v7038
  %v7346 = vpop.f32.mrf.mxu0
  %v7347 = vadd.f32 0.0, %v7346
  %v7348 = vpop.f32.mrf.mxu0
  %7349 = vdwg.mxu0
  %v7350 = vadd.f32 %v6599, %v7107
  %v7351 = vadd.f32 %v6604, %v7112
  %v7352 = vadd.f32 %v6609, %v7117
  %v7353 = vadd.f32 %v6614, %v7122
  %v7354 = vadd.f32 %v6619, %v7127
  %v7355 = vadd.f32 %v6624, %v7132
  %v7356 = vadd.f32 %v6629, %v7137
  %v7357 = vadd.f32 %v6634, %v7142
  %v7358 = vadd.f32 %v6639, %v7147
  %v7359 = vadd.f32 %v6644, %v7152
  %v7360 = vadd.f32 %v6649, %v7157
  %v7361 = vadd.f32 %v6654, %v7162
  %v7362 = vadd.f32 %v6659, %v7167
  %v7363 = vadd.f32 %v6664, %v7172
  %v7364 = vadd.f32 %v6669, %v7177
  %v7365 = vadd.f32 %v6674, %v7182
  %v7366 = vadd.f32 %v6679, %v7187
  %v7367 = vadd.f32 %v6684, %v7192
  %v7368 = vadd.f32 %v6689, %v7197
  %v7369 = vadd.f32 %v6694, %v7202
  %v7370 = vadd.f32 %v6699, %v7207
  %v7371 = vadd.f32 %v6704, %v7212
  %v7372 = vadd.f32 %v6709, %v7217
  %v7373 = vadd.f32 %v6714, %v7222
  %v7374 = vadd.f32 %v6719, %v7227
  %v7375 = vadd.f32 %v6724, %v7232
  %v7376 = vadd.f32 %v6729, %v7237
  %v7377 = vadd.f32 %v6734, %v7242
  %v7378 = vadd.f32 %v6739, %v7247
  %v7379 = vadd.f32 %v6744, %v7252
  %v7380 = vadd.f32 %v6749, %v7257
  %v7381 = vadd.f32 %v6754, %v7262
  %v7382 = vadd.f32 %v6759, %v7267
  %v7383 = vadd.f32 %v6764, %v7272
  %v7384 = vadd.f32 %v6769, %v7277
  %v7385 = vadd.f32 %v6774, %v7282
  %v7386 = vadd.f32 %v6779, %v7287
  %v7387 = vadd.f32 %v6784, %v7292
  %v7388 = vadd.f32 %v6789, %v7297
  %v7389 = vadd.f32 %v6794, %v7302
  %v7390 = vadd.f32 %v6799, %v7307
  %v7391 = vadd.f32 %v6804, %v7312
  %v7392 = vadd.f32 %v6809, %v7317
  %v7393 = vadd.f32 %v6814, %v7322
  %v7394 = vadd.f32 %v6819, %v7327
  %v7395 = vadd.f32 %v6824, %v7332
  %v7396 = vadd.f32 %v6829, %v7337
  %v7397 = vadd.f32 %v6834, %v7342
  %v7398 = vadd.f32 %v6839, %v7347
  %v7399 = vld [vmem:[#allocation2 + $0xe] sm:$0xff]
  %v7400 = vld [vmem:[#allocation2 + $0x16] sm:$0xff]
  %v7401 = vld [vmem:[#allocation2 + $0x1e] sm:$0xff]
  %v7402 = vld [vmem:[#allocation2 + $0x26] sm:$0xff]
  %v7403 = vld [vmem:[#allocation2 + $0x2e] sm:$0xff]
  %v7404 = vld [vmem:[#allocation2 + $0x36] sm:$0xff]
  %v7405 = vld [vmem:[#allocation2 + $0x3e] sm:$0xff]
  %v7406 = vld [vmem:[#allocation2 + $0x46] sm:$0xff]
  %v7407 = vld [vmem:[#allocation2 + $0x4e] sm:$0xff]
  %v7408 = vld [vmem:[#allocation2 + $0x56] sm:$0xff]
  %v7409 = vld [vmem:[#allocation2 + $0x5e] sm:$0xff]
  %v7410 = vld [vmem:[#allocation2 + $0x66] sm:$0xff]
  %v7411 = vld [vmem:[#allocation2 + $0x6e] sm:$0xff]
  %v7412 = vld [vmem:[#allocation2 + $0x76] sm:$0xff]
  %v7413 = vld [vmem:[#allocation2 + $0x7e] sm:$0xff]
  %v7414 = vld [vmem:[#allocation2 + $0x86] sm:$0xff]
  %v7415 = vld [vmem:[#allocation2 + $0x8e] sm:$0xff]
  %v7416 = vld [vmem:[#allocation2 + $0x96] sm:$0xff]
  %v7417 = vld [vmem:[#allocation2 + $0x9e] sm:$0xff]
  %v7418 = vld [vmem:[#allocation2 + $0xa6] sm:$0xff]
  %v7419 = vld [vmem:[#allocation2 + $0xae] sm:$0xff]
  %v7420 = vld [vmem:[#allocation2 + $0xb6] sm:$0xff]
  %v7421 = vld [vmem:[#allocation2 + $0xbe] sm:$0xff]
  %v7422 = vld [vmem:[#allocation2 + $0xc6] sm:$0xff]
  %v7423 = vld [vmem:[#allocation2 + $0xce] sm:$0xff]
  %v7424 = vld [vmem:[#allocation2 + $0xd6] sm:$0xff]
  %v7425 = vld [vmem:[#allocation2 + $0xde] sm:$0xff]
  %v7426 = vld [vmem:[#allocation2 + $0xe6] sm:$0xff]
  %v7427 = vld [vmem:[#allocation2 + $0xee] sm:$0xff]
  %v7428 = vld [vmem:[#allocation2 + $0xf6] sm:$0xff]
  %v7429 = vld [vmem:[#allocation2 + $0xfe] sm:$0xff]
  %v7430 = vld [vmem:[#allocation2 + $0x106] sm:$0xff]
  %v7431 = vld [vmem:[#allocation2 + $0x10e] sm:$0xff]
  %v7432 = vld [vmem:[#allocation2 + $0x116] sm:$0xff]
  %v7433 = vld [vmem:[#allocation2 + $0x11e] sm:$0xff]
  %v7434 = vld [vmem:[#allocation2 + $0x126] sm:$0xff]
  %v7435 = vld [vmem:[#allocation2 + $0x12e] sm:$0xff]
  %v7436 = vld [vmem:[#allocation2 + $0x136] sm:$0xff]
  %v7437 = vld [vmem:[#allocation2 + $0x13e] sm:$0xff]
  %v7438 = vld [vmem:[#allocation2 + $0x146] sm:$0xff]
  %v7439 = vld [vmem:[#allocation2 + $0x14e] sm:$0xff]
  %v7440 = vld [vmem:[#allocation2 + $0x156] sm:$0xff]
  %v7441 = vld [vmem:[#allocation2 + $0x15e] sm:$0xff]
  %v7442 = vld [vmem:[#allocation2 + $0x166] sm:$0xff]
  %v7443 = vld [vmem:[#allocation2 + $0x16e] sm:$0xff]
  %v7444 = vld [vmem:[#allocation2 + $0x176] sm:$0xff]
  %v7445 = vld [vmem:[#allocation2 + $0x17e] sm:$0xff]
  %v7446 = vld [vmem:[#allocation2 + $0x186] sm:$0xff]
  %v7447 = vld [vmem:[#allocation2 + $0x18e] sm:$0xff]
  %s7448 = scalar_lea.vmem %s4, 24
  %v7449 = vld [vmem:[%s7448] sm:$0xff]
  %v7451 = vsel %vm132, %v7399, 0
  %v7454 = vsel %vm132, %v7400, 0
  %v7457 = vsel %vm132, %v7401, 0
  %v7460 = vsel %vm132, %v7402, 0
  %v7463 = vsel %vm132, %v7403, 0
  %v7466 = vsel %vm132, %v7404, 0
  %v7469 = vsel %vm132, %v7405, 0
  %v7472 = vsel %vm132, %v7406, 0
  %v7475 = vsel %vm132, %v7407, 0
  %v7478 = vsel %vm132, %v7408, 0
  %v7481 = vsel %vm132, %v7409, 0
  %v7484 = vsel %vm132, %v7410, 0
  %v7487 = vsel %vm132, %v7411, 0
  %v7490 = vsel %vm132, %v7412, 0
  %v7493 = vsel %vm132, %v7413, 0
  %v7496 = vsel %vm132, %v7414, 0
  %v7499 = vsel %vm132, %v7415, 0
  %v7502 = vsel %vm132, %v7416, 0
  %v7505 = vsel %vm132, %v7417, 0
  %v7508 = vsel %vm132, %v7418, 0
  %v7511 = vsel %vm132, %v7419, 0
  %v7514 = vsel %vm132, %v7420, 0
  %v7517 = vsel %vm132, %v7421, 0
  %v7520 = vsel %vm132, %v7422, 0
  %v7523 = vsel %vm132, %v7423, 0
  %v7526 = vsel %vm132, %v7424, 0
  %v7529 = vsel %vm132, %v7425, 0
  %v7532 = vsel %vm132, %v7426, 0
  %v7535 = vsel %vm132, %v7427, 0
  %v7538 = vsel %vm132, %v7428, 0
  %v7541 = vsel %vm132, %v7429, 0
  %v7544 = vsel %vm132, %v7430, 0
  %v7547 = vsel %vm132, %v7431, 0
  %v7550 = vsel %vm132, %v7432, 0
  %v7553 = vsel %vm132, %v7433, 0
  %v7556 = vsel %vm132, %v7434, 0
  %v7559 = vsel %vm132, %v7435, 0
  %v7562 = vsel %vm132, %v7436, 0
  %v7565 = vsel %vm132, %v7437, 0
  %v7568 = vsel %vm132, %v7438, 0
  %v7571 = vsel %vm132, %v7439, 0
  %v7574 = vsel %vm132, %v7440, 0
  %v7577 = vsel %vm132, %v7441, 0
  %v7580 = vsel %vm132, %v7442, 0
  %v7583 = vsel %vm132, %v7443, 0
  %v7586 = vsel %vm132, %v7444, 0
  %v7589 = vsel %vm132, %v7445, 0
  %v7592 = vsel %vm132, %v7446, 0
  %v7595 = vsel %vm132, %v7447, 0
  %7597 = vmatprep.subr.mxu0 0.0
  %7598 = vmatpush1.msra.mxu0 0.0
  %7599 = vmatprep.subr.mxu0 0.0
  %7600 = vmatpush1.msra.mxu0 0.0
  %7601 = vmatprep.subr.mxu0 0.0
  %7602 = vmatpush1.msra.mxu0 0.0
  %7603 = vmatprep.subr.mxu0 0.0
  %7604 = vmatpush1.msra.mxu0 0.0
  %7605 = vmatprep.subr.mxu0 0.0
  %7606 = vmatpush1.msra.mxu0 0.0
  %7607 = vmatprep.subr.mxu0 0.0
  %7608 = vmatpush1.msra.mxu0 0.0
  %7609 = vmatprep.subr.mxu0 0.0
  %7610 = vmatpush1.msra.mxu0 0.0
  %7611 = vmatprep.subr.mxu0 0.0
  %7612 = vmatpush1.msra.mxu0 0.0
  %7613 = vmatprep.subr.mxu0 0.0
  %7614 = vmatpush1.msra.mxu0 0.0
  %7615 = vmatprep.subr.mxu0 0.0
  %7616 = vmatpush1.msra.mxu0 0.0
  %7617 = vmatprep.subr.mxu0 0.0
  %7618 = vmatpush1.msra.mxu0 0.0
  %7619 = vmatprep.subr.mxu0 0.0
  %7620 = vmatpush1.msra.mxu0 0.0
  %7621 = vmatprep.subr.mxu0 0.0
  %7622 = vmatpush1.msra.mxu0 0.0
  %7623 = vmatprep.subr.mxu0 0.0
  %7624 = vmatpush1.msra.mxu0 0.0
  %7625 = vmatprep.subr.mxu0 0.0
  %7626 = vmatpush1.msra.mxu0 0.0
  %7627 = vmatprep.subr.mxu0 0.0
  %7628 = vmatpush1.msra.mxu0 %v7449
  %7629 = vmatprep.subr.mxu0 0.0
  %7630 = vmatpush2.msra.mxu0 0.0
  %7631 = vmatprep.subr.mxu0 0.0
  %7632 = vmatpush2.msra.mxu0 0.0
  %7633 = vmatprep.subr.mxu0 0.0
  %7634 = vmatpush2.msra.mxu0 0.0
  %7635 = vmatprep.subr.mxu0 0.0
  %7636 = vmatpush2.msra.mxu0 0.0
  %7637 = vmatprep.subr.mxu0 0.0
  %7638 = vmatpush2.msra.mxu0 0.0
  %7639 = vmatprep.subr.mxu0 0.0
  %7640 = vmatpush2.msra.mxu0 0.0
  %7641 = vmatprep.subr.mxu0 0.0
  %7642 = vmatpush2.msra.mxu0 0.0
  %7643 = vmatprep.subr.mxu0 0.0
  %7644 = vmatpush2.msra.mxu0 0.0
  %7645 = vmatprep.subr.mxu0 0.0
  %7646 = vmatpush2.msra.mxu0 0.0
  %7647 = vmatprep.subr.mxu0 0.0
  %7648 = vmatpush2.msra.mxu0 0.0
  %7649 = vmatprep.subr.mxu0 0.0
  %7650 = vmatpush2.msra.mxu0 0.0
  %7651 = vmatprep.subr.mxu0 0.0
  %7652 = vmatpush2.msra.mxu0 0.0
  %7653 = vmatprep.subr.mxu0 0.0
  %7654 = vmatpush2.msra.mxu0 0.0
  %7655 = vmatprep.subr.mxu0 0.0
  %7656 = vmatpush2.msra.mxu0 0.0
  %7657 = vmatprep.subr.mxu0 0.0
  %7658 = vmatpush2.msra.mxu0 0.0
  %7659 = vmatprep.subr.mxu0 0.0
  %7660 = vmatpush2.msra.mxu0 0.0
  %7661 = vmatprep.mubr.f32.mxu0 0.0
  %7662 = vmatmul.mubr.f32.gmra.mxu0 %v7451
  %v7663 = vpop.f32.mrf.mxu0
  %v7664 = vadd.f32 0.0, %v7663
  %v7665 = vpop.f32.mrf.mxu0
  %7666 = vmatprep.mubr.f32.mxu0 0.0
  %7667 = vmatmul.mubr.f32.gmra.mxu0 %v7454
  %v7668 = vpop.f32.mrf.mxu0
  %v7669 = vadd.f32 0.0, %v7668
  %v7670 = vpop.f32.mrf.mxu0
  %7671 = vmatprep.mubr.f32.mxu0 0.0
  %7672 = vmatmul.mubr.f32.gmra.mxu0 %v7457
  %v7673 = vpop.f32.mrf.mxu0
  %v7674 = vadd.f32 0.0, %v7673
  %v7675 = vpop.f32.mrf.mxu0
  %7676 = vmatprep.mubr.f32.mxu0 0.0
  %7677 = vmatmul.mubr.f32.gmra.mxu0 %v7460
  %v7678 = vpop.f32.mrf.mxu0
  %v7679 = vadd.f32 0.0, %v7678
  %v7680 = vpop.f32.mrf.mxu0
  %7681 = vmatprep.mubr.f32.mxu0 0.0
  %7682 = vmatmul.mubr.f32.gmra.mxu0 %v7463
  %v7683 = vpop.f32.mrf.mxu0
  %v7684 = vadd.f32 0.0, %v7683
  %v7685 = vpop.f32.mrf.mxu0
  %7686 = vmatprep.mubr.f32.mxu0 0.0
  %7687 = vmatmul.mubr.f32.gmra.mxu0 %v7466
  %v7688 = vpop.f32.mrf.mxu0
  %v7689 = vadd.f32 0.0, %v7688
  %v7690 = vpop.f32.mrf.mxu0
  %7691 = vmatprep.mubr.f32.mxu0 0.0
  %7692 = vmatmul.mubr.f32.gmra.mxu0 %v7469
  %v7693 = vpop.f32.mrf.mxu0
  %v7694 = vadd.f32 0.0, %v7693
  %v7695 = vpop.f32.mrf.mxu0
  %7696 = vmatprep.mubr.f32.mxu0 0.0
  %7697 = vmatmul.mubr.f32.gmra.mxu0 %v7472
  %v7698 = vpop.f32.mrf.mxu0
  %v7699 = vadd.f32 0.0, %v7698
  %v7700 = vpop.f32.mrf.mxu0
  %7701 = vmatprep.mubr.f32.mxu0 0.0
  %7702 = vmatmul.mubr.f32.gmra.mxu0 %v7475
  %v7703 = vpop.f32.mrf.mxu0
  %v7704 = vadd.f32 0.0, %v7703
  %v7705 = vpop.f32.mrf.mxu0
  %7706 = vmatprep.mubr.f32.mxu0 0.0
  %7707 = vmatmul.mubr.f32.gmra.mxu0 %v7478
  %v7708 = vpop.f32.mrf.mxu0
  %v7709 = vadd.f32 0.0, %v7708
  %v7710 = vpop.f32.mrf.mxu0
  %7711 = vmatprep.mubr.f32.mxu0 0.0
  %7712 = vmatmul.mubr.f32.gmra.mxu0 %v7481
  %v7713 = vpop.f32.mrf.mxu0
  %v7714 = vadd.f32 0.0, %v7713
  %v7715 = vpop.f32.mrf.mxu0
  %7716 = vmatprep.mubr.f32.mxu0 0.0
  %7717 = vmatmul.mubr.f32.gmra.mxu0 %v7484
  %v7718 = vpop.f32.mrf.mxu0
  %v7719 = vadd.f32 0.0, %v7718
  %v7720 = vpop.f32.mrf.mxu0
  %7721 = vmatprep.mubr.f32.mxu0 0.0
  %7722 = vmatmul.mubr.f32.gmra.mxu0 %v7487
  %v7723 = vpop.f32.mrf.mxu0
  %v7724 = vadd.f32 0.0, %v7723
  %v7725 = vpop.f32.mrf.mxu0
  %7726 = vmatprep.mubr.f32.mxu0 0.0
  %7727 = vmatmul.mubr.f32.gmra.mxu0 %v7490
  %v7728 = vpop.f32.mrf.mxu0
  %v7729 = vadd.f32 0.0, %v7728
  %v7730 = vpop.f32.mrf.mxu0
  %7731 = vmatprep.mubr.f32.mxu0 0.0
  %7732 = vmatmul.mubr.f32.gmra.mxu0 %v7493
  %v7733 = vpop.f32.mrf.mxu0
  %v7734 = vadd.f32 0.0, %v7733
  %v7735 = vpop.f32.mrf.mxu0
  %7736 = vmatprep.mubr.f32.mxu0 0.0
  %7737 = vmatmul.mubr.f32.gmra.mxu0 %v7496
  %v7738 = vpop.f32.mrf.mxu0
  %v7739 = vadd.f32 0.0, %v7738
  %v7740 = vpop.f32.mrf.mxu0
  %7741 = vmatprep.mubr.f32.mxu0 0.0
  %7742 = vmatmul.mubr.f32.gmra.mxu0 %v7499
  %v7743 = vpop.f32.mrf.mxu0
  %v7744 = vadd.f32 0.0, %v7743
  %v7745 = vpop.f32.mrf.mxu0
  %7746 = vmatprep.mubr.f32.mxu0 0.0
  %7747 = vmatmul.mubr.f32.gmra.mxu0 %v7502
  %v7748 = vpop.f32.mrf.mxu0
  %v7749 = vadd.f32 0.0, %v7748
  %v7750 = vpop.f32.mrf.mxu0
  %7751 = vmatprep.mubr.f32.mxu0 0.0
  %7752 = vmatmul.mubr.f32.gmra.mxu0 %v7505
  %v7753 = vpop.f32.mrf.mxu0
  %v7754 = vadd.f32 0.0, %v7753
  %v7755 = vpop.f32.mrf.mxu0
  %7756 = vmatprep.mubr.f32.mxu0 0.0
  %7757 = vmatmul.mubr.f32.gmra.mxu0 %v7508
  %v7758 = vpop.f32.mrf.mxu0
  %v7759 = vadd.f32 0.0, %v7758
  %v7760 = vpop.f32.mrf.mxu0
  %7761 = vmatprep.mubr.f32.mxu0 0.0
  %7762 = vmatmul.mubr.f32.gmra.mxu0 %v7511
  %v7763 = vpop.f32.mrf.mxu0
  %v7764 = vadd.f32 0.0, %v7763
  %v7765 = vpop.f32.mrf.mxu0
  %7766 = vmatprep.mubr.f32.mxu0 0.0
  %7767 = vmatmul.mubr.f32.gmra.mxu0 %v7514
  %v7768 = vpop.f32.mrf.mxu0
  %v7769 = vadd.f32 0.0, %v7768
  %v7770 = vpop.f32.mrf.mxu0
  %7771 = vmatprep.mubr.f32.mxu0 0.0
  %7772 = vmatmul.mubr.f32.gmra.mxu0 %v7517
  %v7773 = vpop.f32.mrf.mxu0
  %v7774 = vadd.f32 0.0, %v7773
  %v7775 = vpop.f32.mrf.mxu0
  %7776 = vmatprep.mubr.f32.mxu0 0.0
  %7777 = vmatmul.mubr.f32.gmra.mxu0 %v7520
  %v7778 = vpop.f32.mrf.mxu0
  %v7779 = vadd.f32 0.0, %v7778
  %v7780 = vpop.f32.mrf.mxu0
  %7781 = vmatprep.mubr.f32.mxu0 0.0
  %7782 = vmatmul.mubr.f32.gmra.mxu0 %v7523
  %v7783 = vpop.f32.mrf.mxu0
  %v7784 = vadd.f32 0.0, %v7783
  %v7785 = vpop.f32.mrf.mxu0
  %7786 = vmatprep.mubr.f32.mxu0 0.0
  %7787 = vmatmul.mubr.f32.gmra.mxu0 %v7526
  %v7788 = vpop.f32.mrf.mxu0
  %v7789 = vadd.f32 0.0, %v7788
  %v7790 = vpop.f32.mrf.mxu0
  %7791 = vmatprep.mubr.f32.mxu0 0.0
  %7792 = vmatmul.mubr.f32.gmra.mxu0 %v7529
  %v7793 = vpop.f32.mrf.mxu0
  %v7794 = vadd.f32 0.0, %v7793
  %v7795 = vpop.f32.mrf.mxu0
  %7796 = vmatprep.mubr.f32.mxu0 0.0
  %7797 = vmatmul.mubr.f32.gmra.mxu0 %v7532
  %v7798 = vpop.f32.mrf.mxu0
  %v7799 = vadd.f32 0.0, %v7798
  %v7800 = vpop.f32.mrf.mxu0
  %7801 = vmatprep.mubr.f32.mxu0 0.0
  %7802 = vmatmul.mubr.f32.gmra.mxu0 %v7535
  %v7803 = vpop.f32.mrf.mxu0
  %v7804 = vadd.f32 0.0, %v7803
  %v7805 = vpop.f32.mrf.mxu0
  %7806 = vmatprep.mubr.f32.mxu0 0.0
  %7807 = vmatmul.mubr.f32.gmra.mxu0 %v7538
  %v7808 = vpop.f32.mrf.mxu0
  %v7809 = vadd.f32 0.0, %v7808
  %v7810 = vpop.f32.mrf.mxu0
  %7811 = vmatprep.mubr.f32.mxu0 0.0
  %7812 = vmatmul.mubr.f32.gmra.mxu0 %v7541
  %v7813 = vpop.f32.mrf.mxu0
  %v7814 = vadd.f32 0.0, %v7813
  %v7815 = vpop.f32.mrf.mxu0
  %7816 = vmatprep.mubr.f32.mxu0 0.0
  %7817 = vmatmul.mubr.f32.gmra.mxu0 %v7544
  %v7818 = vpop.f32.mrf.mxu0
  %v7819 = vadd.f32 0.0, %v7818
  %v7820 = vpop.f32.mrf.mxu0
  %7821 = vmatprep.mubr.f32.mxu0 0.0
  %7822 = vmatmul.mubr.f32.gmra.mxu0 %v7547
  %v7823 = vpop.f32.mrf.mxu0
  %v7824 = vadd.f32 0.0, %v7823
  %v7825 = vpop.f32.mrf.mxu0
  %7826 = vmatprep.mubr.f32.mxu0 0.0
  %7827 = vmatmul.mubr.f32.gmra.mxu0 %v7550
  %v7828 = vpop.f32.mrf.mxu0
  %v7829 = vadd.f32 0.0, %v7828
  %v7830 = vpop.f32.mrf.mxu0
  %7831 = vmatprep.mubr.f32.mxu0 0.0
  %7832 = vmatmul.mubr.f32.gmra.mxu0 %v7553
  %v7833 = vpop.f32.mrf.mxu0
  %v7834 = vadd.f32 0.0, %v7833
  %v7835 = vpop.f32.mrf.mxu0
  %7836 = vmatprep.mubr.f32.mxu0 0.0
  %7837 = vmatmul.mubr.f32.gmra.mxu0 %v7556
  %v7838 = vpop.f32.mrf.mxu0
  %v7839 = vadd.f32 0.0, %v7838
  %v7840 = vpop.f32.mrf.mxu0
  %7841 = vmatprep.mubr.f32.mxu0 0.0
  %7842 = vmatmul.mubr.f32.gmra.mxu0 %v7559
  %v7843 = vpop.f32.mrf.mxu0
  %v7844 = vadd.f32 0.0, %v7843
  %v7845 = vpop.f32.mrf.mxu0
  %7846 = vmatprep.mubr.f32.mxu0 0.0
  %7847 = vmatmul.mubr.f32.gmra.mxu0 %v7562
  %v7848 = vpop.f32.mrf.mxu0
  %v7849 = vadd.f32 0.0, %v7848
  %v7850 = vpop.f32.mrf.mxu0
  %7851 = vmatprep.mubr.f32.mxu0 0.0
  %7852 = vmatmul.mubr.f32.gmra.mxu0 %v7565
  %v7853 = vpop.f32.mrf.mxu0
  %v7854 = vadd.f32 0.0, %v7853
  %v7855 = vpop.f32.mrf.mxu0
  %7856 = vmatprep.mubr.f32.mxu0 0.0
  %7857 = vmatmul.mubr.f32.gmra.mxu0 %v7568
  %v7858 = vpop.f32.mrf.mxu0
  %v7859 = vadd.f32 0.0, %v7858
  %v7860 = vpop.f32.mrf.mxu0
  %7861 = vmatprep.mubr.f32.mxu0 0.0
  %7862 = vmatmul.mubr.f32.gmra.mxu0 %v7571
  %v7863 = vpop.f32.mrf.mxu0
  %v7864 = vadd.f32 0.0, %v7863
  %v7865 = vpop.f32.mrf.mxu0
  %7866 = vmatprep.mubr.f32.mxu0 0.0
  %7867 = vmatmul.mubr.f32.gmra.mxu0 %v7574
  %v7868 = vpop.f32.mrf.mxu0
  %v7869 = vadd.f32 0.0, %v7868
  %v7870 = vpop.f32.mrf.mxu0
  %7871 = vmatprep.mubr.f32.mxu0 0.0
  %7872 = vmatmul.mubr.f32.gmra.mxu0 %v7577
  %v7873 = vpop.f32.mrf.mxu0
  %v7874 = vadd.f32 0.0, %v7873
  %v7875 = vpop.f32.mrf.mxu0
  %7876 = vmatprep.mubr.f32.mxu0 0.0
  %7877 = vmatmul.mubr.f32.gmra.mxu0 %v7580
  %v7878 = vpop.f32.mrf.mxu0
  %v7879 = vadd.f32 0.0, %v7878
  %v7880 = vpop.f32.mrf.mxu0
  %7881 = vmatprep.mubr.f32.mxu0 0.0
  %7882 = vmatmul.mubr.f32.gmra.mxu0 %v7583
  %v7883 = vpop.f32.mrf.mxu0
  %v7884 = vadd.f32 0.0, %v7883
  %v7885 = vpop.f32.mrf.mxu0
  %7886 = vmatprep.mubr.f32.mxu0 0.0
  %7887 = vmatmul.mubr.f32.gmra.mxu0 %v7586
  %v7888 = vpop.f32.mrf.mxu0
  %v7889 = vadd.f32 0.0, %v7888
  %v7890 = vpop.f32.mrf.mxu0
  %7891 = vmatprep.mubr.f32.mxu0 0.0
  %7892 = vmatmul.mubr.f32.gmra.mxu0 %v7589
  %v7893 = vpop.f32.mrf.mxu0
  %v7894 = vadd.f32 0.0, %v7893
  %v7895 = vpop.f32.mrf.mxu0
  %7896 = vmatprep.mubr.f32.mxu0 0.0
  %7897 = vmatmul.mubr.f32.gmra.mxu0 %v7592
  %v7898 = vpop.f32.mrf.mxu0
  %v7899 = vadd.f32 0.0, %v7898
  %v7900 = vpop.f32.mrf.mxu0
  %7901 = vmatprep.mubr.f32.mxu0 0.0
  %7902 = vmatmul.mubr.f32.gmra.mxu0 %v7595
  %v7903 = vpop.f32.mrf.mxu0
  %v7904 = vadd.f32 0.0, %v7903
  %v7905 = vpop.f32.mrf.mxu0
  %7906 = vdwg.mxu0
  %v7907 = vadd.f32 %v7350, %v7664
  %v7908 = vadd.f32 %v7351, %v7669
  %v7909 = vadd.f32 %v7352, %v7674
  %v7910 = vadd.f32 %v7353, %v7679
  %v7911 = vadd.f32 %v7354, %v7684
  %v7912 = vadd.f32 %v7355, %v7689
  %v7913 = vadd.f32 %v7356, %v7694
  %v7914 = vadd.f32 %v7357, %v7699
  %v7915 = vadd.f32 %v7358, %v7704
  %v7916 = vadd.f32 %v7359, %v7709
  %v7917 = vadd.f32 %v7360, %v7714
  %v7918 = vadd.f32 %v7361, %v7719
  %v7919 = vadd.f32 %v7362, %v7724
  %v7920 = vadd.f32 %v7363, %v7729
  %v7921 = vadd.f32 %v7364, %v7734
  %v7922 = vadd.f32 %v7365, %v7739
  %v7923 = vadd.f32 %v7366, %v7744
  %v7924 = vadd.f32 %v7367, %v7749
  %v7925 = vadd.f32 %v7368, %v7754
  %v7926 = vadd.f32 %v7369, %v7759
  %v7927 = vadd.f32 %v7370, %v7764
  %v7928 = vadd.f32 %v7371, %v7769
  %v7929 = vadd.f32 %v7372, %v7774
  %v7930 = vadd.f32 %v7373, %v7779
  %v7931 = vadd.f32 %v7374, %v7784
  %v7932 = vadd.f32 %v7375, %v7789
  %v7933 = vadd.f32 %v7376, %v7794
  %v7934 = vadd.f32 %v7377, %v7799
  %v7935 = vadd.f32 %v7378, %v7804
  %v7936 = vadd.f32 %v7379, %v7809
  %v7937 = vadd.f32 %v7380, %v7814
  %v7938 = vadd.f32 %v7381, %v7819
  %v7939 = vadd.f32 %v7382, %v7824
  %v7940 = vadd.f32 %v7383, %v7829
  %v7941 = vadd.f32 %v7384, %v7834
  %v7942 = vadd.f32 %v7385, %v7839
  %v7943 = vadd.f32 %v7386, %v7844
  %v7944 = vadd.f32 %v7387, %v7849
  %v7945 = vadd.f32 %v7388, %v7854
  %v7946 = vadd.f32 %v7389, %v7859
  %v7947 = vadd.f32 %v7390, %v7864
  %v7948 = vadd.f32 %v7391, %v7869
  %v7949 = vadd.f32 %v7392, %v7874
  %v7950 = vadd.f32 %v7393, %v7879
  %v7951 = vadd.f32 %v7394, %v7884
  %v7952 = vadd.f32 %v7395, %v7889
  %v7953 = vadd.f32 %v7396, %v7894
  %v7954 = vadd.f32 %v7397, %v7899
  %v7955 = vadd.f32 %v7398, %v7904
  %v7956 = vld [vmem:[#allocation2 + $0xf] sm:$0xff]
  %v7957 = vld [vmem:[#allocation2 + $0x17] sm:$0xff]
  %v7958 = vld [vmem:[#allocation2 + $0x1f] sm:$0xff]
  %v7959 = vld [vmem:[#allocation2 + $0x27] sm:$0xff]
  %v7960 = vld [vmem:[#allocation2 + $0x2f] sm:$0xff]
  %v7961 = vld [vmem:[#allocation2 + $0x37] sm:$0xff]
  %v7962 = vld [vmem:[#allocation2 + $0x3f] sm:$0xff]
  %v7963 = vld [vmem:[#allocation2 + $0x47] sm:$0xff]
  %v7964 = vld [vmem:[#allocation2 + $0x4f] sm:$0xff]
  %v7965 = vld [vmem:[#allocation2 + $0x57] sm:$0xff]
  %v7966 = vld [vmem:[#allocation2 + $0x5f] sm:$0xff]
  %v7967 = vld [vmem:[#allocation2 + $0x67] sm:$0xff]
  %v7968 = vld [vmem:[#allocation2 + $0x6f] sm:$0xff]
  %v7969 = vld [vmem:[#allocation2 + $0x77] sm:$0xff]
  %v7970 = vld [vmem:[#allocation2 + $0x7f] sm:$0xff]
  %v7971 = vld [vmem:[#allocation2 + $0x87] sm:$0xff]
  %v7972 = vld [vmem:[#allocation2 + $0x8f] sm:$0xff]
  %v7973 = vld [vmem:[#allocation2 + $0x97] sm:$0xff]
  %v7974 = vld [vmem:[#allocation2 + $0x9f] sm:$0xff]
  %v7975 = vld [vmem:[#allocation2 + $0xa7] sm:$0xff]
  %v7976 = vld [vmem:[#allocation2 + $0xaf] sm:$0xff]
  %v7977 = vld [vmem:[#allocation2 + $0xb7] sm:$0xff]
  %v7978 = vld [vmem:[#allocation2 + $0xbf] sm:$0xff]
  %v7979 = vld [vmem:[#allocation2 + $0xc7] sm:$0xff]
  %v7980 = vld [vmem:[#allocation2 + $0xcf] sm:$0xff]
  %v7981 = vld [vmem:[#allocation2 + $0xd7] sm:$0xff]
  %v7982 = vld [vmem:[#allocation2 + $0xdf] sm:$0xff]
  %v7983 = vld [vmem:[#allocation2 + $0xe7] sm:$0xff]
  %v7984 = vld [vmem:[#allocation2 + $0xef] sm:$0xff]
  %v7985 = vld [vmem:[#allocation2 + $0xf7] sm:$0xff]
  %v7986 = vld [vmem:[#allocation2 + $0xff] sm:$0xff]
  %v7987 = vld [vmem:[#allocation2 + $0x107] sm:$0xff]
  %v7988 = vld [vmem:[#allocation2 + $0x10f] sm:$0xff]
  %v7989 = vld [vmem:[#allocation2 + $0x117] sm:$0xff]
  %v7990 = vld [vmem:[#allocation2 + $0x11f] sm:$0xff]
  %v7991 = vld [vmem:[#allocation2 + $0x127] sm:$0xff]
  %v7992 = vld [vmem:[#allocation2 + $0x12f] sm:$0xff]
  %v7993 = vld [vmem:[#allocation2 + $0x137] sm:$0xff]
  %v7994 = vld [vmem:[#allocation2 + $0x13f] sm:$0xff]
  %v7995 = vld [vmem:[#allocation2 + $0x147] sm:$0xff]
  %v7996 = vld [vmem:[#allocation2 + $0x14f] sm:$0xff]
  %v7997 = vld [vmem:[#allocation2 + $0x157] sm:$0xff]
  %v7998 = vld [vmem:[#allocation2 + $0x15f] sm:$0xff]
  %v7999 = vld [vmem:[#allocation2 + $0x167] sm:$0xff]
  %v8000 = vld [vmem:[#allocation2 + $0x16f] sm:$0xff]
  %v8001 = vld [vmem:[#allocation2 + $0x177] sm:$0xff]
  %v8002 = vld [vmem:[#allocation2 + $0x17f] sm:$0xff]
  %v8003 = vld [vmem:[#allocation2 + $0x187] sm:$0xff]
  %v8004 = vld [vmem:[#allocation2 + $0x18f] sm:$0xff]
  %s8005 = scalar_lea.vmem %s4, 32
  %v8006 = vld [vmem:[%s8005] sm:$0xff]
  %v8008 = vsel %vm132, %v7956, 0
  %v8011 = vsel %vm132, %v7957, 0
  %v8014 = vsel %vm132, %v7958, 0
  %v8017 = vsel %vm132, %v7959, 0
  %v8020 = vsel %vm132, %v7960, 0
  %v8023 = vsel %vm132, %v7961, 0
  %v8026 = vsel %vm132, %v7962, 0
  %v8029 = vsel %vm132, %v7963, 0
  %v8032 = vsel %vm132, %v7964, 0
  %v8035 = vsel %vm132, %v7965, 0
  %v8038 = vsel %vm132, %v7966, 0
  %v8041 = vsel %vm132, %v7967, 0
  %v8044 = vsel %vm132, %v7968, 0
  %v8047 = vsel %vm132, %v7969, 0
  %v8050 = vsel %vm132, %v7970, 0
  %v8053 = vsel %vm132, %v7971, 0
  %v8056 = vsel %vm132, %v7972, 0
  %v8059 = vsel %vm132, %v7973, 0
  %v8062 = vsel %vm132, %v7974, 0
  %v8065 = vsel %vm132, %v7975, 0
  %v8068 = vsel %vm132, %v7976, 0
  %v8071 = vsel %vm132, %v7977, 0
  %v8074 = vsel %vm132, %v7978, 0
  %v8077 = vsel %vm132, %v7979, 0
  %v8080 = vsel %vm132, %v7980, 0
  %v8083 = vsel %vm132, %v7981, 0
  %v8086 = vsel %vm132, %v7982, 0
  %v8089 = vsel %vm132, %v7983, 0
  %v8092 = vsel %vm132, %v7984, 0
  %v8095 = vsel %vm132, %v7985, 0
  %v8098 = vsel %vm132, %v7986, 0
  %v8101 = vsel %vm132, %v7987, 0
  %v8104 = vsel %vm132, %v7988, 0
  %v8107 = vsel %vm132, %v7989, 0
  %v8110 = vsel %vm132, %v7990, 0
  %v8113 = vsel %vm132, %v7991, 0
  %v8116 = vsel %vm132, %v7992, 0
  %v8119 = vsel %vm132, %v7993, 0
  %v8122 = vsel %vm132, %v7994, 0
  %v8125 = vsel %vm132, %v7995, 0
  %v8128 = vsel %vm132, %v7996, 0
  %v8131 = vsel %vm132, %v7997, 0
  %v8134 = vsel %vm132, %v7998, 0
  %v8137 = vsel %vm132, %v7999, 0
  %v8140 = vsel %vm132, %v8000, 0
  %v8143 = vsel %vm132, %v8001, 0
  %v8146 = vsel %vm132, %v8002, 0
  %v8149 = vsel %vm132, %v8003, 0
  %v8152 = vsel %vm132, %v8004, 0
  %8154 = vmatprep.subr.mxu0 0.0
  %8155 = vmatpush1.msra.mxu0 0.0
  %8156 = vmatprep.subr.mxu0 0.0
  %8157 = vmatpush1.msra.mxu0 0.0
  %8158 = vmatprep.subr.mxu0 0.0
  %8159 = vmatpush1.msra.mxu0 0.0
  %8160 = vmatprep.subr.mxu0 0.0
  %8161 = vmatpush1.msra.mxu0 0.0
  %8162 = vmatprep.subr.mxu0 0.0
  %8163 = vmatpush1.msra.mxu0 0.0
  %8164 = vmatprep.subr.mxu0 0.0
  %8165 = vmatpush1.msra.mxu0 0.0
  %8166 = vmatprep.subr.mxu0 0.0
  %8167 = vmatpush1.msra.mxu0 0.0
  %8168 = vmatprep.subr.mxu0 0.0
  %8169 = vmatpush1.msra.mxu0 0.0
  %8170 = vmatprep.subr.mxu0 0.0
  %8171 = vmatpush1.msra.mxu0 0.0
  %8172 = vmatprep.subr.mxu0 0.0
  %8173 = vmatpush1.msra.mxu0 0.0
  %8174 = vmatprep.subr.mxu0 0.0
  %8175 = vmatpush1.msra.mxu0 0.0
  %8176 = vmatprep.subr.mxu0 0.0
  %8177 = vmatpush1.msra.mxu0 0.0
  %8178 = vmatprep.subr.mxu0 0.0
  %8179 = vmatpush1.msra.mxu0 0.0
  %8180 = vmatprep.subr.mxu0 0.0
  %8181 = vmatpush1.msra.mxu0 0.0
  %8182 = vmatprep.subr.mxu0 0.0
  %8183 = vmatpush1.msra.mxu0 0.0
  %8184 = vmatprep.subr.mxu0 0.0
  %8185 = vmatpush1.msra.mxu0 %v8006
  %8186 = vmatprep.subr.mxu0 0.0
  %8187 = vmatpush2.msra.mxu0 0.0
  %8188 = vmatprep.subr.mxu0 0.0
  %8189 = vmatpush2.msra.mxu0 0.0
  %8190 = vmatprep.subr.mxu0 0.0
  %8191 = vmatpush2.msra.mxu0 0.0
  %8192 = vmatprep.subr.mxu0 0.0
  %8193 = vmatpush2.msra.mxu0 0.0
  %8194 = vmatprep.subr.mxu0 0.0
  %8195 = vmatpush2.msra.mxu0 0.0
  %8196 = vmatprep.subr.mxu0 0.0
  %8197 = vmatpush2.msra.mxu0 0.0
  %8198 = vmatprep.subr.mxu0 0.0
  %8199 = vmatpush2.msra.mxu0 0.0
  %8200 = vmatprep.subr.mxu0 0.0
  %8201 = vmatpush2.msra.mxu0 0.0
  %8202 = vmatprep.subr.mxu0 0.0
  %8203 = vmatpush2.msra.mxu0 0.0
  %8204 = vmatprep.subr.mxu0 0.0
  %8205 = vmatpush2.msra.mxu0 0.0
  %8206 = vmatprep.subr.mxu0 0.0
  %8207 = vmatpush2.msra.mxu0 0.0
  %8208 = vmatprep.subr.mxu0 0.0
  %8209 = vmatpush2.msra.mxu0 0.0
  %8210 = vmatprep.subr.mxu0 0.0
  %8211 = vmatpush2.msra.mxu0 0.0
  %8212 = vmatprep.subr.mxu0 0.0
  %8213 = vmatpush2.msra.mxu0 0.0
  %8214 = vmatprep.subr.mxu0 0.0
  %8215 = vmatpush2.msra.mxu0 0.0
  %8216 = vmatprep.subr.mxu0 0.0
  %8217 = vmatpush2.msra.mxu0 0.0
  %8218 = vmatprep.mubr.f32.mxu0 0.0
  %8219 = vmatmul.mubr.f32.gmra.mxu0 %v8008
  %v8220 = vpop.f32.mrf.mxu0
  %v8221 = vadd.f32 0.0, %v8220
  %v8222 = vpop.f32.mrf.mxu0
  %8223 = vmatprep.mubr.f32.mxu0 0.0
  %8224 = vmatmul.mubr.f32.gmra.mxu0 %v8011
  %v8225 = vpop.f32.mrf.mxu0
  %v8226 = vadd.f32 0.0, %v8225
  %v8227 = vpop.f32.mrf.mxu0
  %8228 = vmatprep.mubr.f32.mxu0 0.0
  %8229 = vmatmul.mubr.f32.gmra.mxu0 %v8014
  %v8230 = vpop.f32.mrf.mxu0
  %v8231 = vadd.f32 0.0, %v8230
  %v8232 = vpop.f32.mrf.mxu0
  %8233 = vmatprep.mubr.f32.mxu0 0.0
  %8234 = vmatmul.mubr.f32.gmra.mxu0 %v8017
  %v8235 = vpop.f32.mrf.mxu0
  %v8236 = vadd.f32 0.0, %v8235
  %v8237 = vpop.f32.mrf.mxu0
  %8238 = vmatprep.mubr.f32.mxu0 0.0
  %8239 = vmatmul.mubr.f32.gmra.mxu0 %v8020
  %v8240 = vpop.f32.mrf.mxu0
  %v8241 = vadd.f32 0.0, %v8240
  %v8242 = vpop.f32.mrf.mxu0
  %8243 = vmatprep.mubr.f32.mxu0 0.0
  %8244 = vmatmul.mubr.f32.gmra.mxu0 %v8023
  %v8245 = vpop.f32.mrf.mxu0
  %v8246 = vadd.f32 0.0, %v8245
  %v8247 = vpop.f32.mrf.mxu0
  %8248 = vmatprep.mubr.f32.mxu0 0.0
  %8249 = vmatmul.mubr.f32.gmra.mxu0 %v8026
  %v8250 = vpop.f32.mrf.mxu0
  %v8251 = vadd.f32 0.0, %v8250
  %v8252 = vpop.f32.mrf.mxu0
  %8253 = vmatprep.mubr.f32.mxu0 0.0
  %8254 = vmatmul.mubr.f32.gmra.mxu0 %v8029
  %v8255 = vpop.f32.mrf.mxu0
  %v8256 = vadd.f32 0.0, %v8255
  %v8257 = vpop.f32.mrf.mxu0
  %8258 = vmatprep.mubr.f32.mxu0 0.0
  %8259 = vmatmul.mubr.f32.gmra.mxu0 %v8032
  %v8260 = vpop.f32.mrf.mxu0
  %v8261 = vadd.f32 0.0, %v8260
  %v8262 = vpop.f32.mrf.mxu0
  %8263 = vmatprep.mubr.f32.mxu0 0.0
  %8264 = vmatmul.mubr.f32.gmra.mxu0 %v8035
  %v8265 = vpop.f32.mrf.mxu0
  %v8266 = vadd.f32 0.0, %v8265
  %v8267 = vpop.f32.mrf.mxu0
  %8268 = vmatprep.mubr.f32.mxu0 0.0
  %8269 = vmatmul.mubr.f32.gmra.mxu0 %v8038
  %v8270 = vpop.f32.mrf.mxu0
  %v8271 = vadd.f32 0.0, %v8270
  %v8272 = vpop.f32.mrf.mxu0
  %8273 = vmatprep.mubr.f32.mxu0 0.0
  %8274 = vmatmul.mubr.f32.gmra.mxu0 %v8041
  %v8275 = vpop.f32.mrf.mxu0
  %v8276 = vadd.f32 0.0, %v8275
  %v8277 = vpop.f32.mrf.mxu0
  %8278 = vmatprep.mubr.f32.mxu0 0.0
  %8279 = vmatmul.mubr.f32.gmra.mxu0 %v8044
  %v8280 = vpop.f32.mrf.mxu0
  %v8281 = vadd.f32 0.0, %v8280
  %v8282 = vpop.f32.mrf.mxu0
  %8283 = vmatprep.mubr.f32.mxu0 0.0
  %8284 = vmatmul.mubr.f32.gmra.mxu0 %v8047
  %v8285 = vpop.f32.mrf.mxu0
  %v8286 = vadd.f32 0.0, %v8285
  %v8287 = vpop.f32.mrf.mxu0
  %8288 = vmatprep.mubr.f32.mxu0 0.0
  %8289 = vmatmul.mubr.f32.gmra.mxu0 %v8050
  %v8290 = vpop.f32.mrf.mxu0
  %v8291 = vadd.f32 0.0, %v8290
  %v8292 = vpop.f32.mrf.mxu0
  %8293 = vmatprep.mubr.f32.mxu0 0.0
  %8294 = vmatmul.mubr.f32.gmra.mxu0 %v8053
  %v8295 = vpop.f32.mrf.mxu0
  %v8296 = vadd.f32 0.0, %v8295
  %v8297 = vpop.f32.mrf.mxu0
  %8298 = vmatprep.mubr.f32.mxu0 0.0
  %8299 = vmatmul.mubr.f32.gmra.mxu0 %v8056
  %v8300 = vpop.f32.mrf.mxu0
  %v8301 = vadd.f32 0.0, %v8300
  %v8302 = vpop.f32.mrf.mxu0
  %8303 = vmatprep.mubr.f32.mxu0 0.0
  %8304 = vmatmul.mubr.f32.gmra.mxu0 %v8059
  %v8305 = vpop.f32.mrf.mxu0
  %v8306 = vadd.f32 0.0, %v8305
  %v8307 = vpop.f32.mrf.mxu0
  %8308 = vmatprep.mubr.f32.mxu0 0.0
  %8309 = vmatmul.mubr.f32.gmra.mxu0 %v8062
  %v8310 = vpop.f32.mrf.mxu0
  %v8311 = vadd.f32 0.0, %v8310
  %v8312 = vpop.f32.mrf.mxu0
  %8313 = vmatprep.mubr.f32.mxu0 0.0
  %8314 = vmatmul.mubr.f32.gmra.mxu0 %v8065
  %v8315 = vpop.f32.mrf.mxu0
  %v8316 = vadd.f32 0.0, %v8315
  %v8317 = vpop.f32.mrf.mxu0
  %8318 = vmatprep.mubr.f32.mxu0 0.0
  %8319 = vmatmul.mubr.f32.gmra.mxu0 %v8068
  %v8320 = vpop.f32.mrf.mxu0
  %v8321 = vadd.f32 0.0, %v8320
  %v8322 = vpop.f32.mrf.mxu0
  %8323 = vmatprep.mubr.f32.mxu0 0.0
  %8324 = vmatmul.mubr.f32.gmra.mxu0 %v8071
  %v8325 = vpop.f32.mrf.mxu0
  %v8326 = vadd.f32 0.0, %v8325
  %v8327 = vpop.f32.mrf.mxu0
  %8328 = vmatprep.mubr.f32.mxu0 0.0
  %8329 = vmatmul.mubr.f32.gmra.mxu0 %v8074
  %v8330 = vpop.f32.mrf.mxu0
  %v8331 = vadd.f32 0.0, %v8330
  %v8332 = vpop.f32.mrf.mxu0
  %8333 = vmatprep.mubr.f32.mxu0 0.0
  %8334 = vmatmul.mubr.f32.gmra.mxu0 %v8077
  %v8335 = vpop.f32.mrf.mxu0
  %v8336 = vadd.f32 0.0, %v8335
  %v8337 = vpop.f32.mrf.mxu0
  %8338 = vmatprep.mubr.f32.mxu0 0.0
  %8339 = vmatmul.mubr.f32.gmra.mxu0 %v8080
  %v8340 = vpop.f32.mrf.mxu0
  %v8341 = vadd.f32 0.0, %v8340
  %v8342 = vpop.f32.mrf.mxu0
  %8343 = vmatprep.mubr.f32.mxu0 0.0
  %8344 = vmatmul.mubr.f32.gmra.mxu0 %v8083
  %v8345 = vpop.f32.mrf.mxu0
  %v8346 = vadd.f32 0.0, %v8345
  %v8347 = vpop.f32.mrf.mxu0
  %8348 = vmatprep.mubr.f32.mxu0 0.0
  %8349 = vmatmul.mubr.f32.gmra.mxu0 %v8086
  %v8350 = vpop.f32.mrf.mxu0
  %v8351 = vadd.f32 0.0, %v8350
  %v8352 = vpop.f32.mrf.mxu0
  %8353 = vmatprep.mubr.f32.mxu0 0.0
  %8354 = vmatmul.mubr.f32.gmra.mxu0 %v8089
  %v8355 = vpop.f32.mrf.mxu0
  %v8356 = vadd.f32 0.0, %v8355
  %v8357 = vpop.f32.mrf.mxu0
  %8358 = vmatprep.mubr.f32.mxu0 0.0
  %8359 = vmatmul.mubr.f32.gmra.mxu0 %v8092
  %v8360 = vpop.f32.mrf.mxu0
  %v8361 = vadd.f32 0.0, %v8360
  %v8362 = vpop.f32.mrf.mxu0
  %8363 = vmatprep.mubr.f32.mxu0 0.0
  %8364 = vmatmul.mubr.f32.gmra.mxu0 %v8095
  %v8365 = vpop.f32.mrf.mxu0
  %v8366 = vadd.f32 0.0, %v8365
  %v8367 = vpop.f32.mrf.mxu0
  %8368 = vmatprep.mubr.f32.mxu0 0.0
  %8369 = vmatmul.mubr.f32.gmra.mxu0 %v8098
  %v8370 = vpop.f32.mrf.mxu0
  %v8371 = vadd.f32 0.0, %v8370
  %v8372 = vpop.f32.mrf.mxu0
  %8373 = vmatprep.mubr.f32.mxu0 0.0
  %8374 = vmatmul.mubr.f32.gmra.mxu0 %v8101
  %v8375 = vpop.f32.mrf.mxu0
  %v8376 = vadd.f32 0.0, %v8375
  %v8377 = vpop.f32.mrf.mxu0
  %8378 = vmatprep.mubr.f32.mxu0 0.0
  %8379 = vmatmul.mubr.f32.gmra.mxu0 %v8104
  %v8380 = vpop.f32.mrf.mxu0
  %v8381 = vadd.f32 0.0, %v8380
  %v8382 = vpop.f32.mrf.mxu0
  %8383 = vmatprep.mubr.f32.mxu0 0.0
  %8384 = vmatmul.mubr.f32.gmra.mxu0 %v8107
  %v8385 = vpop.f32.mrf.mxu0
  %v8386 = vadd.f32 0.0, %v8385
  %v8387 = vpop.f32.mrf.mxu0
  %8388 = vmatprep.mubr.f32.mxu0 0.0
  %8389 = vmatmul.mubr.f32.gmra.mxu0 %v8110
  %v8390 = vpop.f32.mrf.mxu0
  %v8391 = vadd.f32 0.0, %v8390
  %v8392 = vpop.f32.mrf.mxu0
  %8393 = vmatprep.mubr.f32.mxu0 0.0
  %8394 = vmatmul.mubr.f32.gmra.mxu0 %v8113
  %v8395 = vpop.f32.mrf.mxu0
  %v8396 = vadd.f32 0.0, %v8395
  %v8397 = vpop.f32.mrf.mxu0
  %8398 = vmatprep.mubr.f32.mxu0 0.0
  %8399 = vmatmul.mubr.f32.gmra.mxu0 %v8116
  %v8400 = vpop.f32.mrf.mxu0
  %v8401 = vadd.f32 0.0, %v8400
  %v8402 = vpop.f32.mrf.mxu0
  %8403 = vmatprep.mubr.f32.mxu0 0.0
  %8404 = vmatmul.mubr.f32.gmra.mxu0 %v8119
  %v8405 = vpop.f32.mrf.mxu0
  %v8406 = vadd.f32 0.0, %v8405
  %v8407 = vpop.f32.mrf.mxu0
  %8408 = vmatprep.mubr.f32.mxu0 0.0
  %8409 = vmatmul.mubr.f32.gmra.mxu0 %v8122
  %v8410 = vpop.f32.mrf.mxu0
  %v8411 = vadd.f32 0.0, %v8410
  %v8412 = vpop.f32.mrf.mxu0
  %8413 = vmatprep.mubr.f32.mxu0 0.0
  %8414 = vmatmul.mubr.f32.gmra.mxu0 %v8125
  %v8415 = vpop.f32.mrf.mxu0
  %v8416 = vadd.f32 0.0, %v8415
  %v8417 = vpop.f32.mrf.mxu0
  %8418 = vmatprep.mubr.f32.mxu0 0.0
  %8419 = vmatmul.mubr.f32.gmra.mxu0 %v8128
  %v8420 = vpop.f32.mrf.mxu0
  %v8421 = vadd.f32 0.0, %v8420
  %v8422 = vpop.f32.mrf.mxu0
  %8423 = vmatprep.mubr.f32.mxu0 0.0
  %8424 = vmatmul.mubr.f32.gmra.mxu0 %v8131
  %v8425 = vpop.f32.mrf.mxu0
  %v8426 = vadd.f32 0.0, %v8425
  %v8427 = vpop.f32.mrf.mxu0
  %8428 = vmatprep.mubr.f32.mxu0 0.0
  %8429 = vmatmul.mubr.f32.gmra.mxu0 %v8134
  %v8430 = vpop.f32.mrf.mxu0
  %v8431 = vadd.f32 0.0, %v8430
  %v8432 = vpop.f32.mrf.mxu0
  %8433 = vmatprep.mubr.f32.mxu0 0.0
  %8434 = vmatmul.mubr.f32.gmra.mxu0 %v8137
  %v8435 = vpop.f32.mrf.mxu0
  %v8436 = vadd.f32 0.0, %v8435
  %v8437 = vpop.f32.mrf.mxu0
  %8438 = vmatprep.mubr.f32.mxu0 0.0
  %8439 = vmatmul.mubr.f32.gmra.mxu0 %v8140
  %v8440 = vpop.f32.mrf.mxu0
  %v8441 = vadd.f32 0.0, %v8440
  %v8442 = vpop.f32.mrf.mxu0
  %8443 = vmatprep.mubr.f32.mxu0 0.0
  %8444 = vmatmul.mubr.f32.gmra.mxu0 %v8143
  %v8445 = vpop.f32.mrf.mxu0
  %v8446 = vadd.f32 0.0, %v8445
  %v8447 = vpop.f32.mrf.mxu0
  %8448 = vmatprep.mubr.f32.mxu0 0.0
  %8449 = vmatmul.mubr.f32.gmra.mxu0 %v8146
  %v8450 = vpop.f32.mrf.mxu0
  %v8451 = vadd.f32 0.0, %v8450
  %v8452 = vpop.f32.mrf.mxu0
  %8453 = vmatprep.mubr.f32.mxu0 0.0
  %8454 = vmatmul.mubr.f32.gmra.mxu0 %v8149
  %v8455 = vpop.f32.mrf.mxu0
  %v8456 = vadd.f32 0.0, %v8455
  %v8457 = vpop.f32.mrf.mxu0
  %8458 = vmatprep.mubr.f32.mxu0 0.0
  %8459 = vmatmul.mubr.f32.gmra.mxu0 %v8152
  %v8460 = vpop.f32.mrf.mxu0
  %v8461 = vadd.f32 0.0, %v8460
  %v8462 = vpop.f32.mrf.mxu0
  %8463 = vdwg.mxu0
  %v8464 = vadd.f32 %v7907, %v8221
  %v8465 = vadd.f32 %v7908, %v8226
  %v8466 = vadd.f32 %v7909, %v8231
  %v8467 = vadd.f32 %v7910, %v8236
  %v8468 = vadd.f32 %v7911, %v8241
  %v8469 = vadd.f32 %v7912, %v8246
  %v8470 = vadd.f32 %v7913, %v8251
  %v8471 = vadd.f32 %v7914, %v8256
  %v8472 = vadd.f32 %v7915, %v8261
  %v8473 = vadd.f32 %v7916, %v8266
  %v8474 = vadd.f32 %v7917, %v8271
  %v8475 = vadd.f32 %v7918, %v8276
  %v8476 = vadd.f32 %v7919, %v8281
  %v8477 = vadd.f32 %v7920, %v8286
  %v8478 = vadd.f32 %v7921, %v8291
  %v8479 = vadd.f32 %v7922, %v8296
  %v8480 = vadd.f32 %v7923, %v8301
  %v8481 = vadd.f32 %v7924, %v8306
  %v8482 = vadd.f32 %v7925, %v8311
  %v8483 = vadd.f32 %v7926, %v8316
  %v8484 = vadd.f32 %v7927, %v8321
  %v8485 = vadd.f32 %v7928, %v8326
  %v8486 = vadd.f32 %v7929, %v8331
  %v8487 = vadd.f32 %v7930, %v8336
  %v8488 = vadd.f32 %v7931, %v8341
  %v8489 = vadd.f32 %v7932, %v8346
  %v8490 = vadd.f32 %v7933, %v8351
  %v8491 = vadd.f32 %v7934, %v8356
  %v8492 = vadd.f32 %v7935, %v8361
  %v8493 = vadd.f32 %v7936, %v8366
  %v8494 = vadd.f32 %v7937, %v8371
  %v8495 = vadd.f32 %v7938, %v8376
  %v8496 = vadd.f32 %v7939, %v8381
  %v8497 = vadd.f32 %v7940, %v8386
  %v8498 = vadd.f32 %v7941, %v8391
  %v8499 = vadd.f32 %v7942, %v8396
  %v8500 = vadd.f32 %v7943, %v8401
  %v8501 = vadd.f32 %v7944, %v8406
  %v8502 = vadd.f32 %v7945, %v8411
  %v8503 = vadd.f32 %v7946, %v8416
  %v8504 = vadd.f32 %v7947, %v8421
  %v8505 = vadd.f32 %v7948, %v8426
  %v8506 = vadd.f32 %v7949, %v8431
  %v8507 = vadd.f32 %v7950, %v8436
  %v8508 = vadd.f32 %v7951, %v8441
  %v8509 = vadd.f32 %v7952, %v8446
  %v8510 = vadd.f32 %v7953, %v8451
  %v8511 = vadd.f32 %v7954, %v8456
  %v8512 = vadd.f32 %v7955, %v8461
  %v8513 = vld [vmem:[#allocation2 + $0x10] sm:$0xff]
  %v8514 = vld [vmem:[#allocation2 + $0x18] sm:$0xff]
  %v8515 = vld [vmem:[#allocation2 + $0x20] sm:$0xff]
  %v8516 = vld [vmem:[#allocation2 + $0x28] sm:$0xff]
  %v8517 = vld [vmem:[#allocation2 + $0x30] sm:$0xff]
  %v8518 = vld [vmem:[#allocation2 + $0x38] sm:$0xff]
  %v8519 = vld [vmem:[#allocation2 + $0x40] sm:$0xff]
  %v8520 = vld [vmem:[#allocation2 + $0x48] sm:$0xff]
  %v8521 = vld [vmem:[#allocation2 + $0x50] sm:$0xff]
  %v8522 = vld [vmem:[#allocation2 + $0x58] sm:$0xff]
  %v8523 = vld [vmem:[#allocation2 + $0x60] sm:$0xff]
  %v8524 = vld [vmem:[#allocation2 + $0x68] sm:$0xff]
  %v8525 = vld [vmem:[#allocation2 + $0x70] sm:$0xff]
  %v8526 = vld [vmem:[#allocation2 + $0x78] sm:$0xff]
  %v8527 = vld [vmem:[#allocation2 + $0x80] sm:$0xff]
  %v8528 = vld [vmem:[#allocation2 + $0x88] sm:$0xff]
  %v8529 = vld [vmem:[#allocation2 + $0x90] sm:$0xff]
  %v8530 = vld [vmem:[#allocation2 + $0x98] sm:$0xff]
  %v8531 = vld [vmem:[#allocation2 + $0xa0] sm:$0xff]
  %v8532 = vld [vmem:[#allocation2 + $0xa8] sm:$0xff]
  %v8533 = vld [vmem:[#allocation2 + $0xb0] sm:$0xff]
  %v8534 = vld [vmem:[#allocation2 + $0xb8] sm:$0xff]
  %v8535 = vld [vmem:[#allocation2 + $0xc0] sm:$0xff]
  %v8536 = vld [vmem:[#allocation2 + $0xc8] sm:$0xff]
  %v8537 = vld [vmem:[#allocation2 + $0xd0] sm:$0xff]
  %v8538 = vld [vmem:[#allocation2 + $0xd8] sm:$0xff]
  %v8539 = vld [vmem:[#allocation2 + $0xe0] sm:$0xff]
  %v8540 = vld [vmem:[#allocation2 + $0xe8] sm:$0xff]
  %v8541 = vld [vmem:[#allocation2 + $0xf0] sm:$0xff]
  %v8542 = vld [vmem:[#allocation2 + $0xf8] sm:$0xff]
  %v8543 = vld [vmem:[#allocation2 + $0x100] sm:$0xff]
  %v8544 = vld [vmem:[#allocation2 + $0x108] sm:$0xff]
  %v8545 = vld [vmem:[#allocation2 + $0x110] sm:$0xff]
  %v8546 = vld [vmem:[#allocation2 + $0x118] sm:$0xff]
  %v8547 = vld [vmem:[#allocation2 + $0x120] sm:$0xff]
  %v8548 = vld [vmem:[#allocation2 + $0x128] sm:$0xff]
  %v8549 = vld [vmem:[#allocation2 + $0x130] sm:$0xff]
  %v8550 = vld [vmem:[#allocation2 + $0x138] sm:$0xff]
  %v8551 = vld [vmem:[#allocation2 + $0x140] sm:$0xff]
  %v8552 = vld [vmem:[#allocation2 + $0x148] sm:$0xff]
  %v8553 = vld [vmem:[#allocation2 + $0x150] sm:$0xff]
  %v8554 = vld [vmem:[#allocation2 + $0x158] sm:$0xff]
  %v8555 = vld [vmem:[#allocation2 + $0x160] sm:$0xff]
  %v8556 = vld [vmem:[#allocation2 + $0x168] sm:$0xff]
  %v8557 = vld [vmem:[#allocation2 + $0x170] sm:$0xff]
  %v8558 = vld [vmem:[#allocation2 + $0x178] sm:$0xff]
  %v8559 = vld [vmem:[#allocation2 + $0x180] sm:$0xff]
  %v8560 = vld [vmem:[#allocation2 + $0x188] sm:$0xff]
  %v8561 = vld [vmem:[#allocation2 + $0x190] sm:$0xff]
  %s8562 = scalar_lea.vmem %s4, 40
  %v8563 = vld [vmem:[%s8562] sm:$0xff]
  %v8565 = vsel %vm132, %v8513, 0
  %v8568 = vsel %vm132, %v8514, 0
  %v8571 = vsel %vm132, %v8515, 0
  %v8574 = vsel %vm132, %v8516, 0
  %v8577 = vsel %vm132, %v8517, 0
  %v8580 = vsel %vm132, %v8518, 0
  %v8583 = vsel %vm132, %v8519, 0
  %v8586 = vsel %vm132, %v8520, 0
  %v8589 = vsel %vm132, %v8521, 0
  %v8592 = vsel %vm132, %v8522, 0
  %v8595 = vsel %vm132, %v8523, 0
  %v8598 = vsel %vm132, %v8524, 0
  %v8601 = vsel %vm132, %v8525, 0
  %v8604 = vsel %vm132, %v8526, 0
  %v8607 = vsel %vm132, %v8527, 0
  %v8610 = vsel %vm132, %v8528, 0
  %v8613 = vsel %vm132, %v8529, 0
  %v8616 = vsel %vm132, %v8530, 0
  %v8619 = vsel %vm132, %v8531, 0
  %v8622 = vsel %vm132, %v8532, 0
  %v8625 = vsel %vm132, %v8533, 0
  %v8628 = vsel %vm132, %v8534, 0
  %v8631 = vsel %vm132, %v8535, 0
  %v8634 = vsel %vm132, %v8536, 0
  %v8637 = vsel %vm132, %v8537, 0
  %v8640 = vsel %vm132, %v8538, 0
  %v8643 = vsel %vm132, %v8539, 0
  %v8646 = vsel %vm132, %v8540, 0
  %v8649 = vsel %vm132, %v8541, 0
  %v8652 = vsel %vm132, %v8542, 0
  %v8655 = vsel %vm132, %v8543, 0
  %v8658 = vsel %vm132, %v8544, 0
  %v8661 = vsel %vm132, %v8545, 0
  %v8664 = vsel %vm132, %v8546, 0
  %v8667 = vsel %vm132, %v8547, 0
  %v8670 = vsel %vm132, %v8548, 0
  %v8673 = vsel %vm132, %v8549, 0
  %v8676 = vsel %vm132, %v8550, 0
  %v8679 = vsel %vm132, %v8551, 0
  %v8682 = vsel %vm132, %v8552, 0
  %v8685 = vsel %vm132, %v8553, 0
  %v8688 = vsel %vm132, %v8554, 0
  %v8691 = vsel %vm132, %v8555, 0
  %v8694 = vsel %vm132, %v8556, 0
  %v8697 = vsel %vm132, %v8557, 0
  %v8700 = vsel %vm132, %v8558, 0
  %v8703 = vsel %vm132, %v8559, 0
  %v8706 = vsel %vm132, %v8560, 0
  %v8709 = vsel %vm132, %v8561, 0
  %8711 = vmatprep.subr.mxu0 0.0
  %8712 = vmatpush1.msra.mxu0 0.0
  %8713 = vmatprep.subr.mxu0 0.0
  %8714 = vmatpush1.msra.mxu0 0.0
  %8715 = vmatprep.subr.mxu0 0.0
  %8716 = vmatpush1.msra.mxu0 0.0
  %8717 = vmatprep.subr.mxu0 0.0
  %8718 = vmatpush1.msra.mxu0 0.0
  %8719 = vmatprep.subr.mxu0 0.0
  %8720 = vmatpush1.msra.mxu0 0.0
  %8721 = vmatprep.subr.mxu0 0.0
  %8722 = vmatpush1.msra.mxu0 0.0
  %8723 = vmatprep.subr.mxu0 0.0
  %8724 = vmatpush1.msra.mxu0 0.0
  %8725 = vmatprep.subr.mxu0 0.0
  %8726 = vmatpush1.msra.mxu0 0.0
  %8727 = vmatprep.subr.mxu0 0.0
  %8728 = vmatpush1.msra.mxu0 0.0
  %8729 = vmatprep.subr.mxu0 0.0
  %8730 = vmatpush1.msra.mxu0 0.0
  %8731 = vmatprep.subr.mxu0 0.0
  %8732 = vmatpush1.msra.mxu0 0.0
  %8733 = vmatprep.subr.mxu0 0.0
  %8734 = vmatpush1.msra.mxu0 0.0
  %8735 = vmatprep.subr.mxu0 0.0
  %8736 = vmatpush1.msra.mxu0 0.0
  %8737 = vmatprep.subr.mxu0 0.0
  %8738 = vmatpush1.msra.mxu0 0.0
  %8739 = vmatprep.subr.mxu0 0.0
  %8740 = vmatpush1.msra.mxu0 0.0
  %8741 = vmatprep.subr.mxu0 0.0
  %8742 = vmatpush1.msra.mxu0 %v8563
  %8743 = vmatprep.subr.mxu0 0.0
  %8744 = vmatpush2.msra.mxu0 0.0
  %8745 = vmatprep.subr.mxu0 0.0
  %8746 = vmatpush2.msra.mxu0 0.0
  %8747 = vmatprep.subr.mxu0 0.0
  %8748 = vmatpush2.msra.mxu0 0.0
  %8749 = vmatprep.subr.mxu0 0.0
  %8750 = vmatpush2.msra.mxu0 0.0
  %8751 = vmatprep.subr.mxu0 0.0
  %8752 = vmatpush2.msra.mxu0 0.0
  %8753 = vmatprep.subr.mxu0 0.0
  %8754 = vmatpush2.msra.mxu0 0.0
  %8755 = vmatprep.subr.mxu0 0.0
  %8756 = vmatpush2.msra.mxu0 0.0
  %8757 = vmatprep.subr.mxu0 0.0
  %8758 = vmatpush2.msra.mxu0 0.0
  %8759 = vmatprep.subr.mxu0 0.0
  %8760 = vmatpush2.msra.mxu0 0.0
  %8761 = vmatprep.subr.mxu0 0.0
  %8762 = vmatpush2.msra.mxu0 0.0
  %8763 = vmatprep.subr.mxu0 0.0
  %8764 = vmatpush2.msra.mxu0 0.0
  %8765 = vmatprep.subr.mxu0 0.0
  %8766 = vmatpush2.msra.mxu0 0.0
  %8767 = vmatprep.subr.mxu0 0.0
  %8768 = vmatpush2.msra.mxu0 0.0
  %8769 = vmatprep.subr.mxu0 0.0
  %8770 = vmatpush2.msra.mxu0 0.0
  %8771 = vmatprep.subr.mxu0 0.0
  %8772 = vmatpush2.msra.mxu0 0.0
  %8773 = vmatprep.subr.mxu0 0.0
  %8774 = vmatpush2.msra.mxu0 0.0
  %8775 = vmatprep.mubr.f32.mxu0 0.0
  %8776 = vmatmul.mubr.f32.gmra.mxu0 %v8565
  %v8777 = vpop.f32.mrf.mxu0
  %v8778 = vadd.f32 0.0, %v8777
  %v8779 = vpop.f32.mrf.mxu0
  %8780 = vmatprep.mubr.f32.mxu0 0.0
  %8781 = vmatmul.mubr.f32.gmra.mxu0 %v8568
  %v8782 = vpop.f32.mrf.mxu0
  %v8783 = vadd.f32 0.0, %v8782
  %v8784 = vpop.f32.mrf.mxu0
  %8785 = vmatprep.mubr.f32.mxu0 0.0
  %8786 = vmatmul.mubr.f32.gmra.mxu0 %v8571
  %v8787 = vpop.f32.mrf.mxu0
  %v8788 = vadd.f32 0.0, %v8787
  %v8789 = vpop.f32.mrf.mxu0
  %8790 = vmatprep.mubr.f32.mxu0 0.0
  %8791 = vmatmul.mubr.f32.gmra.mxu0 %v8574
  %v8792 = vpop.f32.mrf.mxu0
  %v8793 = vadd.f32 0.0, %v8792
  %v8794 = vpop.f32.mrf.mxu0
  %8795 = vmatprep.mubr.f32.mxu0 0.0
  %8796 = vmatmul.mubr.f32.gmra.mxu0 %v8577
  %v8797 = vpop.f32.mrf.mxu0
  %v8798 = vadd.f32 0.0, %v8797
  %v8799 = vpop.f32.mrf.mxu0
  %8800 = vmatprep.mubr.f32.mxu0 0.0
  %8801 = vmatmul.mubr.f32.gmra.mxu0 %v8580
  %v8802 = vpop.f32.mrf.mxu0
  %v8803 = vadd.f32 0.0, %v8802
  %v8804 = vpop.f32.mrf.mxu0
  %8805 = vmatprep.mubr.f32.mxu0 0.0
  %8806 = vmatmul.mubr.f32.gmra.mxu0 %v8583
  %v8807 = vpop.f32.mrf.mxu0
  %v8808 = vadd.f32 0.0, %v8807
  %v8809 = vpop.f32.mrf.mxu0
  %8810 = vmatprep.mubr.f32.mxu0 0.0
  %8811 = vmatmul.mubr.f32.gmra.mxu0 %v8586
  %v8812 = vpop.f32.mrf.mxu0
  %v8813 = vadd.f32 0.0, %v8812
  %v8814 = vpop.f32.mrf.mxu0
  %8815 = vmatprep.mubr.f32.mxu0 0.0
  %8816 = vmatmul.mubr.f32.gmra.mxu0 %v8589
  %v8817 = vpop.f32.mrf.mxu0
  %v8818 = vadd.f32 0.0, %v8817
  %v8819 = vpop.f32.mrf.mxu0
  %8820 = vmatprep.mubr.f32.mxu0 0.0
  %8821 = vmatmul.mubr.f32.gmra.mxu0 %v8592
  %v8822 = vpop.f32.mrf.mxu0
  %v8823 = vadd.f32 0.0, %v8822
  %v8824 = vpop.f32.mrf.mxu0
  %8825 = vmatprep.mubr.f32.mxu0 0.0
  %8826 = vmatmul.mubr.f32.gmra.mxu0 %v8595
  %v8827 = vpop.f32.mrf.mxu0
  %v8828 = vadd.f32 0.0, %v8827
  %v8829 = vpop.f32.mrf.mxu0
  %8830 = vmatprep.mubr.f32.mxu0 0.0
  %8831 = vmatmul.mubr.f32.gmra.mxu0 %v8598
  %v8832 = vpop.f32.mrf.mxu0
  %v8833 = vadd.f32 0.0, %v8832
  %v8834 = vpop.f32.mrf.mxu0
  %8835 = vmatprep.mubr.f32.mxu0 0.0
  %8836 = vmatmul.mubr.f32.gmra.mxu0 %v8601
  %v8837 = vpop.f32.mrf.mxu0
  %v8838 = vadd.f32 0.0, %v8837
  %v8839 = vpop.f32.mrf.mxu0
  %8840 = vmatprep.mubr.f32.mxu0 0.0
  %8841 = vmatmul.mubr.f32.gmra.mxu0 %v8604
  %v8842 = vpop.f32.mrf.mxu0
  %v8843 = vadd.f32 0.0, %v8842
  %v8844 = vpop.f32.mrf.mxu0
  %8845 = vmatprep.mubr.f32.mxu0 0.0
  %8846 = vmatmul.mubr.f32.gmra.mxu0 %v8607
  %v8847 = vpop.f32.mrf.mxu0
  %v8848 = vadd.f32 0.0, %v8847
  %v8849 = vpop.f32.mrf.mxu0
  %8850 = vmatprep.mubr.f32.mxu0 0.0
  %8851 = vmatmul.mubr.f32.gmra.mxu0 %v8610
  %v8852 = vpop.f32.mrf.mxu0
  %v8853 = vadd.f32 0.0, %v8852
  %v8854 = vpop.f32.mrf.mxu0
  %8855 = vmatprep.mubr.f32.mxu0 0.0
  %8856 = vmatmul.mubr.f32.gmra.mxu0 %v8613
  %v8857 = vpop.f32.mrf.mxu0
  %v8858 = vadd.f32 0.0, %v8857
  %v8859 = vpop.f32.mrf.mxu0
  %8860 = vmatprep.mubr.f32.mxu0 0.0
  %8861 = vmatmul.mubr.f32.gmra.mxu0 %v8616
  %v8862 = vpop.f32.mrf.mxu0
  %v8863 = vadd.f32 0.0, %v8862
  %v8864 = vpop.f32.mrf.mxu0
  %8865 = vmatprep.mubr.f32.mxu0 0.0
  %8866 = vmatmul.mubr.f32.gmra.mxu0 %v8619
  %v8867 = vpop.f32.mrf.mxu0
  %v8868 = vadd.f32 0.0, %v8867
  %v8869 = vpop.f32.mrf.mxu0
  %8870 = vmatprep.mubr.f32.mxu0 0.0
  %8871 = vmatmul.mubr.f32.gmra.mxu0 %v8622
  %v8872 = vpop.f32.mrf.mxu0
  %v8873 = vadd.f32 0.0, %v8872
  %v8874 = vpop.f32.mrf.mxu0
  %8875 = vmatprep.mubr.f32.mxu0 0.0
  %8876 = vmatmul.mubr.f32.gmra.mxu0 %v8625
  %v8877 = vpop.f32.mrf.mxu0
  %v8878 = vadd.f32 0.0, %v8877
  %v8879 = vpop.f32.mrf.mxu0
  %8880 = vmatprep.mubr.f32.mxu0 0.0
  %8881 = vmatmul.mubr.f32.gmra.mxu0 %v8628
  %v8882 = vpop.f32.mrf.mxu0
  %v8883 = vadd.f32 0.0, %v8882
  %v8884 = vpop.f32.mrf.mxu0
  %8885 = vmatprep.mubr.f32.mxu0 0.0
  %8886 = vmatmul.mubr.f32.gmra.mxu0 %v8631
  %v8887 = vpop.f32.mrf.mxu0
  %v8888 = vadd.f32 0.0, %v8887
  %v8889 = vpop.f32.mrf.mxu0
  %8890 = vmatprep.mubr.f32.mxu0 0.0
  %8891 = vmatmul.mubr.f32.gmra.mxu0 %v8634
  %v8892 = vpop.f32.mrf.mxu0
  %v8893 = vadd.f32 0.0, %v8892
  %v8894 = vpop.f32.mrf.mxu0
  %8895 = vmatprep.mubr.f32.mxu0 0.0
  %8896 = vmatmul.mubr.f32.gmra.mxu0 %v8637
  %v8897 = vpop.f32.mrf.mxu0
  %v8898 = vadd.f32 0.0, %v8897
  %v8899 = vpop.f32.mrf.mxu0
  %8900 = vmatprep.mubr.f32.mxu0 0.0
  %8901 = vmatmul.mubr.f32.gmra.mxu0 %v8640
  %v8902 = vpop.f32.mrf.mxu0
  %v8903 = vadd.f32 0.0, %v8902
  %v8904 = vpop.f32.mrf.mxu0
  %8905 = vmatprep.mubr.f32.mxu0 0.0
  %8906 = vmatmul.mubr.f32.gmra.mxu0 %v8643
  %v8907 = vpop.f32.mrf.mxu0
  %v8908 = vadd.f32 0.0, %v8907
  %v8909 = vpop.f32.mrf.mxu0
  %8910 = vmatprep.mubr.f32.mxu0 0.0
  %8911 = vmatmul.mubr.f32.gmra.mxu0 %v8646
  %v8912 = vpop.f32.mrf.mxu0
  %v8913 = vadd.f32 0.0, %v8912
  %v8914 = vpop.f32.mrf.mxu0
  %8915 = vmatprep.mubr.f32.mxu0 0.0
  %8916 = vmatmul.mubr.f32.gmra.mxu0 %v8649
  %v8917 = vpop.f32.mrf.mxu0
  %v8918 = vadd.f32 0.0, %v8917
  %v8919 = vpop.f32.mrf.mxu0
  %8920 = vmatprep.mubr.f32.mxu0 0.0
  %8921 = vmatmul.mubr.f32.gmra.mxu0 %v8652
  %v8922 = vpop.f32.mrf.mxu0
  %v8923 = vadd.f32 0.0, %v8922
  %v8924 = vpop.f32.mrf.mxu0
  %8925 = vmatprep.mubr.f32.mxu0 0.0
  %8926 = vmatmul.mubr.f32.gmra.mxu0 %v8655
  %v8927 = vpop.f32.mrf.mxu0
  %v8928 = vadd.f32 0.0, %v8927
  %v8929 = vpop.f32.mrf.mxu0
  %8930 = vmatprep.mubr.f32.mxu0 0.0
  %8931 = vmatmul.mubr.f32.gmra.mxu0 %v8658
  %v8932 = vpop.f32.mrf.mxu0
  %v8933 = vadd.f32 0.0, %v8932
  %v8934 = vpop.f32.mrf.mxu0
  %8935 = vmatprep.mubr.f32.mxu0 0.0
  %8936 = vmatmul.mubr.f32.gmra.mxu0 %v8661
  %v8937 = vpop.f32.mrf.mxu0
  %v8938 = vadd.f32 0.0, %v8937
  %v8939 = vpop.f32.mrf.mxu0
  %8940 = vmatprep.mubr.f32.mxu0 0.0
  %8941 = vmatmul.mubr.f32.gmra.mxu0 %v8664
  %v8942 = vpop.f32.mrf.mxu0
  %v8943 = vadd.f32 0.0, %v8942
  %v8944 = vpop.f32.mrf.mxu0
  %8945 = vmatprep.mubr.f32.mxu0 0.0
  %8946 = vmatmul.mubr.f32.gmra.mxu0 %v8667
  %v8947 = vpop.f32.mrf.mxu0
  %v8948 = vadd.f32 0.0, %v8947
  %v8949 = vpop.f32.mrf.mxu0
  %8950 = vmatprep.mubr.f32.mxu0 0.0
  %8951 = vmatmul.mubr.f32.gmra.mxu0 %v8670
  %v8952 = vpop.f32.mrf.mxu0
  %v8953 = vadd.f32 0.0, %v8952
  %v8954 = vpop.f32.mrf.mxu0
  %8955 = vmatprep.mubr.f32.mxu0 0.0
  %8956 = vmatmul.mubr.f32.gmra.mxu0 %v8673
  %v8957 = vpop.f32.mrf.mxu0
  %v8958 = vadd.f32 0.0, %v8957
  %v8959 = vpop.f32.mrf.mxu0
  %8960 = vmatprep.mubr.f32.mxu0 0.0
  %8961 = vmatmul.mubr.f32.gmra.mxu0 %v8676
  %v8962 = vpop.f32.mrf.mxu0
  %v8963 = vadd.f32 0.0, %v8962
  %v8964 = vpop.f32.mrf.mxu0
  %8965 = vmatprep.mubr.f32.mxu0 0.0
  %8966 = vmatmul.mubr.f32.gmra.mxu0 %v8679
  %v8967 = vpop.f32.mrf.mxu0
  %v8968 = vadd.f32 0.0, %v8967
  %v8969 = vpop.f32.mrf.mxu0
  %8970 = vmatprep.mubr.f32.mxu0 0.0
  %8971 = vmatmul.mubr.f32.gmra.mxu0 %v8682
  %v8972 = vpop.f32.mrf.mxu0
  %v8973 = vadd.f32 0.0, %v8972
  %v8974 = vpop.f32.mrf.mxu0
  %8975 = vmatprep.mubr.f32.mxu0 0.0
  %8976 = vmatmul.mubr.f32.gmra.mxu0 %v8685
  %v8977 = vpop.f32.mrf.mxu0
  %v8978 = vadd.f32 0.0, %v8977
  %v8979 = vpop.f32.mrf.mxu0
  %8980 = vmatprep.mubr.f32.mxu0 0.0
  %8981 = vmatmul.mubr.f32.gmra.mxu0 %v8688
  %v8982 = vpop.f32.mrf.mxu0
  %v8983 = vadd.f32 0.0, %v8982
  %v8984 = vpop.f32.mrf.mxu0
  %8985 = vmatprep.mubr.f32.mxu0 0.0
  %8986 = vmatmul.mubr.f32.gmra.mxu0 %v8691
  %v8987 = vpop.f32.mrf.mxu0
  %v8988 = vadd.f32 0.0, %v8987
  %v8989 = vpop.f32.mrf.mxu0
  %8990 = vmatprep.mubr.f32.mxu0 0.0
  %8991 = vmatmul.mubr.f32.gmra.mxu0 %v8694
  %v8992 = vpop.f32.mrf.mxu0
  %v8993 = vadd.f32 0.0, %v8992
  %v8994 = vpop.f32.mrf.mxu0
  %8995 = vmatprep.mubr.f32.mxu0 0.0
  %8996 = vmatmul.mubr.f32.gmra.mxu0 %v8697
  %v8997 = vpop.f32.mrf.mxu0
  %v8998 = vadd.f32 0.0, %v8997
  %v8999 = vpop.f32.mrf.mxu0
  %9000 = vmatprep.mubr.f32.mxu0 0.0
  %9001 = vmatmul.mubr.f32.gmra.mxu0 %v8700
  %v9002 = vpop.f32.mrf.mxu0
  %v9003 = vadd.f32 0.0, %v9002
  %v9004 = vpop.f32.mrf.mxu0
  %9005 = vmatprep.mubr.f32.mxu0 0.0
  %9006 = vmatmul.mubr.f32.gmra.mxu0 %v8703
  %v9007 = vpop.f32.mrf.mxu0
  %v9008 = vadd.f32 0.0, %v9007
  %v9009 = vpop.f32.mrf.mxu0
  %9010 = vmatprep.mubr.f32.mxu0 0.0
  %9011 = vmatmul.mubr.f32.gmra.mxu0 %v8706
  %v9012 = vpop.f32.mrf.mxu0
  %v9013 = vadd.f32 0.0, %v9012
  %v9014 = vpop.f32.mrf.mxu0
  %9015 = vmatprep.mubr.f32.mxu0 0.0
  %9016 = vmatmul.mubr.f32.gmra.mxu0 %v8709
  %v9017 = vpop.f32.mrf.mxu0
  %v9018 = vadd.f32 0.0, %v9017
  %v9019 = vpop.f32.mrf.mxu0
  %9020 = vdwg.mxu0
  %v9021 = vadd.f32 %v8464, %v8778
  %v9022 = vadd.f32 %v8465, %v8783
  %v9023 = vadd.f32 %v8466, %v8788
  %v9024 = vadd.f32 %v8467, %v8793
  %v9025 = vadd.f32 %v8468, %v8798
  %v9026 = vadd.f32 %v8469, %v8803
  %v9027 = vadd.f32 %v8470, %v8808
  %v9028 = vadd.f32 %v8471, %v8813
  %v9029 = vadd.f32 %v8472, %v8818
  %v9030 = vadd.f32 %v8473, %v8823
  %v9031 = vadd.f32 %v8474, %v8828
  %v9032 = vadd.f32 %v8475, %v8833
  %v9033 = vadd.f32 %v8476, %v8838
  %v9034 = vadd.f32 %v8477, %v8843
  %v9035 = vadd.f32 %v8478, %v8848
  %v9036 = vadd.f32 %v8479, %v8853
  %v9037 = vadd.f32 %v8480, %v8858
  %v9038 = vadd.f32 %v8481, %v8863
  %v9039 = vadd.f32 %v8482, %v8868
  %v9040 = vadd.f32 %v8483, %v8873
  %v9041 = vadd.f32 %v8484, %v8878
  %v9042 = vadd.f32 %v8485, %v8883
  %v9043 = vadd.f32 %v8486, %v8888
  %v9044 = vadd.f32 %v8487, %v8893
  %v9045 = vadd.f32 %v8488, %v8898
  %v9046 = vadd.f32 %v8489, %v8903
  %v9047 = vadd.f32 %v8490, %v8908
  %v9048 = vadd.f32 %v8491, %v8913
  %v9049 = vadd.f32 %v8492, %v8918
  %v9050 = vadd.f32 %v8493, %v8923
  %v9051 = vadd.f32 %v8494, %v8928
  %v9052 = vadd.f32 %v8495, %v8933
  %v9053 = vadd.f32 %v8496, %v8938
  %v9054 = vadd.f32 %v8497, %v8943
  %v9055 = vadd.f32 %v8498, %v8948
  %v9056 = vadd.f32 %v8499, %v8953
  %v9057 = vadd.f32 %v8500, %v8958
  %v9058 = vadd.f32 %v8501, %v8963
  %v9059 = vadd.f32 %v8502, %v8968
  %v9060 = vadd.f32 %v8503, %v8973
  %v9061 = vadd.f32 %v8504, %v8978
  %v9062 = vadd.f32 %v8505, %v8983
  %v9063 = vadd.f32 %v8506, %v8988
  %v9064 = vadd.f32 %v8507, %v8993
  %v9065 = vadd.f32 %v8508, %v8998
  %v9066 = vadd.f32 %v8509, %v9003
  %v9067 = vadd.f32 %v8510, %v9008
  %v9068 = vadd.f32 %v8511, %v9013
  %v9069 = vadd.f32 %v8512, %v9018
  %v9070 = vld [vmem:[#allocation2 + $0x1c] sm:$0xff]
  %v9071 = vld [vmem:[#allocation2 + $0x24] sm:$0xff]
  %v9072 = vld [vmem:[#allocation2 + $0x2c] sm:$0xff]
  %v9073 = vld [vmem:[#allocation2 + $0x34] sm:$0xff]
  %v9074 = vld [vmem:[#allocation2 + $0x3c] sm:$0xff]
  %v9075 = vld [vmem:[#allocation2 + $0x44] sm:$0xff]
  %v9076 = vld [vmem:[#allocation2 + $0x4c] sm:$0xff]
  %v9077 = vld [vmem:[#allocation2 + $0x54] sm:$0xff]
  %v9078 = vld [vmem:[#allocation2 + $0x5c] sm:$0xff]
  %v9079 = vld [vmem:[#allocation2 + $0x64] sm:$0xff]
  %v9080 = vld [vmem:[#allocation2 + $0x6c] sm:$0xff]
  %v9081 = vld [vmem:[#allocation2 + $0x74] sm:$0xff]
  %v9082 = vld [vmem:[#allocation2 + $0x7c] sm:$0xff]
  %v9083 = vld [vmem:[#allocation2 + $0x84] sm:$0xff]
  %v9084 = vld [vmem:[#allocation2 + $0x8c] sm:$0xff]
  %v9085 = vld [vmem:[#allocation2 + $0x94] sm:$0xff]
  %v9086 = vld [vmem:[#allocation2 + $0x9c] sm:$0xff]
  %v9087 = vld [vmem:[#allocation2 + $0xa4] sm:$0xff]
  %v9088 = vld [vmem:[#allocation2 + $0xac] sm:$0xff]
  %v9089 = vld [vmem:[#allocation2 + $0xb4] sm:$0xff]
  %v9090 = vld [vmem:[#allocation2 + $0xbc] sm:$0xff]
  %v9091 = vld [vmem:[#allocation2 + $0xc4] sm:$0xff]
  %v9092 = vld [vmem:[#allocation2 + $0xcc] sm:$0xff]
  %v9093 = vld [vmem:[#allocation2 + $0xd4] sm:$0xff]
  %v9094 = vld [vmem:[#allocation2 + $0xdc] sm:$0xff]
  %v9095 = vld [vmem:[#allocation2 + $0xe4] sm:$0xff]
  %v9096 = vld [vmem:[#allocation2 + $0xec] sm:$0xff]
  %v9097 = vld [vmem:[#allocation2 + $0xf4] sm:$0xff]
  %v9098 = vld [vmem:[#allocation2 + $0xfc] sm:$0xff]
  %v9099 = vld [vmem:[#allocation2 + $0x104] sm:$0xff]
  %v9100 = vld [vmem:[#allocation2 + $0x10c] sm:$0xff]
  %v9101 = vld [vmem:[#allocation2 + $0x114] sm:$0xff]
  %v9102 = vld [vmem:[#allocation2 + $0x11c] sm:$0xff]
  %v9103 = vld [vmem:[#allocation2 + $0x124] sm:$0xff]
  %v9104 = vld [vmem:[#allocation2 + $0x12c] sm:$0xff]
  %v9105 = vld [vmem:[#allocation2 + $0x134] sm:$0xff]
  %v9106 = vld [vmem:[#allocation2 + $0x13c] sm:$0xff]
  %v9107 = vld [vmem:[#allocation2 + $0x144] sm:$0xff]
  %v9108 = vld [vmem:[#allocation2 + $0x14c] sm:$0xff]
  %v9109 = vld [vmem:[#allocation2 + $0x154] sm:$0xff]
  %v9110 = vld [vmem:[#allocation2 + $0x15c] sm:$0xff]
  %v9111 = vld [vmem:[#allocation2 + $0x164] sm:$0xff]
  %v9112 = vld [vmem:[#allocation2 + $0x16c] sm:$0xff]
  %v9113 = vld [vmem:[#allocation2 + $0x174] sm:$0xff]
  %v9114 = vld [vmem:[#allocation2 + $0x17c] sm:$0xff]
  %v9115 = vld [vmem:[#allocation2 + $0x184] sm:$0xff]
  %v9116 = vld [vmem:[#allocation2 + $0x18c] sm:$0xff]
  %v9117 = vld [vmem:[#allocation2 + $0x194] sm:$0xff]
  %v9118 = vld [vmem:[#allocation2 + $0x19c] sm:$0xff]
  %s9119 = scalar_lea.vmem %s4, 48
  %v9120 = vld [vmem:[%s9119] sm:$0xff]
  %v9122 = vsel %vm132, %v9070, 0
  %v9125 = vsel %vm132, %v9071, 0
  %v9128 = vsel %vm132, %v9072, 0
  %v9131 = vsel %vm132, %v9073, 0
  %v9134 = vsel %vm132, %v9074, 0
  %v9137 = vsel %vm132, %v9075, 0
  %v9140 = vsel %vm132, %v9076, 0
  %v9143 = vsel %vm132, %v9077, 0
  %v9146 = vsel %vm132, %v9078, 0
  %v9149 = vsel %vm132, %v9079, 0
  %v9152 = vsel %vm132, %v9080, 0
  %v9155 = vsel %vm132, %v9081, 0
  %v9158 = vsel %vm132, %v9082, 0
  %v9161 = vsel %vm132, %v9083, 0
  %v9164 = vsel %vm132, %v9084, 0
  %v9167 = vsel %vm132, %v9085, 0
  %v9170 = vsel %vm132, %v9086, 0
  %v9173 = vsel %vm132, %v9087, 0
  %v9176 = vsel %vm132, %v9088, 0
  %v9179 = vsel %vm132, %v9089, 0
  %v9182 = vsel %vm132, %v9090, 0
  %v9185 = vsel %vm132, %v9091, 0
  %v9188 = vsel %vm132, %v9092, 0
  %v9191 = vsel %vm132, %v9093, 0
  %v9194 = vsel %vm132, %v9094, 0
  %v9197 = vsel %vm132, %v9095, 0
  %v9200 = vsel %vm132, %v9096, 0
  %v9203 = vsel %vm132, %v9097, 0
  %v9206 = vsel %vm132, %v9098, 0
  %v9209 = vsel %vm132, %v9099, 0
  %v9212 = vsel %vm132, %v9100, 0
  %v9215 = vsel %vm132, %v9101, 0
  %v9218 = vsel %vm132, %v9102, 0
  %v9221 = vsel %vm132, %v9103, 0
  %v9224 = vsel %vm132, %v9104, 0
  %v9227 = vsel %vm132, %v9105, 0
  %v9230 = vsel %vm132, %v9106, 0
  %v9233 = vsel %vm132, %v9107, 0
  %v9236 = vsel %vm132, %v9108, 0
  %v9239 = vsel %vm132, %v9109, 0
  %v9242 = vsel %vm132, %v9110, 0
  %v9245 = vsel %vm132, %v9111, 0
  %v9248 = vsel %vm132, %v9112, 0
  %v9251 = vsel %vm132, %v9113, 0
  %v9254 = vsel %vm132, %v9114, 0
  %v9257 = vsel %vm132, %v9115, 0
  %v9260 = vsel %vm132, %v9116, 0
  %v9263 = vsel %vm132, %v9117, 0
  %v9266 = vsel %vm132, %v9118, 0
  %9268 = vmatprep.subr.mxu0 0.0
  %9269 = vmatpush1.msra.mxu0 0.0
  %9270 = vmatprep.subr.mxu0 0.0
  %9271 = vmatpush1.msra.mxu0 0.0
  %9272 = vmatprep.subr.mxu0 0.0
  %9273 = vmatpush1.msra.mxu0 0.0
  %9274 = vmatprep.subr.mxu0 0.0
  %9275 = vmatpush1.msra.mxu0 0.0
  %9276 = vmatprep.subr.mxu0 0.0
  %9277 = vmatpush1.msra.mxu0 0.0
  %9278 = vmatprep.subr.mxu0 0.0
  %9279 = vmatpush1.msra.mxu0 0.0
  %9280 = vmatprep.subr.mxu0 0.0
  %9281 = vmatpush1.msra.mxu0 0.0
  %9282 = vmatprep.subr.mxu0 0.0
  %9283 = vmatpush1.msra.mxu0 0.0
  %9284 = vmatprep.subr.mxu0 0.0
  %9285 = vmatpush1.msra.mxu0 0.0
  %9286 = vmatprep.subr.mxu0 0.0
  %9287 = vmatpush1.msra.mxu0 0.0
  %9288 = vmatprep.subr.mxu0 0.0
  %9289 = vmatpush1.msra.mxu0 0.0
  %9290 = vmatprep.subr.mxu0 0.0
  %9291 = vmatpush1.msra.mxu0 0.0
  %9292 = vmatprep.subr.mxu0 0.0
  %9293 = vmatpush1.msra.mxu0 0.0
  %9294 = vmatprep.subr.mxu0 0.0
  %9295 = vmatpush1.msra.mxu0 0.0
  %9296 = vmatprep.subr.mxu0 0.0
  %9297 = vmatpush1.msra.mxu0 0.0
  %9298 = vmatprep.subr.mxu0 0.0
  %9299 = vmatpush1.msra.mxu0 %v9120
  %9300 = vmatprep.subr.mxu0 0.0
  %9301 = vmatpush2.msra.mxu0 0.0
  %9302 = vmatprep.subr.mxu0 0.0
  %9303 = vmatpush2.msra.mxu0 0.0
  %9304 = vmatprep.subr.mxu0 0.0
  %9305 = vmatpush2.msra.mxu0 0.0
  %9306 = vmatprep.subr.mxu0 0.0
  %9307 = vmatpush2.msra.mxu0 0.0
  %9308 = vmatprep.subr.mxu0 0.0
  %9309 = vmatpush2.msra.mxu0 0.0
  %9310 = vmatprep.subr.mxu0 0.0
  %9311 = vmatpush2.msra.mxu0 0.0
  %9312 = vmatprep.subr.mxu0 0.0
  %9313 = vmatpush2.msra.mxu0 0.0
  %9314 = vmatprep.subr.mxu0 0.0
  %9315 = vmatpush2.msra.mxu0 0.0
  %9316 = vmatprep.subr.mxu0 0.0
  %9317 = vmatpush2.msra.mxu0 0.0
  %9318 = vmatprep.subr.mxu0 0.0
  %9319 = vmatpush2.msra.mxu0 0.0
  %9320 = vmatprep.subr.mxu0 0.0
  %9321 = vmatpush2.msra.mxu0 0.0
  %9322 = vmatprep.subr.mxu0 0.0
  %9323 = vmatpush2.msra.mxu0 0.0
  %9324 = vmatprep.subr.mxu0 0.0
  %9325 = vmatpush2.msra.mxu0 0.0
  %9326 = vmatprep.subr.mxu0 0.0
  %9327 = vmatpush2.msra.mxu0 0.0
  %9328 = vmatprep.subr.mxu0 0.0
  %9329 = vmatpush2.msra.mxu0 0.0
  %9330 = vmatprep.subr.mxu0 0.0
  %9331 = vmatpush2.msra.mxu0 0.0
  %9332 = vmatprep.mubr.f32.mxu0 0.0
  %9333 = vmatmul.mubr.f32.gmra.mxu0 %v9122
  %v9334 = vpop.f32.mrf.mxu0
  %v9335 = vadd.f32 0.0, %v9334
  %v9336 = vpop.f32.mrf.mxu0
  %9337 = vmatprep.mubr.f32.mxu0 0.0
  %9338 = vmatmul.mubr.f32.gmra.mxu0 %v9125
  %v9339 = vpop.f32.mrf.mxu0
  %v9340 = vadd.f32 0.0, %v9339
  %v9341 = vpop.f32.mrf.mxu0
  %9342 = vmatprep.mubr.f32.mxu0 0.0
  %9343 = vmatmul.mubr.f32.gmra.mxu0 %v9128
  %v9344 = vpop.f32.mrf.mxu0
  %v9345 = vadd.f32 0.0, %v9344
  %v9346 = vpop.f32.mrf.mxu0
  %9347 = vmatprep.mubr.f32.mxu0 0.0
  %9348 = vmatmul.mubr.f32.gmra.mxu0 %v9131
  %v9349 = vpop.f32.mrf.mxu0
  %v9350 = vadd.f32 0.0, %v9349
  %v9351 = vpop.f32.mrf.mxu0
  %9352 = vmatprep.mubr.f32.mxu0 0.0
  %9353 = vmatmul.mubr.f32.gmra.mxu0 %v9134
  %v9354 = vpop.f32.mrf.mxu0
  %v9355 = vadd.f32 0.0, %v9354
  %v9356 = vpop.f32.mrf.mxu0
  %9357 = vmatprep.mubr.f32.mxu0 0.0
  %9358 = vmatmul.mubr.f32.gmra.mxu0 %v9137
  %v9359 = vpop.f32.mrf.mxu0
  %v9360 = vadd.f32 0.0, %v9359
  %v9361 = vpop.f32.mrf.mxu0
  %9362 = vmatprep.mubr.f32.mxu0 0.0
  %9363 = vmatmul.mubr.f32.gmra.mxu0 %v9140
  %v9364 = vpop.f32.mrf.mxu0
  %v9365 = vadd.f32 0.0, %v9364
  %v9366 = vpop.f32.mrf.mxu0
  %9367 = vmatprep.mubr.f32.mxu0 0.0
  %9368 = vmatmul.mubr.f32.gmra.mxu0 %v9143
  %v9369 = vpop.f32.mrf.mxu0
  %v9370 = vadd.f32 0.0, %v9369
  %v9371 = vpop.f32.mrf.mxu0
  %9372 = vmatprep.mubr.f32.mxu0 0.0
  %9373 = vmatmul.mubr.f32.gmra.mxu0 %v9146
  %v9374 = vpop.f32.mrf.mxu0
  %v9375 = vadd.f32 0.0, %v9374
  %v9376 = vpop.f32.mrf.mxu0
  %9377 = vmatprep.mubr.f32.mxu0 0.0
  %9378 = vmatmul.mubr.f32.gmra.mxu0 %v9149
  %v9379 = vpop.f32.mrf.mxu0
  %v9380 = vadd.f32 0.0, %v9379
  %v9381 = vpop.f32.mrf.mxu0
  %9382 = vmatprep.mubr.f32.mxu0 0.0
  %9383 = vmatmul.mubr.f32.gmra.mxu0 %v9152
  %v9384 = vpop.f32.mrf.mxu0
  %v9385 = vadd.f32 0.0, %v9384
  %v9386 = vpop.f32.mrf.mxu0
  %9387 = vmatprep.mubr.f32.mxu0 0.0
  %9388 = vmatmul.mubr.f32.gmra.mxu0 %v9155
  %v9389 = vpop.f32.mrf.mxu0
  %v9390 = vadd.f32 0.0, %v9389
  %v9391 = vpop.f32.mrf.mxu0
  %9392 = vmatprep.mubr.f32.mxu0 0.0
  %9393 = vmatmul.mubr.f32.gmra.mxu0 %v9158
  %v9394 = vpop.f32.mrf.mxu0
  %v9395 = vadd.f32 0.0, %v9394
  %v9396 = vpop.f32.mrf.mxu0
  %9397 = vmatprep.mubr.f32.mxu0 0.0
  %9398 = vmatmul.mubr.f32.gmra.mxu0 %v9161
  %v9399 = vpop.f32.mrf.mxu0
  %v9400 = vadd.f32 0.0, %v9399
  %v9401 = vpop.f32.mrf.mxu0
  %9402 = vmatprep.mubr.f32.mxu0 0.0
  %9403 = vmatmul.mubr.f32.gmra.mxu0 %v9164
  %v9404 = vpop.f32.mrf.mxu0
  %v9405 = vadd.f32 0.0, %v9404
  %v9406 = vpop.f32.mrf.mxu0
  %9407 = vmatprep.mubr.f32.mxu0 0.0
  %9408 = vmatmul.mubr.f32.gmra.mxu0 %v9167
  %v9409 = vpop.f32.mrf.mxu0
  %v9410 = vadd.f32 0.0, %v9409
  %v9411 = vpop.f32.mrf.mxu0
  %9412 = vmatprep.mubr.f32.mxu0 0.0
  %9413 = vmatmul.mubr.f32.gmra.mxu0 %v9170
  %v9414 = vpop.f32.mrf.mxu0
  %v9415 = vadd.f32 0.0, %v9414
  %v9416 = vpop.f32.mrf.mxu0
  %9417 = vmatprep.mubr.f32.mxu0 0.0
  %9418 = vmatmul.mubr.f32.gmra.mxu0 %v9173
  %v9419 = vpop.f32.mrf.mxu0
  %v9420 = vadd.f32 0.0, %v9419
  %v9421 = vpop.f32.mrf.mxu0
  %9422 = vmatprep.mubr.f32.mxu0 0.0
  %9423 = vmatmul.mubr.f32.gmra.mxu0 %v9176
  %v9424 = vpop.f32.mrf.mxu0
  %v9425 = vadd.f32 0.0, %v9424
  %v9426 = vpop.f32.mrf.mxu0
  %9427 = vmatprep.mubr.f32.mxu0 0.0
  %9428 = vmatmul.mubr.f32.gmra.mxu0 %v9179
  %v9429 = vpop.f32.mrf.mxu0
  %v9430 = vadd.f32 0.0, %v9429
  %v9431 = vpop.f32.mrf.mxu0
  %9432 = vmatprep.mubr.f32.mxu0 0.0
  %9433 = vmatmul.mubr.f32.gmra.mxu0 %v9182
  %v9434 = vpop.f32.mrf.mxu0
  %v9435 = vadd.f32 0.0, %v9434
  %v9436 = vpop.f32.mrf.mxu0
  %9437 = vmatprep.mubr.f32.mxu0 0.0
  %9438 = vmatmul.mubr.f32.gmra.mxu0 %v9185
  %v9439 = vpop.f32.mrf.mxu0
  %v9440 = vadd.f32 0.0, %v9439
  %v9441 = vpop.f32.mrf.mxu0
  %9442 = vmatprep.mubr.f32.mxu0 0.0
  %9443 = vmatmul.mubr.f32.gmra.mxu0 %v9188
  %v9444 = vpop.f32.mrf.mxu0
  %v9445 = vadd.f32 0.0, %v9444
  %v9446 = vpop.f32.mrf.mxu0
  %9447 = vmatprep.mubr.f32.mxu0 0.0
  %9448 = vmatmul.mubr.f32.gmra.mxu0 %v9191
  %v9449 = vpop.f32.mrf.mxu0
  %v9450 = vadd.f32 0.0, %v9449
  %v9451 = vpop.f32.mrf.mxu0
  %9452 = vmatprep.mubr.f32.mxu0 0.0
  %9453 = vmatmul.mubr.f32.gmra.mxu0 %v9194
  %v9454 = vpop.f32.mrf.mxu0
  %v9455 = vadd.f32 0.0, %v9454
  %v9456 = vpop.f32.mrf.mxu0
  %9457 = vmatprep.mubr.f32.mxu0 0.0
  %9458 = vmatmul.mubr.f32.gmra.mxu0 %v9197
  %v9459 = vpop.f32.mrf.mxu0
  %v9460 = vadd.f32 0.0, %v9459
  %v9461 = vpop.f32.mrf.mxu0
  %9462 = vmatprep.mubr.f32.mxu0 0.0
  %9463 = vmatmul.mubr.f32.gmra.mxu0 %v9200
  %v9464 = vpop.f32.mrf.mxu0
  %v9465 = vadd.f32 0.0, %v9464
  %v9466 = vpop.f32.mrf.mxu0
  %9467 = vmatprep.mubr.f32.mxu0 0.0
  %9468 = vmatmul.mubr.f32.gmra.mxu0 %v9203
  %v9469 = vpop.f32.mrf.mxu0
  %v9470 = vadd.f32 0.0, %v9469
  %v9471 = vpop.f32.mrf.mxu0
  %9472 = vmatprep.mubr.f32.mxu0 0.0
  %9473 = vmatmul.mubr.f32.gmra.mxu0 %v9206
  %v9474 = vpop.f32.mrf.mxu0
  %v9475 = vadd.f32 0.0, %v9474
  %v9476 = vpop.f32.mrf.mxu0
  %9477 = vmatprep.mubr.f32.mxu0 0.0
  %9478 = vmatmul.mubr.f32.gmra.mxu0 %v9209
  %v9479 = vpop.f32.mrf.mxu0
  %v9480 = vadd.f32 0.0, %v9479
  %v9481 = vpop.f32.mrf.mxu0
  %9482 = vmatprep.mubr.f32.mxu0 0.0
  %9483 = vmatmul.mubr.f32.gmra.mxu0 %v9212
  %v9484 = vpop.f32.mrf.mxu0
  %v9485 = vadd.f32 0.0, %v9484
  %v9486 = vpop.f32.mrf.mxu0
  %9487 = vmatprep.mubr.f32.mxu0 0.0
  %9488 = vmatmul.mubr.f32.gmra.mxu0 %v9215
  %v9489 = vpop.f32.mrf.mxu0
  %v9490 = vadd.f32 0.0, %v9489
  %v9491 = vpop.f32.mrf.mxu0
  %9492 = vmatprep.mubr.f32.mxu0 0.0
  %9493 = vmatmul.mubr.f32.gmra.mxu0 %v9218
  %v9494 = vpop.f32.mrf.mxu0
  %v9495 = vadd.f32 0.0, %v9494
  %v9496 = vpop.f32.mrf.mxu0
  %9497 = vmatprep.mubr.f32.mxu0 0.0
  %9498 = vmatmul.mubr.f32.gmra.mxu0 %v9221
  %v9499 = vpop.f32.mrf.mxu0
  %v9500 = vadd.f32 0.0, %v9499
  %v9501 = vpop.f32.mrf.mxu0
  %9502 = vmatprep.mubr.f32.mxu0 0.0
  %9503 = vmatmul.mubr.f32.gmra.mxu0 %v9224
  %v9504 = vpop.f32.mrf.mxu0
  %v9505 = vadd.f32 0.0, %v9504
  %v9506 = vpop.f32.mrf.mxu0
  %9507 = vmatprep.mubr.f32.mxu0 0.0
  %9508 = vmatmul.mubr.f32.gmra.mxu0 %v9227
  %v9509 = vpop.f32.mrf.mxu0
  %v9510 = vadd.f32 0.0, %v9509
  %v9511 = vpop.f32.mrf.mxu0
  %9512 = vmatprep.mubr.f32.mxu0 0.0
  %9513 = vmatmul.mubr.f32.gmra.mxu0 %v9230
  %v9514 = vpop.f32.mrf.mxu0
  %v9515 = vadd.f32 0.0, %v9514
  %v9516 = vpop.f32.mrf.mxu0
  %9517 = vmatprep.mubr.f32.mxu0 0.0
  %9518 = vmatmul.mubr.f32.gmra.mxu0 %v9233
  %v9519 = vpop.f32.mrf.mxu0
  %v9520 = vadd.f32 0.0, %v9519
  %v9521 = vpop.f32.mrf.mxu0
  %9522 = vmatprep.mubr.f32.mxu0 0.0
  %9523 = vmatmul.mubr.f32.gmra.mxu0 %v9236
  %v9524 = vpop.f32.mrf.mxu0
  %v9525 = vadd.f32 0.0, %v9524
  %v9526 = vpop.f32.mrf.mxu0
  %9527 = vmatprep.mubr.f32.mxu0 0.0
  %9528 = vmatmul.mubr.f32.gmra.mxu0 %v9239
  %v9529 = vpop.f32.mrf.mxu0
  %v9530 = vadd.f32 0.0, %v9529
  %v9531 = vpop.f32.mrf.mxu0
  %9532 = vmatprep.mubr.f32.mxu0 0.0
  %9533 = vmatmul.mubr.f32.gmra.mxu0 %v9242
  %v9534 = vpop.f32.mrf.mxu0
  %v9535 = vadd.f32 0.0, %v9534
  %v9536 = vpop.f32.mrf.mxu0
  %9537 = vmatprep.mubr.f32.mxu0 0.0
  %9538 = vmatmul.mubr.f32.gmra.mxu0 %v9245
  %v9539 = vpop.f32.mrf.mxu0
  %v9540 = vadd.f32 0.0, %v9539
  %v9541 = vpop.f32.mrf.mxu0
  %9542 = vmatprep.mubr.f32.mxu0 0.0
  %9543 = vmatmul.mubr.f32.gmra.mxu0 %v9248
  %v9544 = vpop.f32.mrf.mxu0
  %v9545 = vadd.f32 0.0, %v9544
  %v9546 = vpop.f32.mrf.mxu0
  %9547 = vmatprep.mubr.f32.mxu0 0.0
  %9548 = vmatmul.mubr.f32.gmra.mxu0 %v9251
  %v9549 = vpop.f32.mrf.mxu0
  %v9550 = vadd.f32 0.0, %v9549
  %v9551 = vpop.f32.mrf.mxu0
  %9552 = vmatprep.mubr.f32.mxu0 0.0
  %9553 = vmatmul.mubr.f32.gmra.mxu0 %v9254
  %v9554 = vpop.f32.mrf.mxu0
  %v9555 = vadd.f32 0.0, %v9554
  %v9556 = vpop.f32.mrf.mxu0
  %9557 = vmatprep.mubr.f32.mxu0 0.0
  %9558 = vmatmul.mubr.f32.gmra.mxu0 %v9257
  %v9559 = vpop.f32.mrf.mxu0
  %v9560 = vadd.f32 0.0, %v9559
  %v9561 = vpop.f32.mrf.mxu0
  %9562 = vmatprep.mubr.f32.mxu0 0.0
  %9563 = vmatmul.mubr.f32.gmra.mxu0 %v9260
  %v9564 = vpop.f32.mrf.mxu0
  %v9565 = vadd.f32 0.0, %v9564
  %v9566 = vpop.f32.mrf.mxu0
  %9567 = vmatprep.mubr.f32.mxu0 0.0
  %9568 = vmatmul.mubr.f32.gmra.mxu0 %v9263
  %v9569 = vpop.f32.mrf.mxu0
  %v9570 = vadd.f32 0.0, %v9569
  %v9571 = vpop.f32.mrf.mxu0
  %9572 = vmatprep.mubr.f32.mxu0 0.0
  %9573 = vmatmul.mubr.f32.gmra.mxu0 %v9266
  %v9574 = vpop.f32.mrf.mxu0
  %v9575 = vadd.f32 0.0, %v9574
  %v9576 = vpop.f32.mrf.mxu0
  %9577 = vdwg.mxu0
  %v9578 = vadd.f32 %v9021, %v9335
  %v9579 = vadd.f32 %v9022, %v9340
  %v9580 = vadd.f32 %v9023, %v9345
  %v9581 = vadd.f32 %v9024, %v9350
  %v9582 = vadd.f32 %v9025, %v9355
  %v9583 = vadd.f32 %v9026, %v9360
  %v9584 = vadd.f32 %v9027, %v9365
  %v9585 = vadd.f32 %v9028, %v9370
  %v9586 = vadd.f32 %v9029, %v9375
  %v9587 = vadd.f32 %v9030, %v9380
  %v9588 = vadd.f32 %v9031, %v9385
  %v9589 = vadd.f32 %v9032, %v9390
  %v9590 = vadd.f32 %v9033, %v9395
  %v9591 = vadd.f32 %v9034, %v9400
  %v9592 = vadd.f32 %v9035, %v9405
  %v9593 = vadd.f32 %v9036, %v9410
  %v9594 = vadd.f32 %v9037, %v9415
  %v9595 = vadd.f32 %v9038, %v9420
  %v9596 = vadd.f32 %v9039, %v9425
  %v9597 = vadd.f32 %v9040, %v9430
  %v9598 = vadd.f32 %v9041, %v9435
  %v9599 = vadd.f32 %v9042, %v9440
  %v9600 = vadd.f32 %v9043, %v9445
  %v9601 = vadd.f32 %v9044, %v9450
  %v9602 = vadd.f32 %v9045, %v9455
  %v9603 = vadd.f32 %v9046, %v9460
  %v9604 = vadd.f32 %v9047, %v9465
  %v9605 = vadd.f32 %v9048, %v9470
  %v9606 = vadd.f32 %v9049, %v9475
  %v9607 = vadd.f32 %v9050, %v9480
  %v9608 = vadd.f32 %v9051, %v9485
  %v9609 = vadd.f32 %v9052, %v9490
  %v9610 = vadd.f32 %v9053, %v9495
  %v9611 = vadd.f32 %v9054, %v9500
  %v9612 = vadd.f32 %v9055, %v9505
  %v9613 = vadd.f32 %v9056, %v9510
  %v9614 = vadd.f32 %v9057, %v9515
  %v9615 = vadd.f32 %v9058, %v9520
  %v9616 = vadd.f32 %v9059, %v9525
  %v9617 = vadd.f32 %v9060, %v9530
  %v9618 = vadd.f32 %v9061, %v9535
  %v9619 = vadd.f32 %v9062, %v9540
  %v9620 = vadd.f32 %v9063, %v9545
  %v9621 = vadd.f32 %v9064, %v9550
  %v9622 = vadd.f32 %v9065, %v9555
  %v9623 = vadd.f32 %v9066, %v9560
  %v9624 = vadd.f32 %v9067, %v9565
  %v9625 = vadd.f32 %v9068, %v9570
  %v9626 = vadd.f32 %v9069, %v9575
  %v9627 = vld [vmem:[#allocation2 + $0x1d] sm:$0xff]
  %v9628 = vld [vmem:[#allocation2 + $0x25] sm:$0xff]
  %v9629 = vld [vmem:[#allocation2 + $0x2d] sm:$0xff]
  %v9630 = vld [vmem:[#allocation2 + $0x35] sm:$0xff]
  %v9631 = vld [vmem:[#allocation2 + $0x3d] sm:$0xff]
  %v9632 = vld [vmem:[#allocation2 + $0x45] sm:$0xff]
  %v9633 = vld [vmem:[#allocation2 + $0x4d] sm:$0xff]
  %v9634 = vld [vmem:[#allocation2 + $0x55] sm:$0xff]
  %v9635 = vld [vmem:[#allocation2 + $0x5d] sm:$0xff]
  %v9636 = vld [vmem:[#allocation2 + $0x65] sm:$0xff]
  %v9637 = vld [vmem:[#allocation2 + $0x6d] sm:$0xff]
  %v9638 = vld [vmem:[#allocation2 + $0x75] sm:$0xff]
  %v9639 = vld [vmem:[#allocation2 + $0x7d] sm:$0xff]
  %v9640 = vld [vmem:[#allocation2 + $0x85] sm:$0xff]
  %v9641 = vld [vmem:[#allocation2 + $0x8d] sm:$0xff]
  %v9642 = vld [vmem:[#allocation2 + $0x95] sm:$0xff]
  %v9643 = vld [vmem:[#allocation2 + $0x9d] sm:$0xff]
  %v9644 = vld [vmem:[#allocation2 + $0xa5] sm:$0xff]
  %v9645 = vld [vmem:[#allocation2 + $0xad] sm:$0xff]
  %v9646 = vld [vmem:[#allocation2 + $0xb5] sm:$0xff]
  %v9647 = vld [vmem:[#allocation2 + $0xbd] sm:$0xff]
  %v9648 = vld [vmem:[#allocation2 + $0xc5] sm:$0xff]
  %v9649 = vld [vmem:[#allocation2 + $0xcd] sm:$0xff]
  %v9650 = vld [vmem:[#allocation2 + $0xd5] sm:$0xff]
  %v9651 = vld [vmem:[#allocation2 + $0xdd] sm:$0xff]
  %v9652 = vld [vmem:[#allocation2 + $0xe5] sm:$0xff]
  %v9653 = vld [vmem:[#allocation2 + $0xed] sm:$0xff]
  %v9654 = vld [vmem:[#allocation2 + $0xf5] sm:$0xff]
  %v9655 = vld [vmem:[#allocation2 + $0xfd] sm:$0xff]
  %v9656 = vld [vmem:[#allocation2 + $0x105] sm:$0xff]
  %v9657 = vld [vmem:[#allocation2 + $0x10d] sm:$0xff]
  %v9658 = vld [vmem:[#allocation2 + $0x115] sm:$0xff]
  %v9659 = vld [vmem:[#allocation2 + $0x11d] sm:$0xff]
  %v9660 = vld [vmem:[#allocation2 + $0x125] sm:$0xff]
  %v9661 = vld [vmem:[#allocation2 + $0x12d] sm:$0xff]
  %v9662 = vld [vmem:[#allocation2 + $0x135] sm:$0xff]
  %v9663 = vld [vmem:[#allocation2 + $0x13d] sm:$0xff]
  %v9664 = vld [vmem:[#allocation2 + $0x145] sm:$0xff]
  %v9665 = vld [vmem:[#allocation2 + $0x14d] sm:$0xff]
  %v9666 = vld [vmem:[#allocation2 + $0x155] sm:$0xff]
  %v9667 = vld [vmem:[#allocation2 + $0x15d] sm:$0xff]
  %v9668 = vld [vmem:[#allocation2 + $0x165] sm:$0xff]
  %v9669 = vld [vmem:[#allocation2 + $0x16d] sm:$0xff]
  %v9670 = vld [vmem:[#allocation2 + $0x175] sm:$0xff]
  %v9671 = vld [vmem:[#allocation2 + $0x17d] sm:$0xff]
  %v9672 = vld [vmem:[#allocation2 + $0x185] sm:$0xff]
  %v9673 = vld [vmem:[#allocation2 + $0x18d] sm:$0xff]
  %v9674 = vld [vmem:[#allocation2 + $0x195] sm:$0xff]
  %v9675 = vld [vmem:[#allocation2 + $0x19d] sm:$0xff]
  %s9676 = scalar_lea.vmem %s4, 56
  %v9677 = vld [vmem:[%s9676] sm:$0xff]
  %v9679 = vsel %vm132, %v9627, 0
  %v9682 = vsel %vm132, %v9628, 0
  %v9685 = vsel %vm132, %v9629, 0
  %v9688 = vsel %vm132, %v9630, 0
  %v9691 = vsel %vm132, %v9631, 0
  %v9694 = vsel %vm132, %v9632, 0
  %v9697 = vsel %vm132, %v9633, 0
  %v9700 = vsel %vm132, %v9634, 0
  %v9703 = vsel %vm132, %v9635, 0
  %v9706 = vsel %vm132, %v9636, 0
  %v9709 = vsel %vm132, %v9637, 0
  %v9712 = vsel %vm132, %v9638, 0
  %v9715 = vsel %vm132, %v9639, 0
  %v9718 = vsel %vm132, %v9640, 0
  %v9721 = vsel %vm132, %v9641, 0
  %v9724 = vsel %vm132, %v9642, 0
  %v9727 = vsel %vm132, %v9643, 0
  %v9730 = vsel %vm132, %v9644, 0
  %v9733 = vsel %vm132, %v9645, 0
  %v9736 = vsel %vm132, %v9646, 0
  %v9739 = vsel %vm132, %v9647, 0
  %v9742 = vsel %vm132, %v9648, 0
  %v9745 = vsel %vm132, %v9649, 0
  %v9748 = vsel %vm132, %v9650, 0
  %v9751 = vsel %vm132, %v9651, 0
  %v9754 = vsel %vm132, %v9652, 0
  %v9757 = vsel %vm132, %v9653, 0
  %v9760 = vsel %vm132, %v9654, 0
  %v9763 = vsel %vm132, %v9655, 0
  %v9766 = vsel %vm132, %v9656, 0
  %v9769 = vsel %vm132, %v9657, 0
  %v9772 = vsel %vm132, %v9658, 0
  %v9775 = vsel %vm132, %v9659, 0
  %v9778 = vsel %vm132, %v9660, 0
  %v9781 = vsel %vm132, %v9661, 0
  %v9784 = vsel %vm132, %v9662, 0
  %v9787 = vsel %vm132, %v9663, 0
  %v9790 = vsel %vm132, %v9664, 0
  %v9793 = vsel %vm132, %v9665, 0
  %v9796 = vsel %vm132, %v9666, 0
  %v9799 = vsel %vm132, %v9667, 0
  %v9802 = vsel %vm132, %v9668, 0
  %v9805 = vsel %vm132, %v9669, 0
  %v9808 = vsel %vm132, %v9670, 0
  %v9811 = vsel %vm132, %v9671, 0
  %v9814 = vsel %vm132, %v9672, 0
  %v9817 = vsel %vm132, %v9673, 0
  %v9820 = vsel %vm132, %v9674, 0
  %v9823 = vsel %vm132, %v9675, 0
  %9825 = vmatprep.subr.mxu0 0.0
  %9826 = vmatpush1.msra.mxu0 0.0
  %9827 = vmatprep.subr.mxu0 0.0
  %9828 = vmatpush1.msra.mxu0 0.0
  %9829 = vmatprep.subr.mxu0 0.0
  %9830 = vmatpush1.msra.mxu0 0.0
  %9831 = vmatprep.subr.mxu0 0.0
  %9832 = vmatpush1.msra.mxu0 0.0
  %9833 = vmatprep.subr.mxu0 0.0
  %9834 = vmatpush1.msra.mxu0 0.0
  %9835 = vmatprep.subr.mxu0 0.0
  %9836 = vmatpush1.msra.mxu0 0.0
  %9837 = vmatprep.subr.mxu0 0.0
  %9838 = vmatpush1.msra.mxu0 0.0
  %9839 = vmatprep.subr.mxu0 0.0
  %9840 = vmatpush1.msra.mxu0 0.0
  %9841 = vmatprep.subr.mxu0 0.0
  %9842 = vmatpush1.msra.mxu0 0.0
  %9843 = vmatprep.subr.mxu0 0.0
  %9844 = vmatpush1.msra.mxu0 0.0
  %9845 = vmatprep.subr.mxu0 0.0
  %9846 = vmatpush1.msra.mxu0 0.0
  %9847 = vmatprep.subr.mxu0 0.0
  %9848 = vmatpush1.msra.mxu0 0.0
  %9849 = vmatprep.subr.mxu0 0.0
  %9850 = vmatpush1.msra.mxu0 0.0
  %9851 = vmatprep.subr.mxu0 0.0
  %9852 = vmatpush1.msra.mxu0 0.0
  %9853 = vmatprep.subr.mxu0 0.0
  %9854 = vmatpush1.msra.mxu0 0.0
  %9855 = vmatprep.subr.mxu0 0.0
  %9856 = vmatpush1.msra.mxu0 %v9677
  %9857 = vmatprep.subr.mxu0 0.0
  %9858 = vmatpush2.msra.mxu0 0.0
  %9859 = vmatprep.subr.mxu0 0.0
  %9860 = vmatpush2.msra.mxu0 0.0
  %9861 = vmatprep.subr.mxu0 0.0
  %9862 = vmatpush2.msra.mxu0 0.0
  %9863 = vmatprep.subr.mxu0 0.0
  %9864 = vmatpush2.msra.mxu0 0.0
  %9865 = vmatprep.subr.mxu0 0.0
  %9866 = vmatpush2.msra.mxu0 0.0
  %9867 = vmatprep.subr.mxu0 0.0
  %9868 = vmatpush2.msra.mxu0 0.0
  %9869 = vmatprep.subr.mxu0 0.0
  %9870 = vmatpush2.msra.mxu0 0.0
  %9871 = vmatprep.subr.mxu0 0.0
  %9872 = vmatpush2.msra.mxu0 0.0
  %9873 = vmatprep.subr.mxu0 0.0
  %9874 = vmatpush2.msra.mxu0 0.0
  %9875 = vmatprep.subr.mxu0 0.0
  %9876 = vmatpush2.msra.mxu0 0.0
  %9877 = vmatprep.subr.mxu0 0.0
  %9878 = vmatpush2.msra.mxu0 0.0
  %9879 = vmatprep.subr.mxu0 0.0
  %9880 = vmatpush2.msra.mxu0 0.0
  %9881 = vmatprep.subr.mxu0 0.0
  %9882 = vmatpush2.msra.mxu0 0.0
  %9883 = vmatprep.subr.mxu0 0.0
  %9884 = vmatpush2.msra.mxu0 0.0
  %9885 = vmatprep.subr.mxu0 0.0
  %9886 = vmatpush2.msra.mxu0 0.0
  %9887 = vmatprep.subr.mxu0 0.0
  %9888 = vmatpush2.msra.mxu0 0.0
  %9889 = vmatprep.mubr.f32.mxu0 0.0
  %9890 = vmatmul.mubr.f32.gmra.mxu0 %v9679
  %v9891 = vpop.f32.mrf.mxu0
  %v9892 = vadd.f32 0.0, %v9891
  %v9893 = vpop.f32.mrf.mxu0
  %9894 = vmatprep.mubr.f32.mxu0 0.0
  %9895 = vmatmul.mubr.f32.gmra.mxu0 %v9682
  %v9896 = vpop.f32.mrf.mxu0
  %v9897 = vadd.f32 0.0, %v9896
  %v9898 = vpop.f32.mrf.mxu0
  %9899 = vmatprep.mubr.f32.mxu0 0.0
  %9900 = vmatmul.mubr.f32.gmra.mxu0 %v9685
  %v9901 = vpop.f32.mrf.mxu0
  %v9902 = vadd.f32 0.0, %v9901
  %v9903 = vpop.f32.mrf.mxu0
  %9904 = vmatprep.mubr.f32.mxu0 0.0
  %9905 = vmatmul.mubr.f32.gmra.mxu0 %v9688
  %v9906 = vpop.f32.mrf.mxu0
  %v9907 = vadd.f32 0.0, %v9906
  %v9908 = vpop.f32.mrf.mxu0
  %9909 = vmatprep.mubr.f32.mxu0 0.0
  %9910 = vmatmul.mubr.f32.gmra.mxu0 %v9691
  %v9911 = vpop.f32.mrf.mxu0
  %v9912 = vadd.f32 0.0, %v9911
  %v9913 = vpop.f32.mrf.mxu0
  %9914 = vmatprep.mubr.f32.mxu0 0.0
  %9915 = vmatmul.mubr.f32.gmra.mxu0 %v9694
  %v9916 = vpop.f32.mrf.mxu0
  %v9917 = vadd.f32 0.0, %v9916
  %v9918 = vpop.f32.mrf.mxu0
  %9919 = vmatprep.mubr.f32.mxu0 0.0
  %9920 = vmatmul.mubr.f32.gmra.mxu0 %v9697
  %v9921 = vpop.f32.mrf.mxu0
  %v9922 = vadd.f32 0.0, %v9921
  %v9923 = vpop.f32.mrf.mxu0
  %9924 = vmatprep.mubr.f32.mxu0 0.0
  %9925 = vmatmul.mubr.f32.gmra.mxu0 %v9700
  %v9926 = vpop.f32.mrf.mxu0
  %v9927 = vadd.f32 0.0, %v9926
  %v9928 = vpop.f32.mrf.mxu0
  %9929 = vmatprep.mubr.f32.mxu0 0.0
  %9930 = vmatmul.mubr.f32.gmra.mxu0 %v9703
  %v9931 = vpop.f32.mrf.mxu0
  %v9932 = vadd.f32 0.0, %v9931
  %v9933 = vpop.f32.mrf.mxu0
  %9934 = vmatprep.mubr.f32.mxu0 0.0
  %9935 = vmatmul.mubr.f32.gmra.mxu0 %v9706
  %v9936 = vpop.f32.mrf.mxu0
  %v9937 = vadd.f32 0.0, %v9936
  %v9938 = vpop.f32.mrf.mxu0
  %9939 = vmatprep.mubr.f32.mxu0 0.0
  %9940 = vmatmul.mubr.f32.gmra.mxu0 %v9709
  %v9941 = vpop.f32.mrf.mxu0
  %v9942 = vadd.f32 0.0, %v9941
  %v9943 = vpop.f32.mrf.mxu0
  %9944 = vmatprep.mubr.f32.mxu0 0.0
  %9945 = vmatmul.mubr.f32.gmra.mxu0 %v9712
  %v9946 = vpop.f32.mrf.mxu0
  %v9947 = vadd.f32 0.0, %v9946
  %v9948 = vpop.f32.mrf.mxu0
  %9949 = vmatprep.mubr.f32.mxu0 0.0
  %9950 = vmatmul.mubr.f32.gmra.mxu0 %v9715
  %v9951 = vpop.f32.mrf.mxu0
  %v9952 = vadd.f32 0.0, %v9951
  %v9953 = vpop.f32.mrf.mxu0
  %9954 = vmatprep.mubr.f32.mxu0 0.0
  %9955 = vmatmul.mubr.f32.gmra.mxu0 %v9718
  %v9956 = vpop.f32.mrf.mxu0
  %v9957 = vadd.f32 0.0, %v9956
  %v9958 = vpop.f32.mrf.mxu0
  %9959 = vmatprep.mubr.f32.mxu0 0.0
  %9960 = vmatmul.mubr.f32.gmra.mxu0 %v9721
  %v9961 = vpop.f32.mrf.mxu0
  %v9962 = vadd.f32 0.0, %v9961
  %v9963 = vpop.f32.mrf.mxu0
  %9964 = vmatprep.mubr.f32.mxu0 0.0
  %9965 = vmatmul.mubr.f32.gmra.mxu0 %v9724
  %v9966 = vpop.f32.mrf.mxu0
  %v9967 = vadd.f32 0.0, %v9966
  %v9968 = vpop.f32.mrf.mxu0
  %9969 = vmatprep.mubr.f32.mxu0 0.0
  %9970 = vmatmul.mubr.f32.gmra.mxu0 %v9727
  %v9971 = vpop.f32.mrf.mxu0
  %v9972 = vadd.f32 0.0, %v9971
  %v9973 = vpop.f32.mrf.mxu0
  %9974 = vmatprep.mubr.f32.mxu0 0.0
  %9975 = vmatmul.mubr.f32.gmra.mxu0 %v9730
  %v9976 = vpop.f32.mrf.mxu0
  %v9977 = vadd.f32 0.0, %v9976
  %v9978 = vpop.f32.mrf.mxu0
  %9979 = vmatprep.mubr.f32.mxu0 0.0
  %9980 = vmatmul.mubr.f32.gmra.mxu0 %v9733
  %v9981 = vpop.f32.mrf.mxu0
  %v9982 = vadd.f32 0.0, %v9981
  %v9983 = vpop.f32.mrf.mxu0
  %9984 = vmatprep.mubr.f32.mxu0 0.0
  %9985 = vmatmul.mubr.f32.gmra.mxu0 %v9736
  %v9986 = vpop.f32.mrf.mxu0
  %v9987 = vadd.f32 0.0, %v9986
  %v9988 = vpop.f32.mrf.mxu0
  %9989 = vmatprep.mubr.f32.mxu0 0.0
  %9990 = vmatmul.mubr.f32.gmra.mxu0 %v9739
  %v9991 = vpop.f32.mrf.mxu0
  %v9992 = vadd.f32 0.0, %v9991
  %v9993 = vpop.f32.mrf.mxu0
  %9994 = vmatprep.mubr.f32.mxu0 0.0
  %9995 = vmatmul.mubr.f32.gmra.mxu0 %v9742
  %v9996 = vpop.f32.mrf.mxu0
  %v9997 = vadd.f32 0.0, %v9996
  %v9998 = vpop.f32.mrf.mxu0
  %9999 = vmatprep.mubr.f32.mxu0 0.0
  %10000 = vmatmul.mubr.f32.gmra.mxu0 %v9745
  %v10001 = vpop.f32.mrf.mxu0
  %v10002 = vadd.f32 0.0, %v10001
  %v10003 = vpop.f32.mrf.mxu0
  %10004 = vmatprep.mubr.f32.mxu0 0.0
  %10005 = vmatmul.mubr.f32.gmra.mxu0 %v9748
  %v10006 = vpop.f32.mrf.mxu0
  %v10007 = vadd.f32 0.0, %v10006
  %v10008 = vpop.f32.mrf.mxu0
  %10009 = vmatprep.mubr.f32.mxu0 0.0
  %10010 = vmatmul.mubr.f32.gmra.mxu0 %v9751
  %v10011 = vpop.f32.mrf.mxu0
  %v10012 = vadd.f32 0.0, %v10011
  %v10013 = vpop.f32.mrf.mxu0
  %10014 = vmatprep.mubr.f32.mxu0 0.0
  %10015 = vmatmul.mubr.f32.gmra.mxu0 %v9754
  %v10016 = vpop.f32.mrf.mxu0
  %v10017 = vadd.f32 0.0, %v10016
  %v10018 = vpop.f32.mrf.mxu0
  %10019 = vmatprep.mubr.f32.mxu0 0.0
  %10020 = vmatmul.mubr.f32.gmra.mxu0 %v9757
  %v10021 = vpop.f32.mrf.mxu0
  %v10022 = vadd.f32 0.0, %v10021
  %v10023 = vpop.f32.mrf.mxu0
  %10024 = vmatprep.mubr.f32.mxu0 0.0
  %10025 = vmatmul.mubr.f32.gmra.mxu0 %v9760
  %v10026 = vpop.f32.mrf.mxu0
  %v10027 = vadd.f32 0.0, %v10026
  %v10028 = vpop.f32.mrf.mxu0
  %10029 = vmatprep.mubr.f32.mxu0 0.0
  %10030 = vmatmul.mubr.f32.gmra.mxu0 %v9763
  %v10031 = vpop.f32.mrf.mxu0
  %v10032 = vadd.f32 0.0, %v10031
  %v10033 = vpop.f32.mrf.mxu0
  %10034 = vmatprep.mubr.f32.mxu0 0.0
  %10035 = vmatmul.mubr.f32.gmra.mxu0 %v9766
  %v10036 = vpop.f32.mrf.mxu0
  %v10037 = vadd.f32 0.0, %v10036
  %v10038 = vpop.f32.mrf.mxu0
  %10039 = vmatprep.mubr.f32.mxu0 0.0
  %10040 = vmatmul.mubr.f32.gmra.mxu0 %v9769
  %v10041 = vpop.f32.mrf.mxu0
  %v10042 = vadd.f32 0.0, %v10041
  %v10043 = vpop.f32.mrf.mxu0
  %10044 = vmatprep.mubr.f32.mxu0 0.0
  %10045 = vmatmul.mubr.f32.gmra.mxu0 %v9772
  %v10046 = vpop.f32.mrf.mxu0
  %v10047 = vadd.f32 0.0, %v10046
  %v10048 = vpop.f32.mrf.mxu0
  %10049 = vmatprep.mubr.f32.mxu0 0.0
  %10050 = vmatmul.mubr.f32.gmra.mxu0 %v9775
  %v10051 = vpop.f32.mrf.mxu0
  %v10052 = vadd.f32 0.0, %v10051
  %v10053 = vpop.f32.mrf.mxu0
  %10054 = vmatprep.mubr.f32.mxu0 0.0
  %10055 = vmatmul.mubr.f32.gmra.mxu0 %v9778
  %v10056 = vpop.f32.mrf.mxu0
  %v10057 = vadd.f32 0.0, %v10056
  %v10058 = vpop.f32.mrf.mxu0
  %10059 = vmatprep.mubr.f32.mxu0 0.0
  %10060 = vmatmul.mubr.f32.gmra.mxu0 %v9781
  %v10061 = vpop.f32.mrf.mxu0
  %v10062 = vadd.f32 0.0, %v10061
  %v10063 = vpop.f32.mrf.mxu0
  %10064 = vmatprep.mubr.f32.mxu0 0.0
  %10065 = vmatmul.mubr.f32.gmra.mxu0 %v9784
  %v10066 = vpop.f32.mrf.mxu0
  %v10067 = vadd.f32 0.0, %v10066
  %v10068 = vpop.f32.mrf.mxu0
  %10069 = vmatprep.mubr.f32.mxu0 0.0
  %10070 = vmatmul.mubr.f32.gmra.mxu0 %v9787
  %v10071 = vpop.f32.mrf.mxu0
  %v10072 = vadd.f32 0.0, %v10071
  %v10073 = vpop.f32.mrf.mxu0
  %10074 = vmatprep.mubr.f32.mxu0 0.0
  %10075 = vmatmul.mubr.f32.gmra.mxu0 %v9790
  %v10076 = vpop.f32.mrf.mxu0
  %v10077 = vadd.f32 0.0, %v10076
  %v10078 = vpop.f32.mrf.mxu0
  %10079 = vmatprep.mubr.f32.mxu0 0.0
  %10080 = vmatmul.mubr.f32.gmra.mxu0 %v9793
  %v10081 = vpop.f32.mrf.mxu0
  %v10082 = vadd.f32 0.0, %v10081
  %v10083 = vpop.f32.mrf.mxu0
  %10084 = vmatprep.mubr.f32.mxu0 0.0
  %10085 = vmatmul.mubr.f32.gmra.mxu0 %v9796
  %v10086 = vpop.f32.mrf.mxu0
  %v10087 = vadd.f32 0.0, %v10086
  %v10088 = vpop.f32.mrf.mxu0
  %10089 = vmatprep.mubr.f32.mxu0 0.0
  %10090 = vmatmul.mubr.f32.gmra.mxu0 %v9799
  %v10091 = vpop.f32.mrf.mxu0
  %v10092 = vadd.f32 0.0, %v10091
  %v10093 = vpop.f32.mrf.mxu0
  %10094 = vmatprep.mubr.f32.mxu0 0.0
  %10095 = vmatmul.mubr.f32.gmra.mxu0 %v9802
  %v10096 = vpop.f32.mrf.mxu0
  %v10097 = vadd.f32 0.0, %v10096
  %v10098 = vpop.f32.mrf.mxu0
  %10099 = vmatprep.mubr.f32.mxu0 0.0
  %10100 = vmatmul.mubr.f32.gmra.mxu0 %v9805
  %v10101 = vpop.f32.mrf.mxu0
  %v10102 = vadd.f32 0.0, %v10101
  %v10103 = vpop.f32.mrf.mxu0
  %10104 = vmatprep.mubr.f32.mxu0 0.0
  %10105 = vmatmul.mubr.f32.gmra.mxu0 %v9808
  %v10106 = vpop.f32.mrf.mxu0
  %v10107 = vadd.f32 0.0, %v10106
  %v10108 = vpop.f32.mrf.mxu0
  %10109 = vmatprep.mubr.f32.mxu0 0.0
  %10110 = vmatmul.mubr.f32.gmra.mxu0 %v9811
  %v10111 = vpop.f32.mrf.mxu0
  %v10112 = vadd.f32 0.0, %v10111
  %v10113 = vpop.f32.mrf.mxu0
  %10114 = vmatprep.mubr.f32.mxu0 0.0
  %10115 = vmatmul.mubr.f32.gmra.mxu0 %v9814
  %v10116 = vpop.f32.mrf.mxu0
  %v10117 = vadd.f32 0.0, %v10116
  %v10118 = vpop.f32.mrf.mxu0
  %10119 = vmatprep.mubr.f32.mxu0 0.0
  %10120 = vmatmul.mubr.f32.gmra.mxu0 %v9817
  %v10121 = vpop.f32.mrf.mxu0
  %v10122 = vadd.f32 0.0, %v10121
  %v10123 = vpop.f32.mrf.mxu0
  %10124 = vmatprep.mubr.f32.mxu0 0.0
  %10125 = vmatmul.mubr.f32.gmra.mxu0 %v9820
  %v10126 = vpop.f32.mrf.mxu0
  %v10127 = vadd.f32 0.0, %v10126
  %v10128 = vpop.f32.mrf.mxu0
  %10129 = vmatprep.mubr.f32.mxu0 0.0
  %10130 = vmatmul.mubr.f32.gmra.mxu0 %v9823
  %v10131 = vpop.f32.mrf.mxu0
  %v10132 = vadd.f32 0.0, %v10131
  %v10133 = vpop.f32.mrf.mxu0
  %10134 = vdwg.mxu0
  %v10135 = vadd.f32 %v9578, %v9892
  %v10136 = vadd.f32 %v9579, %v9897
  %v10137 = vadd.f32 %v9580, %v9902
  %v10138 = vadd.f32 %v9581, %v9907
  %v10139 = vadd.f32 %v9582, %v9912
  %v10140 = vadd.f32 %v9583, %v9917
  %v10141 = vadd.f32 %v9584, %v9922
  %v10142 = vadd.f32 %v9585, %v9927
  %v10143 = vadd.f32 %v9586, %v9932
  %v10144 = vadd.f32 %v9587, %v9937
  %v10145 = vadd.f32 %v9588, %v9942
  %v10146 = vadd.f32 %v9589, %v9947
  %v10147 = vadd.f32 %v9590, %v9952
  %v10148 = vadd.f32 %v9591, %v9957
  %v10149 = vadd.f32 %v9592, %v9962
  %v10150 = vadd.f32 %v9593, %v9967
  %v10151 = vadd.f32 %v9594, %v9972
  %v10152 = vadd.f32 %v9595, %v9977
  %v10153 = vadd.f32 %v9596, %v9982
  %v10154 = vadd.f32 %v9597, %v9987
  %v10155 = vadd.f32 %v9598, %v9992
  %v10156 = vadd.f32 %v9599, %v9997
  %v10157 = vadd.f32 %v9600, %v10002
  %v10158 = vadd.f32 %v9601, %v10007
  %v10159 = vadd.f32 %v9602, %v10012
  %v10160 = vadd.f32 %v9603, %v10017
  %v10161 = vadd.f32 %v9604, %v10022
  %v10162 = vadd.f32 %v9605, %v10027
  %v10163 = vadd.f32 %v9606, %v10032
  %v10164 = vadd.f32 %v9607, %v10037
  %v10165 = vadd.f32 %v9608, %v10042
  %v10166 = vadd.f32 %v9609, %v10047
  %v10167 = vadd.f32 %v9610, %v10052
  %v10168 = vadd.f32 %v9611, %v10057
  %v10169 = vadd.f32 %v9612, %v10062
  %v10170 = vadd.f32 %v9613, %v10067
  %v10171 = vadd.f32 %v9614, %v10072
  %v10172 = vadd.f32 %v9615, %v10077
  %v10173 = vadd.f32 %v9616, %v10082
  %v10174 = vadd.f32 %v9617, %v10087
  %v10175 = vadd.f32 %v9618, %v10092
  %v10176 = vadd.f32 %v9619, %v10097
  %v10177 = vadd.f32 %v9620, %v10102
  %v10178 = vadd.f32 %v9621, %v10107
  %v10179 = vadd.f32 %v9622, %v10112
  %v10180 = vadd.f32 %v9623, %v10117
  %v10181 = vadd.f32 %v9624, %v10122
  %v10182 = vadd.f32 %v9625, %v10127
  %v10183 = vadd.f32 %v9626, %v10132
  %v10184 = vld [vmem:[#allocation2 + $0x1e] sm:$0xff]
  %v10185 = vld [vmem:[#allocation2 + $0x26] sm:$0xff]
  %v10186 = vld [vmem:[#allocation2 + $0x2e] sm:$0xff]
  %v10187 = vld [vmem:[#allocation2 + $0x36] sm:$0xff]
  %v10188 = vld [vmem:[#allocation2 + $0x3e] sm:$0xff]
  %v10189 = vld [vmem:[#allocation2 + $0x46] sm:$0xff]
  %v10190 = vld [vmem:[#allocation2 + $0x4e] sm:$0xff]
  %v10191 = vld [vmem:[#allocation2 + $0x56] sm:$0xff]
  %v10192 = vld [vmem:[#allocation2 + $0x5e] sm:$0xff]
  %v10193 = vld [vmem:[#allocation2 + $0x66] sm:$0xff]
  %v10194 = vld [vmem:[#allocation2 + $0x6e] sm:$0xff]
  %v10195 = vld [vmem:[#allocation2 + $0x76] sm:$0xff]
  %v10196 = vld [vmem:[#allocation2 + $0x7e] sm:$0xff]
  %v10197 = vld [vmem:[#allocation2 + $0x86] sm:$0xff]
  %v10198 = vld [vmem:[#allocation2 + $0x8e] sm:$0xff]
  %v10199 = vld [vmem:[#allocation2 + $0x96] sm:$0xff]
  %v10200 = vld [vmem:[#allocation2 + $0x9e] sm:$0xff]
  %v10201 = vld [vmem:[#allocation2 + $0xa6] sm:$0xff]
  %v10202 = vld [vmem:[#allocation2 + $0xae] sm:$0xff]
  %v10203 = vld [vmem:[#allocation2 + $0xb6] sm:$0xff]
  %v10204 = vld [vmem:[#allocation2 + $0xbe] sm:$0xff]
  %v10205 = vld [vmem:[#allocation2 + $0xc6] sm:$0xff]
  %v10206 = vld [vmem:[#allocation2 + $0xce] sm:$0xff]
  %v10207 = vld [vmem:[#allocation2 + $0xd6] sm:$0xff]
  %v10208 = vld [vmem:[#allocation2 + $0xde] sm:$0xff]
  %v10209 = vld [vmem:[#allocation2 + $0xe6] sm:$0xff]
  %v10210 = vld [vmem:[#allocation2 + $0xee] sm:$0xff]
  %v10211 = vld [vmem:[#allocation2 + $0xf6] sm:$0xff]
  %v10212 = vld [vmem:[#allocation2 + $0xfe] sm:$0xff]
  %v10213 = vld [vmem:[#allocation2 + $0x106] sm:$0xff]
  %v10214 = vld [vmem:[#allocation2 + $0x10e] sm:$0xff]
  %v10215 = vld [vmem:[#allocation2 + $0x116] sm:$0xff]
  %v10216 = vld [vmem:[#allocation2 + $0x11e] sm:$0xff]
  %v10217 = vld [vmem:[#allocation2 + $0x126] sm:$0xff]
  %v10218 = vld [vmem:[#allocation2 + $0x12e] sm:$0xff]
  %v10219 = vld [vmem:[#allocation2 + $0x136] sm:$0xff]
  %v10220 = vld [vmem:[#allocation2 + $0x13e] sm:$0xff]
  %v10221 = vld [vmem:[#allocation2 + $0x146] sm:$0xff]
  %v10222 = vld [vmem:[#allocation2 + $0x14e] sm:$0xff]
  %v10223 = vld [vmem:[#allocation2 + $0x156] sm:$0xff]
  %v10224 = vld [vmem:[#allocation2 + $0x15e] sm:$0xff]
  %v10225 = vld [vmem:[#allocation2 + $0x166] sm:$0xff]
  %v10226 = vld [vmem:[#allocation2 + $0x16e] sm:$0xff]
  %v10227 = vld [vmem:[#allocation2 + $0x176] sm:$0xff]
  %v10228 = vld [vmem:[#allocation2 + $0x17e] sm:$0xff]
  %v10229 = vld [vmem:[#allocation2 + $0x186] sm:$0xff]
  %v10230 = vld [vmem:[#allocation2 + $0x18e] sm:$0xff]
  %v10231 = vld [vmem:[#allocation2 + $0x196] sm:$0xff]
  %v10232 = vld [vmem:[#allocation2 + $0x19e] sm:$0xff]
  %s10233 = scalar_lea.vmem %s4, 64
  %v10234 = vld [vmem:[%s10233] sm:$0xff]
  %v10236 = vsel %vm132, %v10184, 0
  %v10239 = vsel %vm132, %v10185, 0
  %v10242 = vsel %vm132, %v10186, 0
  %v10245 = vsel %vm132, %v10187, 0
  %v10248 = vsel %vm132, %v10188, 0
  %v10251 = vsel %vm132, %v10189, 0
  %v10254 = vsel %vm132, %v10190, 0
  %v10257 = vsel %vm132, %v10191, 0
  %v10260 = vsel %vm132, %v10192, 0
  %v10263 = vsel %vm132, %v10193, 0
  %v10266 = vsel %vm132, %v10194, 0
  %v10269 = vsel %vm132, %v10195, 0
  %v10272 = vsel %vm132, %v10196, 0
  %v10275 = vsel %vm132, %v10197, 0
  %v10278 = vsel %vm132, %v10198, 0
  %v10281 = vsel %vm132, %v10199, 0
  %v10284 = vsel %vm132, %v10200, 0
  %v10287 = vsel %vm132, %v10201, 0
  %v10290 = vsel %vm132, %v10202, 0
  %v10293 = vsel %vm132, %v10203, 0
  %v10296 = vsel %vm132, %v10204, 0
  %v10299 = vsel %vm132, %v10205, 0
  %v10302 = vsel %vm132, %v10206, 0
  %v10305 = vsel %vm132, %v10207, 0
  %v10308 = vsel %vm132, %v10208, 0
  %v10311 = vsel %vm132, %v10209, 0
  %v10314 = vsel %vm132, %v10210, 0
  %v10317 = vsel %vm132, %v10211, 0
  %v10320 = vsel %vm132, %v10212, 0
  %v10323 = vsel %vm132, %v10213, 0
  %v10326 = vsel %vm132, %v10214, 0
  %v10329 = vsel %vm132, %v10215, 0
  %v10332 = vsel %vm132, %v10216, 0
  %v10335 = vsel %vm132, %v10217, 0
  %v10338 = vsel %vm132, %v10218, 0
  %v10341 = vsel %vm132, %v10219, 0
  %v10344 = vsel %vm132, %v10220, 0
  %v10347 = vsel %vm132, %v10221, 0
  %v10350 = vsel %vm132, %v10222, 0
  %v10353 = vsel %vm132, %v10223, 0
  %v10356 = vsel %vm132, %v10224, 0
  %v10359 = vsel %vm132, %v10225, 0
  %v10362 = vsel %vm132, %v10226, 0
  %v10365 = vsel %vm132, %v10227, 0
  %v10368 = vsel %vm132, %v10228, 0
  %v10371 = vsel %vm132, %v10229, 0
  %v10374 = vsel %vm132, %v10230, 0
  %v10377 = vsel %vm132, %v10231, 0
  %v10380 = vsel %vm132, %v10232, 0
  %10382 = vmatprep.subr.mxu0 0.0
  %10383 = vmatpush1.msra.mxu0 0.0
  %10384 = vmatprep.subr.mxu0 0.0
  %10385 = vmatpush1.msra.mxu0 0.0
  %10386 = vmatprep.subr.mxu0 0.0
  %10387 = vmatpush1.msra.mxu0 0.0
  %10388 = vmatprep.subr.mxu0 0.0
  %10389 = vmatpush1.msra.mxu0 0.0
  %10390 = vmatprep.subr.mxu0 0.0
  %10391 = vmatpush1.msra.mxu0 0.0
  %10392 = vmatprep.subr.mxu0 0.0
  %10393 = vmatpush1.msra.mxu0 0.0
  %10394 = vmatprep.subr.mxu0 0.0
  %10395 = vmatpush1.msra.mxu0 0.0
  %10396 = vmatprep.subr.mxu0 0.0
  %10397 = vmatpush1.msra.mxu0 0.0
  %10398 = vmatprep.subr.mxu0 0.0
  %10399 = vmatpush1.msra.mxu0 0.0
  %10400 = vmatprep.subr.mxu0 0.0
  %10401 = vmatpush1.msra.mxu0 0.0
  %10402 = vmatprep.subr.mxu0 0.0
  %10403 = vmatpush1.msra.mxu0 0.0
  %10404 = vmatprep.subr.mxu0 0.0
  %10405 = vmatpush1.msra.mxu0 0.0
  %10406 = vmatprep.subr.mxu0 0.0
  %10407 = vmatpush1.msra.mxu0 0.0
  %10408 = vmatprep.subr.mxu0 0.0
  %10409 = vmatpush1.msra.mxu0 0.0
  %10410 = vmatprep.subr.mxu0 0.0
  %10411 = vmatpush1.msra.mxu0 0.0
  %10412 = vmatprep.subr.mxu0 0.0
  %10413 = vmatpush1.msra.mxu0 %v10234
  %10414 = vmatprep.subr.mxu0 0.0
  %10415 = vmatpush2.msra.mxu0 0.0
  %10416 = vmatprep.subr.mxu0 0.0
  %10417 = vmatpush2.msra.mxu0 0.0
  %10418 = vmatprep.subr.mxu0 0.0
  %10419 = vmatpush2.msra.mxu0 0.0
  %10420 = vmatprep.subr.mxu0 0.0
  %10421 = vmatpush2.msra.mxu0 0.0
  %10422 = vmatprep.subr.mxu0 0.0
  %10423 = vmatpush2.msra.mxu0 0.0
  %10424 = vmatprep.subr.mxu0 0.0
  %10425 = vmatpush2.msra.mxu0 0.0
  %10426 = vmatprep.subr.mxu0 0.0
  %10427 = vmatpush2.msra.mxu0 0.0
  %10428 = vmatprep.subr.mxu0 0.0
  %10429 = vmatpush2.msra.mxu0 0.0
  %10430 = vmatprep.subr.mxu0 0.0
  %10431 = vmatpush2.msra.mxu0 0.0
  %10432 = vmatprep.subr.mxu0 0.0
  %10433 = vmatpush2.msra.mxu0 0.0
  %10434 = vmatprep.subr.mxu0 0.0
  %10435 = vmatpush2.msra.mxu0 0.0
  %10436 = vmatprep.subr.mxu0 0.0
  %10437 = vmatpush2.msra.mxu0 0.0
  %10438 = vmatprep.subr.mxu0 0.0
  %10439 = vmatpush2.msra.mxu0 0.0
  %10440 = vmatprep.subr.mxu0 0.0
  %10441 = vmatpush2.msra.mxu0 0.0
  %10442 = vmatprep.subr.mxu0 0.0
  %10443 = vmatpush2.msra.mxu0 0.0
  %10444 = vmatprep.subr.mxu0 0.0
  %10445 = vmatpush2.msra.mxu0 0.0
  %10446 = vmatprep.mubr.f32.mxu0 0.0
  %10447 = vmatmul.mubr.f32.gmra.mxu0 %v10236
  %v10448 = vpop.f32.mrf.mxu0
  %v10449 = vadd.f32 0.0, %v10448
  %v10450 = vpop.f32.mrf.mxu0
  %10451 = vmatprep.mubr.f32.mxu0 0.0
  %10452 = vmatmul.mubr.f32.gmra.mxu0 %v10239
  %v10453 = vpop.f32.mrf.mxu0
  %v10454 = vadd.f32 0.0, %v10453
  %v10455 = vpop.f32.mrf.mxu0
  %10456 = vmatprep.mubr.f32.mxu0 0.0
  %10457 = vmatmul.mubr.f32.gmra.mxu0 %v10242
  %v10458 = vpop.f32.mrf.mxu0
  %v10459 = vadd.f32 0.0, %v10458
  %v10460 = vpop.f32.mrf.mxu0
  %10461 = vmatprep.mubr.f32.mxu0 0.0
  %10462 = vmatmul.mubr.f32.gmra.mxu0 %v10245
  %v10463 = vpop.f32.mrf.mxu0
  %v10464 = vadd.f32 0.0, %v10463
  %v10465 = vpop.f32.mrf.mxu0
  %10466 = vmatprep.mubr.f32.mxu0 0.0
  %10467 = vmatmul.mubr.f32.gmra.mxu0 %v10248
  %v10468 = vpop.f32.mrf.mxu0
  %v10469 = vadd.f32 0.0, %v10468
  %v10470 = vpop.f32.mrf.mxu0
  %10471 = vmatprep.mubr.f32.mxu0 0.0
  %10472 = vmatmul.mubr.f32.gmra.mxu0 %v10251
  %v10473 = vpop.f32.mrf.mxu0
  %v10474 = vadd.f32 0.0, %v10473
  %v10475 = vpop.f32.mrf.mxu0
  %10476 = vmatprep.mubr.f32.mxu0 0.0
  %10477 = vmatmul.mubr.f32.gmra.mxu0 %v10254
  %v10478 = vpop.f32.mrf.mxu0
  %v10479 = vadd.f32 0.0, %v10478
  %v10480 = vpop.f32.mrf.mxu0
  %10481 = vmatprep.mubr.f32.mxu0 0.0
  %10482 = vmatmul.mubr.f32.gmra.mxu0 %v10257
  %v10483 = vpop.f32.mrf.mxu0
  %v10484 = vadd.f32 0.0, %v10483
  %v10485 = vpop.f32.mrf.mxu0
  %10486 = vmatprep.mubr.f32.mxu0 0.0
  %10487 = vmatmul.mubr.f32.gmra.mxu0 %v10260
  %v10488 = vpop.f32.mrf.mxu0
  %v10489 = vadd.f32 0.0, %v10488
  %v10490 = vpop.f32.mrf.mxu0
  %10491 = vmatprep.mubr.f32.mxu0 0.0
  %10492 = vmatmul.mubr.f32.gmra.mxu0 %v10263
  %v10493 = vpop.f32.mrf.mxu0
  %v10494 = vadd.f32 0.0, %v10493
  %v10495 = vpop.f32.mrf.mxu0
  %10496 = vmatprep.mubr.f32.mxu0 0.0
  %10497 = vmatmul.mubr.f32.gmra.mxu0 %v10266
  %v10498 = vpop.f32.mrf.mxu0
  %v10499 = vadd.f32 0.0, %v10498
  %v10500 = vpop.f32.mrf.mxu0
  %10501 = vmatprep.mubr.f32.mxu0 0.0
  %10502 = vmatmul.mubr.f32.gmra.mxu0 %v10269
  %v10503 = vpop.f32.mrf.mxu0
  %v10504 = vadd.f32 0.0, %v10503
  %v10505 = vpop.f32.mrf.mxu0
  %10506 = vmatprep.mubr.f32.mxu0 0.0
  %10507 = vmatmul.mubr.f32.gmra.mxu0 %v10272
  %v10508 = vpop.f32.mrf.mxu0
  %v10509 = vadd.f32 0.0, %v10508
  %v10510 = vpop.f32.mrf.mxu0
  %10511 = vmatprep.mubr.f32.mxu0 0.0
  %10512 = vmatmul.mubr.f32.gmra.mxu0 %v10275
  %v10513 = vpop.f32.mrf.mxu0
  %v10514 = vadd.f32 0.0, %v10513
  %v10515 = vpop.f32.mrf.mxu0
  %10516 = vmatprep.mubr.f32.mxu0 0.0
  %10517 = vmatmul.mubr.f32.gmra.mxu0 %v10278
  %v10518 = vpop.f32.mrf.mxu0
  %v10519 = vadd.f32 0.0, %v10518
  %v10520 = vpop.f32.mrf.mxu0
  %10521 = vmatprep.mubr.f32.mxu0 0.0
  %10522 = vmatmul.mubr.f32.gmra.mxu0 %v10281
  %v10523 = vpop.f32.mrf.mxu0
  %v10524 = vadd.f32 0.0, %v10523
  %v10525 = vpop.f32.mrf.mxu0
  %10526 = vmatprep.mubr.f32.mxu0 0.0
  %10527 = vmatmul.mubr.f32.gmra.mxu0 %v10284
  %v10528 = vpop.f32.mrf.mxu0
  %v10529 = vadd.f32 0.0, %v10528
  %v10530 = vpop.f32.mrf.mxu0
  %10531 = vmatprep.mubr.f32.mxu0 0.0
  %10532 = vmatmul.mubr.f32.gmra.mxu0 %v10287
  %v10533 = vpop.f32.mrf.mxu0
  %v10534 = vadd.f32 0.0, %v10533
  %v10535 = vpop.f32.mrf.mxu0
  %10536 = vmatprep.mubr.f32.mxu0 0.0
  %10537 = vmatmul.mubr.f32.gmra.mxu0 %v10290
  %v10538 = vpop.f32.mrf.mxu0
  %v10539 = vadd.f32 0.0, %v10538
  %v10540 = vpop.f32.mrf.mxu0
  %10541 = vmatprep.mubr.f32.mxu0 0.0
  %10542 = vmatmul.mubr.f32.gmra.mxu0 %v10293
  %v10543 = vpop.f32.mrf.mxu0
  %v10544 = vadd.f32 0.0, %v10543
  %v10545 = vpop.f32.mrf.mxu0
  %10546 = vmatprep.mubr.f32.mxu0 0.0
  %10547 = vmatmul.mubr.f32.gmra.mxu0 %v10296
  %v10548 = vpop.f32.mrf.mxu0
  %v10549 = vadd.f32 0.0, %v10548
  %v10550 = vpop.f32.mrf.mxu0
  %10551 = vmatprep.mubr.f32.mxu0 0.0
  %10552 = vmatmul.mubr.f32.gmra.mxu0 %v10299
  %v10553 = vpop.f32.mrf.mxu0
  %v10554 = vadd.f32 0.0, %v10553
  %v10555 = vpop.f32.mrf.mxu0
  %10556 = vmatprep.mubr.f32.mxu0 0.0
  %10557 = vmatmul.mubr.f32.gmra.mxu0 %v10302
  %v10558 = vpop.f32.mrf.mxu0
  %v10559 = vadd.f32 0.0, %v10558
  %v10560 = vpop.f32.mrf.mxu0
  %10561 = vmatprep.mubr.f32.mxu0 0.0
  %10562 = vmatmul.mubr.f32.gmra.mxu0 %v10305
  %v10563 = vpop.f32.mrf.mxu0
  %v10564 = vadd.f32 0.0, %v10563
  %v10565 = vpop.f32.mrf.mxu0
  %10566 = vmatprep.mubr.f32.mxu0 0.0
  %10567 = vmatmul.mubr.f32.gmra.mxu0 %v10308
  %v10568 = vpop.f32.mrf.mxu0
  %v10569 = vadd.f32 0.0, %v10568
  %v10570 = vpop.f32.mrf.mxu0
  %10571 = vmatprep.mubr.f32.mxu0 0.0
  %10572 = vmatmul.mubr.f32.gmra.mxu0 %v10311
  %v10573 = vpop.f32.mrf.mxu0
  %v10574 = vadd.f32 0.0, %v10573
  %v10575 = vpop.f32.mrf.mxu0
  %10576 = vmatprep.mubr.f32.mxu0 0.0
  %10577 = vmatmul.mubr.f32.gmra.mxu0 %v10314
  %v10578 = vpop.f32.mrf.mxu0
  %v10579 = vadd.f32 0.0, %v10578
  %v10580 = vpop.f32.mrf.mxu0
  %10581 = vmatprep.mubr.f32.mxu0 0.0
  %10582 = vmatmul.mubr.f32.gmra.mxu0 %v10317
  %v10583 = vpop.f32.mrf.mxu0
  %v10584 = vadd.f32 0.0, %v10583
  %v10585 = vpop.f32.mrf.mxu0
  %10586 = vmatprep.mubr.f32.mxu0 0.0
  %10587 = vmatmul.mubr.f32.gmra.mxu0 %v10320
  %v10588 = vpop.f32.mrf.mxu0
  %v10589 = vadd.f32 0.0, %v10588
  %v10590 = vpop.f32.mrf.mxu0
  %10591 = vmatprep.mubr.f32.mxu0 0.0
  %10592 = vmatmul.mubr.f32.gmra.mxu0 %v10323
  %v10593 = vpop.f32.mrf.mxu0
  %v10594 = vadd.f32 0.0, %v10593
  %v10595 = vpop.f32.mrf.mxu0
  %10596 = vmatprep.mubr.f32.mxu0 0.0
  %10597 = vmatmul.mubr.f32.gmra.mxu0 %v10326
  %v10598 = vpop.f32.mrf.mxu0
  %v10599 = vadd.f32 0.0, %v10598
  %v10600 = vpop.f32.mrf.mxu0
  %10601 = vmatprep.mubr.f32.mxu0 0.0
  %10602 = vmatmul.mubr.f32.gmra.mxu0 %v10329
  %v10603 = vpop.f32.mrf.mxu0
  %v10604 = vadd.f32 0.0, %v10603
  %v10605 = vpop.f32.mrf.mxu0
  %10606 = vmatprep.mubr.f32.mxu0 0.0
  %10607 = vmatmul.mubr.f32.gmra.mxu0 %v10332
  %v10608 = vpop.f32.mrf.mxu0
  %v10609 = vadd.f32 0.0, %v10608
  %v10610 = vpop.f32.mrf.mxu0
  %10611 = vmatprep.mubr.f32.mxu0 0.0
  %10612 = vmatmul.mubr.f32.gmra.mxu0 %v10335
  %v10613 = vpop.f32.mrf.mxu0
  %v10614 = vadd.f32 0.0, %v10613
  %v10615 = vpop.f32.mrf.mxu0
  %10616 = vmatprep.mubr.f32.mxu0 0.0
  %10617 = vmatmul.mubr.f32.gmra.mxu0 %v10338
  %v10618 = vpop.f32.mrf.mxu0
  %v10619 = vadd.f32 0.0, %v10618
  %v10620 = vpop.f32.mrf.mxu0
  %10621 = vmatprep.mubr.f32.mxu0 0.0
  %10622 = vmatmul.mubr.f32.gmra.mxu0 %v10341
  %v10623 = vpop.f32.mrf.mxu0
  %v10624 = vadd.f32 0.0, %v10623
  %v10625 = vpop.f32.mrf.mxu0
  %10626 = vmatprep.mubr.f32.mxu0 0.0
  %10627 = vmatmul.mubr.f32.gmra.mxu0 %v10344
  %v10628 = vpop.f32.mrf.mxu0
  %v10629 = vadd.f32 0.0, %v10628
  %v10630 = vpop.f32.mrf.mxu0
  %10631 = vmatprep.mubr.f32.mxu0 0.0
  %10632 = vmatmul.mubr.f32.gmra.mxu0 %v10347
  %v10633 = vpop.f32.mrf.mxu0
  %v10634 = vadd.f32 0.0, %v10633
  %v10635 = vpop.f32.mrf.mxu0
  %10636 = vmatprep.mubr.f32.mxu0 0.0
  %10637 = vmatmul.mubr.f32.gmra.mxu0 %v10350
  %v10638 = vpop.f32.mrf.mxu0
  %v10639 = vadd.f32 0.0, %v10638
  %v10640 = vpop.f32.mrf.mxu0
  %10641 = vmatprep.mubr.f32.mxu0 0.0
  %10642 = vmatmul.mubr.f32.gmra.mxu0 %v10353
  %v10643 = vpop.f32.mrf.mxu0
  %v10644 = vadd.f32 0.0, %v10643
  %v10645 = vpop.f32.mrf.mxu0
  %10646 = vmatprep.mubr.f32.mxu0 0.0
  %10647 = vmatmul.mubr.f32.gmra.mxu0 %v10356
  %v10648 = vpop.f32.mrf.mxu0
  %v10649 = vadd.f32 0.0, %v10648
  %v10650 = vpop.f32.mrf.mxu0
  %10651 = vmatprep.mubr.f32.mxu0 0.0
  %10652 = vmatmul.mubr.f32.gmra.mxu0 %v10359
  %v10653 = vpop.f32.mrf.mxu0
  %v10654 = vadd.f32 0.0, %v10653
  %v10655 = vpop.f32.mrf.mxu0
  %10656 = vmatprep.mubr.f32.mxu0 0.0
  %10657 = vmatmul.mubr.f32.gmra.mxu0 %v10362
  %v10658 = vpop.f32.mrf.mxu0
  %v10659 = vadd.f32 0.0, %v10658
  %v10660 = vpop.f32.mrf.mxu0
  %10661 = vmatprep.mubr.f32.mxu0 0.0
  %10662 = vmatmul.mubr.f32.gmra.mxu0 %v10365
  %v10663 = vpop.f32.mrf.mxu0
  %v10664 = vadd.f32 0.0, %v10663
  %v10665 = vpop.f32.mrf.mxu0
  %10666 = vmatprep.mubr.f32.mxu0 0.0
  %10667 = vmatmul.mubr.f32.gmra.mxu0 %v10368
  %v10668 = vpop.f32.mrf.mxu0
  %v10669 = vadd.f32 0.0, %v10668
  %v10670 = vpop.f32.mrf.mxu0
  %10671 = vmatprep.mubr.f32.mxu0 0.0
  %10672 = vmatmul.mubr.f32.gmra.mxu0 %v10371
  %v10673 = vpop.f32.mrf.mxu0
  %v10674 = vadd.f32 0.0, %v10673
  %v10675 = vpop.f32.mrf.mxu0
  %10676 = vmatprep.mubr.f32.mxu0 0.0
  %10677 = vmatmul.mubr.f32.gmra.mxu0 %v10374
  %v10678 = vpop.f32.mrf.mxu0
  %v10679 = vadd.f32 0.0, %v10678
  %v10680 = vpop.f32.mrf.mxu0
  %10681 = vmatprep.mubr.f32.mxu0 0.0
  %10682 = vmatmul.mubr.f32.gmra.mxu0 %v10377
  %v10683 = vpop.f32.mrf.mxu0
  %v10684 = vadd.f32 0.0, %v10683
  %v10685 = vpop.f32.mrf.mxu0
  %10686 = vmatprep.mubr.f32.mxu0 0.0
  %10687 = vmatmul.mubr.f32.gmra.mxu0 %v10380
  %v10688 = vpop.f32.mrf.mxu0
  %v10689 = vadd.f32 0.0, %v10688
  %v10690 = vpop.f32.mrf.mxu0
  %10691 = vdwg.mxu0
  %v10692 = vadd.f32 %v10135, %v10449
  %v10693 = vadd.f32 %v10136, %v10454
  %v10694 = vadd.f32 %v10137, %v10459
  %v10695 = vadd.f32 %v10138, %v10464
  %v10696 = vadd.f32 %v10139, %v10469
  %v10697 = vadd.f32 %v10140, %v10474
  %v10698 = vadd.f32 %v10141, %v10479
  %v10699 = vadd.f32 %v10142, %v10484
  %v10700 = vadd.f32 %v10143, %v10489
  %v10701 = vadd.f32 %v10144, %v10494
  %v10702 = vadd.f32 %v10145, %v10499
  %v10703 = vadd.f32 %v10146, %v10504
  %v10704 = vadd.f32 %v10147, %v10509
  %v10705 = vadd.f32 %v10148, %v10514
  %v10706 = vadd.f32 %v10149, %v10519
  %v10707 = vadd.f32 %v10150, %v10524
  %v10708 = vadd.f32 %v10151, %v10529
  %v10709 = vadd.f32 %v10152, %v10534
  %v10710 = vadd.f32 %v10153, %v10539
  %v10711 = vadd.f32 %v10154, %v10544
  %v10712 = vadd.f32 %v10155, %v10549
  %v10713 = vadd.f32 %v10156, %v10554
  %v10714 = vadd.f32 %v10157, %v10559
  %v10715 = vadd.f32 %v10158, %v10564
  %v10716 = vadd.f32 %v10159, %v10569
  %v10717 = vadd.f32 %v10160, %v10574
  %v10718 = vadd.f32 %v10161, %v10579
  %v10719 = vadd.f32 %v10162, %v10584
  %v10720 = vadd.f32 %v10163, %v10589
  %v10721 = vadd.f32 %v10164, %v10594
  %v10722 = vadd.f32 %v10165, %v10599
  %v10723 = vadd.f32 %v10166, %v10604
  %v10724 = vadd.f32 %v10167, %v10609
  %v10725 = vadd.f32 %v10168, %v10614
  %v10726 = vadd.f32 %v10169, %v10619
  %v10727 = vadd.f32 %v10170, %v10624
  %v10728 = vadd.f32 %v10171, %v10629
  %v10729 = vadd.f32 %v10172, %v10634
  %v10730 = vadd.f32 %v10173, %v10639
  %v10731 = vadd.f32 %v10174, %v10644
  %v10732 = vadd.f32 %v10175, %v10649
  %v10733 = vadd.f32 %v10176, %v10654
  %v10734 = vadd.f32 %v10177, %v10659
  %v10735 = vadd.f32 %v10178, %v10664
  %v10736 = vadd.f32 %v10179, %v10669
  %v10737 = vadd.f32 %v10180, %v10674
  %v10738 = vadd.f32 %v10181, %v10679
  %v10739 = vadd.f32 %v10182, %v10684
  %v10740 = vadd.f32 %v10183, %v10689
  %v10741 = vld [vmem:[%s5] sm:$0x1]
  %v10743 = vlaneseq
  %v10744 = vshrl.u32 %v10743, 7
  %v10745 = vsub.s32 0, %v10744
  %v10746 = vrot.slane %v10741, %v10745
  %v10748 = vadd.f32 %v10692, %v10746
  %v10749 = vadd.f32 %v10693, %v10746
  %v10750 = vadd.f32 %v10694, %v10746
  %v10751 = vadd.f32 %v10695, %v10746
  %v10752 = vadd.f32 %v10696, %v10746
  %v10753 = vadd.f32 %v10697, %v10746
  %v10754 = vadd.f32 %v10698, %v10746
  %v10755 = vadd.f32 %v10699, %v10746
  %v10756 = vadd.f32 %v10700, %v10746
  %v10757 = vadd.f32 %v10701, %v10746
  %v10758 = vadd.f32 %v10702, %v10746
  %v10759 = vadd.f32 %v10703, %v10746
  %v10760 = vadd.f32 %v10704, %v10746
  %v10761 = vadd.f32 %v10705, %v10746
  %v10762 = vadd.f32 %v10706, %v10746
  %v10763 = vadd.f32 %v10707, %v10746
  %v10764 = vadd.f32 %v10708, %v10746
  %v10765 = vadd.f32 %v10709, %v10746
  %v10766 = vadd.f32 %v10710, %v10746
  %v10767 = vadd.f32 %v10711, %v10746
  %v10768 = vadd.f32 %v10712, %v10746
  %v10769 = vadd.f32 %v10713, %v10746
  %v10770 = vadd.f32 %v10714, %v10746
  %v10771 = vadd.f32 %v10715, %v10746
  %v10772 = vadd.f32 %v10716, %v10746
  %v10773 = vadd.f32 %v10717, %v10746
  %v10774 = vadd.f32 %v10718, %v10746
  %v10775 = vadd.f32 %v10719, %v10746
  %v10776 = vadd.f32 %v10720, %v10746
  %v10777 = vadd.f32 %v10721, %v10746
  %v10778 = vadd.f32 %v10722, %v10746
  %v10779 = vadd.f32 %v10723, %v10746
  %v10780 = vadd.f32 %v10724, %v10746
  %v10781 = vadd.f32 %v10725, %v10746
  %v10782 = vadd.f32 %v10726, %v10746
  %v10783 = vadd.f32 %v10727, %v10746
  %v10784 = vadd.f32 %v10728, %v10746
  %v10785 = vadd.f32 %v10729, %v10746
  %v10786 = vadd.f32 %v10730, %v10746
  %v10787 = vadd.f32 %v10731, %v10746
  %v10788 = vadd.f32 %v10732, %v10746
  %v10789 = vadd.f32 %v10733, %v10746
  %v10790 = vadd.f32 %v10734, %v10746
  %v10791 = vadd.f32 %v10735, %v10746
  %v10792 = vadd.f32 %v10736, %v10746
  %v10793 = vadd.f32 %v10737, %v10746
  %v10794 = vadd.f32 %v10738, %v10746
  %v10795 = vadd.f32 %v10739, %v10746
  %v10796 = vadd.f32 %v10740, %v10746
  %v10797 = vtanh.pop %v10748
  %v10798 = vtanh.pop %v10749
  %v10799 = vtanh.pop %v10750
  %v10800 = vtanh.pop %v10751
  %v10801 = vtanh.pop %v10752
  %v10802 = vtanh.pop %v10753
  %v10803 = vtanh.pop %v10754
  %v10804 = vtanh.pop %v10755
  %v10805 = vtanh.pop %v10756
  %v10806 = vtanh.pop %v10757
  %v10807 = vtanh.pop %v10758
  %v10808 = vtanh.pop %v10759
  %v10809 = vtanh.pop %v10760
  %v10810 = vtanh.pop %v10761
  %v10811 = vtanh.pop %v10762
  %v10812 = vtanh.pop %v10763
  %v10813 = vtanh.pop %v10764
  %v10814 = vtanh.pop %v10765
  %v10815 = vtanh.pop %v10766
  %v10816 = vtanh.pop %v10767
  %v10817 = vtanh.pop %v10768
  %v10818 = vtanh.pop %v10769
  %v10819 = vtanh.pop %v10770
  %v10820 = vtanh.pop %v10771
  %v10821 = vtanh.pop %v10772
  %v10822 = vtanh.pop %v10773
  %v10823 = vtanh.pop %v10774
  %v10824 = vtanh.pop %v10775
  %v10825 = vtanh.pop %v10776
  %v10826 = vtanh.pop %v10777
  %v10827 = vtanh.pop %v10778
  %v10828 = vtanh.pop %v10779
  %v10829 = vtanh.pop %v10780
  %v10830 = vtanh.pop %v10781
  %v10831 = vtanh.pop %v10782
  %v10832 = vtanh.pop %v10783
  %v10833 = vtanh.pop %v10784
  %v10834 = vtanh.pop %v10785
  %v10835 = vtanh.pop %v10786
  %v10836 = vtanh.pop %v10787
  %v10837 = vtanh.pop %v10788
  %v10838 = vtanh.pop %v10789
  %v10839 = vtanh.pop %v10790
  %v10840 = vtanh.pop %v10791
  %v10841 = vtanh.pop %v10792
  %v10842 = vtanh.pop %v10793
  %v10843 = vtanh.pop %v10794
  %v10844 = vtanh.pop %v10795
  %v10845 = vtanh.pop %v10796
  %vm10846 = vcmask 23552
  %10847 = vst.msk [vmem:[%s6] sm:$0xff] %vm10846, %v10797
  %10848 = vst.msk [vmem:[%s6 + $0x8] sm:$0xff] %vm10846, %v10798
  %10849 = vst.msk [vmem:[%s6 + $0x10] sm:$0xff] %vm10846, %v10799
  %10850 = vst.msk [vmem:[%s6 + $0x18] sm:$0xff] %vm10846, %v10800
  %10851 = vst.msk [vmem:[%s6 + $0x20] sm:$0xff] %vm10846, %v10801
  %10852 = vst.msk [vmem:[%s6 + $0x28] sm:$0xff] %vm10846, %v10802
  %10853 = vst.msk [vmem:[%s6 + $0x30] sm:$0xff] %vm10846, %v10803
  %10854 = vst.msk [vmem:[%s6 + $0x38] sm:$0xff] %vm10846, %v10804
  %10855 = vst.msk [vmem:[%s6 + $0x40] sm:$0xff] %vm10846, %v10805
  %10856 = vst.msk [vmem:[%s6 + $0x48] sm:$0xff] %vm10846, %v10806
  %10857 = vst.msk [vmem:[%s6 + $0x50] sm:$0xff] %vm10846, %v10807
  %10858 = vst.msk [vmem:[%s6 + $0x58] sm:$0xff] %vm10846, %v10808
  %10859 = vst.msk [vmem:[%s6 + $0x60] sm:$0xff] %vm10846, %v10809
  %10860 = vst.msk [vmem:[%s6 + $0x68] sm:$0xff] %vm10846, %v10810
  %10861 = vst.msk [vmem:[%s6 + $0x70] sm:$0xff] %vm10846, %v10811
  %10862 = vst.msk [vmem:[%s6 + $0x78] sm:$0xff] %vm10846, %v10812
  %10863 = vst.msk [vmem:[%s6 + $0x80] sm:$0xff] %vm10846, %v10813
  %10864 = vst.msk [vmem:[%s6 + $0x88] sm:$0xff] %vm10846, %v10814
  %10865 = vst.msk [vmem:[%s6 + $0x90] sm:$0xff] %vm10846, %v10815
  %10866 = vst.msk [vmem:[%s6 + $0x98] sm:$0xff] %vm10846, %v10816
  %10867 = vst.msk [vmem:[%s6 + $0xa0] sm:$0xff] %vm10846, %v10817
  %10868 = vst.msk [vmem:[%s6 + $0xa8] sm:$0xff] %vm10846, %v10818
  %10869 = vst.msk [vmem:[%s6 + $0xb0] sm:$0xff] %vm10846, %v10819
  %10870 = vst.msk [vmem:[%s6 + $0xb8] sm:$0xff] %vm10846, %v10820
  %10871 = vst.msk [vmem:[%s6 + $0xc0] sm:$0xff] %vm10846, %v10821
  %10872 = vst.msk [vmem:[%s6 + $0xc8] sm:$0xff] %vm10846, %v10822
  %10873 = vst.msk [vmem:[%s6 + $0xd0] sm:$0xff] %vm10846, %v10823
  %10874 = vst.msk [vmem:[%s6 + $0xd8] sm:$0xff] %vm10846, %v10824
  %10875 = vst.msk [vmem:[%s6 + $0xe0] sm:$0xff] %vm10846, %v10825
  %10876 = vst.msk [vmem:[%s6 + $0xe8] sm:$0xff] %vm10846, %v10826
  %10877 = vst.msk [vmem:[%s6 + $0xf0] sm:$0xff] %vm10846, %v10827
  %10878 = vst.msk [vmem:[%s6 + $0xf8] sm:$0xff] %vm10846, %v10828
  %10879 = vst.msk [vmem:[%s6 + $0x100] sm:$0xff] %vm10846, %v10829
  %10880 = vst.msk [vmem:[%s6 + $0x108] sm:$0xff] %vm10846, %v10830
  %10881 = vst.msk [vmem:[%s6 + $0x110] sm:$0xff] %vm10846, %v10831
  %10882 = vst.msk [vmem:[%s6 + $0x118] sm:$0xff] %vm10846, %v10832
  %10883 = vst.msk [vmem:[%s6 + $0x120] sm:$0xff] %vm10846, %v10833
  %10884 = vst.msk [vmem:[%s6 + $0x128] sm:$0xff] %vm10846, %v10834
  %10885 = vst.msk [vmem:[%s6 + $0x130] sm:$0xff] %vm10846, %v10835
  %10886 = vst.msk [vmem:[%s6 + $0x138] sm:$0xff] %vm10846, %v10836
  %10887 = vst.msk [vmem:[%s6 + $0x140] sm:$0xff] %vm10846, %v10837
  %10888 = vst.msk [vmem:[%s6 + $0x148] sm:$0xff] %vm10846, %v10838
  %10889 = vst.msk [vmem:[%s6 + $0x150] sm:$0xff] %vm10846, %v10839
  %10890 = vst.msk [vmem:[%s6 + $0x158] sm:$0xff] %vm10846, %v10840
  %10891 = vst.msk [vmem:[%s6 + $0x160] sm:$0xff] %vm10846, %v10841
  %10892 = vst.msk [vmem:[%s6 + $0x168] sm:$0xff] %vm10846, %v10842
  %10893 = vst.msk [vmem:[%s6 + $0x170] sm:$0xff] %vm10846, %v10843
  %10894 = vst.msk [vmem:[%s6 + $0x178] sm:$0xff] %vm10846, %v10844
  %10895 = vst.msk [vmem:[%s6 + $0x180] sm:$0xff] %vm10846, %v10845
  // Predicated region
  $region26: #{decoder_forward.1} parent=0 // pred_check
    _
  $region27: #{decoder_forward.1} parent=0 // pred_check_branch
    %10897 = sbr.rel (0) target = $region29
  $region28: #{decoder_forward.1} parent=0 // pred_region
    _
  $region29: #{decoder_forward.1} parent=0 // pred_fallthru
    _
  // Predicated region
  $region30: #{decoder_forward.1} parent=0 // pred_check
    _
  $region31: #{decoder_forward.1} parent=0 // pred_check_branch
    %10899 = sbr.rel (0) target = $region33
  $region32: #{decoder_forward.1} parent=0 // pred_region
    _
  $region33: #{decoder_forward.1} parent=0 // pred_fallthru
    _

</llo_original>
